<compile_context>
chip_gen: v5e
topology: v5e:2x2
jax: 0.10.0
libtpu: 0.0.40
codegen_flags: <defaults>
</compile_context>

<pallas_src>
import functools
import math

import jax
import jax.numpy as jnp
from jax import lax
from jax.experimental import pallas as pl
from jax.experimental.pallas import tpu as pltpu

_LANE = 128


# -----------------------------------------------------------------------------
# Pallas kernel: one ResBlockEncDec forward for a TB-batch tile.
# -----------------------------------------------------------------------------
def _resblock_kernel(*refs, n_head, d_k, d_v, diag_mask, has_skip):
    if has_skip:
        (x_ref, skip_ref, cond_ref, dproj_ref,
         w_np_ref, w_cp_ref,
         ln1_g_ref, ln1_b_ref, w_qkv_ref, wfc_ref,
         ln2_g_ref, ln2_b_ref, w1_ref, b1_ref, w2_ref, b2_ref,
         w_out_ref, b_out_ref,
         o_ref, attn_scr) = refs
    else:
        (x_ref, cond_ref, dproj_ref,
         w_np_ref, w_cp_ref,
         ln1_g_ref, ln1_b_ref, w_qkv_ref, wfc_ref,
         ln2_g_ref, ln2_b_ref, w1_ref, b1_ref, w2_ref, b2_ref,
         w_out_ref, b_out_ref,
         o_ref, attn_scr) = refs
        skip_ref = None

    f32, bf16 = jnp.float32, jnp.bfloat16
    TB, L, _ = x_ref.shape
    M = TB * L
    C = w_np_ref.shape[1]                       # in_channels of this block

    # ---- fused input 1x1 convs (+ fused decoder skip add) --------------------
    x = x_ref[...]
    if has_skip:
        x = x + skip_ref[...]                   # U-Net skip fused in-kernel
    x2 = x.reshape(M, -1)                       # (M, Cx) bf16
    c2 = cond_ref[...].reshape(M, -1)           # (M, Cc) bf16
    y = (jnp.dot(x2, w_np_ref[...], preferred_element_type=f32)
         + jnp.dot(c2, w_cp_ref[...], preferred_element_type=f32))
    # diffusion projection + both conv biases (pre-fused per batch element)
    y = (y.reshape(TB, L, C) + dproj_ref[...]).reshape(M, C)

    def layer_norm(z, g_ref, b_ref, eps):
        mu = jnp.mean(z, axis=-1, keepdims=True)
        d = z - mu
        var = jnp.mean(d * d, axis=-1, keepdims=True)
        return d * lax.rsqrt(var + eps) * g_ref[...] + b_ref[...]

    # ---- time encoder layer: pre-LN multi-head self-attention ----------------
    residual = y
    yn = layer_norm(y, ln1_g_ref, ln1_b_ref, 1e-5).astype(bf16)

    # single fused QKV matmul (1/sqrt(d_k) folded into the Q columns)
    qkv = jnp.dot(yn, w_qkv_ref[...], preferred_element_type=f32)   # (M, H*(2dk+dv))
    q_off, k_off, v_off = 0, n_head * d_k, 2 * n_head * d_k

    if diag_mask:
        row = lax.broadcasted_iota(jnp.int32, (L, L), 0)
        col = lax.broadcasted_iota(jnp.int32, (L, L), 1)
        diag = row == col                       # (L, L), batch-invariant

    for h in range(n_head):                     # static unroll; 1 live head at a time
        qh = qkv[:, q_off + h * d_k:q_off + (h + 1) * d_k].astype(bf16).reshape(TB, L, d_k)
        kh = qkv[:, k_off + h * d_k:k_off + (h + 1) * d_k].astype(bf16).reshape(TB, L, d_k)
        vh = qkv[:, v_off + h * d_v:v_off + (h + 1) * d_v].astype(bf16).reshape(TB, L, d_v)
        # bf16 MXU matmuls with f32 accumulation, batched over the TB tile
        s = jnp.einsum('bqd,bkd->bqk', qh, kh, preferred_element_type=f32)
        if diag_mask:
            s = jnp.where(diag, -1e9, s)        # masked_fill(diag, -1e9)
        s = s - jnp.max(s, axis=-1, keepdims=True)
        p = jnp.exp(s)
        p = p * pl.reciprocal(jnp.sum(p, axis=-1, keepdims=True), approx=True)
        oh = jnp.einsum('bqk,bkd->bqd', p.astype(bf16), vh, preferred_element_type=f32)
        attn_scr[:, h * d_v:(h + 1) * d_v] = oh.reshape(M, d_v)

    # all heads assembled in scratch -> ONE fc matmul with the full (H*d_v, C) weight
    attn = attn_scr[...].astype(bf16)
    y = jnp.dot(attn, wfc_ref[...], preferred_element_type=f32) + residual

    # ---- position-wise feed forward (pre-LN, eps=1e-6) ------------------------
    residual = y
    yn = layer_norm(y, ln2_g_ref, ln2_b_ref, 1e-6).astype(bf16)
    h1 = jnp.maximum(
        jnp.dot(yn, w1_ref[...], preferred_element_type=f32) + b1_ref[...], 0.0
    ).astype(bf16)
    y = jnp.dot(h1, w2_ref[...], preferred_element_type=f32) + b2_ref[...] + residual

    # ---- fused output 1x1 convs (no nonlinearity between them in reference) --
    out = jnp.dot(y.astype(bf16), w_out_ref[...],
                  preferred_element_type=f32) + b_out_ref[...]     # (M, C_pad)
    o_ref[...] = out.reshape(TB, L, -1).astype(o_ref.dtype)


# -----------------------------------------------------------------------------
# Tiling / VMEM helpers.
# -----------------------------------------------------------------------------
def _pick_batch_tile(B, L):
    """Largest divisor of B giving >= 2 (prefer 4) grid steps, with the per-step
    f32 attention score tile (TB, L, L) bounded to ~8 MiB."""
    target_steps = 4 if B >= 4 else (2 if B >= 2 else 1)
    best = 1
    for d in range(1, B + 1):
        if B % d == 0 and B // d >= target_steps and d * L * L * 4 <= 8 * 1024 * 1024:
            best = max(best, d)
    return best


def _vmem_limit_bytes():
    try:
        cap = getattr(pltpu.get_tpu_info(), "vmem_capacity_bytes", None)
    except Exception:
        cap = None
    if not cap:
        cap = 128 * 1024 * 1024
    return int(cap) * 3 // 4        # ~96 MiB on v5e/v6e, ~48 MiB on v7x


# -----------------------------------------------------------------------------
# Wrapper: parameter fusion + pallas_call for one ResBlockEncDec.
# -----------------------------------------------------------------------------
def res_block_forward(x_lc, cond_lc, diff_emb, params, *, n_head, d_k, d_v,
                      diag_mask=True, skip_lc=None, batch_tile=None):
    """One ResBlockEncDec.

    x_lc    : (B, L, Cx) channels-last bf16 noisy input; may carry zero-valued
              lane-padding channels from the previous block's lane-dense output.
    cond_lc : (B, L, Cc) channels-last bf16 conditioning.
    skip_lc : optional (B, L, Cx) bf16 U-Net skip, fused into the input conv.
    Returns (out, C_out): out is (B, L, C_pad) bf16 with the true result in
    channels [:C_out] and exact zeros in the padding channels.
    """
    B, L, Cx = x_lc.shape
    f32, bf16 = jnp.float32, jnp.bfloat16
    assert L % 8 == 0, "sequence length must be a multiple of 8 (sublane tile)"

    C_in = params["w_npi"].shape[0]
    # zero rows for any lane-padding channels of the incoming activation slab
    w_np = jnp.pad(params["w_npi"], ((0, Cx - C_in), (0, 0))).astype(bf16)
    w_cp = params["w_cpi"].astype(bf16)

    scale = 1.0 / math.sqrt(d_k)
    w_qkv = jnp.concatenate([params["wq"] * scale, params["wk"], params["wv"]],
                            axis=1).astype(bf16)
    wfc = params["wfc"].astype(bf16)
    w1, b1 = params["w1"].astype(bf16), params["b1"].astype(f32)
    w2, b2 = params["w2"].astype(bf16), params["b2"].astype(f32)

    # fuse the two output 1x1 convs (reference forward has no activation between)
    w_out = params["w_np1"] @ params["w_np2"]
    b_out = params["b_np1"] @ params["w_np2"] + params["b_np2"]
    C_out = w_out.shape[1]
    C_pad = ((C_out + _LANE - 1) // _LANE) * _LANE      # lane-dense output slab
    w_out = jnp.pad(w_out, ((0, 0), (0, C_pad - C_out))).astype(bf16)
    b_out = jnp.pad(b_out, ((0, 0), (0, C_pad - C_out))).astype(f32)

    ln1_g, ln1_b = params["ln1_g"].astype(f32), params["ln1_b"].astype(f32)
    ln2_g, ln2_b = params["ln2_g"].astype(f32), params["ln2_b"].astype(f32)

    # diffusion projection + both input-conv biases, hoisted out of the kernel
    dproj = (diff_emb @ params["w_dif"] + params["b_dif"]
             + params["b_npi"] + params["b_cpi"]).astype(f32)       # (B, C_in)
    dproj = dproj[:, None, :]                                        # (B, 1, C_in)

    TB = _pick_batch_tile(B, L) if batch_tile is None else batch_tile
    assert B % TB == 0, "batch must be divisible by the batch tile"

    weights = [w_np, w_cp, ln1_g, ln1_b, w_qkv, wfc, ln2_g, ln2_b,
               w1, b1, w2, b2, w_out, b_out]

    has_skip = skip_lc is not None
    acts = [x_lc] + ([skip_lc] if has_skip else []) + [cond_lc]
    in_specs = (
        [pl.BlockSpec((TB, L, a.shape[-1]), lambda b: (b, 0, 0)) for a in acts]
        + [pl.BlockSpec((TB, 1, C_in), lambda b: (b, 0, 0))]        # dproj
        + [pl.BlockSpec(w.shape, lambda b: (0, 0)) for w in weights]
    )
    out_specs = pl.BlockSpec((TB, L, C_pad), lambda b: (b, 0, 0))

    kernel = functools.partial(_resblock_kernel, n_head=n_head, d_k=d_k, d_v=d_v,
                               diag_mask=diag_mask, has_skip=has_skip)

    # advisory cost estimate so XLA schedules surrounding ops around the call
    Mtot = B * L
    Cc = cond_lc.shape[-1]
    Hqkv = n_head * (2 * d_k + d_v)
    d_inner = params["w1"].shape[1]
    flops = (2 * Mtot * (Cx * C_in + Cc * C_in + C_in * Hqkv + n_head * d_v * C_in
                         + 2 * C_in * d_inner + C_in * C_pad)
             + 2 * B * n_head * L * L * (d_k + d_v))
    transcend = B * n_head * L * L + 4 * Mtot
    bytes_acc = (sum(int(a.size) * a.dtype.itemsize for a in acts)
                 + int(dproj.size) * 4
                 + sum(int(w.size) * w.dtype.itemsize for w in weights)
                 + Mtot * C_pad * 2)

    out = pl.pallas_call(
        kernel,
        out_shape=jax.ShapeDtypeStruct((B, L, C_pad), bf16),
        grid_spec=pltpu.PrefetchScalarGridSpec(
            num_scalar_prefetch=0,
            grid=(B // TB,),
            in_specs=in_specs,
            out_specs=out_specs,
            scratch_shapes=[pltpu.VMEM((TB * L, n_head * d_v), f32)]),
        compiler_params=pltpu.CompilerParams(
            dimension_semantics=("parallel",),
            vmem_limit_bytes=_vmem_limit_bytes()),
        cost_estimate=pl.CostEstimate(flops=int(flops),
                                      transcendentals=int(transcend),
                                      bytes_accessed=int(bytes_acc)),
    )(*acts, dproj, *weights)

    return out, C_out


# -----------------------------------------------------------------------------
# Deterministic parameter initialization (shapes as implied by __init__).
# Matmul weights are stored pre-transposed as (in, out) for channels-last use.
# -----------------------------------------------------------------------------
def init_resblock_params(key, cond_ch, in_ch, out_ch, d_inner, n_head, d_k, d_v,
                         diff_dim):
    ks = jax.random.split(key, 18)

    def kaiming(k, fan_in, shape):
        return jax.random.normal(k, shape, jnp.float32) * math.sqrt(2.0 / fan_in)

    def unif(k, fan_in, shape):
        bound = 1.0 / math.sqrt(fan_in)
        return jax.random.uniform(k, shape, jnp.float32, -bound, bound)

    p = {}
    p["w_npi"] = kaiming(ks[0], in_ch, (in_ch, in_ch))
    p["b_npi"] = unif(ks[1], in_ch, (1, in_ch))
    p["w_cpi"] = kaiming(ks[2], cond_ch, (cond_ch, in_ch))
    p["b_cpi"] = unif(ks[3], cond_ch, (1, in_ch))
    p["w_dif"] = unif(ks[4], diff_dim, (diff_dim, in_ch))
    p["b_dif"] = unif(ks[5], diff_dim, (1, in_ch))
    p["ln1_g"] = jnp.ones((1, in_ch), jnp.float32)
    p["ln1_b"] = jnp.zeros((1, in_ch), jnp.float32)
    p["wq"] = unif(ks[6], in_ch, (in_ch, n_head * d_k))
    p["wk"] = unif(ks[7], in_ch, (in_ch, n_head * d_k))
    p["wv"] = unif(ks[8], in_ch, (in_ch, n_head * d_v))
    p["wfc"] = unif(ks[9], n_head * d_v, (n_head * d_v, in_ch))
    p["ln2_g"] = jnp.ones((1, in_ch), jnp.float32)
    p["ln2_b"] = jnp.zeros((1, in_ch), jnp.float32)
    p["w1"] = unif(ks[10], in_ch, (in_ch, d_inner))
    p["b1"] = unif(ks[11], in_ch, (1, d_inner))
    p["w2"] = unif(ks[12], d_inner, (d_inner, in_ch))
    p["b2"] = unif(ks[13], d_inner, (1, in_ch))
    p["w_np1"] = kaiming(ks[14], in_ch, (in_ch, in_ch))
    p["b_np1"] = unif(ks[15], in_ch, (1, in_ch))
    p["w_np2"] = kaiming(ks[16], in_ch, (in_ch, out_ch))
    p["b_np2"] = unif(ks[17], in_ch, (1, out_ch))
    return p


def init_encoder_decoder(key, n_layers, d_model, d_inner, n_head, d_k, d_v,
                         diff_emb_dim):
    enc_params, dec_params = [], []
    ch = d_model
    for _ in range(n_layers):
        key, sk = jax.random.split(key)
        enc_params.append(init_resblock_params(sk, d_model, ch, ch // 2,
                                               d_inner, n_head, d_k, d_v,
                                               diff_emb_dim))
        ch //= 2
    for _ in range(n_layers):
        key, sk = jax.random.split(key)
        dec_params.append(init_resblock_params(sk, d_model, ch, 2 * ch,
                                               d_inner, n_head, d_k, d_v,
                                               diff_emb_dim))
        ch *= 2
    return enc_params, dec_params


# -----------------------------------------------------------------------------
# EncoderDecoderBlock forward (U-Net style skip connections).
# Activations between blocks stay bf16 and lane-padded; skip adds are fused
# into the following block's kernel; final slice/cast happens once at the end.
# -----------------------------------------------------------------------------
def encoder_decoder_forward(x, cond, diff_emb, enc_params, dec_params, *,
                            n_head, d_k, d_v, diag_mask=True):
    bf16 = jnp.bfloat16
    y = jnp.transpose(x, (0, 2, 1)).astype(bf16)          # NCL -> NLC
    cond_lc = jnp.transpose(cond, (0, 2, 1)).astype(bf16)

    skips = []
    n_enc = len(enc_params)
    c_cur = x.shape[1]
    for i, p in enumerate(enc_params):
        y, c_cur = res_block_forward(y, cond_lc, diff_emb, p, n_head=n_head,
                                     d_k=d_k, d_v=d_v, diag_mask=diag_mask)
        if i != n_enc - 1:
            skips.append(y)
    for i, p in enumerate(dec_params):
        skip = skips[n_enc - i - 1] if i != 0 else None    # fused in-kernel
        y, c_cur = res_block_forward(y, cond_lc, diff_emb, p, n_head=n_head,
                                     d_k=d_k, d_v=d_v, diag_mask=diag_mask,
                                     skip_lc=skip)
    y = y[:, :, :c_cur].astype(jnp.float32)                # drop lane padding once
    return jnp.transpose(y, (0, 2, 1))                     # back to (B, C, L)


if __name__ == "__main__":
    # small config consistent with the module
    B = 2
    n_layers = 2
    d_model = 8          # channels
    L = 16               # sequence length == d_time
    d_inner = 16
    n_head = 2
    d_k = 4
    d_v = 4
    diff_emb_dim = 16

    key = jax.random.PRNGKey(0)
    kx, kc, kd, kp = jax.random.split(key, 4)
    x = jax.random.normal(kx, (B, d_model, L), jnp.float32)
    cond = jax.random.normal(kc, (B, d_model, L), jnp.float32)
    diff_emb = jax.random.normal(kd, (B, diff_emb_dim), jnp.float32)

    enc_p, dec_p = init_encoder_decoder(kp, n_layers, d_model, d_inner,
                                        n_head, d_k, d_v, diff_emb_dim)

    fwd = jax.jit(functools.partial(encoder_decoder_forward, n_head=n_head,
                                    d_k=d_k, d_v=d_v, diag_mask=True))
    out = fwd(x, cond, diff_emb, enc_p, dec_p)
    out = jax.block_until_ready(out)

    assert out.shape == (B, d_model, L), out.shape
    assert bool(jnp.all(jnp.isfinite(out)))
    print("KERNEL_OK")
</pallas_src>

<mosaic_0001>
module attributes {stable_mosaic.version = 11 : i64} {
  func.func @_resblock_kernel(%arg0: i32, %arg1: memref<1x16x8xbf16, #tpu.memory_space<vmem>>, %arg2: memref<1x16x8xbf16, #tpu.memory_space<vmem>>, %arg3: memref<1x1x8xf32, #tpu.memory_space<vmem>>, %arg4: memref<8x8xbf16, #tpu.memory_space<vmem>>, %arg5: memref<8x8xbf16, #tpu.memory_space<vmem>>, %arg6: memref<1x8xf32, #tpu.memory_space<vmem>>, %arg7: memref<1x8xf32, #tpu.memory_space<vmem>>, %arg8: memref<8x24xbf16, #tpu.memory_space<vmem>>, %arg9: memref<8x8xbf16, #tpu.memory_space<vmem>>, %arg10: memref<1x8xf32, #tpu.memory_space<vmem>>, %arg11: memref<1x8xf32, #tpu.memory_space<vmem>>, %arg12: memref<8x16xbf16, #tpu.memory_space<vmem>>, %arg13: memref<1x16xf32, #tpu.memory_space<vmem>>, %arg14: memref<16x8xbf16, #tpu.memory_space<vmem>>, %arg15: memref<1x8xf32, #tpu.memory_space<vmem>>, %arg16: memref<8x128xbf16, #tpu.memory_space<vmem>>, %arg17: memref<1x128xf32, #tpu.memory_space<vmem>>, %arg18: memref<1x16x128xbf16, #tpu.memory_space<vmem>>, %arg19: memref<16x8xf32, #tpu.memory_space<vmem>>) attributes {dimension_semantics = [#tpu.dimension_semantics<parallel>], iteration_bounds = array<i64: 2>, scalar_prefetch = 0 : i64, scratch_operands = 1 : i64, tpu.core_type = #tpu.core_type<tc>, window_params = [{transform_indices = @transform_0, window_bounds = array<i64: 1, 16, 8>}, {transform_indices = @transform_1, window_bounds = array<i64: 1, 16, 8>}, {transform_indices = @transform_2, window_bounds = array<i64: 1, 1, 8>}, {pipeline_mode = #tpu.pipeline_mode<synchronous>, transform_indices = @transform_3, window_bounds = array<i64: 8, 8>}, {pipeline_mode = #tpu.pipeline_mode<synchronous>, transform_indices = @transform_4, window_bounds = array<i64: 8, 8>}, {pipeline_mode = #tpu.pipeline_mode<synchronous>, transform_indices = @transform_5, window_bounds = array<i64: 1, 8>}, {pipeline_mode = #tpu.pipeline_mode<synchronous>, transform_indices = @transform_6, window_bounds = array<i64: 1, 8>}, {pipeline_mode = #tpu.pipeline_mode<synchronous>, transform_indices = @transform_7, window_bounds = array<i64: 8, 24>}, {pipeline_mode = #tpu.pipeline_mode<synchronous>, transform_indices = @transform_8, window_bounds = array<i64: 8, 8>}, {pipeline_mode = #tpu.pipeline_mode<synchronous>, transform_indices = @transform_9, window_bounds = array<i64: 1, 8>}, {pipeline_mode = #tpu.pipeline_mode<synchronous>, transform_indices = @transform_10, window_bounds = array<i64: 1, 8>}, {pipeline_mode = #tpu.pipeline_mode<synchronous>, transform_indices = @transform_11, window_bounds = array<i64: 8, 16>}, {pipeline_mode = #tpu.pipeline_mode<synchronous>, transform_indices = @transform_12, window_bounds = array<i64: 1, 16>}, {pipeline_mode = #tpu.pipeline_mode<synchronous>, transform_indices = @transform_13, window_bounds = array<i64: 16, 8>}, {pipeline_mode = #tpu.pipeline_mode<synchronous>, transform_indices = @transform_14, window_bounds = array<i64: 1, 8>}, {pipeline_mode = #tpu.pipeline_mode<synchronous>, transform_indices = @transform_15, window_bounds = array<i64: 8, 128>}, {pipeline_mode = #tpu.pipeline_mode<synchronous>, transform_indices = @transform_16, window_bounds = array<i64: 1, 128>}, {transform_indices = @transform_17, window_bounds = array<i64: 1, 16, 128>}]} {
    %c0 = arith.constant 0 : index
    %c0_0 = arith.constant 0 : index
    %c0_1 = arith.constant 0 : index
    %0 = vector.load %arg1[%c0, %c0_0, %c0_1] : memref<1x16x8xbf16, #tpu.memory_space<vmem>>, vector<1x16x8xbf16>
    %1 = vector.shape_cast %0 : vector<1x16x8xbf16> to vector<16x8xbf16>
    %c0_2 = arith.constant 0 : index
    %c0_3 = arith.constant 0 : index
    %c0_4 = arith.constant 0 : index
    %2 = vector.load %arg2[%c0_2, %c0_3, %c0_4] : memref<1x16x8xbf16, #tpu.memory_space<vmem>>, vector<1x16x8xbf16>
    %3 = vector.shape_cast %2 : vector<1x16x8xbf16> to vector<16x8xbf16>
    %c0_5 = arith.constant 0 : index
    %c0_6 = arith.constant 0 : index
    %4 = vector.load %arg4[%c0_5, %c0_6] : memref<8x8xbf16, #tpu.memory_space<vmem>>, vector<8x8xbf16>
    %cst = arith.constant dense<0.000000e+00> : vector<16x8xf32>
    %5 = tpu.matmul %1, %4, %cst {dimension_numbers = #tpu.dot_dimension_numbers<[1], [0], [0], [1], [0, 0, 1, 1], [], []>} : vector<16x8xbf16>, vector<8x8xbf16>, vector<16x8xf32> -> vector<16x8xf32>
    %c0_7 = arith.constant 0 : index
    %c0_8 = arith.constant 0 : index
    %6 = vector.load %arg5[%c0_7, %c0_8] : memref<8x8xbf16, #tpu.memory_space<vmem>>, vector<8x8xbf16>
    %cst_9 = arith.constant dense<0.000000e+00> : vector<16x8xf32>
    %7 = tpu.matmul %3, %6, %cst_9 {dimension_numbers = #tpu.dot_dimension_numbers<[1], [0], [0], [1], [0, 0, 1, 1], [], []>} : vector<16x8xbf16>, vector<8x8xbf16>, vector<16x8xf32> -> vector<16x8xf32>
    %8 = arith.addf %5, %7 : vector<16x8xf32>
    %9 = vector.shape_cast %8 : vector<16x8xf32> to vector<1x16x8xf32>
    %c0_10 = arith.constant 0 : index
    %c0_11 = arith.constant 0 : index
    %c0_12 = arith.constant 0 : index
    %10 = vector.load %arg3[%c0_10, %c0_11, %c0_12] : memref<1x1x8xf32, #tpu.memory_space<vmem>>, vector<1x1x8xf32>
    %11 = vector.broadcast %10 : vector<1x1x8xf32> to vector<1x16x8xf32>
    %12 = arith.addf %9, %11 : vector<1x16x8xf32>
    %13 = vector.shape_cast %12 : vector<1x16x8xf32> to vector<16x8xf32>
    %cst_13 = arith.constant dense<0.000000e+00> : vector<16xf32>
    %14 = vector.multi_reduction <add>, %13, %cst_13 [1] : vector<16x8xf32> to vector<16xf32>
    %15 = vector.shape_cast %14 : vector<16xf32> to vector<16x1xf32>
    %cst_14 = arith.constant 8.000000e+00 : f32
    %16 = vector.broadcast %cst_14 : f32 to vector<16x1xf32>
    %17 = arith.divf %15, %16 : vector<16x1xf32>
    %18 = vector.broadcast %17 : vector<16x1xf32> to vector<16x8xf32>
    %19 = arith.subf %13, %18 : vector<16x8xf32>
    %20 = arith.mulf %19, %19 : vector<16x8xf32>
    %cst_15 = arith.constant dense<0.000000e+00> : vector<16xf32>
    %21 = vector.multi_reduction <add>, %20, %cst_15 [1] : vector<16x8xf32> to vector<16xf32>
    %22 = vector.shape_cast %21 : vector<16xf32> to vector<16x1xf32>
    %cst_16 = arith.constant 8.000000e+00 : f32
    %23 = vector.broadcast %cst_16 : f32 to vector<16x1xf32>
    %24 = arith.divf %22, %23 : vector<16x1xf32>
    %cst_17 = arith.constant 9.99999974E-6 : f32
    %25 = vector.broadcast %cst_17 : f32 to vector<16x1xf32>
    %26 = arith.addf %24, %25 : vector<16x1xf32>
    %27 = math.rsqrt %26 : vector<16x1xf32>
    %28 = vector.broadcast %27 : vector<16x1xf32> to vector<16x8xf32>
    %29 = arith.mulf %19, %28 : vector<16x8xf32>
    %c0_18 = arith.constant 0 : index
    %c0_19 = arith.constant 0 : index
    %30 = vector.load %arg6[%c0_18, %c0_19] : memref<1x8xf32, #tpu.memory_space<vmem>>, vector<1x8xf32>
    %31 = vector.broadcast %30 : vector<1x8xf32> to vector<16x8xf32>
    %32 = arith.mulf %29, %31 : vector<16x8xf32>
    %c0_20 = arith.constant 0 : index
    %c0_21 = arith.constant 0 : index
    %33 = vector.load %arg7[%c0_20, %c0_21] : memref<1x8xf32, #tpu.memory_space<vmem>>, vector<1x8xf32>
    %34 = vector.broadcast %33 : vector<1x8xf32> to vector<16x8xf32>
    %35 = arith.addf %32, %34 : vector<16x8xf32>
    %36 = arith.truncf %35 : vector<16x8xf32> to vector<16x8xbf16>
    %c0_22 = arith.constant 0 : index
    %c0_23 = arith.constant 0 : index
    %37 = vector.load %arg8[%c0_22, %c0_23] : memref<8x24xbf16, #tpu.memory_space<vmem>>, vector<8x24xbf16>
    %cst_24 = arith.constant dense<0.000000e+00> : vector<16x24xf32>
    %38 = tpu.matmul %36, %37, %cst_24 {dimension_numbers = #tpu.dot_dimension_numbers<[1], [0], [0], [1], [0, 0, 1, 1], [], []>} : vector<16x8xbf16>, vector<8x24xbf16>, vector<16x24xf32> -> vector<16x24xf32>
    %39 = tpu.iota {dimensions = array<i32: 0>} : vector<16x16xi32>
    %40 = tpu.iota {dimensions = array<i32: 1>} : vector<16x16xi32>
    %41 = arith.cmpi eq, %39, %40 : vector<16x16xi32>
    %42 = vector.extract_strided_slice %38 {offsets = [0, 0], sizes = [16, 4], strides = [1, 1]} : vector<16x24xf32> to vector<16x4xf32>
    %43 = arith.truncf %42 : vector<16x4xf32> to vector<16x4xbf16>
    %44 = vector.shape_cast %43 : vector<16x4xbf16> to vector<1x16x4xbf16>
    %45 = vector.extract_strided_slice %38 {offsets = [0, 8], sizes = [16, 4], strides = [1, 1]} : vector<16x24xf32> to vector<16x4xf32>
    %46 = arith.truncf %45 : vector<16x4xf32> to vector<16x4xbf16>
    %47 = vector.shape_cast %46 : vector<16x4xbf16> to vector<1x16x4xbf16>
    %48 = vector.extract_strided_slice %38 {offsets = [0, 16], sizes = [16, 4], strides = [1, 1]} : vector<16x24xf32> to vector<16x4xf32>
    %49 = arith.truncf %48 : vector<16x4xf32> to vector<16x4xbf16>
    %50 = vector.shape_cast %49 : vector<16x4xbf16> to vector<1x16x4xbf16>
    "tpu.trace_start"() <{level = 10 : i32, message = "bqd,bkd->bqk"}> : () -> ()
    %cst_25 = arith.constant dense<0.000000e+00> : vector<1x16x16xf32>
    %51 = tpu.matmul %44, %47, %cst_25 {dimension_numbers = #tpu.dot_dimension_numbers<[2], [2], [1], [1], [0, 0, 0, 1, 1, 1], [0], [0]>} : vector<1x16x4xbf16>, vector<1x16x4xbf16>, vector<1x16x16xf32> -> vector<1x16x16xf32>
    %cst_26 = arith.constant -1.000000e+09 : f32
    "tpu.trace_stop"() : () -> ()
    %52 = vector.shape_cast %41 : vector<16x16xi1> to vector<1x16x16xi1>
    %53 = vector.broadcast %cst_26 : f32 to vector<1x16x16xf32>
    %54 = arith.select %52, %53, %51 : vector<1x16x16xi1>, vector<1x16x16xf32>
    %cst_27 = arith.constant dense<0xFF800000> : vector<1x16xf32>
    %55 = vector.multi_reduction <maximumf>, %54, %cst_27 [2] : vector<1x16x16xf32> to vector<1x16xf32>
    %56 = vector.shape_cast %55 : vector<1x16xf32> to vector<1x16x1xf32>
    %57 = vector.broadcast %56 : vector<1x16x1xf32> to vector<1x16x16xf32>
    %58 = arith.subf %54, %57 : vector<1x16x16xf32>
    %59 = math.exp %58 : vector<1x16x16xf32>
    %cst_28 = arith.constant dense<0.000000e+00> : vector<1x16xf32>
    %60 = vector.multi_reduction <add>, %59, %cst_28 [2] : vector<1x16x16xf32> to vector<1x16xf32>
    %61 = vector.shape_cast %60 : vector<1x16xf32> to vector<1x16x1xf32>
    %62 = tpu.reciprocal %61 {approx = true} : vector<1x16x1xf32> -> vector<1x16x1xf32>
    %63 = vector.broadcast %62 : vector<1x16x1xf32> to vector<1x16x16xf32>
    %64 = arith.mulf %59, %63 : vector<1x16x16xf32>
    %65 = arith.truncf %64 : vector<1x16x16xf32> to vector<1x16x16xbf16>
    "tpu.trace_start"() <{level = 10 : i32, message = "bqk,bkd->bqd"}> : () -> ()
    %cst_29 = arith.constant dense<0.000000e+00> : vector<1x16x4xf32>
    %66 = tpu.matmul %65, %50, %cst_29 {dimension_numbers = #tpu.dot_dimension_numbers<[2], [1], [1], [2], [0, 0, 0, 1, 1, 2], [0], [0]>} : vector<1x16x16xbf16>, vector<1x16x4xbf16>, vector<1x16x4xf32> -> vector<1x16x4xf32>
    "tpu.trace_stop"() : () -> ()
    %67 = vector.shape_cast %66 : vector<1x16x4xf32> to vector<16x4xf32>
    %c0_30 = arith.constant 0 : index
    %c0_31 = arith.constant 0 : index
    %68 = vector.load %arg19[%c0_30, %c0_31] : memref<16x8xf32, #tpu.memory_space<vmem>>, vector<16x4xf32>
    tpu.vector_store %arg19[%c0_30, %c0_31], %67 {strides = array<i32>} : memref<16x8xf32, #tpu.memory_space<vmem>>, vector<16x4xf32>,
    %69 = vector.extract_strided_slice %38 {offsets = [0, 4], sizes = [16, 4], strides = [1, 1]} : vector<16x24xf32> to vector<16x4xf32>
    %70 = arith.truncf %69 : vector<16x4xf32> to vector<16x4xbf16>
    %71 = vector.shape_cast %70 : vector<16x4xbf16> to vector<1x16x4xbf16>
    %72 = vector.extract_strided_slice %38 {offsets = [0, 12], sizes = [16, 4], strides = [1, 1]} : vector<16x24xf32> to vector<16x4xf32>
    %73 = arith.truncf %72 : vector<16x4xf32> to vector<16x4xbf16>
    %74 = vector.shape_cast %73 : vector<16x4xbf16> to vector<1x16x4xbf16>
    %75 = vector.extract_strided_slice %38 {offsets = [0, 20], sizes = [16, 4], strides = [1, 1]} : vector<16x24xf32> to vector<16x4xf32>
    %76 = arith.truncf %75 : vector<16x4xf32> to vector<16x4xbf16>
    %77 = vector.shape_cast %76 : vector<16x4xbf16> to vector<1x16x4xbf16>
    "tpu.trace_start"() <{level = 10 : i32, message = "bqd,bkd->bqk"}> : () -> ()
    %cst_32 = arith.constant dense<0.000000e+00> : vector<1x16x16xf32>
    %78 = tpu.matmul %71, %74, %cst_32 {dimension_numbers = #tpu.dot_dimension_numbers<[2], [2], [1], [1], [0, 0, 0, 1, 1, 1], [0], [0]>} : vector<1x16x4xbf16>, vector<1x16x4xbf16>, vector<1x16x16xf32> -> vector<1x16x16xf32>
    %cst_33 = arith.constant -1.000000e+09 : f32
    "tpu.trace_stop"() : () -> ()
    %79 = vector.shape_cast %41 : vector<16x16xi1> to vector<1x16x16xi1>
    %80 = vector.broadcast %cst_33 : f32 to vector<1x16x16xf32>
    %81 = arith.select %79, %80, %78 : vector<1x16x16xi1>, vector<1x16x16xf32>
    %cst_34 = arith.constant dense<0xFF800000> : vector<1x16xf32>
    %82 = vector.multi_reduction <maximumf>, %81, %cst_34 [2] : vector<1x16x16xf32> to vector<1x16xf32>
    %83 = vector.shape_cast %82 : vector<1x16xf32> to vector<1x16x1xf32>
    %84 = vector.broadcast %83 : vector<1x16x1xf32> to vector<1x16x16xf32>
    %85 = arith.subf %81, %84 : vector<1x16x16xf32>
    %86 = math.exp %85 : vector<1x16x16xf32>
    %cst_35 = arith.constant dense<0.000000e+00> : vector<1x16xf32>
    %87 = vector.multi_reduction <add>, %86, %cst_35 [2] : vector<1x16x16xf32> to vector<1x16xf32>
    %88 = vector.shape_cast %87 : vector<1x16xf32> to vector<1x16x1xf32>
    %89 = tpu.reciprocal %88 {approx = true} : vector<1x16x1xf32> -> vector<1x16x1xf32>
    %90 = vector.broadcast %89 : vector<1x16x1xf32> to vector<1x16x16xf32>
    %91 = arith.mulf %86, %90 : vector<1x16x16xf32>
    %92 = arith.truncf %91 : vector<1x16x16xf32> to vector<1x16x16xbf16>
    "tpu.trace_start"() <{level = 10 : i32, message = "bqk,bkd->bqd"}> : () -> ()
    %cst_36 = arith.constant dense<0.000000e+00> : vector<1x16x4xf32>
    %93 = tpu.matmul %92, %77, %cst_36 {dimension_numbers = #tpu.dot_dimension_numbers<[2], [1], [1], [2], [0, 0, 0, 1, 1, 2], [0], [0]>} : vector<1x16x16xbf16>, vector<1x16x4xbf16>, vector<1x16x4xf32> -> vector<1x16x4xf32>
    "tpu.trace_stop"() : () -> ()
    %94 = vector.shape_cast %93 : vector<1x16x4xf32> to vector<16x4xf32>
    %c0_37 = arith.constant 0 : index
    %c4 = arith.constant 4 : index
    %95 = vector.load %arg19[%c0_37, %c4] : memref<16x8xf32, #tpu.memory_space<vmem>>, vector<16x4xf32>
    tpu.vector_store %arg19[%c0_37, %c4], %94 {strides = array<i32>} : memref<16x8xf32, #tpu.memory_space<vmem>>, vector<16x4xf32>,
    %c0_38 = arith.constant 0 : index
    %c0_39 = arith.constant 0 : index
    %96 = vector.load %arg19[%c0_38, %c0_39] : memref<16x8xf32, #tpu.memory_space<vmem>>, vector<16x8xf32>
    %97 = arith.truncf %96 : vector<16x8xf32> to vector<16x8xbf16>
    %c0_40 = arith.constant 0 : index
    %c0_41 = arith.constant 0 : index
    %98 = vector.load %arg9[%c0_40, %c0_41] : memref<8x8xbf16, #tpu.memory_space<vmem>>, vector<8x8xbf16>
    %cst_42 = arith.constant dense<0.000000e+00> : vector<16x8xf32>
    %99 = tpu.matmul %97, %98, %cst_42 {dimension_numbers = #tpu.dot_dimension_numbers<[1], [0], [0], [1], [0, 0, 1, 1], [], []>} : vector<16x8xbf16>, vector<8x8xbf16>, vector<16x8xf32> -> vector<16x8xf32>
    %100 = arith.addf %99, %13 : vector<16x8xf32>
    %cst_43 = arith.constant dense<0.000000e+00> : vector<16xf32>
    %101 = vector.multi_reduction <add>, %100, %cst_43 [1] : vector<16x8xf32> to vector<16xf32>
    %102 = vector.shape_cast %101 : vector<16xf32> to vector<16x1xf32>
    %cst_44 = arith.constant 8.000000e+00 : f32
    %103 = vector.broadcast %cst_44 : f32 to vector<16x1xf32>
    %104 = arith.divf %102, %103 : vector<16x1xf32>
    %105 = vector.broadcast %104 : vector<16x1xf32> to vector<16x8xf32>
    %106 = arith.subf %100, %105 : vector<16x8xf32>
    %107 = arith.mulf %106, %106 : vector<16x8xf32>
    %cst_45 = arith.constant dense<0.000000e+00> : vector<16xf32>
    %108 = vector.multi_reduction <add>, %107, %cst_45 [1] : vector<16x8xf32> to vector<16xf32>
    %109 = vector.shape_cast %108 : vector<16xf32> to vector<16x1xf32>
    %cst_46 = arith.constant 8.000000e+00 : f32
    %110 = vector.broadcast %cst_46 : f32 to vector<16x1xf32>
    %111 = arith.divf %109, %110 : vector<16x1xf32>
    %cst_47 = arith.constant 9.99999997E-7 : f32
    %112 = vector.broadcast %cst_47 : f32 to vector<16x1xf32>
    %113 = arith.addf %111, %112 : vector<16x1xf32>
    %114 = math.rsqrt %113 : vector<16x1xf32>
    %115 = vector.broadcast %114 : vector<16x1xf32> to vector<16x8xf32>
    %116 = arith.mulf %106, %115 : vector<16x8xf32>
    %c0_48 = arith.constant 0 : index
    %c0_49 = arith.constant 0 : index
    %117 = vector.load %arg10[%c0_48, %c0_49] : memref<1x8xf32, #tpu.memory_space<vmem>>, vector<1x8xf32>
    %118 = vector.broadcast %117 : vector<1x8xf32> to vector<16x8xf32>
    %119 = arith.mulf %116, %118 : vector<16x8xf32>
    %c0_50 = arith.constant 0 : index
    %c0_51 = arith.constant 0 : index
    %120 = vector.load %arg11[%c0_50, %c0_51] : memref<1x8xf32, #tpu.memory_space<vmem>>, vector<1x8xf32>
    %121 = vector.broadcast %120 : vector<1x8xf32> to vector<16x8xf32>
    %122 = arith.addf %119, %121 : vector<16x8xf32>
    %123 = arith.truncf %122 : vector<16x8xf32> to vector<16x8xbf16>
    %c0_52 = arith.constant 0 : index
    %c0_53 = arith.constant 0 : index
    %124 = vector.load %arg12[%c0_52, %c0_53] : memref<8x16xbf16, #tpu.memory_space<vmem>>, vector<8x16xbf16>
    %cst_54 = arith.constant dense<0.000000e+00> : vector<16x16xf32>
    %125 = tpu.matmul %123, %124, %cst_54 {dimension_numbers = #tpu.dot_dimension_numbers<[1], [0], [0], [1], [0, 0, 1, 1], [], []>} : vector<16x8xbf16>, vector<8x16xbf16>, vector<16x16xf32> -> vector<16x16xf32>
    %c0_55 = arith.constant 0 : index
    %c0_56 = arith.constant 0 : index
    %126 = vector.load %arg13[%c0_55, %c0_56] : memref<1x16xf32, #tpu.memory_space<vmem>>, vector<1x16xf32>
    %127 = vector.broadcast %126 : vector<1x16xf32> to vector<16x16xf32>
    %128 = arith.addf %125, %127 : vector<16x16xf32>
    %cst_57 = arith.constant 0.000000e+00 : f32
    %129 = vector.broadcast %cst_57 : f32 to vector<16x16xf32>
    %130 = arith.maximumf %128, %129 : vector<16x16xf32>
    %131 = arith.truncf %130 : vector<16x16xf32> to vector<16x16xbf16>
    %c0_58 = arith.constant 0 : index
    %c0_59 = arith.constant 0 : index
    %132 = vector.load %arg14[%c0_58, %c0_59] : memref<16x8xbf16, #tpu.memory_space<vmem>>, vector<16x8xbf16>
    %cst_60 = arith.constant dense<0.000000e+00> : vector<16x8xf32>
    %133 = tpu.matmul %131, %132, %cst_60 {dimension_numbers = #tpu.dot_dimension_numbers<[1], [0], [0], [1], [0, 0, 1, 1], [], []>} : vector<16x16xbf16>, vector<16x8xbf16>, vector<16x8xf32> -> vector<16x8xf32>
    %c0_61 = arith.constant 0 : index
    %c0_62 = arith.constant 0 : index
    %134 = vector.load %arg15[%c0_61, %c0_62] : memref<1x8xf32, #tpu.memory_space<vmem>>, vector<1x8xf32>
    %135 = vector.broadcast %134 : vector<1x8xf32> to vector<16x8xf32>
    %136 = arith.addf %133, %135 : vector<16x8xf32>
    %137 = arith.addf %136, %100 : vector<16x8xf32>
    %138 = arith.truncf %137 : vector<16x8xf32> to vector<16x8xbf16>
    %c0_63 = arith.constant 0 : index
    %c0_64 = arith.constant 0 : index
    %139 = vector.load %arg16[%c0_63, %c0_64] : memref<8x128xbf16, #tpu.memory_space<vmem>>, vector<8x128xbf16>
    %cst_65 = arith.constant dense<0.000000e+00> : vector<16x128xf32>
    %140 = tpu.matmul %138, %139, %cst_65 {dimension_numbers = #tpu.dot_dimension_numbers<[1], [0], [0], [1], [0, 0, 1, 1], [], []>} : vector<16x8xbf16>, vector<8x128xbf16>, vector<16x128xf32> -> vector<16x128xf32>
    %c0_66 = arith.constant 0 : index
    %c0_67 = arith.constant 0 : index
    %141 = vector.load %arg17[%c0_66, %c0_67] : memref<1x128xf32, #tpu.memory_space<vmem>>, vector<1x128xf32>
    %142 = vector.broadcast %141 : vector<1x128xf32> to vector<16x128xf32>
    %143 = arith.addf %140, %142 : vector<16x128xf32>
    %144 = vector.shape_cast %143 : vector<16x128xf32> to vector<1x16x128xf32>
    %145 = arith.truncf %144 : vector<1x16x128xf32> to vector<1x16x128xbf16>
    %c0_68 = arith.constant 0 : index
    %c0_69 = arith.constant 0 : index
    %c0_70 = arith.constant 0 : index
    %146 = vector.load %arg18[%c0_68, %c0_69, %c0_70] : memref<1x16x128xbf16, #tpu.memory_space<vmem>>, vector<1x16x128xbf16>
    tpu.vector_store %arg18[%c0_68, %c0_69, %c0_70], %145 {strides = array<i32>} : memref<1x16x128xbf16, #tpu.memory_space<vmem>>, vector<1x16x128xbf16>,
    return
  }
  func.func @transform_0(%arg0: i32) -> (i32, i32, i32) {
    %c0_i32 = arith.constant 0 : i32
    %c0_i32_0 = arith.constant 0 : i32
    %c0_i32_1 = arith.constant 0 : i32
    return %arg0, %c0_i32, %c0_i32_0 : i32, i32, i32
  }
  func.func @transform_1(%arg0: i32) -> (i32, i32, i32) {
    %c0_i32 = arith.constant 0 : i32
    %c0_i32_0 = arith.constant 0 : i32
    %c0_i32_1 = arith.constant 0 : i32
    return %arg0, %c0_i32, %c0_i32_0 : i32, i32, i32
  }
  func.func @transform_2(%arg0: i32) -> (i32, i32, i32) {
    %c0_i32 = arith.constant 0 : i32
    %c0_i32_0 = arith.constant 0 : i32
    %c0_i32_1 = arith.constant 0 : i32
    return %arg0, %c0_i32, %c0_i32_0 : i32, i32, i32
  }
  func.func @transform_3(%arg0: i32) -> (i32, i32) {
    %c0_i32 = arith.constant 0 : i32
    %c0_i32_0 = arith.constant 0 : i32
    %c0_i32_1 = arith.constant 0 : i32
    return %c0_i32, %c0_i32_0 : i32, i32
  }
  func.func @transform_4(%arg0: i32) -> (i32, i32) {
    %c0_i32 = arith.constant 0 : i32
    %c0_i32_0 = arith.constant 0 : i32
    %c0_i32_1 = arith.constant 0 : i32
    return %c0_i32, %c0_i32_0 : i32, i32
  }
  func.func @transform_5(%arg0: i32) -> (i32, i32) {
    %c0_i32 = arith.constant 0 : i32
    %c0_i32_0 = arith.constant 0 : i32
    %c0_i32_1 = arith.constant 0 : i32
    return %c0_i32, %c0_i32_0 : i32, i32
  }
  func.func @transform_6(%arg0: i32) -> (i32, i32) {
    %c0_i32 = arith.constant 0 : i32
    %c0_i32_0 = arith.constant 0 : i32
    %c0_i32_1 = arith.constant 0 : i32
    return %c0_i32, %c0_i32_0 : i32, i32
  }
  func.func @transform_7(%arg0: i32) -> (i32, i32) {
    %c0_i32 = arith.constant 0 : i32
    %c0_i32_0 = arith.constant 0 : i32
    %c0_i32_1 = arith.constant 0 : i32
    return %c0_i32, %c0_i32_0 : i32, i32
  }
  func.func @transform_8(%arg0: i32) -> (i32, i32) {
    %c0_i32 = arith.constant 0 : i32
    %c0_i32_0 = arith.constant 0 : i32
    %c0_i32_1 = arith.constant 0 : i32
    return %c0_i32, %c0_i32_0 : i32, i32
  }
  func.func @transform_9(%arg0: i32) -> (i32, i32) {
    %c0_i32 = arith.constant 0 : i32
    %c0_i32_0 = arith.constant 0 : i32
    %c0_i32_1 = arith.constant 0 : i32
    return %c0_i32, %c0_i32_0 : i32, i32
  }
  func.func @transform_10(%arg0: i32) -> (i32, i32) {
    %c0_i32 = arith.constant 0 : i32
    %c0_i32_0 = arith.constant 0 : i32
    %c0_i32_1 = arith.constant 0 : i32
    return %c0_i32, %c0_i32_0 : i32, i32
  }
  func.func @transform_11(%arg0: i32) -> (i32, i32) {
    %c0_i32 = arith.constant 0 : i32
    %c0_i32_0 = arith.constant 0 : i32
    %c0_i32_1 = arith.constant 0 : i32
    return %c0_i32, %c0_i32_0 : i32, i32
  }
  func.func @transform_12(%arg0: i32) -> (i32, i32) {
    %c0_i32 = arith.constant 0 : i32
    %c0_i32_0 = arith.constant 0 : i32
    %c0_i32_1 = arith.constant 0 : i32
    return %c0_i32, %c0_i32_0 : i32, i32
  }
  func.func @transform_13(%arg0: i32) -> (i32, i32) {
    %c0_i32 = arith.constant 0 : i32
    %c0_i32_0 = arith.constant 0 : i32
    %c0_i32_1 = arith.constant 0 : i32
    return %c0_i32, %c0_i32_0 : i32, i32
  }
  func.func @transform_14(%arg0: i32) -> (i32, i32) {
    %c0_i32 = arith.constant 0 : i32
    %c0_i32_0 = arith.constant 0 : i32
    %c0_i32_1 = arith.constant 0 : i32
    return %c0_i32, %c0_i32_0 : i32, i32
  }
  func.func @transform_15(%arg0: i32) -> (i32, i32) {
    %c0_i32 = arith.constant 0 : i32
    %c0_i32_0 = arith.constant 0 : i32
    %c0_i32_1 = arith.constant 0 : i32
    return %c0_i32, %c0_i32_0 : i32, i32
  }
  func.func @transform_16(%arg0: i32) -> (i32, i32) {
    %c0_i32 = arith.constant 0 : i32
    %c0_i32_0 = arith.constant 0 : i32
    %c0_i32_1 = arith.constant 0 : i32
    return %c0_i32, %c0_i32_0 : i32, i32
  }
  func.func @transform_17(%arg0: i32) -> (i32, i32, i32) {
    %c0_i32 = arith.constant 0 : i32
    %c0_i32_0 = arith.constant 0 : i32
    %c0_i32_1 = arith.constant 0 : i32
    return %arg0, %c0_i32, %c0_i32_0 : i32, i32, i32
  }
}

module attributes {stable_mosaic.version = 11 : i64} {
  func.func @_resblock_kernel(%arg0: i32, %arg1: memref<1x16x128xbf16, #tpu.memory_space<vmem>>, %arg2: memref<1x16x8xbf16, #tpu.memory_space<vmem>>, %arg3: memref<1x1x4xf32, #tpu.memory_space<vmem>>, %arg4: memref<128x4xbf16, #tpu.memory_space<vmem>>, %arg5: memref<8x4xbf16, #tpu.memory_space<vmem>>, %arg6: memref<1x4xf32, #tpu.memory_space<vmem>>, %arg7: memref<1x4xf32, #tpu.memory_space<vmem>>, %arg8: memref<4x24xbf16, #tpu.memory_space<vmem>>, %arg9: memref<8x4xbf16, #tpu.memory_space<vmem>>, %arg10: memref<1x4xf32, #tpu.memory_space<vmem>>, %arg11: memref<1x4xf32, #tpu.memory_space<vmem>>, %arg12: memref<4x16xbf16, #tpu.memory_space<vmem>>, %arg13: memref<1x16xf32, #tpu.memory_space<vmem>>, %arg14: memref<16x4xbf16, #tpu.memory_space<vmem>>, %arg15: memref<1x4xf32, #tpu.memory_space<vmem>>, %arg16: memref<4x128xbf16, #tpu.memory_space<vmem>>, %arg17: memref<1x128xf32, #tpu.memory_space<vmem>>, %arg18: memref<1x16x128xbf16, #tpu.memory_space<vmem>>, %arg19: memref<16x8xf32, #tpu.memory_space<vmem>>) attributes {dimension_semantics = [#tpu.dimension_semantics<parallel>], iteration_bounds = array<i64: 2>, scalar_prefetch = 0 : i64, scratch_operands = 1 : i64, tpu.core_type = #tpu.core_type<tc>, window_params = [{transform_indices = @transform_0, window_bounds = array<i64: 1, 16, 128>}, {transform_indices = @transform_1, window_bounds = array<i64: 1, 16, 8>}, {transform_indices = @transform_2, window_bounds = array<i64: 1, 1, 4>}, {pipeline_mode = #tpu.pipeline_mode<synchronous>, transform_indices = @transform_3, window_bounds = array<i64: 128, 4>}, {pipeline_mode = #tpu.pipeline_mode<synchronous>, transform_indices = @transform_4, window_bounds = array<i64: 8, 4>}, {pipeline_mode = #tpu.pipeline_mode<synchronous>, transform_indices = @transform_5, window_bounds = array<i64: 1, 4>}, {pipeline_mode = #tpu.pipeline_mode<synchronous>, transform_indices = @transform_6, window_bounds = array<i64: 1, 4>}, {pipeline_mode = #tpu.pipeline_mode<synchronous>, transform_indices = @transform_7, window_bounds = array<i64: 4, 24>}, {pipeline_mode = #tpu.pipeline_mode<synchronous>, transform_indices = @transform_8, window_bounds = array<i64: 8, 4>}, {pipeline_mode = #tpu.pipeline_mode<synchronous>, transform_indices = @transform_9, window_bounds = array<i64: 1, 4>}, {pipeline_mode = #tpu.pipeline_mode<synchronous>, transform_indices = @transform_10, window_bounds = array<i64: 1, 4>}, {pipeline_mode = #tpu.pipeline_mode<synchronous>, transform_indices = @transform_11, window_bounds = array<i64: 4, 16>}, {pipeline_mode = #tpu.pipeline_mode<synchronous>, transform_indices = @transform_12, window_bounds = array<i64: 1, 16>}, {pipeline_mode = #tpu.pipeline_mode<synchronous>, transform_indices = @transform_13, window_bounds = array<i64: 16, 4>}, {pipeline_mode = #tpu.pipeline_mode<synchronous>, transform_indices = @transform_14, window_bounds = array<i64: 1, 4>}, {pipeline_mode = #tpu.pipeline_mode<synchronous>, transform_indices = @transform_15, window_bounds = array<i64: 4, 128>}, {pipeline_mode = #tpu.pipeline_mode<synchronous>, transform_indices = @transform_16, window_bounds = array<i64: 1, 128>}, {transform_indices = @transform_17, window_bounds = array<i64: 1, 16, 128>}]} {
    %c0 = arith.constant 0 : index
    %c0_0 = arith.constant 0 : index
    %c0_1 = arith.constant 0 : index
    %0 = vector.load %arg1[%c0, %c0_0, %c0_1] : memref<1x16x128xbf16, #tpu.memory_space<vmem>>, vector<1x16x128xbf16>
    %1 = vector.shape_cast %0 : vector<1x16x128xbf16> to vector<16x128xbf16>
    %c0_2 = arith.constant 0 : index
    %c0_3 = arith.constant 0 : index
    %c0_4 = arith.constant 0 : index
    %2 = vector.load %arg2[%c0_2, %c0_3, %c0_4] : memref<1x16x8xbf16, #tpu.memory_space<vmem>>, vector<1x16x8xbf16>
    %3 = vector.shape_cast %2 : vector<1x16x8xbf16> to vector<16x8xbf16>
    %c0_5 = arith.constant 0 : index
    %c0_6 = arith.constant 0 : index
    %4 = vector.load %arg4[%c0_5, %c0_6] : memref<128x4xbf16, #tpu.memory_space<vmem>>, vector<128x4xbf16>
    %cst = arith.constant dense<0.000000e+00> : vector<16x4xf32>
    %5 = tpu.matmul %1, %4, %cst {dimension_numbers = #tpu.dot_dimension_numbers<[1], [0], [0], [1], [0, 0, 1, 1], [], []>} : vector<16x128xbf16>, vector<128x4xbf16>, vector<16x4xf32> -> vector<16x4xf32>
    %c0_7 = arith.constant 0 : index
    %c0_8 = arith.constant 0 : index
    %6 = vector.load %arg5[%c0_7, %c0_8] : memref<8x4xbf16, #tpu.memory_space<vmem>>, vector<8x4xbf16>
    %cst_9 = arith.constant dense<0.000000e+00> : vector<16x4xf32>
    %7 = tpu.matmul %3, %6, %cst_9 {dimension_numbers = #tpu.dot_dimension_numbers<[1], [0], [0], [1], [0, 0, 1, 1], [], []>} : vector<16x8xbf16>, vector<8x4xbf16>, vector<16x4xf32> -> vector<16x4xf32>
    %8 = arith.addf %5, %7 : vector<16x4xf32>
    %9 = vector.shape_cast %8 : vector<16x4xf32> to vector<1x16x4xf32>
    %c0_10 = arith.constant 0 : index
    %c0_11 = arith.constant 0 : index
    %c0_12 = arith.constant 0 : index
    %10 = vector.load %arg3[%c0_10, %c0_11, %c0_12] : memref<1x1x4xf32, #tpu.memory_space<vmem>>, vector<1x1x4xf32>
    %11 = vector.broadcast %10 : vector<1x1x4xf32> to vector<1x16x4xf32>
    %12 = arith.addf %9, %11 : vector<1x16x4xf32>
    %13 = vector.shape_cast %12 : vector<1x16x4xf32> to vector<16x4xf32>
    %cst_13 = arith.constant dense<0.000000e+00> : vector<16xf32>
    %14 = vector.multi_reduction <add>, %13, %cst_13 [1] : vector<16x4xf32> to vector<16xf32>
    %15 = vector.shape_cast %14 : vector<16xf32> to vector<16x1xf32>
    %cst_14 = arith.constant 4.000000e+00 : f32
    %16 = vector.broadcast %cst_14 : f32 to vector<16x1xf32>
    %17 = arith.divf %15, %16 : vector<16x1xf32>
    %18 = vector.broadcast %17 : vector<16x1xf32> to vector<16x4xf32>
    %19 = arith.subf %13, %18 : vector<16x4xf32>
    %20 = arith.mulf %19, %19 : vector<16x4xf32>
    %cst_15 = arith.constant dense<0.000000e+00> : vector<16xf32>
    %21 = vector.multi_reduction <add>, %20, %cst_15 [1] : vector<16x4xf32> to vector<16xf32>
    %22 = vector.shape_cast %21 : vector<16xf32> to vector<16x1xf32>
    %cst_16 = arith.constant 4.000000e+00 : f32
    %23 = vector.broadcast %cst_16 : f32 to vector<16x1xf32>
    %24 = arith.divf %22, %23 : vector<16x1xf32>
    %cst_17 = arith.constant 9.99999974E-6 : f32
    %25 = vector.broadcast %cst_17 : f32 to vector<16x1xf32>
    %26 = arith.addf %24, %25 : vector<16x1xf32>
    %27 = math.rsqrt %26 : vector<16x1xf32>
    %28 = vector.broadcast %27 : vector<16x1xf32> to vector<16x4xf32>
    %29 = arith.mulf %19, %28 : vector<16x4xf32>
    %c0_18 = arith.constant 0 : index
    %c0_19 = arith.constant 0 : index
    %30 = vector.load %arg6[%c0_18, %c0_19] : memref<1x4xf32, #tpu.memory_space<vmem>>, vector<1x4xf32>
    %31 = vector.broadcast %30 : vector<1x4xf32> to vector<16x4xf32>
    %32 = arith.mulf %29, %31 : vector<16x4xf32>
    %c0_20 = arith.constant 0 : index
    %c0_21 = arith.constant 0 : index
    %33 = vector.load %arg7[%c0_20, %c0_21] : memref<1x4xf32, #tpu.memory_space<vmem>>, vector<1x4xf32>
    %34 = vector.broadcast %33 : vector<1x4xf32> to vector<16x4xf32>
    %35 = arith.addf %32, %34 : vector<16x4xf32>
    %36 = arith.truncf %35 : vector<16x4xf32> to vector<16x4xbf16>
    %c0_22 = arith.constant 0 : index
    %c0_23 = arith.constant 0 : index
    %37 = vector.load %arg8[%c0_22, %c0_23] : memref<4x24xbf16, #tpu.memory_space<vmem>>, vector<4x24xbf16>
    %cst_24 = arith.constant dense<0.000000e+00> : vector<16x24xf32>
    %38 = tpu.matmul %36, %37, %cst_24 {dimension_numbers = #tpu.dot_dimension_numbers<[1], [0], [0], [1], [0, 0, 1, 1], [], []>} : vector<16x4xbf16>, vector<4x24xbf16>, vector<16x24xf32> -> vector<16x24xf32>
    %39 = tpu.iota {dimensions = array<i32: 0>} : vector<16x16xi32>
    %40 = tpu.iota {dimensions = array<i32: 1>} : vector<16x16xi32>
    %41 = arith.cmpi eq, %39, %40 : vector<16x16xi32>
    %42 = vector.extract_strided_slice %38 {offsets = [0, 0], sizes = [16, 4], strides = [1, 1]} : vector<16x24xf32> to vector<16x4xf32>
    %43 = arith.truncf %42 : vector<16x4xf32> to vector<16x4xbf16>
    %44 = vector.shape_cast %43 : vector<16x4xbf16> to vector<1x16x4xbf16>
    %45 = vector.extract_strided_slice %38 {offsets = [0, 8], sizes = [16, 4], strides = [1, 1]} : vector<16x24xf32> to vector<16x4xf32>
    %46 = arith.truncf %45 : vector<16x4xf32> to vector<16x4xbf16>
    %47 = vector.shape_cast %46 : vector<16x4xbf16> to vector<1x16x4xbf16>
    %48 = vector.extract_strided_slice %38 {offsets = [0, 16], sizes = [16, 4], strides = [1, 1]} : vector<16x24xf32> to vector<16x4xf32>
    %49 = arith.truncf %48 : vector<16x4xf32> to vector<16x4xbf16>
    %50 = vector.shape_cast %49 : vector<16x4xbf16> to vector<1x16x4xbf16>
    "tpu.trace_start"() <{level = 10 : i32, message = "bqd,bkd->bqk"}> : () -> ()
    %cst_25 = arith.constant dense<0.000000e+00> : vector<1x16x16xf32>
    %51 = tpu.matmul %44, %47, %cst_25 {dimension_numbers = #tpu.dot_dimension_numbers<[2], [2], [1], [1], [0, 0, 0, 1, 1, 1], [0], [0]>} : vector<1x16x4xbf16>, vector<1x16x4xbf16>, vector<1x16x16xf32> -> vector<1x16x16xf32>
    %cst_26 = arith.constant -1.000000e+09 : f32
    "tpu.trace_stop"() : () -> ()
    %52 = vector.shape_cast %41 : vector<16x16xi1> to vector<1x16x16xi1>
    %53 = vector.broadcast %cst_26 : f32 to vector<1x16x16xf32>
    %54 = arith.select %52, %53, %51 : vector<1x16x16xi1>, vector<1x16x16xf32>
    %cst_27 = arith.constant dense<0xFF800000> : vector<1x16xf32>
    %55 = vector.multi_reduction <maximumf>, %54, %cst_27 [2] : vector<1x16x16xf32> to vector<1x16xf32>
    %56 = vector.shape_cast %55 : vector<1x16xf32> to vector<1x16x1xf32>
    %57 = vector.broadcast %56 : vector<1x16x1xf32> to vector<1x16x16xf32>
    %58 = arith.subf %54, %57 : vector<1x16x16xf32>
    %59 = math.exp %58 : vector<1x16x16xf32>
    %cst_28 = arith.constant dense<0.000000e+00> : vector<1x16xf32>
    %60 = vector.multi_reduction <add>, %59, %cst_28 [2] : vector<1x16x16xf32> to vector<1x16xf32>
    %61 = vector.shape_cast %60 : vector<1x16xf32> to vector<1x16x1xf32>
    %62 = tpu.reciprocal %61 {approx = true} : vector<1x16x1xf32> -> vector<1x16x1xf32>
    %63 = vector.broadcast %62 : vector<1x16x1xf32> to vector<1x16x16xf32>
    %64 = arith.mulf %59, %63 : vector<1x16x16xf32>
    %65 = arith.truncf %64 : vector<1x16x16xf32> to vector<1x16x16xbf16>
    "tpu.trace_start"() <{level = 10 : i32, message = "bqk,bkd->bqd"}> : () -> ()
    %cst_29 = arith.constant dense<0.000000e+00> : vector<1x16x4xf32>
    %66 = tpu.matmul %65, %50, %cst_29 {dimension_numbers = #tpu.dot_dimension_numbers<[2], [1], [1], [2], [0, 0, 0, 1, 1, 2], [0], [0]>} : vector<1x16x16xbf16>, vector<1x16x4xbf16>, vector<1x16x4xf32> -> vector<1x16x4xf32>
    "tpu.trace_stop"() : () -> ()
    %67 = vector.shape_cast %66 : vector<1x16x4xf32> to vector<16x4xf32>
    %c0_30 = arith.constant 0 : index
    %c0_31 = arith.constant 0 : index
    %68 = vector.load %arg19[%c0_30, %c0_31] : memref<16x8xf32, #tpu.memory_space<vmem>>, vector<16x4xf32>
    tpu.vector_store %arg19[%c0_30, %c0_31], %67 {strides = array<i32>} : memref<16x8xf32, #tpu.memory_space<vmem>>, vector<16x4xf32>,
    %69 = vector.extract_strided_slice %38 {offsets = [0, 4], sizes = [16, 4], strides = [1, 1]} : vector<16x24xf32> to vector<16x4xf32>
    %70 = arith.truncf %69 : vector<16x4xf32> to vector<16x4xbf16>
    %71 = vector.shape_cast %70 : vector<16x4xbf16> to vector<1x16x4xbf16>
    %72 = vector.extract_strided_slice %38 {offsets = [0, 12], sizes = [16, 4], strides = [1, 1]} : vector<16x24xf32> to vector<16x4xf32>
    %73 = arith.truncf %72 : vector<16x4xf32> to vector<16x4xbf16>
    %74 = vector.shape_cast %73 : vector<16x4xbf16> to vector<1x16x4xbf16>
    %75 = vector.extract_strided_slice %38 {offsets = [0, 20], sizes = [16, 4], strides = [1, 1]} : vector<16x24xf32> to vector<16x4xf32>
    %76 = arith.truncf %75 : vector<16x4xf32> to vector<16x4xbf16>
    %77 = vector.shape_cast %76 : vector<16x4xbf16> to vector<1x16x4xbf16>
    "tpu.trace_start"() <{level = 10 : i32, message = "bqd,bkd->bqk"}> : () -> ()
    %cst_32 = arith.constant dense<0.000000e+00> : vector<1x16x16xf32>
    %78 = tpu.matmul %71, %74, %cst_32 {dimension_numbers = #tpu.dot_dimension_numbers<[2], [2], [1], [1], [0, 0, 0, 1, 1, 1], [0], [0]>} : vector<1x16x4xbf16>, vector<1x16x4xbf16>, vector<1x16x16xf32> -> vector<1x16x16xf32>
    %cst_33 = arith.constant -1.000000e+09 : f32
    "tpu.trace_stop"() : () -> ()
    %79 = vector.shape_cast %41 : vector<16x16xi1> to vector<1x16x16xi1>
    %80 = vector.broadcast %cst_33 : f32 to vector<1x16x16xf32>
    %81 = arith.select %79, %80, %78 : vector<1x16x16xi1>, vector<1x16x16xf32>
    %cst_34 = arith.constant dense<0xFF800000> : vector<1x16xf32>
    %82 = vector.multi_reduction <maximumf>, %81, %cst_34 [2] : vector<1x16x16xf32> to vector<1x16xf32>
    %83 = vector.shape_cast %82 : vector<1x16xf32> to vector<1x16x1xf32>
    %84 = vector.broadcast %83 : vector<1x16x1xf32> to vector<1x16x16xf32>
    %85 = arith.subf %81, %84 : vector<1x16x16xf32>
    %86 = math.exp %85 : vector<1x16x16xf32>
    %cst_35 = arith.constant dense<0.000000e+00> : vector<1x16xf32>
    %87 = vector.multi_reduction <add>, %86, %cst_35 [2] : vector<1x16x16xf32> to vector<1x16xf32>
    %88 = vector.shape_cast %87 : vector<1x16xf32> to vector<1x16x1xf32>
    %89 = tpu.reciprocal %88 {approx = true} : vector<1x16x1xf32> -> vector<1x16x1xf32>
    %90 = vector.broadcast %89 : vector<1x16x1xf32> to vector<1x16x16xf32>
    %91 = arith.mulf %86, %90 : vector<1x16x16xf32>
    %92 = arith.truncf %91 : vector<1x16x16xf32> to vector<1x16x16xbf16>
    "tpu.trace_start"() <{level = 10 : i32, message = "bqk,bkd->bqd"}> : () -> ()
    %cst_36 = arith.constant dense<0.000000e+00> : vector<1x16x4xf32>
    %93 = tpu.matmul %92, %77, %cst_36 {dimension_numbers = #tpu.dot_dimension_numbers<[2], [1], [1], [2], [0, 0, 0, 1, 1, 2], [0], [0]>} : vector<1x16x16xbf16>, vector<1x16x4xbf16>, vector<1x16x4xf32> -> vector<1x16x4xf32>
    "tpu.trace_stop"() : () -> ()
    %94 = vector.shape_cast %93 : vector<1x16x4xf32> to vector<16x4xf32>
    %c0_37 = arith.constant 0 : index
    %c4 = arith.constant 4 : index
    %95 = vector.load %arg19[%c0_37, %c4] : memref<16x8xf32, #tpu.memory_space<vmem>>, vector<16x4xf32>
    tpu.vector_store %arg19[%c0_37, %c4], %94 {strides = array<i32>} : memref<16x8xf32, #tpu.memory_space<vmem>>, vector<16x4xf32>,
    %c0_38 = arith.constant 0 : index
    %c0_39 = arith.constant 0 : index
    %96 = vector.load %arg19[%c0_38, %c0_39] : memref<16x8xf32, #tpu.memory_space<vmem>>, vector<16x8xf32>
    %97 = arith.truncf %96 : vector<16x8xf32> to vector<16x8xbf16>
    %c0_40 = arith.constant 0 : index
    %c0_41 = arith.constant 0 : index
    %98 = vector.load %arg9[%c0_40, %c0_41] : memref<8x4xbf16, #tpu.memory_space<vmem>>, vector<8x4xbf16>
    %cst_42 = arith.constant dense<0.000000e+00> : vector<16x4xf32>
    %99 = tpu.matmul %97, %98, %cst_42 {dimension_numbers = #tpu.dot_dimension_numbers<[1], [0], [0], [1], [0, 0, 1, 1], [], []>} : vector<16x8xbf16>, vector<8x4xbf16>, vector<16x4xf32> -> vector<16x4xf32>
    %100 = arith.addf %99, %13 : vector<16x4xf32>
    %cst_43 = arith.constant dense<0.000000e+00> : vector<16xf32>
    %101 = vector.multi_reduction <add>, %100, %cst_43 [1] : vector<16x4xf32> to vector<16xf32>
    %102 = vector.shape_cast %101 : vector<16xf32> to vector<16x1xf32>
    %cst_44 = arith.constant 4.000000e+00 : f32
    %103 = vector.broadcast %cst_44 : f32 to vector<16x1xf32>
    %104 = arith.divf %102, %103 : vector<16x1xf32>
    %105 = vector.broadcast %104 : vector<16x1xf32> to vector<16x4xf32>
    %106 = arith.subf %100, %105 : vector<16x4xf32>
    %107 = arith.mulf %106, %106 : vector<16x4xf32>
    %cst_45 = arith.constant dense<0.000000e+00> : vector<16xf32>
    %108 = vector.multi_reduction <add>, %107, %cst_45 [1] : vector<16x4xf32> to vector<16xf32>
    %109 = vector.shape_cast %108 : vector<16xf32> to vector<16x1xf32>
    %cst_46 = arith.constant 4.000000e+00 : f32
    %110 = vector.broadcast %cst_46 : f32 to vector<16x1xf32>
    %111 = arith.divf %109, %110 : vector<16x1xf32>
    %cst_47 = arith.constant 9.99999997E-7 : f32
    %112 = vector.broadcast %cst_47 : f32 to vector<16x1xf32>
    %113 = arith.addf %111, %112 : vector<16x1xf32>
    %114 = math.rsqrt %113 : vector<16x1xf32>
    %115 = vector.broadcast %114 : vector<16x1xf32> to vector<16x4xf32>
    %116 = arith.mulf %106, %115 : vector<16x4xf32>
    %c0_48 = arith.constant 0 : index
    %c0_49 = arith.constant 0 : index
    %117 = vector.load %arg10[%c0_48, %c0_49] : memref<1x4xf32, #tpu.memory_space<vmem>>, vector<1x4xf32>
    %118 = vector.broadcast %117 : vector<1x4xf32> to vector<16x4xf32>
    %119 = arith.mulf %116, %118 : vector<16x4xf32>
    %c0_50 = arith.constant 0 : index
    %c0_51 = arith.constant 0 : index
    %120 = vector.load %arg11[%c0_50, %c0_51] : memref<1x4xf32, #tpu.memory_space<vmem>>, vector<1x4xf32>
    %121 = vector.broadcast %120 : vector<1x4xf32> to vector<16x4xf32>
    %122 = arith.addf %119, %121 : vector<16x4xf32>
    %123 = arith.truncf %122 : vector<16x4xf32> to vector<16x4xbf16>
    %c0_52 = arith.constant 0 : index
    %c0_53 = arith.constant 0 : index
    %124 = vector.load %arg12[%c0_52, %c0_53] : memref<4x16xbf16, #tpu.memory_space<vmem>>, vector<4x16xbf16>
    %cst_54 = arith.constant dense<0.000000e+00> : vector<16x16xf32>
    %125 = tpu.matmul %123, %124, %cst_54 {dimension_numbers = #tpu.dot_dimension_numbers<[1], [0], [0], [1], [0, 0, 1, 1], [], []>} : vector<16x4xbf16>, vector<4x16xbf16>, vector<16x16xf32> -> vector<16x16xf32>
    %c0_55 = arith.constant 0 : index
    %c0_56 = arith.constant 0 : index
    %126 = vector.load %arg13[%c0_55, %c0_56] : memref<1x16xf32, #tpu.memory_space<vmem>>, vector<1x16xf32>
    %127 = vector.broadcast %126 : vector<1x16xf32> to vector<16x16xf32>
    %128 = arith.addf %125, %127 : vector<16x16xf32>
    %cst_57 = arith.constant 0.000000e+00 : f32
    %129 = vector.broadcast %cst_57 : f32 to vector<16x16xf32>
    %130 = arith.maximumf %128, %129 : vector<16x16xf32>
    %131 = arith.truncf %130 : vector<16x16xf32> to vector<16x16xbf16>
    %c0_58 = arith.constant 0 : index
    %c0_59 = arith.constant 0 : index
    %132 = vector.load %arg14[%c0_58, %c0_59] : memref<16x4xbf16, #tpu.memory_space<vmem>>, vector<16x4xbf16>
    %cst_60 = arith.constant dense<0.000000e+00> : vector<16x4xf32>
    %133 = tpu.matmul %131, %132, %cst_60 {dimension_numbers = #tpu.dot_dimension_numbers<[1], [0], [0], [1], [0, 0, 1, 1], [], []>} : vector<16x16xbf16>, vector<16x4xbf16>, vector<16x4xf32> -> vector<16x4xf32>
    %c0_61 = arith.constant 0 : index
    %c0_62 = arith.constant 0 : index
    %134 = vector.load %arg15[%c0_61, %c0_62] : memref<1x4xf32, #tpu.memory_space<vmem>>, vector<1x4xf32>
    %135 = vector.broadcast %134 : vector<1x4xf32> to vector<16x4xf32>
    %136 = arith.addf %133, %135 : vector<16x4xf32>
    %137 = arith.addf %136, %100 : vector<16x4xf32>
    %138 = arith.truncf %137 : vector<16x4xf32> to vector<16x4xbf16>
    %c0_63 = arith.constant 0 : index
    %c0_64 = arith.constant 0 : index
    %139 = vector.load %arg16[%c0_63, %c0_64] : memref<4x128xbf16, #tpu.memory_space<vmem>>, vector<4x128xbf16>
    %cst_65 = arith.constant dense<0.000000e+00> : vector<16x128xf32>
    %140 = tpu.matmul %138, %139, %cst_65 {dimension_numbers = #tpu.dot_dimension_numbers<[1], [0], [0], [1], [0, 0, 1, 1], [], []>} : vector<16x4xbf16>, vector<4x128xbf16>, vector<16x128xf32> -> vector<16x128xf32>
    %c0_66 = arith.constant 0 : index
    %c0_67 = arith.constant 0 : index
    %141 = vector.load %arg17[%c0_66, %c0_67] : memref<1x128xf32, #tpu.memory_space<vmem>>, vector<1x128xf32>
    %142 = vector.broadcast %141 : vector<1x128xf32> to vector<16x128xf32>
    %143 = arith.addf %140, %142 : vector<16x128xf32>
    %144 = vector.shape_cast %143 : vector<16x128xf32> to vector<1x16x128xf32>
    %145 = arith.truncf %144 : vector<1x16x128xf32> to vector<1x16x128xbf16>
    %c0_68 = arith.constant 0 : index
    %c0_69 = arith.constant 0 : index
    %c0_70 = arith.constant 0 : index
    %146 = vector.load %arg18[%c0_68, %c0_69, %c0_70] : memref<1x16x128xbf16, #tpu.memory_space<vmem>>, vector<1x16x128xbf16>
    tpu.vector_store %arg18[%c0_68, %c0_69, %c0_70], %145 {strides = array<i32>} : memref<1x16x128xbf16, #tpu.memory_space<vmem>>, vector<1x16x128xbf16>,
    return
  }
  func.func @transform_0(%arg0: i32) -> (i32, i32, i32) {
    %c0_i32 = arith.constant 0 : i32
    %c0_i32_0 = arith.constant 0 : i32
    %c0_i32_1 = arith.constant 0 : i32
    return %arg0, %c0_i32, %c0_i32_0 : i32, i32, i32
  }
  func.func @transform_1(%arg0: i32) -> (i32, i32, i32) {
    %c0_i32 = arith.constant 0 : i32
    %c0_i32_0 = arith.constant 0 : i32
    %c0_i32_1 = arith.constant 0 : i32
    return %arg0, %c0_i32, %c0_i32_0 : i32, i32, i32
  }
  func.func @transform_2(%arg0: i32) -> (i32, i32, i32) {
    %c0_i32 = arith.constant 0 : i32
    %c0_i32_0 = arith.constant 0 : i32
    %c0_i32_1 = arith.constant 0 : i32
    return %arg0, %c0_i32, %c0_i32_0 : i32, i32, i32
  }
  func.func @transform_3(%arg0: i32) -> (i32, i32) {
    %c0_i32 = arith.constant 0 : i32
    %c0_i32_0 = arith.constant 0 : i32
    %c0_i32_1 = arith.constant 0 : i32
    return %c0_i32, %c0_i32_0 : i32, i32
  }
  func.func @transform_4(%arg0: i32) -> (i32, i32) {
    %c0_i32 = arith.constant 0 : i32
    %c0_i32_0 = arith.constant 0 : i32
    %c0_i32_1 = arith.constant 0 : i32
    return %c0_i32, %c0_i32_0 : i32, i32
  }
  func.func @transform_5(%arg0: i32) -> (i32, i32) {
    %c0_i32 = arith.constant 0 : i32
    %c0_i32_0 = arith.constant 0 : i32
    %c0_i32_1 = arith.constant 0 : i32
    return %c0_i32, %c0_i32_0 : i32, i32
  }
  func.func @transform_6(%arg0: i32) -> (i32, i32) {
    %c0_i32 = arith.constant 0 : i32
    %c0_i32_0 = arith.constant 0 : i32
    %c0_i32_1 = arith.constant 0 : i32
    return %c0_i32, %c0_i32_0 : i32, i32
  }
  func.func @transform_7(%arg0: i32) -> (i32, i32) {
    %c0_i32 = arith.constant 0 : i32
    %c0_i32_0 = arith.constant 0 : i32
    %c0_i32_1 = arith.constant 0 : i32
    return %c0_i32, %c0_i32_0 : i32, i32
  }
  func.func @transform_8(%arg0: i32) -> (i32, i32) {
    %c0_i32 = arith.constant 0 : i32
    %c0_i32_0 = arith.constant 0 : i32
    %c0_i32_1 = arith.constant 0 : i32
    return %c0_i32, %c0_i32_0 : i32, i32
  }
  func.func @transform_9(%arg0: i32) -> (i32, i32) {
    %c0_i32 = arith.constant 0 : i32
    %c0_i32_0 = arith.constant 0 : i32
    %c0_i32_1 = arith.constant 0 : i32
    return %c0_i32, %c0_i32_0 : i32, i32
  }
  func.func @transform_10(%arg0: i32) -> (i32, i32) {
    %c0_i32 = arith.constant 0 : i32
    %c0_i32_0 = arith.constant 0 : i32
    %c0_i32_1 = arith.constant 0 : i32
    return %c0_i32, %c0_i32_0 : i32, i32
  }
  func.func @transform_11(%arg0: i32) -> (i32, i32) {
    %c0_i32 = arith.constant 0 : i32
    %c0_i32_0 = arith.constant 0 : i32
    %c0_i32_1 = arith.constant 0 : i32
    return %c0_i32, %c0_i32_0 : i32, i32
  }
  func.func @transform_12(%arg0: i32) -> (i32, i32) {
    %c0_i32 = arith.constant 0 : i32
    %c0_i32_0 = arith.constant 0 : i32
    %c0_i32_1 = arith.constant 0 : i32
    return %c0_i32, %c0_i32_0 : i32, i32
  }
  func.func @transform_13(%arg0: i32) -> (i32, i32) {
    %c0_i32 = arith.constant 0 : i32
    %c0_i32_0 = arith.constant 0 : i32
    %c0_i32_1 = arith.constant 0 : i32
    return %c0_i32, %c0_i32_0 : i32, i32
  }
  func.func @transform_14(%arg0: i32) -> (i32, i32) {
    %c0_i32 = arith.constant 0 : i32
    %c0_i32_0 = arith.constant 0 : i32
    %c0_i32_1 = arith.constant 0 : i32
    return %c0_i32, %c0_i32_0 : i32, i32
  }
  func.func @transform_15(%arg0: i32) -> (i32, i32) {
    %c0_i32 = arith.constant 0 : i32
    %c0_i32_0 = arith.constant 0 : i32
    %c0_i32_1 = arith.constant 0 : i32
    return %c0_i32, %c0_i32_0 : i32, i32
  }
  func.func @transform_16(%arg0: i32) -> (i32, i32) {
    %c0_i32 = arith.constant 0 : i32
    %c0_i32_0 = arith.constant 0 : i32
    %c0_i32_1 = arith.constant 0 : i32
    return %c0_i32, %c0_i32_0 : i32, i32
  }
  func.func @transform_17(%arg0: i32) -> (i32, i32, i32) {
    %c0_i32 = arith.constant 0 : i32
    %c0_i32_0 = arith.constant 0 : i32
    %c0_i32_1 = arith.constant 0 : i32
    return %arg0, %c0_i32, %c0_i32_0 : i32, i32, i32
  }
}

module attributes {stable_mosaic.version = 11 : i64} {
  func.func @_resblock_kernel(%arg0: i32, %arg1: memref<1x16x128xbf16, #tpu.memory_space<vmem>>, %arg2: memref<1x16x8xbf16, #tpu.memory_space<vmem>>, %arg3: memref<1x1x2xf32, #tpu.memory_space<vmem>>, %arg4: memref<128x2xbf16, #tpu.memory_space<vmem>>, %arg5: memref<8x2xbf16, #tpu.memory_space<vmem>>, %arg6: memref<1x2xf32, #tpu.memory_space<vmem>>, %arg7: memref<1x2xf32, #tpu.memory_space<vmem>>, %arg8: memref<2x24xbf16, #tpu.memory_space<vmem>>, %arg9: memref<8x2xbf16, #tpu.memory_space<vmem>>, %arg10: memref<1x2xf32, #tpu.memory_space<vmem>>, %arg11: memref<1x2xf32, #tpu.memory_space<vmem>>, %arg12: memref<2x16xbf16, #tpu.memory_space<vmem>>, %arg13: memref<1x16xf32, #tpu.memory_space<vmem>>, %arg14: memref<16x2xbf16, #tpu.memory_space<vmem>>, %arg15: memref<1x2xf32, #tpu.memory_space<vmem>>, %arg16: memref<2x128xbf16, #tpu.memory_space<vmem>>, %arg17: memref<1x128xf32, #tpu.memory_space<vmem>>, %arg18: memref<1x16x128xbf16, #tpu.memory_space<vmem>>, %arg19: memref<16x8xf32, #tpu.memory_space<vmem>>) attributes {dimension_semantics = [#tpu.dimension_semantics<parallel>], iteration_bounds = array<i64: 2>, scalar_prefetch = 0 : i64, scratch_operands = 1 : i64, tpu.core_type = #tpu.core_type<tc>, window_params = [{transform_indices = @transform_0, window_bounds = array<i64: 1, 16, 128>}, {transform_indices = @transform_1, window_bounds = array<i64: 1, 16, 8>}, {transform_indices = @transform_2, window_bounds = array<i64: 1, 1, 2>}, {pipeline_mode = #tpu.pipeline_mode<synchronous>, transform_indices = @transform_3, window_bounds = array<i64: 128, 2>}, {pipeline_mode = #tpu.pipeline_mode<synchronous>, transform_indices = @transform_4, window_bounds = array<i64: 8, 2>}, {pipeline_mode = #tpu.pipeline_mode<synchronous>, transform_indices = @transform_5, window_bounds = array<i64: 1, 2>}, {pipeline_mode = #tpu.pipeline_mode<synchronous>, transform_indices = @transform_6, window_bounds = array<i64: 1, 2>}, {pipeline_mode = #tpu.pipeline_mode<synchronous>, transform_indices = @transform_7, window_bounds = array<i64: 2, 24>}, {pipeline_mode = #tpu.pipeline_mode<synchronous>, transform_indices = @transform_8, window_bounds = array<i64: 8, 2>}, {pipeline_mode = #tpu.pipeline_mode<synchronous>, transform_indices = @transform_9, window_bounds = array<i64: 1, 2>}, {pipeline_mode = #tpu.pipeline_mode<synchronous>, transform_indices = @transform_10, window_bounds = array<i64: 1, 2>}, {pipeline_mode = #tpu.pipeline_mode<synchronous>, transform_indices = @transform_11, window_bounds = array<i64: 2, 16>}, {pipeline_mode = #tpu.pipeline_mode<synchronous>, transform_indices = @transform_12, window_bounds = array<i64: 1, 16>}, {pipeline_mode = #tpu.pipeline_mode<synchronous>, transform_indices = @transform_13, window_bounds = array<i64: 16, 2>}, {pipeline_mode = #tpu.pipeline_mode<synchronous>, transform_indices = @transform_14, window_bounds = array<i64: 1, 2>}, {pipeline_mode = #tpu.pipeline_mode<synchronous>, transform_indices = @transform_15, window_bounds = array<i64: 2, 128>}, {pipeline_mode = #tpu.pipeline_mode<synchronous>, transform_indices = @transform_16, window_bounds = array<i64: 1, 128>}, {transform_indices = @transform_17, window_bounds = array<i64: 1, 16, 128>}]} {
    %c0 = arith.constant 0 : index
    %c0_0 = arith.constant 0 : index
    %c0_1 = arith.constant 0 : index
    %0 = vector.load %arg1[%c0, %c0_0, %c0_1] : memref<1x16x128xbf16, #tpu.memory_space<vmem>>, vector<1x16x128xbf16>
    %1 = vector.shape_cast %0 : vector<1x16x128xbf16> to vector<16x128xbf16>
    %c0_2 = arith.constant 0 : index
    %c0_3 = arith.constant 0 : index
    %c0_4 = arith.constant 0 : index
    %2 = vector.load %arg2[%c0_2, %c0_3, %c0_4] : memref<1x16x8xbf16, #tpu.memory_space<vmem>>, vector<1x16x8xbf16>
    %3 = vector.shape_cast %2 : vector<1x16x8xbf16> to vector<16x8xbf16>
    %c0_5 = arith.constant 0 : index
    %c0_6 = arith.constant 0 : index
    %4 = vector.load %arg4[%c0_5, %c0_6] : memref<128x2xbf16, #tpu.memory_space<vmem>>, vector<128x2xbf16>
    %cst = arith.constant dense<0.000000e+00> : vector<16x2xf32>
    %5 = tpu.matmul %1, %4, %cst {dimension_numbers = #tpu.dot_dimension_numbers<[1], [0], [0], [1], [0, 0, 1, 1], [], []>} : vector<16x128xbf16>, vector<128x2xbf16>, vector<16x2xf32> -> vector<16x2xf32>
    %c0_7 = arith.constant 0 : index
    %c0_8 = arith.constant 0 : index
    %6 = vector.load %arg5[%c0_7, %c0_8] : memref<8x2xbf16, #tpu.memory_space<vmem>>, vector<8x2xbf16>
    %cst_9 = arith.constant dense<0.000000e+00> : vector<16x2xf32>
    %7 = tpu.matmul %3, %6, %cst_9 {dimension_numbers = #tpu.dot_dimension_numbers<[1], [0], [0], [1], [0, 0, 1, 1], [], []>} : vector<16x8xbf16>, vector<8x2xbf16>, vector<16x2xf32> -> vector<16x2xf32>
    %8 = arith.addf %5, %7 : vector<16x2xf32>
    %9 = vector.shape_cast %8 : vector<16x2xf32> to vector<1x16x2xf32>
    %c0_10 = arith.constant 0 : index
    %c0_11 = arith.constant 0 : index
    %c0_12 = arith.constant 0 : index
    %10 = vector.load %arg3[%c0_10, %c0_11, %c0_12] : memref<1x1x2xf32, #tpu.memory_space<vmem>>, vector<1x1x2xf32>
    %11 = vector.broadcast %10 : vector<1x1x2xf32> to vector<1x16x2xf32>
    %12 = arith.addf %9, %11 : vector<1x16x2xf32>
    %13 = vector.shape_cast %12 : vector<1x16x2xf32> to vector<16x2xf32>
    %cst_13 = arith.constant dense<0.000000e+00> : vector<16xf32>
    %14 = vector.multi_reduction <add>, %13, %cst_13 [1] : vector<16x2xf32> to vector<16xf32>
    %15 = vector.shape_cast %14 : vector<16xf32> to vector<16x1xf32>
    %cst_14 = arith.constant 2.000000e+00 : f32
    %16 = vector.broadcast %cst_14 : f32 to vector<16x1xf32>
    %17 = arith.divf %15, %16 : vector<16x1xf32>
    %18 = vector.broadcast %17 : vector<16x1xf32> to vector<16x2xf32>
    %19 = arith.subf %13, %18 : vector<16x2xf32>
    %20 = arith.mulf %19, %19 : vector<16x2xf32>
    %cst_15 = arith.constant dense<0.000000e+00> : vector<16xf32>
    %21 = vector.multi_reduction <add>, %20, %cst_15 [1] : vector<16x2xf32> to vector<16xf32>
    %22 = vector.shape_cast %21 : vector<16xf32> to vector<16x1xf32>
    %cst_16 = arith.constant 2.000000e+00 : f32
    %23 = vector.broadcast %cst_16 : f32 to vector<16x1xf32>
    %24 = arith.divf %22, %23 : vector<16x1xf32>
    %cst_17 = arith.constant 9.99999974E-6 : f32
    %25 = vector.broadcast %cst_17 : f32 to vector<16x1xf32>
    %26 = arith.addf %24, %25 : vector<16x1xf32>
    %27 = math.rsqrt %26 : vector<16x1xf32>
    %28 = vector.broadcast %27 : vector<16x1xf32> to vector<16x2xf32>
    %29 = arith.mulf %19, %28 : vector<16x2xf32>
    %c0_18 = arith.constant 0 : index
    %c0_19 = arith.constant 0 : index
    %30 = vector.load %arg6[%c0_18, %c0_19] : memref<1x2xf32, #tpu.memory_space<vmem>>, vector<1x2xf32>
    %31 = vector.broadcast %30 : vector<1x2xf32> to vector<16x2xf32>
    %32 = arith.mulf %29, %31 : vector<16x2xf32>
    %c0_20 = arith.constant 0 : index
    %c0_21 = arith.constant 0 : index
    %33 = vector.load %arg7[%c0_20, %c0_21] : memref<1x2xf32, #tpu.memory_space<vmem>>, vector<1x2xf32>
    %34 = vector.broadcast %33 : vector<1x2xf32> to vector<16x2xf32>
    %35 = arith.addf %32, %34 : vector<16x2xf32>
    %36 = arith.truncf %35 : vector<16x2xf32> to vector<16x2xbf16>
    %c0_22 = arith.constant 0 : index
    %c0_23 = arith.constant 0 : index
    %37 = vector.load %arg8[%c0_22, %c0_23] : memref<2x24xbf16, #tpu.memory_space<vmem>>, vector<2x24xbf16>
    %cst_24 = arith.constant dense<0.000000e+00> : vector<16x24xf32>
    %38 = tpu.matmul %36, %37, %cst_24 {dimension_numbers = #tpu.dot_dimension_numbers<[1], [0], [0], [1], [0, 0, 1, 1], [], []>} : vector<16x2xbf16>, vector<2x24xbf16>, vector<16x24xf32> -> vector<16x24xf32>
    %39 = tpu.iota {dimensions = array<i32: 0>} : vector<16x16xi32>
    %40 = tpu.iota {dimensions = array<i32: 1>} : vector<16x16xi32>
    %41 = arith.cmpi eq, %39, %40 : vector<16x16xi32>
    %42 = vector.extract_strided_slice %38 {offsets = [0, 0], sizes = [16, 4], strides = [1, 1]} : vector<16x24xf32> to vector<16x4xf32>
    %43 = arith.truncf %42 : vector<16x4xf32> to vector<16x4xbf16>
    %44 = vector.shape_cast %43 : vector<16x4xbf16> to vector<1x16x4xbf16>
    %45 = vector.extract_strided_slice %38 {offsets = [0, 8], sizes = [16, 4], strides = [1, 1]} : vector<16x24xf32> to vector<16x4xf32>
    %46 = arith.truncf %45 : vector<16x4xf32> to vector<16x4xbf16>
    %47 = vector.shape_cast %46 : vector<16x4xbf16> to vector<1x16x4xbf16>
    %48 = vector.extract_strided_slice %38 {offsets = [0, 16], sizes = [16, 4], strides = [1, 1]} : vector<16x24xf32> to vector<16x4xf32>
    %49 = arith.truncf %48 : vector<16x4xf32> to vector<16x4xbf16>
    %50 = vector.shape_cast %49 : vector<16x4xbf16> to vector<1x16x4xbf16>
    "tpu.trace_start"() <{level = 10 : i32, message = "bqd,bkd->bqk"}> : () -> ()
    %cst_25 = arith.constant dense<0.000000e+00> : vector<1x16x16xf32>
    %51 = tpu.matmul %44, %47, %cst_25 {dimension_numbers = #tpu.dot_dimension_numbers<[2], [2], [1], [1], [0, 0, 0, 1, 1, 1], [0], [0]>} : vector<1x16x4xbf16>, vector<1x16x4xbf16>, vector<1x16x16xf32> -> vector<1x16x16xf32>
    %cst_26 = arith.constant -1.000000e+09 : f32
    "tpu.trace_stop"() : () -> ()
    %52 = vector.shape_cast %41 : vector<16x16xi1> to vector<1x16x16xi1>
    %53 = vector.broadcast %cst_26 : f32 to vector<1x16x16xf32>
    %54 = arith.select %52, %53, %51 : vector<1x16x16xi1>, vector<1x16x16xf32>
    %cst_27 = arith.constant dense<0xFF800000> : vector<1x16xf32>
    %55 = vector.multi_reduction <maximumf>, %54, %cst_27 [2] : vector<1x16x16xf32> to vector<1x16xf32>
    %56 = vector.shape_cast %55 : vector<1x16xf32> to vector<1x16x1xf32>
    %57 = vector.broadcast %56 : vector<1x16x1xf32> to vector<1x16x16xf32>
    %58 = arith.subf %54, %57 : vector<1x16x16xf32>
    %59 = math.exp %58 : vector<1x16x16xf32>
    %cst_28 = arith.constant dense<0.000000e+00> : vector<1x16xf32>
    %60 = vector.multi_reduction <add>, %59, %cst_28 [2] : vector<1x16x16xf32> to vector<1x16xf32>
    %61 = vector.shape_cast %60 : vector<1x16xf32> to vector<1x16x1xf32>
    %62 = tpu.reciprocal %61 {approx = true} : vector<1x16x1xf32> -> vector<1x16x1xf32>
    %63 = vector.broadcast %62 : vector<1x16x1xf32> to vector<1x16x16xf32>
    %64 = arith.mulf %59, %63 : vector<1x16x16xf32>
    %65 = arith.truncf %64 : vector<1x16x16xf32> to vector<1x16x16xbf16>
    "tpu.trace_start"() <{level = 10 : i32, message = "bqk,bkd->bqd"}> : () -> ()
    %cst_29 = arith.constant dense<0.000000e+00> : vector<1x16x4xf32>
    %66 = tpu.matmul %65, %50, %cst_29 {dimension_numbers = #tpu.dot_dimension_numbers<[2], [1], [1], [2], [0, 0, 0, 1, 1, 2], [0], [0]>} : vector<1x16x16xbf16>, vector<1x16x4xbf16>, vector<1x16x4xf32> -> vector<1x16x4xf32>
    "tpu.trace_stop"() : () -> ()
    %67 = vector.shape_cast %66 : vector<1x16x4xf32> to vector<16x4xf32>
    %c0_30 = arith.constant 0 : index
    %c0_31 = arith.constant 0 : index
    %68 = vector.load %arg19[%c0_30, %c0_31] : memref<16x8xf32, #tpu.memory_space<vmem>>, vector<16x4xf32>
    tpu.vector_store %arg19[%c0_30, %c0_31], %67 {strides = array<i32>} : memref<16x8xf32, #tpu.memory_space<vmem>>, vector<16x4xf32>,
    %69 = vector.extract_strided_slice %38 {offsets = [0, 4], sizes = [16, 4], strides = [1, 1]} : vector<16x24xf32> to vector<16x4xf32>
    %70 = arith.truncf %69 : vector<16x4xf32> to vector<16x4xbf16>
    %71 = vector.shape_cast %70 : vector<16x4xbf16> to vector<1x16x4xbf16>
    %72 = vector.extract_strided_slice %38 {offsets = [0, 12], sizes = [16, 4], strides = [1, 1]} : vector<16x24xf32> to vector<16x4xf32>
    %73 = arith.truncf %72 : vector<16x4xf32> to vector<16x4xbf16>
    %74 = vector.shape_cast %73 : vector<16x4xbf16> to vector<1x16x4xbf16>
    %75 = vector.extract_strided_slice %38 {offsets = [0, 20], sizes = [16, 4], strides = [1, 1]} : vector<16x24xf32> to vector<16x4xf32>
    %76 = arith.truncf %75 : vector<16x4xf32> to vector<16x4xbf16>
    %77 = vector.shape_cast %76 : vector<16x4xbf16> to vector<1x16x4xbf16>
    "tpu.trace_start"() <{level = 10 : i32, message = "bqd,bkd->bqk"}> : () -> ()
    %cst_32 = arith.constant dense<0.000000e+00> : vector<1x16x16xf32>
    %78 = tpu.matmul %71, %74, %cst_32 {dimension_numbers = #tpu.dot_dimension_numbers<[2], [2], [1], [1], [0, 0, 0, 1, 1, 1], [0], [0]>} : vector<1x16x4xbf16>, vector<1x16x4xbf16>, vector<1x16x16xf32> -> vector<1x16x16xf32>
    %cst_33 = arith.constant -1.000000e+09 : f32
    "tpu.trace_stop"() : () -> ()
    %79 = vector.shape_cast %41 : vector<16x16xi1> to vector<1x16x16xi1>
    %80 = vector.broadcast %cst_33 : f32 to vector<1x16x16xf32>
    %81 = arith.select %79, %80, %78 : vector<1x16x16xi1>, vector<1x16x16xf32>
    %cst_34 = arith.constant dense<0xFF800000> : vector<1x16xf32>
    %82 = vector.multi_reduction <maximumf>, %81, %cst_34 [2] : vector<1x16x16xf32> to vector<1x16xf32>
    %83 = vector.shape_cast %82 : vector<1x16xf32> to vector<1x16x1xf32>
    %84 = vector.broadcast %83 : vector<1x16x1xf32> to vector<1x16x16xf32>
    %85 = arith.subf %81, %84 : vector<1x16x16xf32>
    %86 = math.exp %85 : vector<1x16x16xf32>
    %cst_35 = arith.constant dense<0.000000e+00> : vector<1x16xf32>
    %87 = vector.multi_reduction <add>, %86, %cst_35 [2] : vector<1x16x16xf32> to vector<1x16xf32>
    %88 = vector.shape_cast %87 : vector<1x16xf32> to vector<1x16x1xf32>
    %89 = tpu.reciprocal %88 {approx = true} : vector<1x16x1xf32> -> vector<1x16x1xf32>
    %90 = vector.broadcast %89 : vector<1x16x1xf32> to vector<1x16x16xf32>
    %91 = arith.mulf %86, %90 : vector<1x16x16xf32>
    %92 = arith.truncf %91 : vector<1x16x16xf32> to vector<1x16x16xbf16>
    "tpu.trace_start"() <{level = 10 : i32, message = "bqk,bkd->bqd"}> : () -> ()
    %cst_36 = arith.constant dense<0.000000e+00> : vector<1x16x4xf32>
    %93 = tpu.matmul %92, %77, %cst_36 {dimension_numbers = #tpu.dot_dimension_numbers<[2], [1], [1], [2], [0, 0, 0, 1, 1, 2], [0], [0]>} : vector<1x16x16xbf16>, vector<1x16x4xbf16>, vector<1x16x4xf32> -> vector<1x16x4xf32>
    "tpu.trace_stop"() : () -> ()
    %94 = vector.shape_cast %93 : vector<1x16x4xf32> to vector<16x4xf32>
    %c0_37 = arith.constant 0 : index
    %c4 = arith.constant 4 : index
    %95 = vector.load %arg19[%c0_37, %c4] : memref<16x8xf32, #tpu.memory_space<vmem>>, vector<16x4xf32>
    tpu.vector_store %arg19[%c0_37, %c4], %94 {strides = array<i32>} : memref<16x8xf32, #tpu.memory_space<vmem>>, vector<16x4xf32>,
    %c0_38 = arith.constant 0 : index
    %c0_39 = arith.constant 0 : index
    %96 = vector.load %arg19[%c0_38, %c0_39] : memref<16x8xf32, #tpu.memory_space<vmem>>, vector<16x8xf32>
    %97 = arith.truncf %96 : vector<16x8xf32> to vector<16x8xbf16>
    %c0_40 = arith.constant 0 : index
    %c0_41 = arith.constant 0 : index
    %98 = vector.load %arg9[%c0_40, %c0_41] : memref<8x2xbf16, #tpu.memory_space<vmem>>, vector<8x2xbf16>
    %cst_42 = arith.constant dense<0.000000e+00> : vector<16x2xf32>
    %99 = tpu.matmul %97, %98, %cst_42 {dimension_numbers = #tpu.dot_dimension_numbers<[1], [0], [0], [1], [0, 0, 1, 1], [], []>} : vector<16x8xbf16>, vector<8x2xbf16>, vector<16x2xf32> -> vector<16x2xf32>
    %100 = arith.addf %99, %13 : vector<16x2xf32>
    %cst_43 = arith.constant dense<0.000000e+00> : vector<16xf32>
    %101 = vector.multi_reduction <add>, %100, %cst_43 [1] : vector<16x2xf32> to vector<16xf32>
    %102 = vector.shape_cast %101 : vector<16xf32> to vector<16x1xf32>
    %cst_44 = arith.constant 2.000000e+00 : f32
    %103 = vector.broadcast %cst_44 : f32 to vector<16x1xf32>
    %104 = arith.divf %102, %103 : vector<16x1xf32>
    %105 = vector.broadcast %104 : vector<16x1xf32> to vector<16x2xf32>
    %106 = arith.subf %100, %105 : vector<16x2xf32>
    %107 = arith.mulf %106, %106 : vector<16x2xf32>
    %cst_45 = arith.constant dense<0.000000e+00> : vector<16xf32>
    %108 = vector.multi_reduction <add>, %107, %cst_45 [1] : vector<16x2xf32> to vector<16xf32>
    %109 = vector.shape_cast %108 : vector<16xf32> to vector<16x1xf32>
    %cst_46 = arith.constant 2.000000e+00 : f32
    %110 = vector.broadcast %cst_46 : f32 to vector<16x1xf32>
    %111 = arith.divf %109, %110 : vector<16x1xf32>
    %cst_47 = arith.constant 9.99999997E-7 : f32
    %112 = vector.broadcast %cst_47 : f32 to vector<16x1xf32>
    %113 = arith.addf %111, %112 : vector<16x1xf32>
    %114 = math.rsqrt %113 : vector<16x1xf32>
    %115 = vector.broadcast %114 : vector<16x1xf32> to vector<16x2xf32>
    %116 = arith.mulf %106, %115 : vector<16x2xf32>
    %c0_48 = arith.constant 0 : index
    %c0_49 = arith.constant 0 : index
    %117 = vector.load %arg10[%c0_48, %c0_49] : memref<1x2xf32, #tpu.memory_space<vmem>>, vector<1x2xf32>
    %118 = vector.broadcast %117 : vector<1x2xf32> to vector<16x2xf32>
    %119 = arith.mulf %116, %118 : vector<16x2xf32>
    %c0_50 = arith.constant 0 : index
    %c0_51 = arith.constant 0 : index
    %120 = vector.load %arg11[%c0_50, %c0_51] : memref<1x2xf32, #tpu.memory_space<vmem>>, vector<1x2xf32>
    %121 = vector.broadcast %120 : vector<1x2xf32> to vector<16x2xf32>
    %122 = arith.addf %119, %121 : vector<16x2xf32>
    %123 = arith.truncf %122 : vector<16x2xf32> to vector<16x2xbf16>
    %c0_52 = arith.constant 0 : index
    %c0_53 = arith.constant 0 : index
    %124 = vector.load %arg12[%c0_52, %c0_53] : memref<2x16xbf16, #tpu.memory_space<vmem>>, vector<2x16xbf16>
    %cst_54 = arith.constant dense<0.000000e+00> : vector<16x16xf32>
    %125 = tpu.matmul %123, %124, %cst_54 {dimension_numbers = #tpu.dot_dimension_numbers<[1], [0], [0], [1], [0, 0, 1, 1], [], []>} : vector<16x2xbf16>, vector<2x16xbf16>, vector<16x16xf32> -> vector<16x16xf32>
    %c0_55 = arith.constant 0 : index
    %c0_56 = arith.constant 0 : index
    %126 = vector.load %arg13[%c0_55, %c0_56] : memref<1x16xf32, #tpu.memory_space<vmem>>, vector<1x16xf32>
    %127 = vector.broadcast %126 : vector<1x16xf32> to vector<16x16xf32>
    %128 = arith.addf %125, %127 : vector<16x16xf32>
    %cst_57 = arith.constant 0.000000e+00 : f32
    %129 = vector.broadcast %cst_57 : f32 to vector<16x16xf32>
    %130 = arith.maximumf %128, %129 : vector<16x16xf32>
    %131 = arith.truncf %130 : vector<16x16xf32> to vector<16x16xbf16>
    %c0_58 = arith.constant 0 : index
    %c0_59 = arith.constant 0 : index
    %132 = vector.load %arg14[%c0_58, %c0_59] : memref<16x2xbf16, #tpu.memory_space<vmem>>, vector<16x2xbf16>
    %cst_60 = arith.constant dense<0.000000e+00> : vector<16x2xf32>
    %133 = tpu.matmul %131, %132, %cst_60 {dimension_numbers = #tpu.dot_dimension_numbers<[1], [0], [0], [1], [0, 0, 1, 1], [], []>} : vector<16x16xbf16>, vector<16x2xbf16>, vector<16x2xf32> -> vector<16x2xf32>
    %c0_61 = arith.constant 0 : index
    %c0_62 = arith.constant 0 : index
    %134 = vector.load %arg15[%c0_61, %c0_62] : memref<1x2xf32, #tpu.memory_space<vmem>>, vector<1x2xf32>
    %135 = vector.broadcast %134 : vector<1x2xf32> to vector<16x2xf32>
    %136 = arith.addf %133, %135 : vector<16x2xf32>
    %137 = arith.addf %136, %100 : vector<16x2xf32>
    %138 = arith.truncf %137 : vector<16x2xf32> to vector<16x2xbf16>
    %c0_63 = arith.constant 0 : index
    %c0_64 = arith.constant 0 : index
    %139 = vector.load %arg16[%c0_63, %c0_64] : memref<2x128xbf16, #tpu.memory_space<vmem>>, vector<2x128xbf16>
    %cst_65 = arith.constant dense<0.000000e+00> : vector<16x128xf32>
    %140 = tpu.matmul %138, %139, %cst_65 {dimension_numbers = #tpu.dot_dimension_numbers<[1], [0], [0], [1], [0, 0, 1, 1], [], []>} : vector<16x2xbf16>, vector<2x128xbf16>, vector<16x128xf32> -> vector<16x128xf32>
    %c0_66 = arith.constant 0 : index
    %c0_67 = arith.constant 0 : index
    %141 = vector.load %arg17[%c0_66, %c0_67] : memref<1x128xf32, #tpu.memory_space<vmem>>, vector<1x128xf32>
    %142 = vector.broadcast %141 : vector<1x128xf32> to vector<16x128xf32>
    %143 = arith.addf %140, %142 : vector<16x128xf32>
    %144 = vector.shape_cast %143 : vector<16x128xf32> to vector<1x16x128xf32>
    %145 = arith.truncf %144 : vector<1x16x128xf32> to vector<1x16x128xbf16>
    %c0_68 = arith.constant 0 : index
    %c0_69 = arith.constant 0 : index
    %c0_70 = arith.constant 0 : index
    %146 = vector.load %arg18[%c0_68, %c0_69, %c0_70] : memref<1x16x128xbf16, #tpu.memory_space<vmem>>, vector<1x16x128xbf16>
    tpu.vector_store %arg18[%c0_68, %c0_69, %c0_70], %145 {strides = array<i32>} : memref<1x16x128xbf16, #tpu.memory_space<vmem>>, vector<1x16x128xbf16>,
    return
  }
  func.func @transform_0(%arg0: i32) -> (i32, i32, i32) {
    %c0_i32 = arith.constant 0 : i32
    %c0_i32_0 = arith.constant 0 : i32
    %c0_i32_1 = arith.constant 0 : i32
    return %arg0, %c0_i32, %c0_i32_0 : i32, i32, i32
  }
  func.func @transform_1(%arg0: i32) -> (i32, i32, i32) {
    %c0_i32 = arith.constant 0 : i32
    %c0_i32_0 = arith.constant 0 : i32
    %c0_i32_1 = arith.constant 0 : i32
    return %arg0, %c0_i32, %c0_i32_0 : i32, i32, i32
  }
  func.func @transform_2(%arg0: i32) -> (i32, i32, i32) {
    %c0_i32 = arith.constant 0 : i32
    %c0_i32_0 = arith.constant 0 : i32
    %c0_i32_1 = arith.constant 0 : i32
    return %arg0, %c0_i32, %c0_i32_0 : i32, i32, i32
  }
  func.func @transform_3(%arg0: i32) -> (i32, i32) {
    %c0_i32 = arith.constant 0 : i32
    %c0_i32_0 = arith.constant 0 : i32
    %c0_i32_1 = arith.constant 0 : i32
    return %c0_i32, %c0_i32_0 : i32, i32
  }
  func.func @transform_4(%arg0: i32) -> (i32, i32) {
    %c0_i32 = arith.constant 0 : i32
    %c0_i32_0 = arith.constant 0 : i32
    %c0_i32_1 = arith.constant 0 : i32
    return %c0_i32, %c0_i32_0 : i32, i32
  }
  func.func @transform_5(%arg0: i32) -> (i32, i32) {
    %c0_i32 = arith.constant 0 : i32
    %c0_i32_0 = arith.constant 0 : i32
    %c0_i32_1 = arith.constant 0 : i32
    return %c0_i32, %c0_i32_0 : i32, i32
  }
  func.func @transform_6(%arg0: i32) -> (i32, i32) {
    %c0_i32 = arith.constant 0 : i32
    %c0_i32_0 = arith.constant 0 : i32
    %c0_i32_1 = arith.constant 0 : i32
    return %c0_i32, %c0_i32_0 : i32, i32
  }
  func.func @transform_7(%arg0: i32) -> (i32, i32) {
    %c0_i32 = arith.constant 0 : i32
    %c0_i32_0 = arith.constant 0 : i32
    %c0_i32_1 = arith.constant 0 : i32
    return %c0_i32, %c0_i32_0 : i32, i32
  }
  func.func @transform_8(%arg0: i32) -> (i32, i32) {
    %c0_i32 = arith.constant 0 : i32
    %c0_i32_0 = arith.constant 0 : i32
    %c0_i32_1 = arith.constant 0 : i32
    return %c0_i32, %c0_i32_0 : i32, i32
  }
  func.func @transform_9(%arg0: i32) -> (i32, i32) {
    %c0_i32 = arith.constant 0 : i32
    %c0_i32_0 = arith.constant 0 : i32
    %c0_i32_1 = arith.constant 0 : i32
    return %c0_i32, %c0_i32_0 : i32, i32
  }
  func.func @transform_10(%arg0: i32) -> (i32, i32) {
    %c0_i32 = arith.constant 0 : i32
    %c0_i32_0 = arith.constant 0 : i32
    %c0_i32_1 = arith.constant 0 : i32
    return %c0_i32, %c0_i32_0 : i32, i32
  }
  func.func @transform_11(%arg0: i32) -> (i32, i32) {
    %c0_i32 = arith.constant 0 : i32
    %c0_i32_0 = arith.constant 0 : i32
    %c0_i32_1 = arith.constant 0 : i32
    return %c0_i32, %c0_i32_0 : i32, i32
  }
  func.func @transform_12(%arg0: i32) -> (i32, i32) {
    %c0_i32 = arith.constant 0 : i32
    %c0_i32_0 = arith.constant 0 : i32
    %c0_i32_1 = arith.constant 0 : i32
    return %c0_i32, %c0_i32_0 : i32, i32
  }
  func.func @transform_13(%arg0: i32) -> (i32, i32) {
    %c0_i32 = arith.constant 0 : i32
    %c0_i32_0 = arith.constant 0 : i32
    %c0_i32_1 = arith.constant 0 : i32
    return %c0_i32, %c0_i32_0 : i32, i32
  }
  func.func @transform_14(%arg0: i32) -> (i32, i32) {
    %c0_i32 = arith.constant 0 : i32
    %c0_i32_0 = arith.constant 0 : i32
    %c0_i32_1 = arith.constant 0 : i32
    return %c0_i32, %c0_i32_0 : i32, i32
  }
  func.func @transform_15(%arg0: i32) -> (i32, i32) {
    %c0_i32 = arith.constant 0 : i32
    %c0_i32_0 = arith.constant 0 : i32
    %c0_i32_1 = arith.constant 0 : i32
    return %c0_i32, %c0_i32_0 : i32, i32
  }
  func.func @transform_16(%arg0: i32) -> (i32, i32) {
    %c0_i32 = arith.constant 0 : i32
    %c0_i32_0 = arith.constant 0 : i32
    %c0_i32_1 = arith.constant 0 : i32
    return %c0_i32, %c0_i32_0 : i32, i32
  }
  func.func @transform_17(%arg0: i32) -> (i32, i32, i32) {
    %c0_i32 = arith.constant 0 : i32
    %c0_i32_0 = arith.constant 0 : i32
    %c0_i32_1 = arith.constant 0 : i32
    return %arg0, %c0_i32, %c0_i32_0 : i32, i32, i32
  }
}

module attributes {stable_mosaic.version = 11 : i64} {
  func.func @_resblock_kernel(%arg0: i32, %arg1: memref<1x16x128xbf16, #tpu.memory_space<vmem>>, %arg2: memref<1x16x128xbf16, #tpu.memory_space<vmem>>, %arg3: memref<1x16x8xbf16, #tpu.memory_space<vmem>>, %arg4: memref<1x1x4xf32, #tpu.memory_space<vmem>>, %arg5: memref<128x4xbf16, #tpu.memory_space<vmem>>, %arg6: memref<8x4xbf16, #tpu.memory_space<vmem>>, %arg7: memref<1x4xf32, #tpu.memory_space<vmem>>, %arg8: memref<1x4xf32, #tpu.memory_space<vmem>>, %arg9: memref<4x24xbf16, #tpu.memory_space<vmem>>, %arg10: memref<8x4xbf16, #tpu.memory_space<vmem>>, %arg11: memref<1x4xf32, #tpu.memory_space<vmem>>, %arg12: memref<1x4xf32, #tpu.memory_space<vmem>>, %arg13: memref<4x16xbf16, #tpu.memory_space<vmem>>, %arg14: memref<1x16xf32, #tpu.memory_space<vmem>>, %arg15: memref<16x4xbf16, #tpu.memory_space<vmem>>, %arg16: memref<1x4xf32, #tpu.memory_space<vmem>>, %arg17: memref<4x128xbf16, #tpu.memory_space<vmem>>, %arg18: memref<1x128xf32, #tpu.memory_space<vmem>>, %arg19: memref<1x16x128xbf16, #tpu.memory_space<vmem>>, %arg20: memref<16x8xf32, #tpu.memory_space<vmem>>) attributes {dimension_semantics = [#tpu.dimension_semantics<parallel>], iteration_bounds = array<i64: 2>, scalar_prefetch = 0 : i64, scratch_operands = 1 : i64, tpu.core_type = #tpu.core_type<tc>, window_params = [{transform_indices = @transform_0, window_bounds = array<i64: 1, 16, 128>}, {transform_indices = @transform_1, window_bounds = array<i64: 1, 16, 128>}, {transform_indices = @transform_2, window_bounds = array<i64: 1, 16, 8>}, {transform_indices = @transform_3, window_bounds = array<i64: 1, 1, 4>}, {pipeline_mode = #tpu.pipeline_mode<synchronous>, transform_indices = @transform_4, window_bounds = array<i64: 128, 4>}, {pipeline_mode = #tpu.pipeline_mode<synchronous>, transform_indices = @transform_5, window_bounds = array<i64: 8, 4>}, {pipeline_mode = #tpu.pipeline_mode<synchronous>, transform_indices = @transform_6, window_bounds = array<i64: 1, 4>}, {pipeline_mode = #tpu.pipeline_mode<synchronous>, transform_indices = @transform_7, window_bounds = array<i64: 1, 4>}, {pipeline_mode = #tpu.pipeline_mode<synchronous>, transform_indices = @transform_8, window_bounds = array<i64: 4, 24>}, {pipeline_mode = #tpu.pipeline_mode<synchronous>, transform_indices = @transform_9, window_bounds = array<i64: 8, 4>}, {pipeline_mode = #tpu.pipeline_mode<synchronous>, transform_indices = @transform_10, window_bounds = array<i64: 1, 4>}, {pipeline_mode = #tpu.pipeline_mode<synchronous>, transform_indices = @transform_11, window_bounds = array<i64: 1, 4>}, {pipeline_mode = #tpu.pipeline_mode<synchronous>, transform_indices = @transform_12, window_bounds = array<i64: 4, 16>}, {pipeline_mode = #tpu.pipeline_mode<synchronous>, transform_indices = @transform_13, window_bounds = array<i64: 1, 16>}, {pipeline_mode = #tpu.pipeline_mode<synchronous>, transform_indices = @transform_14, window_bounds = array<i64: 16, 4>}, {pipeline_mode = #tpu.pipeline_mode<synchronous>, transform_indices = @transform_15, window_bounds = array<i64: 1, 4>}, {pipeline_mode = #tpu.pipeline_mode<synchronous>, transform_indices = @transform_16, window_bounds = array<i64: 4, 128>}, {pipeline_mode = #tpu.pipeline_mode<synchronous>, transform_indices = @transform_17, window_bounds = array<i64: 1, 128>}, {transform_indices = @transform_18, window_bounds = array<i64: 1, 16, 128>}]} {
    %c0 = arith.constant 0 : index
    %c0_0 = arith.constant 0 : index
    %c0_1 = arith.constant 0 : index
    %0 = vector.load %arg1[%c0, %c0_0, %c0_1] : memref<1x16x128xbf16, #tpu.memory_space<vmem>>, vector<1x16x128xbf16>
    %c0_2 = arith.constant 0 : index
    %c0_3 = arith.constant 0 : index
    %c0_4 = arith.constant 0 : index
    %1 = vector.load %arg2[%c0_2, %c0_3, %c0_4] : memref<1x16x128xbf16, #tpu.memory_space<vmem>>, vector<1x16x128xbf16>
    %2 = arith.addf %0, %1 : vector<1x16x128xbf16>
    %3 = vector.shape_cast %2 : vector<1x16x128xbf16> to vector<16x128xbf16>
    %c0_5 = arith.constant 0 : index
    %c0_6 = arith.constant 0 : index
    %c0_7 = arith.constant 0 : index
    %4 = vector.load %arg3[%c0_5, %c0_6, %c0_7] : memref<1x16x8xbf16, #tpu.memory_space<vmem>>, vector<1x16x8xbf16>
    %5 = vector.shape_cast %4 : vector<1x16x8xbf16> to vector<16x8xbf16>
    %c0_8 = arith.constant 0 : index
    %c0_9 = arith.constant 0 : index
    %6 = vector.load %arg5[%c0_8, %c0_9] : memref<128x4xbf16, #tpu.memory_space<vmem>>, vector<128x4xbf16>
    %cst = arith.constant dense<0.000000e+00> : vector<16x4xf32>
    %7 = tpu.matmul %3, %6, %cst {dimension_numbers = #tpu.dot_dimension_numbers<[1], [0], [0], [1], [0, 0, 1, 1], [], []>} : vector<16x128xbf16>, vector<128x4xbf16>, vector<16x4xf32> -> vector<16x4xf32>
    %c0_10 = arith.constant 0 : index
    %c0_11 = arith.constant 0 : index
    %8 = vector.load %arg6[%c0_10, %c0_11] : memref<8x4xbf16, #tpu.memory_space<vmem>>, vector<8x4xbf16>
    %cst_12 = arith.constant dense<0.000000e+00> : vector<16x4xf32>
    %9 = tpu.matmul %5, %8, %cst_12 {dimension_numbers = #tpu.dot_dimension_numbers<[1], [0], [0], [1], [0, 0, 1, 1], [], []>} : vector<16x8xbf16>, vector<8x4xbf16>, vector<16x4xf32> -> vector<16x4xf32>
    %10 = arith.addf %7, %9 : vector<16x4xf32>
    %11 = vector.shape_cast %10 : vector<16x4xf32> to vector<1x16x4xf32>
    %c0_13 = arith.constant 0 : index
    %c0_14 = arith.constant 0 : index
    %c0_15 = arith.constant 0 : index
    %12 = vector.load %arg4[%c0_13, %c0_14, %c0_15] : memref<1x1x4xf32, #tpu.memory_space<vmem>>, vector<1x1x4xf32>
    %13 = vector.broadcast %12 : vector<1x1x4xf32> to vector<1x16x4xf32>
    %14 = arith.addf %11, %13 : vector<1x16x4xf32>
    %15 = vector.shape_cast %14 : vector<1x16x4xf32> to vector<16x4xf32>
    %cst_16 = arith.constant dense<0.000000e+00> : vector<16xf32>
    %16 = vector.multi_reduction <add>, %15, %cst_16 [1] : vector<16x4xf32> to vector<16xf32>
    %17 = vector.shape_cast %16 : vector<16xf32> to vector<16x1xf32>
    %cst_17 = arith.constant 4.000000e+00 : f32
    %18 = vector.broadcast %cst_17 : f32 to vector<16x1xf32>
    %19 = arith.divf %17, %18 : vector<16x1xf32>
    %20 = vector.broadcast %19 : vector<16x1xf32> to vector<16x4xf32>
    %21 = arith.subf %15, %20 : vector<16x4xf32>
    %22 = arith.mulf %21, %21 : vector<16x4xf32>
    %cst_18 = arith.constant dense<0.000000e+00> : vector<16xf32>
    %23 = vector.multi_reduction <add>, %22, %cst_18 [1] : vector<16x4xf32> to vector<16xf32>
    %24 = vector.shape_cast %23 : vector<16xf32> to vector<16x1xf32>
    %cst_19 = arith.constant 4.000000e+00 : f32
    %25 = vector.broadcast %cst_19 : f32 to vector<16x1xf32>
    %26 = arith.divf %24, %25 : vector<16x1xf32>
    %cst_20 = arith.constant 9.99999974E-6 : f32
    %27 = vector.broadcast %cst_20 : f32 to vector<16x1xf32>
    %28 = arith.addf %26, %27 : vector<16x1xf32>
    %29 = math.rsqrt %28 : vector<16x1xf32>
    %30 = vector.broadcast %29 : vector<16x1xf32> to vector<16x4xf32>
    %31 = arith.mulf %21, %30 : vector<16x4xf32>
    %c0_21 = arith.constant 0 : index
    %c0_22 = arith.constant 0 : index
    %32 = vector.load %arg7[%c0_21, %c0_22] : memref<1x4xf32, #tpu.memory_space<vmem>>, vector<1x4xf32>
    %33 = vector.broadcast %32 : vector<1x4xf32> to vector<16x4xf32>
    %34 = arith.mulf %31, %33 : vector<16x4xf32>
    %c0_23 = arith.constant 0 : index
    %c0_24 = arith.constant 0 : index
    %35 = vector.load %arg8[%c0_23, %c0_24] : memref<1x4xf32, #tpu.memory_space<vmem>>, vector<1x4xf32>
    %36 = vector.broadcast %35 : vector<1x4xf32> to vector<16x4xf32>
    %37 = arith.addf %34, %36 : vector<16x4xf32>
    %38 = arith.truncf %37 : vector<16x4xf32> to vector<16x4xbf16>
    %c0_25 = arith.constant 0 : index
    %c0_26 = arith.constant 0 : index
    %39 = vector.load %arg9[%c0_25, %c0_26] : memref<4x24xbf16, #tpu.memory_space<vmem>>, vector<4x24xbf16>
    %cst_27 = arith.constant dense<0.000000e+00> : vector<16x24xf32>
    %40 = tpu.matmul %38, %39, %cst_27 {dimension_numbers = #tpu.dot_dimension_numbers<[1], [0], [0], [1], [0, 0, 1, 1], [], []>} : vector<16x4xbf16>, vector<4x24xbf16>, vector<16x24xf32> -> vector<16x24xf32>
    %41 = tpu.iota {dimensions = array<i32: 0>} : vector<16x16xi32>
    %42 = tpu.iota {dimensions = array<i32: 1>} : vector<16x16xi32>
    %43 = arith.cmpi eq, %41, %42 : vector<16x16xi32>
    %44 = vector.extract_strided_slice %40 {offsets = [0, 0], sizes = [16, 4], strides = [1, 1]} : vector<16x24xf32> to vector<16x4xf32>
    %45 = arith.truncf %44 : vector<16x4xf32> to vector<16x4xbf16>
    %46 = vector.shape_cast %45 : vector<16x4xbf16> to vector<1x16x4xbf16>
    %47 = vector.extract_strided_slice %40 {offsets = [0, 8], sizes = [16, 4], strides = [1, 1]} : vector<16x24xf32> to vector<16x4xf32>
    %48 = arith.truncf %47 : vector<16x4xf32> to vector<16x4xbf16>
    %49 = vector.shape_cast %48 : vector<16x4xbf16> to vector<1x16x4xbf16>
    %50 = vector.extract_strided_slice %40 {offsets = [0, 16], sizes = [16, 4], strides = [1, 1]} : vector<16x24xf32> to vector<16x4xf32>
    %51 = arith.truncf %50 : vector<16x4xf32> to vector<16x4xbf16>
    %52 = vector.shape_cast %51 : vector<16x4xbf16> to vector<1x16x4xbf16>
    "tpu.trace_start"() <{level = 10 : i32, message = "bqd,bkd->bqk"}> : () -> ()
    %cst_28 = arith.constant dense<0.000000e+00> : vector<1x16x16xf32>
    %53 = tpu.matmul %46, %49, %cst_28 {dimension_numbers = #tpu.dot_dimension_numbers<[2], [2], [1], [1], [0, 0, 0, 1, 1, 1], [0], [0]>} : vector<1x16x4xbf16>, vector<1x16x4xbf16>, vector<1x16x16xf32> -> vector<1x16x16xf32>
    %cst_29 = arith.constant -1.000000e+09 : f32
    "tpu.trace_stop"() : () -> ()
    %54 = vector.shape_cast %43 : vector<16x16xi1> to vector<1x16x16xi1>
    %55 = vector.broadcast %cst_29 : f32 to vector<1x16x16xf32>
    %56 = arith.select %54, %55, %53 : vector<1x16x16xi1>, vector<1x16x16xf32>
    %cst_30 = arith.constant dense<0xFF800000> : vector<1x16xf32>
    %57 = vector.multi_reduction <maximumf>, %56, %cst_30 [2] : vector<1x16x16xf32> to vector<1x16xf32>
    %58 = vector.shape_cast %57 : vector<1x16xf32> to vector<1x16x1xf32>
    %59 = vector.broadcast %58 : vector<1x16x1xf32> to vector<1x16x16xf32>
    %60 = arith.subf %56, %59 : vector<1x16x16xf32>
    %61 = math.exp %60 : vector<1x16x16xf32>
    %cst_31 = arith.constant dense<0.000000e+00> : vector<1x16xf32>
    %62 = vector.multi_reduction <add>, %61, %cst_31 [2] : vector<1x16x16xf32> to vector<1x16xf32>
    %63 = vector.shape_cast %62 : vector<1x16xf32> to vector<1x16x1xf32>
    %64 = tpu.reciprocal %63 {approx = true} : vector<1x16x1xf32> -> vector<1x16x1xf32>
    %65 = vector.broadcast %64 : vector<1x16x1xf32> to vector<1x16x16xf32>
    %66 = arith.mulf %61, %65 : vector<1x16x16xf32>
    %67 = arith.truncf %66 : vector<1x16x16xf32> to vector<1x16x16xbf16>
    "tpu.trace_start"() <{level = 10 : i32, message = "bqk,bkd->bqd"}> : () -> ()
    %cst_32 = arith.constant dense<0.000000e+00> : vector<1x16x4xf32>
    %68 = tpu.matmul %67, %52, %cst_32 {dimension_numbers = #tpu.dot_dimension_numbers<[2], [1], [1], [2], [0, 0, 0, 1, 1, 2], [0], [0]>} : vector<1x16x16xbf16>, vector<1x16x4xbf16>, vector<1x16x4xf32> -> vector<1x16x4xf32>
    "tpu.trace_stop"() : () -> ()
    %69 = vector.shape_cast %68 : vector<1x16x4xf32> to vector<16x4xf32>
    %c0_33 = arith.constant 0 : index
    %c0_34 = arith.constant 0 : index
    %70 = vector.load %arg20[%c0_33, %c0_34] : memref<16x8xf32, #tpu.memory_space<vmem>>, vector<16x4xf32>
    tpu.vector_store %arg20[%c0_33, %c0_34], %69 {strides = array<i32>} : memref<16x8xf32, #tpu.memory_space<vmem>>, vector<16x4xf32>,
    %71 = vector.extract_strided_slice %40 {offsets = [0, 4], sizes = [16, 4], strides = [1, 1]} : vector<16x24xf32> to vector<16x4xf32>
    %72 = arith.truncf %71 : vector<16x4xf32> to vector<16x4xbf16>
    %73 = vector.shape_cast %72 : vector<16x4xbf16> to vector<1x16x4xbf16>
    %74 = vector.extract_strided_slice %40 {offsets = [0, 12], sizes = [16, 4], strides = [1, 1]} : vector<16x24xf32> to vector<16x4xf32>
    %75 = arith.truncf %74 : vector<16x4xf32> to vector<16x4xbf16>
    %76 = vector.shape_cast %75 : vector<16x4xbf16> to vector<1x16x4xbf16>
    %77 = vector.extract_strided_slice %40 {offsets = [0, 20], sizes = [16, 4], strides = [1, 1]} : vector<16x24xf32> to vector<16x4xf32>
    %78 = arith.truncf %77 : vector<16x4xf32> to vector<16x4xbf16>
    %79 = vector.shape_cast %78 : vector<16x4xbf16> to vector<1x16x4xbf16>
    "tpu.trace_start"() <{level = 10 : i32, message = "bqd,bkd->bqk"}> : () -> ()
    %cst_35 = arith.constant dense<0.000000e+00> : vector<1x16x16xf32>
    %80 = tpu.matmul %73, %76, %cst_35 {dimension_numbers = #tpu.dot_dimension_numbers<[2], [2], [1], [1], [0, 0, 0, 1, 1, 1], [0], [0]>} : vector<1x16x4xbf16>, vector<1x16x4xbf16>, vector<1x16x16xf32> -> vector<1x16x16xf32>
    %cst_36 = arith.constant -1.000000e+09 : f32
    "tpu.trace_stop"() : () -> ()
    %81 = vector.shape_cast %43 : vector<16x16xi1> to vector<1x16x16xi1>
    %82 = vector.broadcast %cst_36 : f32 to vector<1x16x16xf32>
    %83 = arith.select %81, %82, %80 : vector<1x16x16xi1>, vector<1x16x16xf32>
    %cst_37 = arith.constant dense<0xFF800000> : vector<1x16xf32>
    %84 = vector.multi_reduction <maximumf>, %83, %cst_37 [2] : vector<1x16x16xf32> to vector<1x16xf32>
    %85 = vector.shape_cast %84 : vector<1x16xf32> to vector<1x16x1xf32>
    %86 = vector.broadcast %85 : vector<1x16x1xf32> to vector<1x16x16xf32>
    %87 = arith.subf %83, %86 : vector<1x16x16xf32>
    %88 = math.exp %87 : vector<1x16x16xf32>
    %cst_38 = arith.constant dense<0.000000e+00> : vector<1x16xf32>
    %89 = vector.multi_reduction <add>, %88, %cst_38 [2] : vector<1x16x16xf32> to vector<1x16xf32>
    %90 = vector.shape_cast %89 : vector<1x16xf32> to vector<1x16x1xf32>
    %91 = tpu.reciprocal %90 {approx = true} : vector<1x16x1xf32> -> vector<1x16x1xf32>
    %92 = vector.broadcast %91 : vector<1x16x1xf32> to vector<1x16x16xf32>
    %93 = arith.mulf %88, %92 : vector<1x16x16xf32>
    %94 = arith.truncf %93 : vector<1x16x16xf32> to vector<1x16x16xbf16>
    "tpu.trace_start"() <{level = 10 : i32, message = "bqk,bkd->bqd"}> : () -> ()
    %cst_39 = arith.constant dense<0.000000e+00> : vector<1x16x4xf32>
    %95 = tpu.matmul %94, %79, %cst_39 {dimension_numbers = #tpu.dot_dimension_numbers<[2], [1], [1], [2], [0, 0, 0, 1, 1, 2], [0], [0]>} : vector<1x16x16xbf16>, vector<1x16x4xbf16>, vector<1x16x4xf32> -> vector<1x16x4xf32>
    "tpu.trace_stop"() : () -> ()
    %96 = vector.shape_cast %95 : vector<1x16x4xf32> to vector<16x4xf32>
    %c0_40 = arith.constant 0 : index
    %c4 = arith.constant 4 : index
    %97 = vector.load %arg20[%c0_40, %c4] : memref<16x8xf32, #tpu.memory_space<vmem>>, vector<16x4xf32>
    tpu.vector_store %arg20[%c0_40, %c4], %96 {strides = array<i32>} : memref<16x8xf32, #tpu.memory_space<vmem>>, vector<16x4xf32>,
    %c0_41 = arith.constant 0 : index
    %c0_42 = arith.constant 0 : index
    %98 = vector.load %arg20[%c0_41, %c0_42] : memref<16x8xf32, #tpu.memory_space<vmem>>, vector<16x8xf32>
    %99 = arith.truncf %98 : vector<16x8xf32> to vector<16x8xbf16>
    %c0_43 = arith.constant 0 : index
    %c0_44 = arith.constant 0 : index
    %100 = vector.load %arg10[%c0_43, %c0_44] : memref<8x4xbf16, #tpu.memory_space<vmem>>, vector<8x4xbf16>
    %cst_45 = arith.constant dense<0.000000e+00> : vector<16x4xf32>
    %101 = tpu.matmul %99, %100, %cst_45 {dimension_numbers = #tpu.dot_dimension_numbers<[1], [0], [0], [1], [0, 0, 1, 1], [], []>} : vector<16x8xbf16>, vector<8x4xbf16>, vector<16x4xf32> -> vector<16x4xf32>
    %102 = arith.addf %101, %15 : vector<16x4xf32>
    %cst_46 = arith.constant dense<0.000000e+00> : vector<16xf32>
    %103 = vector.multi_reduction <add>, %102, %cst_46 [1] : vector<16x4xf32> to vector<16xf32>
    %104 = vector.shape_cast %103 : vector<16xf32> to vector<16x1xf32>
    %cst_47 = arith.constant 4.000000e+00 : f32
    %105 = vector.broadcast %cst_47 : f32 to vector<16x1xf32>
    %106 = arith.divf %104, %105 : vector<16x1xf32>
    %107 = vector.broadcast %106 : vector<16x1xf32> to vector<16x4xf32>
    %108 = arith.subf %102, %107 : vector<16x4xf32>
    %109 = arith.mulf %108, %108 : vector<16x4xf32>
    %cst_48 = arith.constant dense<0.000000e+00> : vector<16xf32>
    %110 = vector.multi_reduction <add>, %109, %cst_48 [1] : vector<16x4xf32> to vector<16xf32>
    %111 = vector.shape_cast %110 : vector<16xf32> to vector<16x1xf32>
    %cst_49 = arith.constant 4.000000e+00 : f32
    %112 = vector.broadcast %cst_49 : f32 to vector<16x1xf32>
    %113 = arith.divf %111, %112 : vector<16x1xf32>
    %cst_50 = arith.constant 9.99999997E-7 : f32
    %114 = vector.broadcast %cst_50 : f32 to vector<16x1xf32>
    %115 = arith.addf %113, %114 : vector<16x1xf32>
    %116 = math.rsqrt %115 : vector<16x1xf32>
    %117 = vector.broadcast %116 : vector<16x1xf32> to vector<16x4xf32>
    %118 = arith.mulf %108, %117 : vector<16x4xf32>
    %c0_51 = arith.constant 0 : index
    %c0_52 = arith.constant 0 : index
    %119 = vector.load %arg11[%c0_51, %c0_52] : memref<1x4xf32, #tpu.memory_space<vmem>>, vector<1x4xf32>
    %120 = vector.broadcast %119 : vector<1x4xf32> to vector<16x4xf32>
    %121 = arith.mulf %118, %120 : vector<16x4xf32>
    %c0_53 = arith.constant 0 : index
    %c0_54 = arith.constant 0 : index
    %122 = vector.load %arg12[%c0_53, %c0_54] : memref<1x4xf32, #tpu.memory_space<vmem>>, vector<1x4xf32>
    %123 = vector.broadcast %122 : vector<1x4xf32> to vector<16x4xf32>
    %124 = arith.addf %121, %123 : vector<16x4xf32>
    %125 = arith.truncf %124 : vector<16x4xf32> to vector<16x4xbf16>
    %c0_55 = arith.constant 0 : index
    %c0_56 = arith.constant 0 : index
    %126 = vector.load %arg13[%c0_55, %c0_56] : memref<4x16xbf16, #tpu.memory_space<vmem>>, vector<4x16xbf16>
    %cst_57 = arith.constant dense<0.000000e+00> : vector<16x16xf32>
    %127 = tpu.matmul %125, %126, %cst_57 {dimension_numbers = #tpu.dot_dimension_numbers<[1], [0], [0], [1], [0, 0, 1, 1], [], []>} : vector<16x4xbf16>, vector<4x16xbf16>, vector<16x16xf32> -> vector<16x16xf32>
    %c0_58 = arith.constant 0 : index
    %c0_59 = arith.constant 0 : index
    %128 = vector.load %arg14[%c0_58, %c0_59] : memref<1x16xf32, #tpu.memory_space<vmem>>, vector<1x16xf32>
    %129 = vector.broadcast %128 : vector<1x16xf32> to vector<16x16xf32>
    %130 = arith.addf %127, %129 : vector<16x16xf32>
    %cst_60 = arith.constant 0.000000e+00 : f32
    %131 = vector.broadcast %cst_60 : f32 to vector<16x16xf32>
    %132 = arith.maximumf %130, %131 : vector<16x16xf32>
    %133 = arith.truncf %132 : vector<16x16xf32> to vector<16x16xbf16>
    %c0_61 = arith.constant 0 : index
    %c0_62 = arith.constant 0 : index
    %134 = vector.load %arg15[%c0_61, %c0_62] : memref<16x4xbf16, #tpu.memory_space<vmem>>, vector<16x4xbf16>
    %cst_63 = arith.constant dense<0.000000e+00> : vector<16x4xf32>
    %135 = tpu.matmul %133, %134, %cst_63 {dimension_numbers = #tpu.dot_dimension_numbers<[1], [0], [0], [1], [0, 0, 1, 1], [], []>} : vector<16x16xbf16>, vector<16x4xbf16>, vector<16x4xf32> -> vector<16x4xf32>
    %c0_64 = arith.constant 0 : index
    %c0_65 = arith.constant 0 : index
    %136 = vector.load %arg16[%c0_64, %c0_65] : memref<1x4xf32, #tpu.memory_space<vmem>>, vector<1x4xf32>
    %137 = vector.broadcast %136 : vector<1x4xf32> to vector<16x4xf32>
    %138 = arith.addf %135, %137 : vector<16x4xf32>
    %139 = arith.addf %138, %102 : vector<16x4xf32>
    %140 = arith.truncf %139 : vector<16x4xf32> to vector<16x4xbf16>
    %c0_66 = arith.constant 0 : index
    %c0_67 = arith.constant 0 : index
    %141 = vector.load %arg17[%c0_66, %c0_67] : memref<4x128xbf16, #tpu.memory_space<vmem>>, vector<4x128xbf16>
    %cst_68 = arith.constant dense<0.000000e+00> : vector<16x128xf32>
    %142 = tpu.matmul %140, %141, %cst_68 {dimension_numbers = #tpu.dot_dimension_numbers<[1], [0], [0], [1], [0, 0, 1, 1], [], []>} : vector<16x4xbf16>, vector<4x128xbf16>, vector<16x128xf32> -> vector<16x128xf32>
    %c0_69 = arith.constant 0 : index
    %c0_70 = arith.constant 0 : index
    %143 = vector.load %arg18[%c0_69, %c0_70] : memref<1x128xf32, #tpu.memory_space<vmem>>, vector<1x128xf32>
    %144 = vector.broadcast %143 : vector<1x128xf32> to vector<16x128xf32>
    %145 = arith.addf %142, %144 : vector<16x128xf32>
    %146 = vector.shape_cast %145 : vector<16x128xf32> to vector<1x16x128xf32>
    %147 = arith.truncf %146 : vector<1x16x128xf32> to vector<1x16x128xbf16>
    %c0_71 = arith.constant 0 : index
    %c0_72 = arith.constant 0 : index
    %c0_73 = arith.constant 0 : index
    %148 = vector.load %arg19[%c0_71, %c0_72, %c0_73] : memref<1x16x128xbf16, #tpu.memory_space<vmem>>, vector<1x16x128xbf16>
    tpu.vector_store %arg19[%c0_71, %c0_72, %c0_73], %147 {strides = array<i32>} : memref<1x16x128xbf16, #tpu.memory_space<vmem>>, vector<1x16x128xbf16>,
    return
  }
  func.func @transform_0(%arg0: i32) -> (i32, i32, i32) {
    %c0_i32 = arith.constant 0 : i32
    %c0_i32_0 = arith.constant 0 : i32
    %c0_i32_1 = arith.constant 0 : i32
    return %arg0, %c0_i32, %c0_i32_0 : i32, i32, i32
  }
  func.func @transform_1(%arg0: i32) -> (i32, i32, i32) {
    %c0_i32 = arith.constant 0 : i32
    %c0_i32_0 = arith.constant 0 : i32
    %c0_i32_1 = arith.constant 0 : i32
    return %arg0, %c0_i32, %c0_i32_0 : i32, i32, i32
  }
  func.func @transform_2(%arg0: i32) -> (i32, i32, i32) {
    %c0_i32 = arith.constant 0 : i32
    %c0_i32_0 = arith.constant 0 : i32
    %c0_i32_1 = arith.constant 0 : i32
    return %arg0, %c0_i32, %c0_i32_0 : i32, i32, i32
  }
  func.func @transform_3(%arg0: i32) -> (i32, i32, i32) {
    %c0_i32 = arith.constant 0 : i32
    %c0_i32_0 = arith.constant 0 : i32
    %c0_i32_1 = arith.constant 0 : i32
    return %arg0, %c0_i32, %c0_i32_0 : i32, i32, i32
  }
  func.func @transform_4(%arg0: i32) -> (i32, i32) {
    %c0_i32 = arith.constant 0 : i32
    %c0_i32_0 = arith.constant 0 : i32
    %c0_i32_1 = arith.constant 0 : i32
    return %c0_i32, %c0_i32_0 : i32, i32
  }
  func.func @transform_5(%arg0: i32) -> (i32, i32) {
    %c0_i32 = arith.constant 0 : i32
    %c0_i32_0 = arith.constant 0 : i32
    %c0_i32_1 = arith.constant 0 : i32
    return %c0_i32, %c0_i32_0 : i32, i32
  }
  func.func @transform_6(%arg0: i32) -> (i32, i32) {
    %c0_i32 = arith.constant 0 : i32
    %c0_i32_0 = arith.constant 0 : i32
    %c0_i32_1 = arith.constant 0 : i32
    return %c0_i32, %c0_i32_0 : i32, i32
  }
  func.func @transform_7(%arg0: i32) -> (i32, i32) {
    %c0_i32 = arith.constant 0 : i32
    %c0_i32_0 = arith.constant 0 : i32
    %c0_i32_1 = arith.constant 0 : i32
    return %c0_i32, %c0_i32_0 : i32, i32
  }
  func.func @transform_8(%arg0: i32) -> (i32, i32) {
    %c0_i32 = arith.constant 0 : i32
    %c0_i32_0 = arith.constant 0 : i32
    %c0_i32_1 = arith.constant 0 : i32
    return %c0_i32, %c0_i32_0 : i32, i32
  }
  func.func @transform_9(%arg0: i32) -> (i32, i32) {
    %c0_i32 = arith.constant 0 : i32
    %c0_i32_0 = arith.constant 0 : i32
    %c0_i32_1 = arith.constant 0 : i32
    return %c0_i32, %c0_i32_0 : i32, i32
  }
  func.func @transform_10(%arg0: i32) -> (i32, i32) {
    %c0_i32 = arith.constant 0 : i32
    %c0_i32_0 = arith.constant 0 : i32
    %c0_i32_1 = arith.constant 0 : i32
    return %c0_i32, %c0_i32_0 : i32, i32
  }
  func.func @transform_11(%arg0: i32) -> (i32, i32) {
    %c0_i32 = arith.constant 0 : i32
    %c0_i32_0 = arith.constant 0 : i32
    %c0_i32_1 = arith.constant 0 : i32
    return %c0_i32, %c0_i32_0 : i32, i32
  }
  func.func @transform_12(%arg0: i32) -> (i32, i32) {
    %c0_i32 = arith.constant 0 : i32
    %c0_i32_0 = arith.constant 0 : i32
    %c0_i32_1 = arith.constant 0 : i32
    return %c0_i32, %c0_i32_0 : i32, i32
  }
  func.func @transform_13(%arg0: i32) -> (i32, i32) {
    %c0_i32 = arith.constant 0 : i32
    %c0_i32_0 = arith.constant 0 : i32
    %c0_i32_1 = arith.constant 0 : i32
    return %c0_i32, %c0_i32_0 : i32, i32
  }
  func.func @transform_14(%arg0: i32) -> (i32, i32) {
    %c0_i32 = arith.constant 0 : i32
    %c0_i32_0 = arith.constant 0 : i32
    %c0_i32_1 = arith.constant 0 : i32
    return %c0_i32, %c0_i32_0 : i32, i32
  }
  func.func @transform_15(%arg0: i32) -> (i32, i32) {
    %c0_i32 = arith.constant 0 : i32
    %c0_i32_0 = arith.constant 0 : i32
    %c0_i32_1 = arith.constant 0 : i32
    return %c0_i32, %c0_i32_0 : i32, i32
  }
  func.func @transform_16(%arg0: i32) -> (i32, i32) {
    %c0_i32 = arith.constant 0 : i32
    %c0_i32_0 = arith.constant 0 : i32
    %c0_i32_1 = arith.constant 0 : i32
    return %c0_i32, %c0_i32_0 : i32, i32
  }
  func.func @transform_17(%arg0: i32) -> (i32, i32) {
    %c0_i32 = arith.constant 0 : i32
    %c0_i32_0 = arith.constant 0 : i32
    %c0_i32_1 = arith.constant 0 : i32
    return %c0_i32, %c0_i32_0 : i32, i32
  }
  func.func @transform_18(%arg0: i32) -> (i32, i32, i32) {
    %c0_i32 = arith.constant 0 : i32
    %c0_i32_0 = arith.constant 0 : i32
    %c0_i32_1 = arith.constant 0 : i32
    return %arg0, %c0_i32, %c0_i32_0 : i32, i32, i32
  }
}

</mosaic_0001>

<llo_original>
// kernel: encoder_decoder_forward.4
$region0: #{encoder_decoder_forward.4}
  #allocation0 [shape = 'u32[]', space=smem, size = 0x4, offset = 0x4, fixed_abs, tag = 'smem constant byte address 0x4 - core index']
  #allocation1 [shape = 'u32[72,128]{1,0:T(1,128)}', space=vmem, size = 0x9000, scoped, tag = 'internal scratch']
  #allocation2 [shape = 'f32[16,8]{1,0:T(8,128)}', space=vmem, size = 0x2000, scoped, tag = 'scratch operand']
  %s0 = inlined_call_operand.vmem [shape: bf16[2,16,8], index: 0, kind: input, shape index: {}]
  %s1 = inlined_call_operand.vmem [shape: bf16[2,16,8], index: 1, kind: input, shape index: {}]
  %s2 = inlined_call_operand.vmem [shape: f32[2,1,8], index: 2, kind: input, shape index: {}]
  %s3 = inlined_call_operand.vmem [shape: bf16[8,8], index: 3, kind: input, shape index: {}]
  %s4 = inlined_call_operand.vmem [shape: bf16[8,8], index: 4, kind: input, shape index: {}]
  %s5 = inlined_call_operand.vmem [shape: f32[1,8], index: 5, kind: input, shape index: {}]
  %s6 = inlined_call_operand.vmem [shape: f32[1,8], index: 6, kind: input, shape index: {}]
  %s7 = inlined_call_operand.vmem [shape: bf16[8,24], index: 7, kind: input, shape index: {}]
  %s8 = inlined_call_operand.vmem [shape: bf16[8,8], index: 8, kind: input, shape index: {}]
  %s9 = inlined_call_operand.vmem [shape: f32[1,8], index: 9, kind: input, shape index: {}]
  %s10 = inlined_call_operand.vmem [shape: f32[1,8], index: 10, kind: input, shape index: {}]
  %s11 = inlined_call_operand.vmem [shape: bf16[8,16], index: 11, kind: input, shape index: {}]
  %s12 = inlined_call_operand.vmem [shape: f32[1,16], index: 12, kind: input, shape index: {}]
  %s13 = inlined_call_operand.vmem [shape: bf16[16,8], index: 13, kind: input, shape index: {}]
  %s14 = inlined_call_operand.vmem [shape: f32[1,8], index: 14, kind: input, shape index: {}]
  %s15 = inlined_call_operand.vmem [shape: bf16[8,128], index: 15, kind: input, shape index: {}]
  %s16 = inlined_call_operand.vmem [shape: f32[1,128], index: 16, kind: input, shape index: {}]
  %s17 = inlined_call_operand.vmem [shape: bf16[2,16,128], index: 17, kind: output, shape index: {}]
  %s18 = sld [smem:[#allocation0]]
  $region101: #{encoder_decoder_forward.4} parent=0
    _
  %s20 = ssub.s32 1, %s18
  %s21 = scalar_select 0, %s20, %s18
  loop: start=0, step=1, limit=4
  $region2: #{encoder_decoder_forward.4} parent=0 // loop_pre_header
    _
  $region3: #{encoder_decoder_forward.4} parent=0 // loop_header
    %s23 = sphi 0, %s27
    %p24 = scmp.ge.s32.totalorder %s23, 4
    %s33 = sphi 0, %s35
    %s36 = sphi 0, %s33
    %s37 = sphi 0, %s36
    %s53 = sphi 0, %s37
    %s59 = sphi 0, %s61
    %s62 = sphi 0, %s59
    %s63 = sphi 0, %s62
    %s79 = sphi 0, %s63
    %s85 = sphi 0, %s87
    %s88 = sphi 0, %s85
    %s89 = sphi 0, %s88
    %s105 = sphi 0, %s89
    %s109 = sphi 0, %s109
    %s111 = sphi 0, %s109
    %s112 = sphi 0, %s111
    %s126 = sphi 0, %s112
    %s130 = sphi 0, %s130
    %s132 = sphi 0, %s130
    %s133 = sphi 0, %s132
    %s147 = sphi 0, %s133
    %s151 = sphi 0, %s151
    %s153 = sphi 0, %s151
    %s154 = sphi 0, %s153
    %s168 = sphi 0, %s154
    %s172 = sphi 0, %s172
    %s174 = sphi 0, %s172
    %s175 = sphi 0, %s174
    %s189 = sphi 0, %s175
    %s193 = sphi 0, %s193
    %s195 = sphi 0, %s193
    %s196 = sphi 0, %s195
    %s210 = sphi 0, %s196
    %s214 = sphi 0, %s214
    %s216 = sphi 0, %s214
    %s217 = sphi 0, %s216
    %s231 = sphi 0, %s217
    %s235 = sphi 0, %s235
    %s237 = sphi 0, %s235
    %s238 = sphi 0, %s237
    %s252 = sphi 0, %s238
    %s256 = sphi 0, %s256
    %s258 = sphi 0, %s256
    %s259 = sphi 0, %s258
    %s273 = sphi 0, %s259
    %s277 = sphi 0, %s277
    %s279 = sphi 0, %s277
    %s280 = sphi 0, %s279
    %s294 = sphi 0, %s280
    %s298 = sphi 0, %s298
    %s300 = sphi 0, %s298
    %s301 = sphi 0, %s300
    %s315 = sphi 0, %s301
    %s319 = sphi 0, %s319
    %s321 = sphi 0, %s319
    %s322 = sphi 0, %s321
    %s336 = sphi 0, %s322
    %s340 = sphi 0, %s340
    %s342 = sphi 0, %s340
    %s343 = sphi 0, %s342
    %s357 = sphi 0, %s343
    %s361 = sphi 0, %s361
    %s363 = sphi 0, %s361
    %s364 = sphi 0, %s363
    %s378 = sphi 0, %s364
    %s382 = sphi 0, %s382
    %s384 = sphi 0, %s382
    %s385 = sphi 0, %s384
    %s399 = sphi 0, %s385
    %s405 = sphi 0, %s407
    %s408 = sphi 0, %s405
    %s409 = sphi 0, %s408
    %s425 = sphi 0, %s409
  $region4: #{encoder_decoder_forward.4} parent=0 // loop_header_branch
    %26 = sbr.rel (%p24) target = $region8
  $region5: #{encoder_decoder_forward.4} parent=0 // loop_body
    %s28 = ssub.s32 %s23, 1
    %s29 = ssub.s32 %s23, 2
    %s30 = sadd.s32 %s23, 1
    %s31 = ssub.s32 %s23, %s30
    %p32 = scmp.eq.s32.totalorder %s31, 0
    %s34 = sadd.s32 %s33, 1
    %s35 = scalar_select %p32, %s33, %s34
    %p38 = pneg %p32
    %p39 = scmp.eq.s32.totalorder %s23, 1
    %p40 = por %p38, %p39
    %p41 = scmp.ne.s32.totalorder %s33, %s36
    %p42 = scmp.eq.s32.totalorder %s23, 0
    %p43 = por %p41, %p42
    %p44 = scmp.ne.s32.totalorder %s33, %s36
    %p45 = scmp.eq.s32.totalorder %s28, 1
    %p46 = por %p44, %p45
    %p47 = scmp.ne.s32.totalorder %s36, %s37
    %p48 = scmp.eq.s32.totalorder %s28, 0
    %p49 = por %p47, %p48
    %p50 = scmp.ne.s32.totalorder %s36, %s37
    %p51 = scmp.eq.s32.totalorder %s29, 1
    %p52 = por %p50, %p51
    %p54 = scmp.ne.s32.totalorder %s37, %s53
    %p55 = scmp.eq.s32.totalorder %s29, 0
    %p56 = por %p54, %p55
    %s57 = ssub.s32 %s23, %s30
    %p58 = scmp.eq.s32.totalorder %s57, 0
    %s60 = sadd.s32 %s59, 1
    %s61 = scalar_select %p58, %s59, %s60
    %p64 = pneg %p58
    %p65 = scmp.eq.s32.totalorder %s23, 1
    %p66 = por %p64, %p65
    %p67 = scmp.ne.s32.totalorder %s59, %s62
    %p68 = scmp.eq.s32.totalorder %s23, 0
    %p69 = por %p67, %p68
    %p70 = scmp.ne.s32.totalorder %s59, %s62
    %p71 = scmp.eq.s32.totalorder %s28, 1
    %p72 = por %p70, %p71
    %p73 = scmp.ne.s32.totalorder %s62, %s63
    %p74 = scmp.eq.s32.totalorder %s28, 0
    %p75 = por %p73, %p74
    %p76 = scmp.ne.s32.totalorder %s62, %s63
    %p77 = scmp.eq.s32.totalorder %s29, 1
    %p78 = por %p76, %p77
    %p80 = scmp.ne.s32.totalorder %s63, %s79
    %p81 = scmp.eq.s32.totalorder %s29, 0
    %p82 = por %p80, %p81
    %s83 = ssub.s32 %s23, %s30
    %p84 = scmp.eq.s32.totalorder %s83, 0
    %s86 = sadd.s32 %s85, 1
    %s87 = scalar_select %p84, %s85, %s86
    %p90 = pneg %p84
    %p91 = scmp.eq.s32.totalorder %s23, 1
    %p92 = por %p90, %p91
    %p93 = scmp.ne.s32.totalorder %s85, %s88
    %p94 = scmp.eq.s32.totalorder %s23, 0
    %p95 = por %p93, %p94
    %p96 = scmp.ne.s32.totalorder %s85, %s88
    %p97 = scmp.eq.s32.totalorder %s28, 1
    %p98 = por %p96, %p97
    %p99 = scmp.ne.s32.totalorder %s88, %s89
    %p100 = scmp.eq.s32.totalorder %s28, 0
    %p101 = por %p99, %p100
    %p102 = scmp.ne.s32.totalorder %s88, %s89
    %p103 = scmp.eq.s32.totalorder %s29, 1
    %p104 = por %p102, %p103
    %p106 = scmp.ne.s32.totalorder %s89, %s105
    %p107 = scmp.eq.s32.totalorder %s29, 0
    %p108 = por %p106, %p107
    %s110 = sadd.s32 %s109, 1
    %p113 = scmp.eq.s32.totalorder %s23, 1
    %p114 = scmp.ne.s32.totalorder %s109, %s111
    %p115 = scmp.eq.s32.totalorder %s23, 0
    %p116 = por %p114, %p115
    %p117 = scmp.ne.s32.totalorder %s109, %s111
    %p118 = scmp.eq.s32.totalorder %s28, 1
    %p119 = por %p117, %p118
    %p120 = scmp.ne.s32.totalorder %s111, %s112
    %p121 = scmp.eq.s32.totalorder %s28, 0
    %p122 = por %p120, %p121
    %p123 = scmp.ne.s32.totalorder %s111, %s112
    %p124 = scmp.eq.s32.totalorder %s29, 1
    %p125 = por %p123, %p124
    %p127 = scmp.ne.s32.totalorder %s112, %s126
    %p128 = scmp.eq.s32.totalorder %s29, 0
    %p129 = por %p127, %p128
    %s131 = sadd.s32 %s130, 1
    %p134 = scmp.eq.s32.totalorder %s23, 1
    %p135 = scmp.ne.s32.totalorder %s130, %s132
    %p136 = scmp.eq.s32.totalorder %s23, 0
    %p137 = por %p135, %p136
    %p138 = scmp.ne.s32.totalorder %s130, %s132
    %p139 = scmp.eq.s32.totalorder %s28, 1
    %p140 = por %p138, %p139
    %p141 = scmp.ne.s32.totalorder %s132, %s133
    %p142 = scmp.eq.s32.totalorder %s28, 0
    %p143 = por %p141, %p142
    %p144 = scmp.ne.s32.totalorder %s132, %s133
    %p145 = scmp.eq.s32.totalorder %s29, 1
    %p146 = por %p144, %p145
    %p148 = scmp.ne.s32.totalorder %s133, %s147
    %p149 = scmp.eq.s32.totalorder %s29, 0
    %p150 = por %p148, %p149
    %s152 = sadd.s32 %s151, 1
    %p155 = scmp.eq.s32.totalorder %s23, 1
    %p156 = scmp.ne.s32.totalorder %s151, %s153
    %p157 = scmp.eq.s32.totalorder %s23, 0
    %p158 = por %p156, %p157
    %p159 = scmp.ne.s32.totalorder %s151, %s153
    %p160 = scmp.eq.s32.totalorder %s28, 1
    %p161 = por %p159, %p160
    %p162 = scmp.ne.s32.totalorder %s153, %s154
    %p163 = scmp.eq.s32.totalorder %s28, 0
    %p164 = por %p162, %p163
    %p165 = scmp.ne.s32.totalorder %s153, %s154
    %p166 = scmp.eq.s32.totalorder %s29, 1
    %p167 = por %p165, %p166
    %p169 = scmp.ne.s32.totalorder %s154, %s168
    %p170 = scmp.eq.s32.totalorder %s29, 0
    %p171 = por %p169, %p170
    %s173 = sadd.s32 %s172, 1
    %p176 = scmp.eq.s32.totalorder %s23, 1
    %p177 = scmp.ne.s32.totalorder %s172, %s174
    %p178 = scmp.eq.s32.totalorder %s23, 0
    %p179 = por %p177, %p178
    %p180 = scmp.ne.s32.totalorder %s172, %s174
    %p181 = scmp.eq.s32.totalorder %s28, 1
    %p182 = por %p180, %p181
    %p183 = scmp.ne.s32.totalorder %s174, %s175
    %p184 = scmp.eq.s32.totalorder %s28, 0
    %p185 = por %p183, %p184
    %p186 = scmp.ne.s32.totalorder %s174, %s175
    %p187 = scmp.eq.s32.totalorder %s29, 1
    %p188 = por %p186, %p187
    %p190 = scmp.ne.s32.totalorder %s175, %s189
    %p191 = scmp.eq.s32.totalorder %s29, 0
    %p192 = por %p190, %p191
    %s194 = sadd.s32 %s193, 1
    %p197 = scmp.eq.s32.totalorder %s23, 1
    %p198 = scmp.ne.s32.totalorder %s193, %s195
    %p199 = scmp.eq.s32.totalorder %s23, 0
    %p200 = por %p198, %p199
    %p201 = scmp.ne.s32.totalorder %s193, %s195
    %p202 = scmp.eq.s32.totalorder %s28, 1
    %p203 = por %p201, %p202
    %p204 = scmp.ne.s32.totalorder %s195, %s196
    %p205 = scmp.eq.s32.totalorder %s28, 0
    %p206 = por %p204, %p205
    %p207 = scmp.ne.s32.totalorder %s195, %s196
    %p208 = scmp.eq.s32.totalorder %s29, 1
    %p209 = por %p207, %p208
    %p211 = scmp.ne.s32.totalorder %s196, %s210
    %p212 = scmp.eq.s32.totalorder %s29, 0
    %p213 = por %p211, %p212
    %s215 = sadd.s32 %s214, 1
    %p218 = scmp.eq.s32.totalorder %s23, 1
    %p219 = scmp.ne.s32.totalorder %s214, %s216
    %p220 = scmp.eq.s32.totalorder %s23, 0
    %p221 = por %p219, %p220
    %p222 = scmp.ne.s32.totalorder %s214, %s216
    %p223 = scmp.eq.s32.totalorder %s28, 1
    %p224 = por %p222, %p223
    %p225 = scmp.ne.s32.totalorder %s216, %s217
    %p226 = scmp.eq.s32.totalorder %s28, 0
    %p227 = por %p225, %p226
    %p228 = scmp.ne.s32.totalorder %s216, %s217
    %p229 = scmp.eq.s32.totalorder %s29, 1
    %p230 = por %p228, %p229
    %p232 = scmp.ne.s32.totalorder %s217, %s231
    %p233 = scmp.eq.s32.totalorder %s29, 0
    %p234 = por %p232, %p233
    %s236 = sadd.s32 %s235, 1
    %p239 = scmp.eq.s32.totalorder %s23, 1
    %p240 = scmp.ne.s32.totalorder %s235, %s237
    %p241 = scmp.eq.s32.totalorder %s23, 0
    %p242 = por %p240, %p241
    %p243 = scmp.ne.s32.totalorder %s235, %s237
    %p244 = scmp.eq.s32.totalorder %s28, 1
    %p245 = por %p243, %p244
    %p246 = scmp.ne.s32.totalorder %s237, %s238
    %p247 = scmp.eq.s32.totalorder %s28, 0
    %p248 = por %p246, %p247
    %p249 = scmp.ne.s32.totalorder %s237, %s238
    %p250 = scmp.eq.s32.totalorder %s29, 1
    %p251 = por %p249, %p250
    %p253 = scmp.ne.s32.totalorder %s238, %s252
    %p254 = scmp.eq.s32.totalorder %s29, 0
    %p255 = por %p253, %p254
    %s257 = sadd.s32 %s256, 1
    %p260 = scmp.eq.s32.totalorder %s23, 1
    %p261 = scmp.ne.s32.totalorder %s256, %s258
    %p262 = scmp.eq.s32.totalorder %s23, 0
    %p263 = por %p261, %p262
    %p264 = scmp.ne.s32.totalorder %s256, %s258
    %p265 = scmp.eq.s32.totalorder %s28, 1
    %p266 = por %p264, %p265
    %p267 = scmp.ne.s32.totalorder %s258, %s259
    %p268 = scmp.eq.s32.totalorder %s28, 0
    %p269 = por %p267, %p268
    %p270 = scmp.ne.s32.totalorder %s258, %s259
    %p271 = scmp.eq.s32.totalorder %s29, 1
    %p272 = por %p270, %p271
    %p274 = scmp.ne.s32.totalorder %s259, %s273
    %p275 = scmp.eq.s32.totalorder %s29, 0
    %p276 = por %p274, %p275
    %s278 = sadd.s32 %s277, 1
    %p281 = scmp.eq.s32.totalorder %s23, 1
    %p282 = scmp.ne.s32.totalorder %s277, %s279
    %p283 = scmp.eq.s32.totalorder %s23, 0
    %p284 = por %p282, %p283
    %p285 = scmp.ne.s32.totalorder %s277, %s279
    %p286 = scmp.eq.s32.totalorder %s28, 1
    %p287 = por %p285, %p286
    %p288 = scmp.ne.s32.totalorder %s279, %s280
    %p289 = scmp.eq.s32.totalorder %s28, 0
    %p290 = por %p288, %p289
    %p291 = scmp.ne.s32.totalorder %s279, %s280
    %p292 = scmp.eq.s32.totalorder %s29, 1
    %p293 = por %p291, %p292
    %p295 = scmp.ne.s32.totalorder %s280, %s294
    %p296 = scmp.eq.s32.totalorder %s29, 0
    %p297 = por %p295, %p296
    %s299 = sadd.s32 %s298, 1
    %p302 = scmp.eq.s32.totalorder %s23, 1
    %p303 = scmp.ne.s32.totalorder %s298, %s300
    %p304 = scmp.eq.s32.totalorder %s23, 0
    %p305 = por %p303, %p304
    %p306 = scmp.ne.s32.totalorder %s298, %s300
    %p307 = scmp.eq.s32.totalorder %s28, 1
    %p308 = por %p306, %p307
    %p309 = scmp.ne.s32.totalorder %s300, %s301
    %p310 = scmp.eq.s32.totalorder %s28, 0
    %p311 = por %p309, %p310
    %p312 = scmp.ne.s32.totalorder %s300, %s301
    %p313 = scmp.eq.s32.totalorder %s29, 1
    %p314 = por %p312, %p313
    %p316 = scmp.ne.s32.totalorder %s301, %s315
    %p317 = scmp.eq.s32.totalorder %s29, 0
    %p318 = por %p316, %p317
    %s320 = sadd.s32 %s319, 1
    %p323 = scmp.eq.s32.totalorder %s23, 1
    %p324 = scmp.ne.s32.totalorder %s319, %s321
    %p325 = scmp.eq.s32.totalorder %s23, 0
    %p326 = por %p324, %p325
    %p327 = scmp.ne.s32.totalorder %s319, %s321
    %p328 = scmp.eq.s32.totalorder %s28, 1
    %p329 = por %p327, %p328
    %p330 = scmp.ne.s32.totalorder %s321, %s322
    %p331 = scmp.eq.s32.totalorder %s28, 0
    %p332 = por %p330, %p331
    %p333 = scmp.ne.s32.totalorder %s321, %s322
    %p334 = scmp.eq.s32.totalorder %s29, 1
    %p335 = por %p333, %p334
    %p337 = scmp.ne.s32.totalorder %s322, %s336
    %p338 = scmp.eq.s32.totalorder %s29, 0
    %p339 = por %p337, %p338
    %s341 = sadd.s32 %s340, 1
    %p344 = scmp.eq.s32.totalorder %s23, 1
    %p345 = scmp.ne.s32.totalorder %s340, %s342
    %p346 = scmp.eq.s32.totalorder %s23, 0
    %p347 = por %p345, %p346
    %p348 = scmp.ne.s32.totalorder %s340, %s342
    %p349 = scmp.eq.s32.totalorder %s28, 1
    %p350 = por %p348, %p349
    %p351 = scmp.ne.s32.totalorder %s342, %s343
    %p352 = scmp.eq.s32.totalorder %s28, 0
    %p353 = por %p351, %p352
    %p354 = scmp.ne.s32.totalorder %s342, %s343
    %p355 = scmp.eq.s32.totalorder %s29, 1
    %p356 = por %p354, %p355
    %p358 = scmp.ne.s32.totalorder %s343, %s357
    %p359 = scmp.eq.s32.totalorder %s29, 0
    %p360 = por %p358, %p359
    %s362 = sadd.s32 %s361, 1
    %p365 = scmp.eq.s32.totalorder %s23, 1
    %p366 = scmp.ne.s32.totalorder %s361, %s363
    %p367 = scmp.eq.s32.totalorder %s23, 0
    %p368 = por %p366, %p367
    %p369 = scmp.ne.s32.totalorder %s361, %s363
    %p370 = scmp.eq.s32.totalorder %s28, 1
    %p371 = por %p369, %p370
    %p372 = scmp.ne.s32.totalorder %s363, %s364
    %p373 = scmp.eq.s32.totalorder %s28, 0
    %p374 = por %p372, %p373
    %p375 = scmp.ne.s32.totalorder %s363, %s364
    %p376 = scmp.eq.s32.totalorder %s29, 1
    %p377 = por %p375, %p376
    %p379 = scmp.ne.s32.totalorder %s364, %s378
    %p380 = scmp.eq.s32.totalorder %s29, 0
    %p381 = por %p379, %p380
    %s383 = sadd.s32 %s382, 1
    %p386 = scmp.eq.s32.totalorder %s23, 1
    %p387 = scmp.ne.s32.totalorder %s382, %s384
    %p388 = scmp.eq.s32.totalorder %s23, 0
    %p389 = por %p387, %p388
    %p390 = scmp.ne.s32.totalorder %s382, %s384
    %p391 = scmp.eq.s32.totalorder %s28, 1
    %p392 = por %p390, %p391
    %p393 = scmp.ne.s32.totalorder %s384, %s385
    %p394 = scmp.eq.s32.totalorder %s28, 0
    %p395 = por %p393, %p394
    %p396 = scmp.ne.s32.totalorder %s384, %s385
    %p397 = scmp.eq.s32.totalorder %s29, 1
    %p398 = por %p396, %p397
    %p400 = scmp.ne.s32.totalorder %s385, %s399
    %p401 = scmp.eq.s32.totalorder %s29, 0
    %p402 = por %p400, %p401
    %s403 = ssub.s32 %s23, %s30
    %p404 = scmp.eq.s32.totalorder %s403, 0
    %s406 = sadd.s32 %s405, 1
    %s407 = scalar_select %p404, %s405, %s406
    %p410 = pneg %p404
    %p411 = scmp.eq.s32.totalorder %s23, 1
    %p412 = por %p410, %p411
    %p413 = scmp.ne.s32.totalorder %s405, %s408
    %p414 = scmp.eq.s32.totalorder %s23, 0
    %p415 = por %p413, %p414
    %p416 = scmp.ne.s32.totalorder %s405, %s408
    %p417 = scmp.eq.s32.totalorder %s28, 1
    %p418 = por %p416, %p417
    %p419 = scmp.ne.s32.totalorder %s408, %s409
    %p420 = scmp.eq.s32.totalorder %s28, 0
    %p421 = por %p419, %p420
    %p422 = scmp.ne.s32.totalorder %s408, %s409
    %p423 = scmp.eq.s32.totalorder %s29, 1
    %p424 = por %p422, %p423
    %p426 = scmp.ne.s32.totalorder %s409, %s425
    %p427 = scmp.eq.s32.totalorder %s29, 0
    %p428 = por %p426, %p427
    %p429 = scmp.le.s32.totalorder 1, %s23
    %p430 = scmp.lt.s32.totalorder %s23, 3
    %p431 = pnand %p429, %p430
    %p432 = pneg %p431
    // Predicated region
    $region9: #{encoder_decoder_forward.4} parent=5 // pred_check
      _
    $region10: #{encoder_decoder_forward.4} parent=5 // pred_check_branch
      %434 = sbr.rel (%p431) target = $region12
    $region11: #{encoder_decoder_forward.4} parent=5 // pred_region
      %s435 = ssub.s32 %s23, 1
      // Predicated region
      $region13: #{encoder_decoder_forward.4} parent=11 // pred_check
        %p436 = pneg %p122
      $region14: #{encoder_decoder_forward.4} parent=11 // pred_check_branch
        %438 = sbr.rel (%p436) target = $region16
      $region15: #{encoder_decoder_forward.4} parent=11 // pred_region
        _
      $region16: #{encoder_decoder_forward.4} parent=11 // pred_fallthru
        _
      // Predicated region
      $region17: #{encoder_decoder_forward.4} parent=11 // pred_check
        %p439 = pneg %p143
      $region18: #{encoder_decoder_forward.4} parent=11 // pred_check_branch
        %441 = sbr.rel (%p439) target = $region20
      $region19: #{encoder_decoder_forward.4} parent=11 // pred_region
        _
      $region20: #{encoder_decoder_forward.4} parent=11 // pred_fallthru
        _
      // Predicated region
      $region21: #{encoder_decoder_forward.4} parent=11 // pred_check
        %p442 = pneg %p164
      $region22: #{encoder_decoder_forward.4} parent=11 // pred_check_branch
        %444 = sbr.rel (%p442) target = $region24
      $region23: #{encoder_decoder_forward.4} parent=11 // pred_region
        _
      $region24: #{encoder_decoder_forward.4} parent=11 // pred_fallthru
        _
      // Predicated region
      $region25: #{encoder_decoder_forward.4} parent=11 // pred_check
        %p445 = pneg %p185
      $region26: #{encoder_decoder_forward.4} parent=11 // pred_check_branch
        %447 = sbr.rel (%p445) target = $region28
      $region27: #{encoder_decoder_forward.4} parent=11 // pred_region
        _
      $region28: #{encoder_decoder_forward.4} parent=11 // pred_fallthru
        _
      // Predicated region
      $region29: #{encoder_decoder_forward.4} parent=11 // pred_check
        %p448 = pneg %p206
      $region30: #{encoder_decoder_forward.4} parent=11 // pred_check_branch
        %450 = sbr.rel (%p448) target = $region32
      $region31: #{encoder_decoder_forward.4} parent=11 // pred_region
        _
      $region32: #{encoder_decoder_forward.4} parent=11 // pred_fallthru
        _
      // Predicated region
      $region33: #{encoder_decoder_forward.4} parent=11 // pred_check
        %p451 = pneg %p227
      $region34: #{encoder_decoder_forward.4} parent=11 // pred_check_branch
        %453 = sbr.rel (%p451) target = $region36
      $region35: #{encoder_decoder_forward.4} parent=11 // pred_region
        _
      $region36: #{encoder_decoder_forward.4} parent=11 // pred_fallthru
        _
      // Predicated region
      $region37: #{encoder_decoder_forward.4} parent=11 // pred_check
        %p454 = pneg %p248
      $region38: #{encoder_decoder_forward.4} parent=11 // pred_check_branch
        %456 = sbr.rel (%p454) target = $region40
      $region39: #{encoder_decoder_forward.4} parent=11 // pred_region
        _
      $region40: #{encoder_decoder_forward.4} parent=11 // pred_fallthru
        _
      // Predicated region
      $region41: #{encoder_decoder_forward.4} parent=11 // pred_check
        %p457 = pneg %p269
      $region42: #{encoder_decoder_forward.4} parent=11 // pred_check_branch
        %459 = sbr.rel (%p457) target = $region44
      $region43: #{encoder_decoder_forward.4} parent=11 // pred_region
        _
      $region44: #{encoder_decoder_forward.4} parent=11 // pred_fallthru
        _
      // Predicated region
      $region45: #{encoder_decoder_forward.4} parent=11 // pred_check
        %p460 = pneg %p290
      $region46: #{encoder_decoder_forward.4} parent=11 // pred_check_branch
        %462 = sbr.rel (%p460) target = $region48
      $region47: #{encoder_decoder_forward.4} parent=11 // pred_region
        _
      $region48: #{encoder_decoder_forward.4} parent=11 // pred_fallthru
        _
      // Predicated region
      $region49: #{encoder_decoder_forward.4} parent=11 // pred_check
        %p463 = pneg %p311
      $region50: #{encoder_decoder_forward.4} parent=11 // pred_check_branch
        %465 = sbr.rel (%p463) target = $region52
      $region51: #{encoder_decoder_forward.4} parent=11 // pred_region
        _
      $region52: #{encoder_decoder_forward.4} parent=11 // pred_fallthru
        _
      // Predicated region
      $region53: #{encoder_decoder_forward.4} parent=11 // pred_check
        %p466 = pneg %p332
      $region54: #{encoder_decoder_forward.4} parent=11 // pred_check_branch
        %468 = sbr.rel (%p466) target = $region56
      $region55: #{encoder_decoder_forward.4} parent=11 // pred_region
        _
      $region56: #{encoder_decoder_forward.4} parent=11 // pred_fallthru
        _
      // Predicated region
      $region57: #{encoder_decoder_forward.4} parent=11 // pred_check
        %p469 = pneg %p353
      $region58: #{encoder_decoder_forward.4} parent=11 // pred_check_branch
        %471 = sbr.rel (%p469) target = $region60
      $region59: #{encoder_decoder_forward.4} parent=11 // pred_region
        _
      $region60: #{encoder_decoder_forward.4} parent=11 // pred_fallthru
        _
      // Predicated region
      $region61: #{encoder_decoder_forward.4} parent=11 // pred_check
        %p472 = pneg %p374
      $region62: #{encoder_decoder_forward.4} parent=11 // pred_check_branch
        %474 = sbr.rel (%p472) target = $region64
      $region63: #{encoder_decoder_forward.4} parent=11 // pred_region
        _
      $region64: #{encoder_decoder_forward.4} parent=11 // pred_fallthru
        _
      // Predicated region
      $region65: #{encoder_decoder_forward.4} parent=11 // pred_check
        %p475 = pneg %p395
      $region66: #{encoder_decoder_forward.4} parent=11 // pred_check_branch
        %477 = sbr.rel (%p475) target = $region68
      $region67: #{encoder_decoder_forward.4} parent=11 // pred_region
        _
      $region68: #{encoder_decoder_forward.4} parent=11 // pred_fallthru
        _
    $region12: #{encoder_decoder_forward.4} parent=5 // pred_fallthru
      _
    %p478 = scmp.lt.s32.totalorder %s23, 2
    // Predicated region
    $region69: #{encoder_decoder_forward.4} parent=5 // pred_check
      %p479 = pneg %p478
    $region70: #{encoder_decoder_forward.4} parent=5 // pred_check_branch
      %481 = sbr.rel (%p479) target = $region72
    $region71: #{encoder_decoder_forward.4} parent=5 // pred_region
      // Predicated region
      $region73: #{encoder_decoder_forward.4} parent=71 // pred_check
        %p482 = pneg %p43
      $region74: #{encoder_decoder_forward.4} parent=71 // pred_check_branch
        %484 = sbr.rel (%p482) target = $region76
      $region75: #{encoder_decoder_forward.4} parent=71 // pred_region
        %p485 = scmp.lt.s32.totalorder %s23, 1
        %s486 = scalar_select %p485, %s23, 1
        %s487 = smul.addr %s486, 2
        %s488 = smul.addr %s487, 4
        %s489 = scalar_lea.vmem %s0, %s488
      $region76: #{encoder_decoder_forward.4} parent=71 // pred_fallthru
        _
      // Predicated region
      $region77: #{encoder_decoder_forward.4} parent=71 // pred_check
        %p490 = pneg %p69
      $region78: #{encoder_decoder_forward.4} parent=71 // pred_check_branch
        %492 = sbr.rel (%p490) target = $region80
      $region79: #{encoder_decoder_forward.4} parent=71 // pred_region
        %p493 = scmp.lt.s32.totalorder %s23, 1
        %s494 = scalar_select %p493, %s23, 1
        %s495 = smul.addr %s494, 2
        %s496 = smul.addr %s495, 4
        %s497 = scalar_lea.vmem %s1, %s496
      $region80: #{encoder_decoder_forward.4} parent=71 // pred_fallthru
        _
      // Predicated region
      $region81: #{encoder_decoder_forward.4} parent=71 // pred_check
        %p498 = pneg %p95
      $region82: #{encoder_decoder_forward.4} parent=71 // pred_check_branch
        %500 = sbr.rel (%p498) target = $region84
      $region83: #{encoder_decoder_forward.4} parent=71 // pred_region
        %p501 = scmp.lt.s32.totalorder %s23, 1
        %s502 = scalar_select %p501, %s23, 1
        %s503 = scalar_lea.vmem %s2, %s502
      $region84: #{encoder_decoder_forward.4} parent=71 // pred_fallthru
        _
    $region72: #{encoder_decoder_forward.4} parent=5 // pred_fallthru
      _
    %p504 = scmp.le.s32.totalorder 1, %s23
    %p505 = scmp.lt.s32.totalorder %s23, 3
    %p506 = pnand %p504, %p505
    %p507 = pneg %p506
    // Predicated region
    $region85: #{encoder_decoder_forward.4} parent=5 // pred_check
      _
    $region86: #{encoder_decoder_forward.4} parent=5 // pred_check_branch
      %509 = sbr.rel (%p506) target = $region88
    $region87: #{encoder_decoder_forward.4} parent=5 // pred_region
      %s510 = ssub.s32 %s23, 1
      %p511 = scmp.lt.s32.totalorder %s28, 1
      %s512 = scalar_select %p511, %s28, 1
      %s513 = smul.addr %s512, 2
      %s514 = smul.addr %s513, 4
      %s515 = scalar_lea.vmem %s0, %s514
      %p516 = pneg %p49
      %p517 = pneg %p46
      %p518 = scmp.lt.s32.totalorder %s28, 1
      %s519 = scalar_select %p518, %s28, 1
      %s520 = smul.addr %s519, 2
      %s521 = smul.addr %s520, 4
      %s522 = scalar_lea.vmem %s1, %s521
      %p523 = pneg %p75
      %p524 = pneg %p72
      %p525 = scmp.lt.s32.totalorder %s28, 1
      %s526 = scalar_select %p525, %s28, 1
      %s527 = scalar_lea.vmem %s2, %s526
      %p528 = pneg %p101
      %p529 = pneg %p98
      %p530 = pneg %p122
      %p531 = pneg %p119
      %p532 = pneg %p143
      %p533 = pneg %p140
      %p534 = pneg %p164
      %p535 = pneg %p161
      %p536 = pneg %p185
      %p537 = pneg %p182
      %p538 = pneg %p206
      %p539 = pneg %p203
      %p540 = pneg %p227
      %p541 = pneg %p224
      %p542 = pneg %p248
      %p543 = pneg %p245
      %p544 = pneg %p269
      %p545 = pneg %p266
      %p546 = pneg %p290
      %p547 = pneg %p287
      %p548 = pneg %p311
      %p549 = pneg %p308
      %p550 = pneg %p332
      %p551 = pneg %p329
      %p552 = pneg %p353
      %p553 = pneg %p350
      %p554 = pneg %p374
      %p555 = pneg %p371
      %p556 = pneg %p395
      %p557 = pneg %p392
      %p558 = pneg %p421
      %p559 = pneg %p418
      %p560 = scmp.lt.s32.totalorder %s28, 1
      %s561 = scalar_select %p560, %s28, 1
      %s562 = smul.addr %s561, 2
      %s563 = smul.addr %s562, 4
      %s564 = scalar_lea.vmem %s17, %s563
      %p565 = scmp.lt.s32.totalorder %s28, 1
      %s566 = scalar_select %p565, %s28, 1
      %s567 = smul.addr %s566, 2
      %s568 = smul.addr %s567, 4
      %s569 = scalar_lea.vmem %s0, %s568
      %p570 = scmp.lt.s32.totalorder %s28, 1
      %s571 = scalar_select %p570, %s28, 1
      %s572 = smul.addr %s571, 2
      %s573 = smul.addr %s572, 4
      %s574 = scalar_lea.vmem %s1, %s573
      %p575 = scmp.lt.s32.totalorder %s28, 1
      %s576 = scalar_select %p575, %s28, 1
      %s577 = scalar_lea.vmem %s2, %s576
      %p578 = scmp.lt.s32.totalorder %s28, 1
      %s579 = scalar_select %p578, %s28, 1
      %s580 = smul.addr %s579, 2
      %s581 = smul.addr %s580, 4
      %s582 = scalar_lea.vmem %s17, %s581
      %v584 = vld [vmem:[%s569] sm:$0xf]
      %v585 = vld [vmem:[%s569 + $0x4] sm:$0xf]
      %v586 = vld [vmem:[%s574] sm:$0xf]
      %v587 = vld [vmem:[%s574 + $0x4] sm:$0xf]
      %v588 = vld [vmem:[%s3] sm:$0xf]
      %v589 = vld [vmem:[%s4] sm:$0xf]
      %v592 = vunpack.c.l.b16 %v586
      %v593 = vunpack.c.l.b16 %v587
      %v594 = vpack.c.b16 %v593, %v592
      %vm595 = vcmask 64512
      %v597 = vsel %vm595, %v594, 0
      %vm599 = vcmask 1043456
      %v601 = vsel %vm599, %v589, 0
      %603 = vmatpush.bf16.msra.mxu0 0
      %604 = vmatpush.bf16.msra.mxu0 0
      %605 = vmatpush.bf16.msra.mxu0 0
      %606 = vmatpush.bf16.msra.mxu0 0
      %607 = vmatpush.bf16.msra.mxu0 0
      %608 = vmatpush.bf16.msra.mxu0 0
      %609 = vmatpush.bf16.msra.mxu0 0
      %610 = vmatpush.bf16.msra.mxu0 %v601
      %611 = vmatmul.bf16.gmra.mxu0 %v597
      %v612 = vpop.f32.mrf.mxu0
      %v613 = vadd.f32 0.0, %v612
      %v614 = vpop.f32.mrf.mxu0
      %v615 = vadd.f32 0.0, %v614
      %616 = vdwg.mxu0
      %v619 = vunpack.c.l.b16 %v584
      %v620 = vunpack.c.l.b16 %v585
      %v621 = vpack.c.b16 %v620, %v619
      %v623 = vsel %vm595, %v621, 0
      %v626 = vsel %vm599, %v588, 0
      %628 = vmatpush.bf16.msra.mxu0 0
      %629 = vmatpush.bf16.msra.mxu0 0
      %630 = vmatpush.bf16.msra.mxu0 0
      %631 = vmatpush.bf16.msra.mxu0 0
      %632 = vmatpush.bf16.msra.mxu0 0
      %633 = vmatpush.bf16.msra.mxu0 0
      %634 = vmatpush.bf16.msra.mxu0 0
      %635 = vmatpush.bf16.msra.mxu0 %v626
      %636 = vmatmul.bf16.gmra.mxu0 %v623
      %v637 = vpop.f32.mrf.mxu0
      %v638 = vadd.f32 %v613, %v637
      %v639 = vpop.f32.mrf.mxu0
      %v640 = vadd.f32 %v615, %v639
      %641 = vdwg.mxu0
      %v642 = vld [vmem:[%s577] sm:$0x1]
      %v644 = vperm.slane %v642, 0
      %v646 = vadd.f32 %v638, %v644
      %v647 = vadd.f32 %v640, %v644
      %v648 = vsel %vm595, %v646, 0.0
      %649 = vadd.xlane.f32.xlu0 %v648
      %v650 = vpop.xlane.xlu0 %649
      %v651 = vsel %vm595, %v647, 0.0
      %652 = vadd.xlane.f32.xlu0 %v651
      %v653 = vpop.xlane.xlu0 %652
      %v654 = vrcp.pop 8.0
      %v655 = vmul.f32 8.0, %v654
      %v656 = vsub.f32 1.0, %v655
      %v657 = vmul.f32 %v654, %v656
      %v658 = vadd.f32 %v654, %v657
      %vm659 = vweird.f32 %v654
      %v660 = vsel %vm659, %v654, %v658
      %v661 = vmul.f32 %v650, %v660
      %v662 = vmul.f32 %v653, %v660
      %v663 = vsub.f32 %v646, %v661
      %v664 = vsub.f32 %v647, %v662
      %v665 = vmul.f32 %v663, %v663
      %v666 = vmul.f32 %v664, %v664
      %v667 = vsel %vm595, %v665, 0.0
      %668 = vadd.xlane.f32.xlu0 %v667
      %v669 = vpop.xlane.xlu0 %668
      %v670 = vsel %vm595, %v666, 0.0
      %671 = vadd.xlane.f32.xlu0 %v670
      %v672 = vpop.xlane.xlu0 %671
      %v673 = vmul.f32 %v669, %v660
      %v674 = vmul.f32 %v672, %v660
      %v675 = vadd.f32 %v673, 1e-05
      %v676 = vadd.f32 %v674, 1e-05
      %v677 = vrsqrt.pop %v675
      %v678 = vmul.f32 %v677, %v675
      %v679 = vmul.f32 %v678, %v677
      %v680 = vmul.f32 0.5, %v679
      %v681 = vsub.f32 1.5, %v680
      %v682 = vmul.f32 %v677, %v681
      %vm683 = vweird.f32 %v675
      %vm684 = vweird.f32 %v677
      %vm685 = vmor %vm683, %vm684
      %v686 = vsel %vm685, %v677, %v682
      %v687 = vrsqrt.pop %v676
      %v688 = vmul.f32 %v687, %v676
      %v689 = vmul.f32 %v688, %v687
      %v690 = vmul.f32 0.5, %v689
      %v691 = vsub.f32 1.5, %v690
      %v692 = vmul.f32 %v687, %v691
      %vm693 = vweird.f32 %v676
      %vm694 = vweird.f32 %v687
      %vm695 = vmor %vm693, %vm694
      %v696 = vsel %vm695, %v687, %v692
      %v697 = vmul.f32 %v663, %v686
      %v698 = vmul.f32 %v664, %v696
      %v699 = vld [vmem:[%s5] sm:$0x1]
      %v701 = vperm.slane %v699, 0
      %v703 = vmul.f32 %v697, %v701
      %v704 = vmul.f32 %v698, %v701
      %v705 = vld [vmem:[%s6] sm:$0x1]
      %v707 = vperm.slane %v705, 0
      %v709 = vadd.f32 %v703, %v707
      %v710 = vadd.f32 %v704, %v707
      %v711 = vpack.c.bf16 %v710, %v709
      %v712 = vld [vmem:[%s7] sm:$0xf]
      %v714 = vsel %vm595, %v711, 0
      %v717 = vsel %vm599, %v712, 0
      %719 = vmatpush.bf16.msra.mxu0 0
      %720 = vmatpush.bf16.msra.mxu0 0
      %721 = vmatpush.bf16.msra.mxu0 0
      %722 = vmatpush.bf16.msra.mxu0 0
      %723 = vmatpush.bf16.msra.mxu0 0
      %724 = vmatpush.bf16.msra.mxu0 0
      %725 = vmatpush.bf16.msra.mxu0 0
      %726 = vmatpush.bf16.msra.mxu0 %v717
      %727 = vmatmul.bf16.gmra.mxu0 %v714
      %v728 = vpop.f32.mrf.mxu0
      %v729 = vadd.f32 0.0, %v728
      %v730 = vpop.f32.mrf.mxu0
      %v731 = vadd.f32 0.0, %v730
      %732 = vdwg.mxu0
      %v733 = vlaneseq
      %v734 = vshrl.u32 %v733, 7
      %v735 = vadd.s32 %v734, 8
      %v736 = vlaneseq
      %v737 = vand.u32 %v736, 127
      %vm738 = vcmp.eq.s32.totalorder %v734, %v737
      %vm739 = vcmp.eq.s32.totalorder %v735, %v737
      %v740 = vpack.c.bf16 %v729, %v729
      %v741 = vpack.c.bf16 %v731, %v731
      %v744 = vunpack.c.l.b16 %v740
      %v745 = vunpack.c.l.b16 %v741
      %v746 = vpack.c.b16 %v745, %v744
      %747 = vrot.lane.b32.xlu0 %v746, 120
      %v748 = vpop.permute.xlu0 %747
      %vm749 = vcmask 31744
      %v751 = vsel %vm749, %v746, 0
      %v754 = vsel %vm749, %v748, 0
      %756 = vmatpush.bf16.xpose.msra.mxu0 0
      %757 = vmatpush.bf16.xpose.msra.mxu0 0
      %758 = vmatpush.bf16.xpose.msra.mxu0 0
      %759 = vmatpush.bf16.xpose.msra.mxu0 0
      %760 = vmatpush.bf16.xpose.msra.mxu0 0
      %761 = vmatpush.bf16.xpose.msra.mxu0 0
      %762 = vmatpush.bf16.xpose.msra.mxu0 0
      %763 = vmatpush.bf16.xpose.msra.mxu0 %v754
      %764 = vmatmul.bf16.gmra.mxu0 %v751
      %v765 = vpop.f32.mrf.mxu0
      %v766 = vadd.f32 0.0, %v765
      %v767 = vpop.f32.mrf.mxu0
      %v768 = vadd.f32 0.0, %v767
      %769 = vdwg.mxu0
      %v770 = vsel %vm738, -1e+09, %v766
      %v771 = vsel %vm739, -1e+09, %v768
      %vm772 = vcmask 130048
      %v773 = vsel %vm772, %v770, -inf
      %774 = vmax.xlane.f32.xlu0 %v773
      %v775 = vpop.xlane.xlu0 %774
      %v776 = vsel %vm772, %v771, -inf
      %777 = vmax.xlane.f32.xlu0 %v776
      %v778 = vpop.xlane.xlu0 %777
      %v779 = vsub.f32 %v770, %v775
      %v780 = vsub.f32 %v771, %v778
      %v781 = vmul.f32 %v779, 1.442695
      %v782 = vpow.pop %v781
      %v783 = vmul.f32 %v780, 1.442695
      %v784 = vpow.pop %v783
      %v785 = vsel %vm772, %v782, 0.0
      %786 = vadd.xlane.f32.xlu0 %v785
      %v787 = vpop.xlane.xlu0 %786
      %v788 = vsel %vm772, %v784, 0.0
      %789 = vadd.xlane.f32.xlu0 %v788
      %v790 = vpop.xlane.xlu0 %789
      %v791 = vrcp.pop %v787
      %v792 = vrcp.pop %v790
      %v793 = vmul.f32 %v782, %v791
      %v794 = vmul.f32 %v784, %v792
      %v795 = vpack.c.bf16 %v793, %v793
      %v796 = vpack.c.bf16 %v794, %v794
      %v799 = vunpack.c.l.b16 %v795
      %v800 = vunpack.c.l.b16 %v796
      %v801 = vpack.c.b16 %v800, %v799
      %802 = vrot.lane.b32.xlu0 %v746, 112
      %v803 = vpop.permute.xlu0 %802
      %v806 = vsel %vm772, %v801, 0
      %808 = vmatpush.bf16.msra.mxu0 0
      %809 = vmatpush.bf16.msra.mxu0 0
      %810 = vmatpush.bf16.msra.mxu0 0
      %811 = vmatpush.bf16.msra.mxu0 0
      %812 = vmatpush.bf16.msra.mxu0 0
      %813 = vmatpush.bf16.msra.mxu0 0
      %814 = vmatpush.bf16.msra.mxu0 0
      %815 = vmatpush.bf16.msra.mxu0 %v803
      %816 = vmatmul.bf16.gmra.mxu0 %v806
      %v817 = vpop.f32.mrf.mxu0
      %v818 = vadd.f32 0.0, %v817
      %v819 = vpop.f32.mrf.mxu0
      %v820 = vadd.f32 0.0, %v819
      %821 = vdwg.mxu0
      %822 = vst.msk [vmem:[#allocation2] sm:$0xff] %vm749, %v818
      %823 = vst.msk [vmem:[#allocation2 + $0x8] sm:$0xff] %vm749, %v820
      %824 = vrot.lane.b32.xlu0 %v746, 124
      %v825 = vpop.permute.xlu0 %824
      %826 = vrot.lane.b32.xlu0 %v746, 116
      %v827 = vpop.permute.xlu0 %826
      %v829 = vsel %vm749, %v825, 0
      %v832 = vsel %vm749, %v827, 0
      %834 = vmatpush.bf16.xpose.msra.mxu0 0
      %835 = vmatpush.bf16.xpose.msra.mxu0 0
      %836 = vmatpush.bf16.xpose.msra.mxu0 0
      %837 = vmatpush.bf16.xpose.msra.mxu0 0
      %838 = vmatpush.bf16.xpose.msra.mxu0 0
      %839 = vmatpush.bf16.xpose.msra.mxu0 0
      %840 = vmatpush.bf16.xpose.msra.mxu0 0
      %841 = vmatpush.bf16.xpose.msra.mxu0 %v832
      %842 = vmatmul.bf16.gmra.mxu0 %v829
      %v843 = vpop.f32.mrf.mxu0
      %v844 = vadd.f32 0.0, %v843
      %v845 = vpop.f32.mrf.mxu0
      %v846 = vadd.f32 0.0, %v845
      %847 = vdwg.mxu0
      %v848 = vsel %vm738, -1e+09, %v844
      %v849 = vsel %vm739, -1e+09, %v846
      %v850 = vsel %vm772, %v848, -inf
      %851 = vmax.xlane.f32.xlu0 %v850
      %v852 = vpop.xlane.xlu0 %851
      %v853 = vsel %vm772, %v849, -inf
      %854 = vmax.xlane.f32.xlu0 %v853
      %v855 = vpop.xlane.xlu0 %854
      %v856 = vsub.f32 %v848, %v852
      %v857 = vsub.f32 %v849, %v855
      %v858 = vmul.f32 %v856, 1.442695
      %v859 = vpow.pop %v858
      %v860 = vmul.f32 %v857, 1.442695
      %v861 = vpow.pop %v860
      %v862 = vsel %vm772, %v859, 0.0
      %863 = vadd.xlane.f32.xlu0 %v862
      %v864 = vpop.xlane.xlu0 %863
      %v865 = vsel %vm772, %v861, 0.0
      %866 = vadd.xlane.f32.xlu0 %v865
      %v867 = vpop.xlane.xlu0 %866
      %v868 = vrcp.pop %v864
      %v869 = vrcp.pop %v867
      %v870 = vmul.f32 %v859, %v868
      %v871 = vmul.f32 %v861, %v869
      %v872 = vpack.c.bf16 %v870, %v870
      %v873 = vpack.c.bf16 %v871, %v871
      %v876 = vunpack.c.l.b16 %v872
      %v877 = vunpack.c.l.b16 %v873
      %v878 = vpack.c.b16 %v877, %v876
      %879 = vrot.lane.b32.xlu0 %v746, 108
      %v880 = vpop.permute.xlu0 %879
      %v883 = vsel %vm772, %v878, 0
      %885 = vmatpush.bf16.msra.mxu0 0
      %886 = vmatpush.bf16.msra.mxu0 0
      %887 = vmatpush.bf16.msra.mxu0 0
      %888 = vmatpush.bf16.msra.mxu0 0
      %889 = vmatpush.bf16.msra.mxu0 0
      %890 = vmatpush.bf16.msra.mxu0 0
      %891 = vmatpush.bf16.msra.mxu0 0
      %892 = vmatpush.bf16.msra.mxu0 %v880
      %893 = vmatmul.bf16.gmra.mxu0 %v883
      %v894 = vpop.f32.mrf.mxu0
      %v895 = vadd.f32 0.0, %v894
      %v896 = vpop.f32.mrf.mxu0
      %v897 = vadd.f32 0.0, %v896
      %898 = vdwg.mxu0
      %901 = vrot.lane.b32.xlu0 %v895, 4
      %v902 = vpop.permute.xlu0 %901
      %903 = vrot.lane.b32.xlu0 %v897, 4
      %v904 = vpop.permute.xlu0 %903
      %vm907 = vcmask 64544
      %908 = vst.msk [vmem:[#allocation2] sm:$0xff] %vm907, %v902
      %909 = vst.msk [vmem:[#allocation2 + $0x8] sm:$0xff] %vm907, %v904
      %v910 = vld [vmem:[#allocation2] sm:$0xff]
      %v911 = vld [vmem:[#allocation2 + $0x8] sm:$0xff]
      %v912 = vpack.c.bf16 %v911, %v910
      %v913 = vld [vmem:[%s8] sm:$0xf]
      %v915 = vsel %vm595, %v912, 0
      %v918 = vsel %vm599, %v913, 0
      %920 = vmatpush.bf16.msra.mxu0 0
      %921 = vmatpush.bf16.msra.mxu0 0
      %922 = vmatpush.bf16.msra.mxu0 0
      %923 = vmatpush.bf16.msra.mxu0 0
      %924 = vmatpush.bf16.msra.mxu0 0
      %925 = vmatpush.bf16.msra.mxu0 0
      %926 = vmatpush.bf16.msra.mxu0 0
      %927 = vmatpush.bf16.msra.mxu0 %v918
      %928 = vmatmul.bf16.gmra.mxu0 %v915
      %v929 = vpop.f32.mrf.mxu0
      %v930 = vadd.f32 %v646, %v929
      %v931 = vpop.f32.mrf.mxu0
      %v932 = vadd.f32 %v647, %v931
      %933 = vdwg.mxu0
      %v934 = vsel %vm595, %v930, 0.0
      %935 = vadd.xlane.f32.xlu0 %v934
      %v936 = vpop.xlane.xlu0 %935
      %v937 = vsel %vm595, %v932, 0.0
      %938 = vadd.xlane.f32.xlu0 %v937
      %v939 = vpop.xlane.xlu0 %938
      %v940 = vmul.f32 %v936, %v660
      %v941 = vmul.f32 %v939, %v660
      %v942 = vsub.f32 %v930, %v940
      %v943 = vsub.f32 %v932, %v941
      %v944 = vmul.f32 %v942, %v942
      %v945 = vmul.f32 %v943, %v943
      %v946 = vsel %vm595, %v944, 0.0
      %947 = vadd.xlane.f32.xlu0 %v946
      %v948 = vpop.xlane.xlu0 %947
      %v949 = vsel %vm595, %v945, 0.0
      %950 = vadd.xlane.f32.xlu0 %v949
      %v951 = vpop.xlane.xlu0 %950
      %v952 = vmul.f32 %v948, %v660
      %v953 = vmul.f32 %v951, %v660
      %v954 = vadd.f32 %v952, 1e-06
      %v955 = vadd.f32 %v953, 1e-06
      %v956 = vrsqrt.pop %v954
      %v957 = vmul.f32 %v956, %v954
      %v958 = vmul.f32 %v957, %v956
      %v959 = vmul.f32 0.5, %v958
      %v960 = vsub.f32 1.5, %v959
      %v961 = vmul.f32 %v956, %v960
      %vm962 = vweird.f32 %v954
      %vm963 = vweird.f32 %v956
      %vm964 = vmor %vm962, %vm963
      %v965 = vsel %vm964, %v956, %v961
      %v966 = vrsqrt.pop %v955
      %v967 = vmul.f32 %v966, %v955
      %v968 = vmul.f32 %v967, %v966
      %v969 = vmul.f32 0.5, %v968
      %v970 = vsub.f32 1.5, %v969
      %v971 = vmul.f32 %v966, %v970
      %vm972 = vweird.f32 %v955
      %vm973 = vweird.f32 %v966
      %vm974 = vmor %vm972, %vm973
      %v975 = vsel %vm974, %v966, %v971
      %v976 = vmul.f32 %v942, %v965
      %v977 = vmul.f32 %v943, %v975
      %v978 = vld [vmem:[%s9] sm:$0x1]
      %v980 = vperm.slane %v978, 0
      %v982 = vmul.f32 %v976, %v980
      %v983 = vmul.f32 %v977, %v980
      %v984 = vld [vmem:[%s10] sm:$0x1]
      %v986 = vperm.slane %v984, 0
      %v988 = vadd.f32 %v982, %v986
      %v989 = vadd.f32 %v983, %v986
      %v990 = vpack.c.bf16 %v989, %v988
      %v991 = vld [vmem:[%s11] sm:$0xf]
      %v992 = vld [vmem:[%s12] sm:$0x1]
      %v994 = vperm.slane %v992, 0
      %v997 = vsel %vm595, %v990, 0
      %v1000 = vsel %vm599, %v991, 0
      %1002 = vmatpush.bf16.msra.mxu0 0
      %1003 = vmatpush.bf16.msra.mxu0 0
      %1004 = vmatpush.bf16.msra.mxu0 0
      %1005 = vmatpush.bf16.msra.mxu0 0
      %1006 = vmatpush.bf16.msra.mxu0 0
      %1007 = vmatpush.bf16.msra.mxu0 0
      %1008 = vmatpush.bf16.msra.mxu0 0
      %1009 = vmatpush.bf16.msra.mxu0 %v1000
      %1010 = vmatmul.bf16.gmra.mxu0 %v997
      %v1011 = vpop.f32.mrf.mxu0
      %v1012 = vadd.f32 %v994, %v1011
      %v1013 = vpop.f32.mrf.mxu0
      %v1014 = vadd.f32 %v994, %v1013
      %1015 = vdwg.mxu0
      %v1016 = vmax.f32 %v1012, 0.0
      %v1017 = vmax.f32 %v1014, 0.0
      %v1018 = vpack.c.bf16 %v1017, %v1016
      %v1019 = vld [vmem:[%s13] sm:$0xf]
      %v1020 = vld [vmem:[%s13 + $0x4] sm:$0xf]
      %v1021 = vld [vmem:[%s14] sm:$0x1]
      %v1023 = vperm.slane %v1021, 0
      %v1027 = vunpack.c.l.b16 %v1019
      %v1028 = vunpack.c.l.b16 %v1020
      %v1029 = vpack.c.b16 %v1028, %v1027
      %v1032 = vsel %vm772, %v1018, 0
      %1034 = vmatpush.bf16.msra.mxu0 0
      %1035 = vmatpush.bf16.msra.mxu0 0
      %1036 = vmatpush.bf16.msra.mxu0 0
      %1037 = vmatpush.bf16.msra.mxu0 0
      %1038 = vmatpush.bf16.msra.mxu0 0
      %1039 = vmatpush.bf16.msra.mxu0 0
      %1040 = vmatpush.bf16.msra.mxu0 0
      %1041 = vmatpush.bf16.msra.mxu0 %v1029
      %1042 = vmatmul.bf16.gmra.mxu0 %v1032
      %v1043 = vpop.f32.mrf.mxu0
      %v1044 = vadd.f32 %v1023, %v1043
      %v1045 = vpop.f32.mrf.mxu0
      %v1046 = vadd.f32 %v1023, %v1045
      %1047 = vdwg.mxu0
      %v1048 = vadd.f32 %v1044, %v930
      %v1049 = vadd.f32 %v1046, %v932
      %v1050 = vpack.c.bf16 %v1049, %v1048
      %v1051 = vld [vmem:[%s15] sm:$0xf]
      %v1052 = vld [vmem:[%s16] sm:$0x1]
      %v1054 = vperm.slane %v1052, 0
      %v1057 = vsel %vm595, %v1050, 0
      %v1060 = vsel %vm599, %v1051, 0
      %1062 = vmatpush.bf16.msra.mxu0 0
      %1063 = vmatpush.bf16.msra.mxu0 0
      %1064 = vmatpush.bf16.msra.mxu0 0
      %1065 = vmatpush.bf16.msra.mxu0 0
      %1066 = vmatpush.bf16.msra.mxu0 0
      %1067 = vmatpush.bf16.msra.mxu0 0
      %1068 = vmatpush.bf16.msra.mxu0 0
      %1069 = vmatpush.bf16.msra.mxu0 %v1060
      %1070 = vmatmul.bf16.gmra.mxu0 %v1057
      %v1071 = vpop.f32.mrf.mxu0
      %v1072 = vadd.f32 %v1054, %v1071
      %v1073 = vpop.f32.mrf.mxu0
      %v1074 = vadd.f32 %v1054, %v1073
      %1075 = vdwg.mxu0
      %v1076 = vpack.c.bf16 %v1072, %v1072
      %v1077 = vpack.c.bf16 %v1074, %v1074
      %1078 = vst [vmem:[%s582] sm:$0xf] %v1076
      %1079 = vst [vmem:[%s582 + $0x4] sm:$0xf] %v1077
      %p1080 = scmp.lt.s32.totalorder %s28, 1
      %s1081 = scalar_select %p1080, %s28, 1
      %s1082 = smul.addr %s1081, 2
      %s1083 = smul.addr %s1082, 4
      %s1084 = scalar_lea.vmem %s17, %s1083
      // Predicated region
      $region89: #{encoder_decoder_forward.4} parent=87 // pred_check
        %p1085 = pneg %p418
      $region90: #{encoder_decoder_forward.4} parent=87 // pred_check_branch
        %1087 = sbr.rel (%p1085) target = $region92
      $region91: #{encoder_decoder_forward.4} parent=87 // pred_region
        _
      $region92: #{encoder_decoder_forward.4} parent=87 // pred_fallthru
        _
    $region88: #{encoder_decoder_forward.4} parent=5 // pred_fallthru
      _
    %p1088 = scmp.le.s32.totalorder 2, %s23
    // Predicated region
    $region93: #{encoder_decoder_forward.4} parent=5 // pred_check
      %p1089 = pneg %p1088
    $region94: #{encoder_decoder_forward.4} parent=5 // pred_check_branch
      %1091 = sbr.rel (%p1089) target = $region96
    $region95: #{encoder_decoder_forward.4} parent=5 // pred_region
      %s1092 = ssub.s32 %s23, 2
      // Predicated region
      $region97: #{encoder_decoder_forward.4} parent=95 // pred_check
        %p1093 = pneg %p424
      $region98: #{encoder_decoder_forward.4} parent=95 // pred_check_branch
        %1095 = sbr.rel (%p1093) target = $region100
      $region99: #{encoder_decoder_forward.4} parent=95 // pred_region
        %p1096 = scmp.lt.s32.totalorder %s29, 1
        %s1097 = scalar_select %p1096, %s29, 1
        %s1098 = smul.addr %s1097, 2
        %s1099 = smul.addr %s1098, 4
        %s1100 = scalar_lea.vmem %s17, %s1099
      $region100: #{encoder_decoder_forward.4} parent=95 // pred_fallthru
        _
    $region96: #{encoder_decoder_forward.4} parent=5 // pred_fallthru
      _
  $region6: #{encoder_decoder_forward.4} parent=0 // loop_footer
    %s27 = sadd.s32 1, %s23
  $region7: #{encoder_decoder_forward.4} parent=0 // loop_footer_branch
    %22 = sbr.rel target = $region3
  $region8: #{encoder_decoder_forward.4} parent=0 // loop_exit
    _

// kernel: encoder_decoder_forward.5
$region0: #{encoder_decoder_forward.5}
  #allocation0 [shape = 'u32[]', space=smem, size = 0x4, offset = 0x4, fixed_abs, tag = 'smem constant byte address 0x4 - core index']
  #allocation1 [shape = 'u32[72,128]{1,0:T(1,128)}', space=vmem, size = 0x9000, scoped, tag = 'internal scratch']
  #allocation2 [shape = 'f32[16,8]{1,0:T(8,128)}', space=vmem, size = 0x2000, scoped, tag = 'scratch operand']
  %s0 = inlined_call_operand.vmem [shape: bf16[2,16,128], index: 0, kind: input, shape index: {}]
  %s1 = inlined_call_operand.vmem [shape: bf16[2,16,8], index: 1, kind: input, shape index: {}]
  %s2 = inlined_call_operand.vmem [shape: f32[2,1,4], index: 2, kind: input, shape index: {}]
  %s3 = inlined_call_operand.vmem [shape: bf16[128,4], index: 3, kind: input, shape index: {}]
  %s4 = inlined_call_operand.vmem [shape: bf16[8,4], index: 4, kind: input, shape index: {}]
  %s5 = inlined_call_operand.vmem [shape: f32[1,4], index: 5, kind: input, shape index: {}]
  %s6 = inlined_call_operand.vmem [shape: f32[1,4], index: 6, kind: input, shape index: {}]
  %s7 = inlined_call_operand.vmem [shape: bf16[4,24], index: 7, kind: input, shape index: {}]
  %s8 = inlined_call_operand.vmem [shape: bf16[8,4], index: 8, kind: input, shape index: {}]
  %s9 = inlined_call_operand.vmem [shape: f32[1,4], index: 9, kind: input, shape index: {}]
  %s10 = inlined_call_operand.vmem [shape: f32[1,4], index: 10, kind: input, shape index: {}]
  %s11 = inlined_call_operand.vmem [shape: bf16[4,16], index: 11, kind: input, shape index: {}]
  %s12 = inlined_call_operand.vmem [shape: f32[1,16], index: 12, kind: input, shape index: {}]
  %s13 = inlined_call_operand.vmem [shape: bf16[16,4], index: 13, kind: input, shape index: {}]
  %s14 = inlined_call_operand.vmem [shape: f32[1,4], index: 14, kind: input, shape index: {}]
  %s15 = inlined_call_operand.vmem [shape: bf16[4,128], index: 15, kind: input, shape index: {}]
  %s16 = inlined_call_operand.vmem [shape: f32[1,128], index: 16, kind: input, shape index: {}]
  %s17 = inlined_call_operand.vmem [shape: bf16[2,16,128], index: 17, kind: output, shape index: {}]
  %s18 = sld [smem:[#allocation0]]
  $region101: #{encoder_decoder_forward.5} parent=0
    _
  %s20 = ssub.s32 1, %s18
  %s21 = scalar_select 0, %s20, %s18
  loop: start=0, step=1, limit=4
  $region2: #{encoder_decoder_forward.5} parent=0 // loop_pre_header
    _
  $region3: #{encoder_decoder_forward.5} parent=0 // loop_header
    %s23 = sphi 0, %s27
    %p24 = scmp.ge.s32.totalorder %s23, 4
    %s33 = sphi 0, %s35
    %s36 = sphi 0, %s33
    %s37 = sphi 0, %s36
    %s53 = sphi 0, %s37
    %s59 = sphi 0, %s61
    %s62 = sphi 0, %s59
    %s63 = sphi 0, %s62
    %s79 = sphi 0, %s63
    %s85 = sphi 0, %s87
    %s88 = sphi 0, %s85
    %s89 = sphi 0, %s88
    %s105 = sphi 0, %s89
    %s109 = sphi 0, %s109
    %s111 = sphi 0, %s109
    %s112 = sphi 0, %s111
    %s126 = sphi 0, %s112
    %s130 = sphi 0, %s130
    %s132 = sphi 0, %s130
    %s133 = sphi 0, %s132
    %s147 = sphi 0, %s133
    %s151 = sphi 0, %s151
    %s153 = sphi 0, %s151
    %s154 = sphi 0, %s153
    %s168 = sphi 0, %s154
    %s172 = sphi 0, %s172
    %s174 = sphi 0, %s172
    %s175 = sphi 0, %s174
    %s189 = sphi 0, %s175
    %s193 = sphi 0, %s193
    %s195 = sphi 0, %s193
    %s196 = sphi 0, %s195
    %s210 = sphi 0, %s196
    %s214 = sphi 0, %s214
    %s216 = sphi 0, %s214
    %s217 = sphi 0, %s216
    %s231 = sphi 0, %s217
    %s235 = sphi 0, %s235
    %s237 = sphi 0, %s235
    %s238 = sphi 0, %s237
    %s252 = sphi 0, %s238
    %s256 = sphi 0, %s256
    %s258 = sphi 0, %s256
    %s259 = sphi 0, %s258
    %s273 = sphi 0, %s259
    %s277 = sphi 0, %s277
    %s279 = sphi 0, %s277
    %s280 = sphi 0, %s279
    %s294 = sphi 0, %s280
    %s298 = sphi 0, %s298
    %s300 = sphi 0, %s298
    %s301 = sphi 0, %s300
    %s315 = sphi 0, %s301
    %s319 = sphi 0, %s319
    %s321 = sphi 0, %s319
    %s322 = sphi 0, %s321
    %s336 = sphi 0, %s322
    %s340 = sphi 0, %s340
    %s342 = sphi 0, %s340
    %s343 = sphi 0, %s342
    %s357 = sphi 0, %s343
    %s361 = sphi 0, %s361
    %s363 = sphi 0, %s361
    %s364 = sphi 0, %s363
    %s378 = sphi 0, %s364
    %s382 = sphi 0, %s382
    %s384 = sphi 0, %s382
    %s385 = sphi 0, %s384
    %s399 = sphi 0, %s385
    %s405 = sphi 0, %s407
    %s408 = sphi 0, %s405
    %s409 = sphi 0, %s408
    %s425 = sphi 0, %s409
  $region4: #{encoder_decoder_forward.5} parent=0 // loop_header_branch
    %26 = sbr.rel (%p24) target = $region8
  $region5: #{encoder_decoder_forward.5} parent=0 // loop_body
    %s28 = ssub.s32 %s23, 1
    %s29 = ssub.s32 %s23, 2
    %s30 = sadd.s32 %s23, 1
    %s31 = ssub.s32 %s23, %s30
    %p32 = scmp.eq.s32.totalorder %s31, 0
    %s34 = sadd.s32 %s33, 1
    %s35 = scalar_select %p32, %s33, %s34
    %p38 = pneg %p32
    %p39 = scmp.eq.s32.totalorder %s23, 1
    %p40 = por %p38, %p39
    %p41 = scmp.ne.s32.totalorder %s33, %s36
    %p42 = scmp.eq.s32.totalorder %s23, 0
    %p43 = por %p41, %p42
    %p44 = scmp.ne.s32.totalorder %s33, %s36
    %p45 = scmp.eq.s32.totalorder %s28, 1
    %p46 = por %p44, %p45
    %p47 = scmp.ne.s32.totalorder %s36, %s37
    %p48 = scmp.eq.s32.totalorder %s28, 0
    %p49 = por %p47, %p48
    %p50 = scmp.ne.s32.totalorder %s36, %s37
    %p51 = scmp.eq.s32.totalorder %s29, 1
    %p52 = por %p50, %p51
    %p54 = scmp.ne.s32.totalorder %s37, %s53
    %p55 = scmp.eq.s32.totalorder %s29, 0
    %p56 = por %p54, %p55
    %s57 = ssub.s32 %s23, %s30
    %p58 = scmp.eq.s32.totalorder %s57, 0
    %s60 = sadd.s32 %s59, 1
    %s61 = scalar_select %p58, %s59, %s60
    %p64 = pneg %p58
    %p65 = scmp.eq.s32.totalorder %s23, 1
    %p66 = por %p64, %p65
    %p67 = scmp.ne.s32.totalorder %s59, %s62
    %p68 = scmp.eq.s32.totalorder %s23, 0
    %p69 = por %p67, %p68
    %p70 = scmp.ne.s32.totalorder %s59, %s62
    %p71 = scmp.eq.s32.totalorder %s28, 1
    %p72 = por %p70, %p71
    %p73 = scmp.ne.s32.totalorder %s62, %s63
    %p74 = scmp.eq.s32.totalorder %s28, 0
    %p75 = por %p73, %p74
    %p76 = scmp.ne.s32.totalorder %s62, %s63
    %p77 = scmp.eq.s32.totalorder %s29, 1
    %p78 = por %p76, %p77
    %p80 = scmp.ne.s32.totalorder %s63, %s79
    %p81 = scmp.eq.s32.totalorder %s29, 0
    %p82 = por %p80, %p81
    %s83 = ssub.s32 %s23, %s30
    %p84 = scmp.eq.s32.totalorder %s83, 0
    %s86 = sadd.s32 %s85, 1
    %s87 = scalar_select %p84, %s85, %s86
    %p90 = pneg %p84
    %p91 = scmp.eq.s32.totalorder %s23, 1
    %p92 = por %p90, %p91
    %p93 = scmp.ne.s32.totalorder %s85, %s88
    %p94 = scmp.eq.s32.totalorder %s23, 0
    %p95 = por %p93, %p94
    %p96 = scmp.ne.s32.totalorder %s85, %s88
    %p97 = scmp.eq.s32.totalorder %s28, 1
    %p98 = por %p96, %p97
    %p99 = scmp.ne.s32.totalorder %s88, %s89
    %p100 = scmp.eq.s32.totalorder %s28, 0
    %p101 = por %p99, %p100
    %p102 = scmp.ne.s32.totalorder %s88, %s89
    %p103 = scmp.eq.s32.totalorder %s29, 1
    %p104 = por %p102, %p103
    %p106 = scmp.ne.s32.totalorder %s89, %s105
    %p107 = scmp.eq.s32.totalorder %s29, 0
    %p108 = por %p106, %p107
    %s110 = sadd.s32 %s109, 1
    %p113 = scmp.eq.s32.totalorder %s23, 1
    %p114 = scmp.ne.s32.totalorder %s109, %s111
    %p115 = scmp.eq.s32.totalorder %s23, 0
    %p116 = por %p114, %p115
    %p117 = scmp.ne.s32.totalorder %s109, %s111
    %p118 = scmp.eq.s32.totalorder %s28, 1
    %p119 = por %p117, %p118
    %p120 = scmp.ne.s32.totalorder %s111, %s112
    %p121 = scmp.eq.s32.totalorder %s28, 0
    %p122 = por %p120, %p121
    %p123 = scmp.ne.s32.totalorder %s111, %s112
    %p124 = scmp.eq.s32.totalorder %s29, 1
    %p125 = por %p123, %p124
    %p127 = scmp.ne.s32.totalorder %s112, %s126
    %p128 = scmp.eq.s32.totalorder %s29, 0
    %p129 = por %p127, %p128
    %s131 = sadd.s32 %s130, 1
    %p134 = scmp.eq.s32.totalorder %s23, 1
    %p135 = scmp.ne.s32.totalorder %s130, %s132
    %p136 = scmp.eq.s32.totalorder %s23, 0
    %p137 = por %p135, %p136
    %p138 = scmp.ne.s32.totalorder %s130, %s132
    %p139 = scmp.eq.s32.totalorder %s28, 1
    %p140 = por %p138, %p139
    %p141 = scmp.ne.s32.totalorder %s132, %s133
    %p142 = scmp.eq.s32.totalorder %s28, 0
    %p143 = por %p141, %p142
    %p144 = scmp.ne.s32.totalorder %s132, %s133
    %p145 = scmp.eq.s32.totalorder %s29, 1
    %p146 = por %p144, %p145
    %p148 = scmp.ne.s32.totalorder %s133, %s147
    %p149 = scmp.eq.s32.totalorder %s29, 0
    %p150 = por %p148, %p149
    %s152 = sadd.s32 %s151, 1
    %p155 = scmp.eq.s32.totalorder %s23, 1
    %p156 = scmp.ne.s32.totalorder %s151, %s153
    %p157 = scmp.eq.s32.totalorder %s23, 0
    %p158 = por %p156, %p157
    %p159 = scmp.ne.s32.totalorder %s151, %s153
    %p160 = scmp.eq.s32.totalorder %s28, 1
    %p161 = por %p159, %p160
    %p162 = scmp.ne.s32.totalorder %s153, %s154
    %p163 = scmp.eq.s32.totalorder %s28, 0
    %p164 = por %p162, %p163
    %p165 = scmp.ne.s32.totalorder %s153, %s154
    %p166 = scmp.eq.s32.totalorder %s29, 1
    %p167 = por %p165, %p166
    %p169 = scmp.ne.s32.totalorder %s154, %s168
    %p170 = scmp.eq.s32.totalorder %s29, 0
    %p171 = por %p169, %p170
    %s173 = sadd.s32 %s172, 1
    %p176 = scmp.eq.s32.totalorder %s23, 1
    %p177 = scmp.ne.s32.totalorder %s172, %s174
    %p178 = scmp.eq.s32.totalorder %s23, 0
    %p179 = por %p177, %p178
    %p180 = scmp.ne.s32.totalorder %s172, %s174
    %p181 = scmp.eq.s32.totalorder %s28, 1
    %p182 = por %p180, %p181
    %p183 = scmp.ne.s32.totalorder %s174, %s175
    %p184 = scmp.eq.s32.totalorder %s28, 0
    %p185 = por %p183, %p184
    %p186 = scmp.ne.s32.totalorder %s174, %s175
    %p187 = scmp.eq.s32.totalorder %s29, 1
    %p188 = por %p186, %p187
    %p190 = scmp.ne.s32.totalorder %s175, %s189
    %p191 = scmp.eq.s32.totalorder %s29, 0
    %p192 = por %p190, %p191
    %s194 = sadd.s32 %s193, 1
    %p197 = scmp.eq.s32.totalorder %s23, 1
    %p198 = scmp.ne.s32.totalorder %s193, %s195
    %p199 = scmp.eq.s32.totalorder %s23, 0
    %p200 = por %p198, %p199
    %p201 = scmp.ne.s32.totalorder %s193, %s195
    %p202 = scmp.eq.s32.totalorder %s28, 1
    %p203 = por %p201, %p202
    %p204 = scmp.ne.s32.totalorder %s195, %s196
    %p205 = scmp.eq.s32.totalorder %s28, 0
    %p206 = por %p204, %p205
    %p207 = scmp.ne.s32.totalorder %s195, %s196
    %p208 = scmp.eq.s32.totalorder %s29, 1
    %p209 = por %p207, %p208
    %p211 = scmp.ne.s32.totalorder %s196, %s210
    %p212 = scmp.eq.s32.totalorder %s29, 0
    %p213 = por %p211, %p212
    %s215 = sadd.s32 %s214, 1
    %p218 = scmp.eq.s32.totalorder %s23, 1
    %p219 = scmp.ne.s32.totalorder %s214, %s216
    %p220 = scmp.eq.s32.totalorder %s23, 0
    %p221 = por %p219, %p220
    %p222 = scmp.ne.s32.totalorder %s214, %s216
    %p223 = scmp.eq.s32.totalorder %s28, 1
    %p224 = por %p222, %p223
    %p225 = scmp.ne.s32.totalorder %s216, %s217
    %p226 = scmp.eq.s32.totalorder %s28, 0
    %p227 = por %p225, %p226
    %p228 = scmp.ne.s32.totalorder %s216, %s217
    %p229 = scmp.eq.s32.totalorder %s29, 1
    %p230 = por %p228, %p229
    %p232 = scmp.ne.s32.totalorder %s217, %s231
    %p233 = scmp.eq.s32.totalorder %s29, 0
    %p234 = por %p232, %p233
    %s236 = sadd.s32 %s235, 1
    %p239 = scmp.eq.s32.totalorder %s23, 1
    %p240 = scmp.ne.s32.totalorder %s235, %s237
    %p241 = scmp.eq.s32.totalorder %s23, 0
    %p242 = por %p240, %p241
    %p243 = scmp.ne.s32.totalorder %s235, %s237
    %p244 = scmp.eq.s32.totalorder %s28, 1
    %p245 = por %p243, %p244
    %p246 = scmp.ne.s32.totalorder %s237, %s238
    %p247 = scmp.eq.s32.totalorder %s28, 0
    %p248 = por %p246, %p247
    %p249 = scmp.ne.s32.totalorder %s237, %s238
    %p250 = scmp.eq.s32.totalorder %s29, 1
    %p251 = por %p249, %p250
    %p253 = scmp.ne.s32.totalorder %s238, %s252
    %p254 = scmp.eq.s32.totalorder %s29, 0
    %p255 = por %p253, %p254
    %s257 = sadd.s32 %s256, 1
    %p260 = scmp.eq.s32.totalorder %s23, 1
    %p261 = scmp.ne.s32.totalorder %s256, %s258
    %p262 = scmp.eq.s32.totalorder %s23, 0
    %p263 = por %p261, %p262
    %p264 = scmp.ne.s32.totalorder %s256, %s258
    %p265 = scmp.eq.s32.totalorder %s28, 1
    %p266 = por %p264, %p265
    %p267 = scmp.ne.s32.totalorder %s258, %s259
    %p268 = scmp.eq.s32.totalorder %s28, 0
    %p269 = por %p267, %p268
    %p270 = scmp.ne.s32.totalorder %s258, %s259
    %p271 = scmp.eq.s32.totalorder %s29, 1
    %p272 = por %p270, %p271
    %p274 = scmp.ne.s32.totalorder %s259, %s273
    %p275 = scmp.eq.s32.totalorder %s29, 0
    %p276 = por %p274, %p275
    %s278 = sadd.s32 %s277, 1
    %p281 = scmp.eq.s32.totalorder %s23, 1
    %p282 = scmp.ne.s32.totalorder %s277, %s279
    %p283 = scmp.eq.s32.totalorder %s23, 0
    %p284 = por %p282, %p283
    %p285 = scmp.ne.s32.totalorder %s277, %s279
    %p286 = scmp.eq.s32.totalorder %s28, 1
    %p287 = por %p285, %p286
    %p288 = scmp.ne.s32.totalorder %s279, %s280
    %p289 = scmp.eq.s32.totalorder %s28, 0
    %p290 = por %p288, %p289
    %p291 = scmp.ne.s32.totalorder %s279, %s280
    %p292 = scmp.eq.s32.totalorder %s29, 1
    %p293 = por %p291, %p292
    %p295 = scmp.ne.s32.totalorder %s280, %s294
    %p296 = scmp.eq.s32.totalorder %s29, 0
    %p297 = por %p295, %p296
    %s299 = sadd.s32 %s298, 1
    %p302 = scmp.eq.s32.totalorder %s23, 1
    %p303 = scmp.ne.s32.totalorder %s298, %s300
    %p304 = scmp.eq.s32.totalorder %s23, 0
    %p305 = por %p303, %p304
    %p306 = scmp.ne.s32.totalorder %s298, %s300
    %p307 = scmp.eq.s32.totalorder %s28, 1
    %p308 = por %p306, %p307
    %p309 = scmp.ne.s32.totalorder %s300, %s301
    %p310 = scmp.eq.s32.totalorder %s28, 0
    %p311 = por %p309, %p310
    %p312 = scmp.ne.s32.totalorder %s300, %s301
    %p313 = scmp.eq.s32.totalorder %s29, 1
    %p314 = por %p312, %p313
    %p316 = scmp.ne.s32.totalorder %s301, %s315
    %p317 = scmp.eq.s32.totalorder %s29, 0
    %p318 = por %p316, %p317
    %s320 = sadd.s32 %s319, 1
    %p323 = scmp.eq.s32.totalorder %s23, 1
    %p324 = scmp.ne.s32.totalorder %s319, %s321
    %p325 = scmp.eq.s32.totalorder %s23, 0
    %p326 = por %p324, %p325
    %p327 = scmp.ne.s32.totalorder %s319, %s321
    %p328 = scmp.eq.s32.totalorder %s28, 1
    %p329 = por %p327, %p328
    %p330 = scmp.ne.s32.totalorder %s321, %s322
    %p331 = scmp.eq.s32.totalorder %s28, 0
    %p332 = por %p330, %p331
    %p333 = scmp.ne.s32.totalorder %s321, %s322
    %p334 = scmp.eq.s32.totalorder %s29, 1
    %p335 = por %p333, %p334
    %p337 = scmp.ne.s32.totalorder %s322, %s336
    %p338 = scmp.eq.s32.totalorder %s29, 0
    %p339 = por %p337, %p338
    %s341 = sadd.s32 %s340, 1
    %p344 = scmp.eq.s32.totalorder %s23, 1
    %p345 = scmp.ne.s32.totalorder %s340, %s342
    %p346 = scmp.eq.s32.totalorder %s23, 0
    %p347 = por %p345, %p346
    %p348 = scmp.ne.s32.totalorder %s340, %s342
    %p349 = scmp.eq.s32.totalorder %s28, 1
    %p350 = por %p348, %p349
    %p351 = scmp.ne.s32.totalorder %s342, %s343
    %p352 = scmp.eq.s32.totalorder %s28, 0
    %p353 = por %p351, %p352
    %p354 = scmp.ne.s32.totalorder %s342, %s343
    %p355 = scmp.eq.s32.totalorder %s29, 1
    %p356 = por %p354, %p355
    %p358 = scmp.ne.s32.totalorder %s343, %s357
    %p359 = scmp.eq.s32.totalorder %s29, 0
    %p360 = por %p358, %p359
    %s362 = sadd.s32 %s361, 1
    %p365 = scmp.eq.s32.totalorder %s23, 1
    %p366 = scmp.ne.s32.totalorder %s361, %s363
    %p367 = scmp.eq.s32.totalorder %s23, 0
    %p368 = por %p366, %p367
    %p369 = scmp.ne.s32.totalorder %s361, %s363
    %p370 = scmp.eq.s32.totalorder %s28, 1
    %p371 = por %p369, %p370
    %p372 = scmp.ne.s32.totalorder %s363, %s364
    %p373 = scmp.eq.s32.totalorder %s28, 0
    %p374 = por %p372, %p373
    %p375 = scmp.ne.s32.totalorder %s363, %s364
    %p376 = scmp.eq.s32.totalorder %s29, 1
    %p377 = por %p375, %p376
    %p379 = scmp.ne.s32.totalorder %s364, %s378
    %p380 = scmp.eq.s32.totalorder %s29, 0
    %p381 = por %p379, %p380
    %s383 = sadd.s32 %s382, 1
    %p386 = scmp.eq.s32.totalorder %s23, 1
    %p387 = scmp.ne.s32.totalorder %s382, %s384
    %p388 = scmp.eq.s32.totalorder %s23, 0
    %p389 = por %p387, %p388
    %p390 = scmp.ne.s32.totalorder %s382, %s384
    %p391 = scmp.eq.s32.totalorder %s28, 1
    %p392 = por %p390, %p391
    %p393 = scmp.ne.s32.totalorder %s384, %s385
    %p394 = scmp.eq.s32.totalorder %s28, 0
    %p395 = por %p393, %p394
    %p396 = scmp.ne.s32.totalorder %s384, %s385
    %p397 = scmp.eq.s32.totalorder %s29, 1
    %p398 = por %p396, %p397
    %p400 = scmp.ne.s32.totalorder %s385, %s399
    %p401 = scmp.eq.s32.totalorder %s29, 0
    %p402 = por %p400, %p401
    %s403 = ssub.s32 %s23, %s30
    %p404 = scmp.eq.s32.totalorder %s403, 0
    %s406 = sadd.s32 %s405, 1
    %s407 = scalar_select %p404, %s405, %s406
    %p410 = pneg %p404
    %p411 = scmp.eq.s32.totalorder %s23, 1
    %p412 = por %p410, %p411
    %p413 = scmp.ne.s32.totalorder %s405, %s408
    %p414 = scmp.eq.s32.totalorder %s23, 0
    %p415 = por %p413, %p414
    %p416 = scmp.ne.s32.totalorder %s405, %s408
    %p417 = scmp.eq.s32.totalorder %s28, 1
    %p418 = por %p416, %p417
    %p419 = scmp.ne.s32.totalorder %s408, %s409
    %p420 = scmp.eq.s32.totalorder %s28, 0
    %p421 = por %p419, %p420
    %p422 = scmp.ne.s32.totalorder %s408, %s409
    %p423 = scmp.eq.s32.totalorder %s29, 1
    %p424 = por %p422, %p423
    %p426 = scmp.ne.s32.totalorder %s409, %s425
    %p427 = scmp.eq.s32.totalorder %s29, 0
    %p428 = por %p426, %p427
    %p429 = scmp.le.s32.totalorder 1, %s23
    %p430 = scmp.lt.s32.totalorder %s23, 3
    %p431 = pnand %p429, %p430
    %p432 = pneg %p431
    // Predicated region
    $region9: #{encoder_decoder_forward.5} parent=5 // pred_check
      _
    $region10: #{encoder_decoder_forward.5} parent=5 // pred_check_branch
      %434 = sbr.rel (%p431) target = $region12
    $region11: #{encoder_decoder_forward.5} parent=5 // pred_region
      %s435 = ssub.s32 %s23, 1
      // Predicated region
      $region13: #{encoder_decoder_forward.5} parent=11 // pred_check
        %p436 = pneg %p122
      $region14: #{encoder_decoder_forward.5} parent=11 // pred_check_branch
        %438 = sbr.rel (%p436) target = $region16
      $region15: #{encoder_decoder_forward.5} parent=11 // pred_region
        _
      $region16: #{encoder_decoder_forward.5} parent=11 // pred_fallthru
        _
      // Predicated region
      $region17: #{encoder_decoder_forward.5} parent=11 // pred_check
        %p439 = pneg %p143
      $region18: #{encoder_decoder_forward.5} parent=11 // pred_check_branch
        %441 = sbr.rel (%p439) target = $region20
      $region19: #{encoder_decoder_forward.5} parent=11 // pred_region
        _
      $region20: #{encoder_decoder_forward.5} parent=11 // pred_fallthru
        _
      // Predicated region
      $region21: #{encoder_decoder_forward.5} parent=11 // pred_check
        %p442 = pneg %p164
      $region22: #{encoder_decoder_forward.5} parent=11 // pred_check_branch
        %444 = sbr.rel (%p442) target = $region24
      $region23: #{encoder_decoder_forward.5} parent=11 // pred_region
        _
      $region24: #{encoder_decoder_forward.5} parent=11 // pred_fallthru
        _
      // Predicated region
      $region25: #{encoder_decoder_forward.5} parent=11 // pred_check
        %p445 = pneg %p185
      $region26: #{encoder_decoder_forward.5} parent=11 // pred_check_branch
        %447 = sbr.rel (%p445) target = $region28
      $region27: #{encoder_decoder_forward.5} parent=11 // pred_region
        _
      $region28: #{encoder_decoder_forward.5} parent=11 // pred_fallthru
        _
      // Predicated region
      $region29: #{encoder_decoder_forward.5} parent=11 // pred_check
        %p448 = pneg %p206
      $region30: #{encoder_decoder_forward.5} parent=11 // pred_check_branch
        %450 = sbr.rel (%p448) target = $region32
      $region31: #{encoder_decoder_forward.5} parent=11 // pred_region
        _
      $region32: #{encoder_decoder_forward.5} parent=11 // pred_fallthru
        _
      // Predicated region
      $region33: #{encoder_decoder_forward.5} parent=11 // pred_check
        %p451 = pneg %p227
      $region34: #{encoder_decoder_forward.5} parent=11 // pred_check_branch
        %453 = sbr.rel (%p451) target = $region36
      $region35: #{encoder_decoder_forward.5} parent=11 // pred_region
        _
      $region36: #{encoder_decoder_forward.5} parent=11 // pred_fallthru
        _
      // Predicated region
      $region37: #{encoder_decoder_forward.5} parent=11 // pred_check
        %p454 = pneg %p248
      $region38: #{encoder_decoder_forward.5} parent=11 // pred_check_branch
        %456 = sbr.rel (%p454) target = $region40
      $region39: #{encoder_decoder_forward.5} parent=11 // pred_region
        _
      $region40: #{encoder_decoder_forward.5} parent=11 // pred_fallthru
        _
      // Predicated region
      $region41: #{encoder_decoder_forward.5} parent=11 // pred_check
        %p457 = pneg %p269
      $region42: #{encoder_decoder_forward.5} parent=11 // pred_check_branch
        %459 = sbr.rel (%p457) target = $region44
      $region43: #{encoder_decoder_forward.5} parent=11 // pred_region
        _
      $region44: #{encoder_decoder_forward.5} parent=11 // pred_fallthru
        _
      // Predicated region
      $region45: #{encoder_decoder_forward.5} parent=11 // pred_check
        %p460 = pneg %p290
      $region46: #{encoder_decoder_forward.5} parent=11 // pred_check_branch
        %462 = sbr.rel (%p460) target = $region48
      $region47: #{encoder_decoder_forward.5} parent=11 // pred_region
        _
      $region48: #{encoder_decoder_forward.5} parent=11 // pred_fallthru
        _
      // Predicated region
      $region49: #{encoder_decoder_forward.5} parent=11 // pred_check
        %p463 = pneg %p311
      $region50: #{encoder_decoder_forward.5} parent=11 // pred_check_branch
        %465 = sbr.rel (%p463) target = $region52
      $region51: #{encoder_decoder_forward.5} parent=11 // pred_region
        _
      $region52: #{encoder_decoder_forward.5} parent=11 // pred_fallthru
        _
      // Predicated region
      $region53: #{encoder_decoder_forward.5} parent=11 // pred_check
        %p466 = pneg %p332
      $region54: #{encoder_decoder_forward.5} parent=11 // pred_check_branch
        %468 = sbr.rel (%p466) target = $region56
      $region55: #{encoder_decoder_forward.5} parent=11 // pred_region
        _
      $region56: #{encoder_decoder_forward.5} parent=11 // pred_fallthru
        _
      // Predicated region
      $region57: #{encoder_decoder_forward.5} parent=11 // pred_check
        %p469 = pneg %p353
      $region58: #{encoder_decoder_forward.5} parent=11 // pred_check_branch
        %471 = sbr.rel (%p469) target = $region60
      $region59: #{encoder_decoder_forward.5} parent=11 // pred_region
        _
      $region60: #{encoder_decoder_forward.5} parent=11 // pred_fallthru
        _
      // Predicated region
      $region61: #{encoder_decoder_forward.5} parent=11 // pred_check
        %p472 = pneg %p374
      $region62: #{encoder_decoder_forward.5} parent=11 // pred_check_branch
        %474 = sbr.rel (%p472) target = $region64
      $region63: #{encoder_decoder_forward.5} parent=11 // pred_region
        _
      $region64: #{encoder_decoder_forward.5} parent=11 // pred_fallthru
        _
      // Predicated region
      $region65: #{encoder_decoder_forward.5} parent=11 // pred_check
        %p475 = pneg %p395
      $region66: #{encoder_decoder_forward.5} parent=11 // pred_check_branch
        %477 = sbr.rel (%p475) target = $region68
      $region67: #{encoder_decoder_forward.5} parent=11 // pred_region
        _
      $region68: #{encoder_decoder_forward.5} parent=11 // pred_fallthru
        _
    $region12: #{encoder_decoder_forward.5} parent=5 // pred_fallthru
      _
    %p478 = scmp.lt.s32.totalorder %s23, 2
    // Predicated region
    $region69: #{encoder_decoder_forward.5} parent=5 // pred_check
      %p479 = pneg %p478
    $region70: #{encoder_decoder_forward.5} parent=5 // pred_check_branch
      %481 = sbr.rel (%p479) target = $region72
    $region71: #{encoder_decoder_forward.5} parent=5 // pred_region
      // Predicated region
      $region73: #{encoder_decoder_forward.5} parent=71 // pred_check
        %p482 = pneg %p43
      $region74: #{encoder_decoder_forward.5} parent=71 // pred_check_branch
        %484 = sbr.rel (%p482) target = $region76
      $region75: #{encoder_decoder_forward.5} parent=71 // pred_region
        %p485 = scmp.lt.s32.totalorder %s23, 1
        %s486 = scalar_select %p485, %s23, 1
        %s487 = smul.addr %s486, 2
        %s488 = smul.addr %s487, 4
        %s489 = scalar_lea.vmem %s0, %s488
      $region76: #{encoder_decoder_forward.5} parent=71 // pred_fallthru
        _
      // Predicated region
      $region77: #{encoder_decoder_forward.5} parent=71 // pred_check
        %p490 = pneg %p69
      $region78: #{encoder_decoder_forward.5} parent=71 // pred_check_branch
        %492 = sbr.rel (%p490) target = $region80
      $region79: #{encoder_decoder_forward.5} parent=71 // pred_region
        %p493 = scmp.lt.s32.totalorder %s23, 1
        %s494 = scalar_select %p493, %s23, 1
        %s495 = smul.addr %s494, 2
        %s496 = smul.addr %s495, 4
        %s497 = scalar_lea.vmem %s1, %s496
      $region80: #{encoder_decoder_forward.5} parent=71 // pred_fallthru
        _
      // Predicated region
      $region81: #{encoder_decoder_forward.5} parent=71 // pred_check
        %p498 = pneg %p95
      $region82: #{encoder_decoder_forward.5} parent=71 // pred_check_branch
        %500 = sbr.rel (%p498) target = $region84
      $region83: #{encoder_decoder_forward.5} parent=71 // pred_region
        %p501 = scmp.lt.s32.totalorder %s23, 1
        %s502 = scalar_select %p501, %s23, 1
        %s503 = scalar_lea.vmem %s2, %s502
      $region84: #{encoder_decoder_forward.5} parent=71 // pred_fallthru
        _
    $region72: #{encoder_decoder_forward.5} parent=5 // pred_fallthru
      _
    %p504 = scmp.le.s32.totalorder 1, %s23
    %p505 = scmp.lt.s32.totalorder %s23, 3
    %p506 = pnand %p504, %p505
    %p507 = pneg %p506
    // Predicated region
    $region85: #{encoder_decoder_forward.5} parent=5 // pred_check
      _
    $region86: #{encoder_decoder_forward.5} parent=5 // pred_check_branch
      %509 = sbr.rel (%p506) target = $region88
    $region87: #{encoder_decoder_forward.5} parent=5 // pred_region
      %s510 = ssub.s32 %s23, 1
      %p511 = scmp.lt.s32.totalorder %s28, 1
      %s512 = scalar_select %p511, %s28, 1
      %s513 = smul.addr %s512, 2
      %s514 = smul.addr %s513, 4
      %s515 = scalar_lea.vmem %s0, %s514
      %p516 = pneg %p49
      %p517 = pneg %p46
      %p518 = scmp.lt.s32.totalorder %s28, 1
      %s519 = scalar_select %p518, %s28, 1
      %s520 = smul.addr %s519, 2
      %s521 = smul.addr %s520, 4
      %s522 = scalar_lea.vmem %s1, %s521
      %p523 = pneg %p75
      %p524 = pneg %p72
      %p525 = scmp.lt.s32.totalorder %s28, 1
      %s526 = scalar_select %p525, %s28, 1
      %s527 = scalar_lea.vmem %s2, %s526
      %p528 = pneg %p101
      %p529 = pneg %p98
      %p530 = pneg %p122
      %p531 = pneg %p119
      %p532 = pneg %p143
      %p533 = pneg %p140
      %p534 = pneg %p164
      %p535 = pneg %p161
      %p536 = pneg %p185
      %p537 = pneg %p182
      %p538 = pneg %p206
      %p539 = pneg %p203
      %p540 = pneg %p227
      %p541 = pneg %p224
      %p542 = pneg %p248
      %p543 = pneg %p245
      %p544 = pneg %p269
      %p545 = pneg %p266
      %p546 = pneg %p290
      %p547 = pneg %p287
      %p548 = pneg %p311
      %p549 = pneg %p308
      %p550 = pneg %p332
      %p551 = pneg %p329
      %p552 = pneg %p353
      %p553 = pneg %p350
      %p554 = pneg %p374
      %p555 = pneg %p371
      %p556 = pneg %p395
      %p557 = pneg %p392
      %p558 = pneg %p421
      %p559 = pneg %p418
      %p560 = scmp.lt.s32.totalorder %s28, 1
      %s561 = scalar_select %p560, %s28, 1
      %s562 = smul.addr %s561, 2
      %s563 = smul.addr %s562, 4
      %s564 = scalar_lea.vmem %s17, %s563
      %p565 = scmp.lt.s32.totalorder %s28, 1
      %s566 = scalar_select %p565, %s28, 1
      %s567 = smul.addr %s566, 2
      %s568 = smul.addr %s567, 4
      %s569 = scalar_lea.vmem %s0, %s568
      %p570 = scmp.lt.s32.totalorder %s28, 1
      %s571 = scalar_select %p570, %s28, 1
      %s572 = smul.addr %s571, 2
      %s573 = smul.addr %s572, 4
      %s574 = scalar_lea.vmem %s1, %s573
      %p575 = scmp.lt.s32.totalorder %s28, 1
      %s576 = scalar_select %p575, %s28, 1
      %s577 = scalar_lea.vmem %s2, %s576
      %p578 = scmp.lt.s32.totalorder %s28, 1
      %s579 = scalar_select %p578, %s28, 1
      %s580 = smul.addr %s579, 2
      %s581 = smul.addr %s580, 4
      %s582 = scalar_lea.vmem %s17, %s581
      %v584 = vld [vmem:[%s569] sm:$0xf]
      %v585 = vld [vmem:[%s569 + $0x4] sm:$0xf]
      %v586 = vld [vmem:[%s574] sm:$0xf]
      %v587 = vld [vmem:[%s574 + $0x4] sm:$0xf]
      %v588 = vld [vmem:[%s3] sm:$0xf]
      %v589 = vld [vmem:[%s3 + $0x4] sm:$0xf]
      %v590 = vld [vmem:[%s3 + $0x8] sm:$0xf]
      %v591 = vld [vmem:[%s3 + $0xc] sm:$0xf]
      %v592 = vld [vmem:[%s3 + $0x10] sm:$0xf]
      %v593 = vld [vmem:[%s3 + $0x14] sm:$0xf]
      %v594 = vld [vmem:[%s3 + $0x18] sm:$0xf]
      %v595 = vld [vmem:[%s3 + $0x1c] sm:$0xf]
      %v596 = vld [vmem:[%s3 + $0x20] sm:$0xf]
      %v597 = vld [vmem:[%s3 + $0x24] sm:$0xf]
      %v598 = vld [vmem:[%s3 + $0x28] sm:$0xf]
      %v599 = vld [vmem:[%s3 + $0x2c] sm:$0xf]
      %v600 = vld [vmem:[%s3 + $0x30] sm:$0xf]
      %v601 = vld [vmem:[%s3 + $0x34] sm:$0xf]
      %v602 = vld [vmem:[%s3 + $0x38] sm:$0xf]
      %v603 = vld [vmem:[%s3 + $0x3c] sm:$0xf]
      %v604 = vld [vmem:[%s4] sm:$0xf]
      %v607 = vunpack.c.l.b16 %v586
      %v608 = vunpack.c.l.b16 %v587
      %v609 = vpack.c.b16 %v608, %v607
      %vm610 = vcmask 64512
      %v612 = vsel %vm610, %v609, 0
      %vm614 = vcmask 1043456
      %v616 = vsel %vm614, %v604, 0
      %618 = vmatpush.bf16.msra.mxu0 0
      %619 = vmatpush.bf16.msra.mxu0 0
      %620 = vmatpush.bf16.msra.mxu0 0
      %621 = vmatpush.bf16.msra.mxu0 0
      %622 = vmatpush.bf16.msra.mxu0 0
      %623 = vmatpush.bf16.msra.mxu0 0
      %624 = vmatpush.bf16.msra.mxu0 0
      %625 = vmatpush.bf16.msra.mxu0 %v616
      %626 = vmatmul.bf16.gmra.mxu0 %v612
      %v627 = vpop.f32.mrf.mxu0
      %v628 = vadd.f32 0.0, %v627
      %v629 = vpop.f32.mrf.mxu0
      %v630 = vadd.f32 0.0, %v629
      %631 = vdwg.mxu0
      %v634 = vunpack.c.l.b16 %v584
      %v635 = vunpack.c.l.b16 %v585
      %v636 = vpack.c.b16 %v635, %v634
      %v654 = vunpack.c.l.b16 %v588
      %v655 = vunpack.c.l.b16 %v589
      %v656 = vunpack.c.l.b16 %v590
      %v657 = vunpack.c.l.b16 %v591
      %v658 = vunpack.c.l.b16 %v592
      %v659 = vunpack.c.l.b16 %v593
      %v660 = vunpack.c.l.b16 %v594
      %v661 = vunpack.c.l.b16 %v595
      %v662 = vunpack.c.l.b16 %v596
      %v663 = vunpack.c.l.b16 %v597
      %v664 = vunpack.c.l.b16 %v598
      %v665 = vunpack.c.l.b16 %v599
      %v666 = vunpack.c.l.b16 %v600
      %v667 = vunpack.c.l.b16 %v601
      %v668 = vunpack.c.l.b16 %v602
      %v669 = vunpack.c.l.b16 %v603
      %v670 = vpack.c.b16 %v655, %v654
      %v671 = vpack.c.b16 %v657, %v656
      %v672 = vpack.c.b16 %v659, %v658
      %v673 = vpack.c.b16 %v661, %v660
      %v674 = vpack.c.b16 %v663, %v662
      %v675 = vpack.c.b16 %v665, %v664
      %v676 = vpack.c.b16 %v667, %v666
      %v677 = vpack.c.b16 %v669, %v668
      %686 = vmatpush.bf16.msra.mxu0 %v677
      %687 = vmatpush.bf16.msra.mxu0 %v676
      %688 = vmatpush.bf16.msra.mxu0 %v675
      %689 = vmatpush.bf16.msra.mxu0 %v674
      %690 = vmatpush.bf16.msra.mxu0 %v673
      %691 = vmatpush.bf16.msra.mxu0 %v672
      %692 = vmatpush.bf16.msra.mxu0 %v671
      %693 = vmatpush.bf16.msra.mxu0 %v670
      %694 = vmatmul.bf16.gmra.mxu0 %v636
      %v695 = vpop.f32.mrf.mxu0
      %v696 = vadd.f32 %v628, %v695
      %v697 = vpop.f32.mrf.mxu0
      %v698 = vadd.f32 %v630, %v697
      %699 = vdwg.mxu0
      %v700 = vld [vmem:[%s577] sm:$0x1]
      %v702 = vperm.slane %v700, 0
      %v704 = vadd.f32 %v696, %v702
      %v705 = vadd.f32 %v698, %v702
      %vm706 = vcmask 31744
      %v707 = vsel %vm706, %v704, 0.0
      %708 = vadd.xlane.f32.xlu0 %v707
      %v709 = vpop.xlane.xlu0 %708
      %v710 = vsel %vm706, %v705, 0.0
      %711 = vadd.xlane.f32.xlu0 %v710
      %v712 = vpop.xlane.xlu0 %711
      %v713 = vrcp.pop 4.0
      %v714 = vmul.f32 4.0, %v713
      %v715 = vsub.f32 1.0, %v714
      %v716 = vmul.f32 %v713, %v715
      %v717 = vadd.f32 %v713, %v716
      %vm718 = vweird.f32 %v713
      %v719 = vsel %vm718, %v713, %v717
      %v720 = vmul.f32 %v709, %v719
      %v721 = vmul.f32 %v712, %v719
      %v722 = vsub.f32 %v704, %v720
      %v723 = vsub.f32 %v705, %v721
      %v724 = vmul.f32 %v722, %v722
      %v725 = vmul.f32 %v723, %v723
      %v726 = vsel %vm706, %v724, 0.0
      %727 = vadd.xlane.f32.xlu0 %v726
      %v728 = vpop.xlane.xlu0 %727
      %v729 = vsel %vm706, %v725, 0.0
      %730 = vadd.xlane.f32.xlu0 %v729
      %v731 = vpop.xlane.xlu0 %730
      %v732 = vmul.f32 %v728, %v719
      %v733 = vmul.f32 %v731, %v719
      %v734 = vadd.f32 %v732, 1e-05
      %v735 = vadd.f32 %v733, 1e-05
      %v736 = vrsqrt.pop %v734
      %v737 = vmul.f32 %v736, %v734
      %v738 = vmul.f32 %v737, %v736
      %v739 = vmul.f32 0.5, %v738
      %v740 = vsub.f32 1.5, %v739
      %v741 = vmul.f32 %v736, %v740
      %vm742 = vweird.f32 %v734
      %vm743 = vweird.f32 %v736
      %vm744 = vmor %vm742, %vm743
      %v745 = vsel %vm744, %v736, %v741
      %v746 = vrsqrt.pop %v735
      %v747 = vmul.f32 %v746, %v735
      %v748 = vmul.f32 %v747, %v746
      %v749 = vmul.f32 0.5, %v748
      %v750 = vsub.f32 1.5, %v749
      %v751 = vmul.f32 %v746, %v750
      %vm752 = vweird.f32 %v735
      %vm753 = vweird.f32 %v746
      %vm754 = vmor %vm752, %vm753
      %v755 = vsel %vm754, %v746, %v751
      %v756 = vmul.f32 %v722, %v745
      %v757 = vmul.f32 %v723, %v755
      %v758 = vld [vmem:[%s5] sm:$0x1]
      %v760 = vperm.slane %v758, 0
      %v762 = vmul.f32 %v756, %v760
      %v763 = vmul.f32 %v757, %v760
      %v764 = vld [vmem:[%s6] sm:$0x1]
      %v766 = vperm.slane %v764, 0
      %v768 = vadd.f32 %v762, %v766
      %v769 = vadd.f32 %v763, %v766
      %v770 = vpack.c.bf16 %v769, %v768
      %v771 = vld [vmem:[%s7] sm:$0x3]
      %v773 = vsel %vm706, %v770, 0
      %vm775 = vcmask 1041408
      %v777 = vsel %vm775, %v771, 0
      %779 = vmatpush.bf16.msra.mxu0 0
      %780 = vmatpush.bf16.msra.mxu0 0
      %781 = vmatpush.bf16.msra.mxu0 0
      %782 = vmatpush.bf16.msra.mxu0 0
      %783 = vmatpush.bf16.msra.mxu0 0
      %784 = vmatpush.bf16.msra.mxu0 0
      %785 = vmatpush.bf16.msra.mxu0 0
      %786 = vmatpush.bf16.msra.mxu0 %v777
      %787 = vmatmul.bf16.gmra.mxu0 %v773
      %v788 = vpop.f32.mrf.mxu0
      %v789 = vadd.f32 0.0, %v788
      %v790 = vpop.f32.mrf.mxu0
      %v791 = vadd.f32 0.0, %v790
      %792 = vdwg.mxu0
      %v793 = vlaneseq
      %v794 = vshrl.u32 %v793, 7
      %v795 = vadd.s32 %v794, 8
      %v796 = vlaneseq
      %v797 = vand.u32 %v796, 127
      %vm798 = vcmp.eq.s32.totalorder %v794, %v797
      %vm799 = vcmp.eq.s32.totalorder %v795, %v797
      %v800 = vpack.c.bf16 %v789, %v789
      %v801 = vpack.c.bf16 %v791, %v791
      %v804 = vunpack.c.l.b16 %v800
      %v805 = vunpack.c.l.b16 %v801
      %v806 = vpack.c.b16 %v805, %v804
      %807 = vrot.lane.b32.xlu0 %v806, 120
      %v808 = vpop.permute.xlu0 %807
      %v810 = vsel %vm706, %v806, 0
      %v813 = vsel %vm706, %v808, 0
      %815 = vmatpush.bf16.xpose.msra.mxu0 0
      %816 = vmatpush.bf16.xpose.msra.mxu0 0
      %817 = vmatpush.bf16.xpose.msra.mxu0 0
      %818 = vmatpush.bf16.xpose.msra.mxu0 0
      %819 = vmatpush.bf16.xpose.msra.mxu0 0
      %820 = vmatpush.bf16.xpose.msra.mxu0 0
      %821 = vmatpush.bf16.xpose.msra.mxu0 0
      %822 = vmatpush.bf16.xpose.msra.mxu0 %v813
      %823 = vmatmul.bf16.gmra.mxu0 %v810
      %v824 = vpop.f32.mrf.mxu0
      %v825 = vadd.f32 0.0, %v824
      %v826 = vpop.f32.mrf.mxu0
      %v827 = vadd.f32 0.0, %v826
      %828 = vdwg.mxu0
      %v829 = vsel %vm798, -1e+09, %v825
      %v830 = vsel %vm799, -1e+09, %v827
      %vm831 = vcmask 130048
      %v832 = vsel %vm831, %v829, -inf
      %833 = vmax.xlane.f32.xlu0 %v832
      %v834 = vpop.xlane.xlu0 %833
      %v835 = vsel %vm831, %v830, -inf
      %836 = vmax.xlane.f32.xlu0 %v835
      %v837 = vpop.xlane.xlu0 %836
      %v838 = vsub.f32 %v829, %v834
      %v839 = vsub.f32 %v830, %v837
      %v840 = vmul.f32 %v838, 1.442695
      %v841 = vpow.pop %v840
      %v842 = vmul.f32 %v839, 1.442695
      %v843 = vpow.pop %v842
      %v844 = vsel %vm831, %v841, 0.0
      %845 = vadd.xlane.f32.xlu0 %v844
      %v846 = vpop.xlane.xlu0 %845
      %v847 = vsel %vm831, %v843, 0.0
      %848 = vadd.xlane.f32.xlu0 %v847
      %v849 = vpop.xlane.xlu0 %848
      %v850 = vrcp.pop %v846
      %v851 = vrcp.pop %v849
      %v852 = vmul.f32 %v841, %v850
      %v853 = vmul.f32 %v843, %v851
      %v854 = vpack.c.bf16 %v852, %v852
      %v855 = vpack.c.bf16 %v853, %v853
      %v858 = vunpack.c.l.b16 %v854
      %v859 = vunpack.c.l.b16 %v855
      %v860 = vpack.c.b16 %v859, %v858
      %861 = vrot.lane.b32.xlu0 %v806, 112
      %v862 = vpop.permute.xlu0 %861
      %v865 = vsel %vm831, %v860, 0
      %867 = vmatpush.bf16.msra.mxu0 0
      %868 = vmatpush.bf16.msra.mxu0 0
      %869 = vmatpush.bf16.msra.mxu0 0
      %870 = vmatpush.bf16.msra.mxu0 0
      %871 = vmatpush.bf16.msra.mxu0 0
      %872 = vmatpush.bf16.msra.mxu0 0
      %873 = vmatpush.bf16.msra.mxu0 0
      %874 = vmatpush.bf16.msra.mxu0 %v862
      %875 = vmatmul.bf16.gmra.mxu0 %v865
      %v876 = vpop.f32.mrf.mxu0
      %v877 = vadd.f32 0.0, %v876
      %v878 = vpop.f32.mrf.mxu0
      %v879 = vadd.f32 0.0, %v878
      %880 = vdwg.mxu0
      %881 = vst.msk [vmem:[#allocation2] sm:$0xff] %vm706, %v877
      %882 = vst.msk [vmem:[#allocation2 + $0x8] sm:$0xff] %vm706, %v879
      %883 = vrot.lane.b32.xlu0 %v806, 124
      %v884 = vpop.permute.xlu0 %883
      %885 = vrot.lane.b32.xlu0 %v806, 116
      %v886 = vpop.permute.xlu0 %885
      %v888 = vsel %vm706, %v884, 0
      %v891 = vsel %vm706, %v886, 0
      %893 = vmatpush.bf16.xpose.msra.mxu0 0
      %894 = vmatpush.bf16.xpose.msra.mxu0 0
      %895 = vmatpush.bf16.xpose.msra.mxu0 0
      %896 = vmatpush.bf16.xpose.msra.mxu0 0
      %897 = vmatpush.bf16.xpose.msra.mxu0 0
      %898 = vmatpush.bf16.xpose.msra.mxu0 0
      %899 = vmatpush.bf16.xpose.msra.mxu0 0
      %900 = vmatpush.bf16.xpose.msra.mxu0 %v891
      %901 = vmatmul.bf16.gmra.mxu0 %v888
      %v902 = vpop.f32.mrf.mxu0
      %v903 = vadd.f32 0.0, %v902
      %v904 = vpop.f32.mrf.mxu0
      %v905 = vadd.f32 0.0, %v904
      %906 = vdwg.mxu0
      %v907 = vsel %vm798, -1e+09, %v903
      %v908 = vsel %vm799, -1e+09, %v905
      %v909 = vsel %vm831, %v907, -inf
      %910 = vmax.xlane.f32.xlu0 %v909
      %v911 = vpop.xlane.xlu0 %910
      %v912 = vsel %vm831, %v908, -inf
      %913 = vmax.xlane.f32.xlu0 %v912
      %v914 = vpop.xlane.xlu0 %913
      %v915 = vsub.f32 %v907, %v911
      %v916 = vsub.f32 %v908, %v914
      %v917 = vmul.f32 %v915, 1.442695
      %v918 = vpow.pop %v917
      %v919 = vmul.f32 %v916, 1.442695
      %v920 = vpow.pop %v919
      %v921 = vsel %vm831, %v918, 0.0
      %922 = vadd.xlane.f32.xlu0 %v921
      %v923 = vpop.xlane.xlu0 %922
      %v924 = vsel %vm831, %v920, 0.0
      %925 = vadd.xlane.f32.xlu0 %v924
      %v926 = vpop.xlane.xlu0 %925
      %v927 = vrcp.pop %v923
      %v928 = vrcp.pop %v926
      %v929 = vmul.f32 %v918, %v927
      %v930 = vmul.f32 %v920, %v928
      %v931 = vpack.c.bf16 %v929, %v929
      %v932 = vpack.c.bf16 %v930, %v930
      %v935 = vunpack.c.l.b16 %v931
      %v936 = vunpack.c.l.b16 %v932
      %v937 = vpack.c.b16 %v936, %v935
      %938 = vrot.lane.b32.xlu0 %v806, 108
      %v939 = vpop.permute.xlu0 %938
      %v942 = vsel %vm831, %v937, 0
      %944 = vmatpush.bf16.msra.mxu0 0
      %945 = vmatpush.bf16.msra.mxu0 0
      %946 = vmatpush.bf16.msra.mxu0 0
      %947 = vmatpush.bf16.msra.mxu0 0
      %948 = vmatpush.bf16.msra.mxu0 0
      %949 = vmatpush.bf16.msra.mxu0 0
      %950 = vmatpush.bf16.msra.mxu0 0
      %951 = vmatpush.bf16.msra.mxu0 %v939
      %952 = vmatmul.bf16.gmra.mxu0 %v942
      %v953 = vpop.f32.mrf.mxu0
      %v954 = vadd.f32 0.0, %v953
      %v955 = vpop.f32.mrf.mxu0
      %v956 = vadd.f32 0.0, %v955
      %957 = vdwg.mxu0
      %960 = vrot.lane.b32.xlu0 %v954, 4
      %v961 = vpop.permute.xlu0 %960
      %962 = vrot.lane.b32.xlu0 %v956, 4
      %v963 = vpop.permute.xlu0 %962
      %vm966 = vcmask 64544
      %967 = vst.msk [vmem:[#allocation2] sm:$0xff] %vm966, %v961
      %968 = vst.msk [vmem:[#allocation2 + $0x8] sm:$0xff] %vm966, %v963
      %v969 = vld [vmem:[#allocation2] sm:$0xff]
      %v970 = vld [vmem:[#allocation2 + $0x8] sm:$0xff]
      %v971 = vpack.c.bf16 %v970, %v969
      %v972 = vld [vmem:[%s8] sm:$0xf]
      %v974 = vsel %vm610, %v971, 0
      %v977 = vsel %vm614, %v972, 0
      %979 = vmatpush.bf16.msra.mxu0 0
      %980 = vmatpush.bf16.msra.mxu0 0
      %981 = vmatpush.bf16.msra.mxu0 0
      %982 = vmatpush.bf16.msra.mxu0 0
      %983 = vmatpush.bf16.msra.mxu0 0
      %984 = vmatpush.bf16.msra.mxu0 0
      %985 = vmatpush.bf16.msra.mxu0 0
      %986 = vmatpush.bf16.msra.mxu0 %v977
      %987 = vmatmul.bf16.gmra.mxu0 %v974
      %v988 = vpop.f32.mrf.mxu0
      %v989 = vadd.f32 %v704, %v988
      %v990 = vpop.f32.mrf.mxu0
      %v991 = vadd.f32 %v705, %v990
      %992 = vdwg.mxu0
      %v993 = vsel %vm706, %v989, 0.0
      %994 = vadd.xlane.f32.xlu0 %v993
      %v995 = vpop.xlane.xlu0 %994
      %v996 = vsel %vm706, %v991, 0.0
      %997 = vadd.xlane.f32.xlu0 %v996
      %v998 = vpop.xlane.xlu0 %997
      %v999 = vmul.f32 %v995, %v719
      %v1000 = vmul.f32 %v998, %v719
      %v1001 = vsub.f32 %v989, %v999
      %v1002 = vsub.f32 %v991, %v1000
      %v1003 = vmul.f32 %v1001, %v1001
      %v1004 = vmul.f32 %v1002, %v1002
      %v1005 = vsel %vm706, %v1003, 0.0
      %1006 = vadd.xlane.f32.xlu0 %v1005
      %v1007 = vpop.xlane.xlu0 %1006
      %v1008 = vsel %vm706, %v1004, 0.0
      %1009 = vadd.xlane.f32.xlu0 %v1008
      %v1010 = vpop.xlane.xlu0 %1009
      %v1011 = vmul.f32 %v1007, %v719
      %v1012 = vmul.f32 %v1010, %v719
      %v1013 = vadd.f32 %v1011, 1e-06
      %v1014 = vadd.f32 %v1012, 1e-06
      %v1015 = vrsqrt.pop %v1013
      %v1016 = vmul.f32 %v1015, %v1013
      %v1017 = vmul.f32 %v1016, %v1015
      %v1018 = vmul.f32 0.5, %v1017
      %v1019 = vsub.f32 1.5, %v1018
      %v1020 = vmul.f32 %v1015, %v1019
      %vm1021 = vweird.f32 %v1013
      %vm1022 = vweird.f32 %v1015
      %vm1023 = vmor %vm1021, %vm1022
      %v1024 = vsel %vm1023, %v1015, %v1020
      %v1025 = vrsqrt.pop %v1014
      %v1026 = vmul.f32 %v1025, %v1014
      %v1027 = vmul.f32 %v1026, %v1025
      %v1028 = vmul.f32 0.5, %v1027
      %v1029 = vsub.f32 1.5, %v1028
      %v1030 = vmul.f32 %v1025, %v1029
      %vm1031 = vweird.f32 %v1014
      %vm1032 = vweird.f32 %v1025
      %vm1033 = vmor %vm1031, %vm1032
      %v1034 = vsel %vm1033, %v1025, %v1030
      %v1035 = vmul.f32 %v1001, %v1024
      %v1036 = vmul.f32 %v1002, %v1034
      %v1037 = vld [vmem:[%s9] sm:$0x1]
      %v1039 = vperm.slane %v1037, 0
      %v1041 = vmul.f32 %v1035, %v1039
      %v1042 = vmul.f32 %v1036, %v1039
      %v1043 = vld [vmem:[%s10] sm:$0x1]
      %v1045 = vperm.slane %v1043, 0
      %v1047 = vadd.f32 %v1041, %v1045
      %v1048 = vadd.f32 %v1042, %v1045
      %v1049 = vpack.c.bf16 %v1048, %v1047
      %v1050 = vld [vmem:[%s11] sm:$0x3]
      %v1051 = vld [vmem:[%s12] sm:$0x1]
      %v1053 = vperm.slane %v1051, 0
      %v1056 = vsel %vm706, %v1049, 0
      %v1059 = vsel %vm775, %v1050, 0
      %1061 = vmatpush.bf16.msra.mxu0 0
      %1062 = vmatpush.bf16.msra.mxu0 0
      %1063 = vmatpush.bf16.msra.mxu0 0
      %1064 = vmatpush.bf16.msra.mxu0 0
      %1065 = vmatpush.bf16.msra.mxu0 0
      %1066 = vmatpush.bf16.msra.mxu0 0
      %1067 = vmatpush.bf16.msra.mxu0 0
      %1068 = vmatpush.bf16.msra.mxu0 %v1059
      %1069 = vmatmul.bf16.gmra.mxu0 %v1056
      %v1070 = vpop.f32.mrf.mxu0
      %v1071 = vadd.f32 %v1053, %v1070
      %v1072 = vpop.f32.mrf.mxu0
      %v1073 = vadd.f32 %v1053, %v1072
      %1074 = vdwg.mxu0
      %v1075 = vmax.f32 %v1071, 0.0
      %v1076 = vmax.f32 %v1073, 0.0
      %v1077 = vpack.c.bf16 %v1076, %v1075
      %v1078 = vld [vmem:[%s13] sm:$0xf]
      %v1079 = vld [vmem:[%s13 + $0x4] sm:$0xf]
      %v1080 = vld [vmem:[%s14] sm:$0x1]
      %v1082 = vperm.slane %v1080, 0
      %v1086 = vunpack.c.l.b16 %v1078
      %v1087 = vunpack.c.l.b16 %v1079
      %v1088 = vpack.c.b16 %v1087, %v1086
      %v1091 = vsel %vm831, %v1077, 0
      %1093 = vmatpush.bf16.msra.mxu0 0
      %1094 = vmatpush.bf16.msra.mxu0 0
      %1095 = vmatpush.bf16.msra.mxu0 0
      %1096 = vmatpush.bf16.msra.mxu0 0
      %1097 = vmatpush.bf16.msra.mxu0 0
      %1098 = vmatpush.bf16.msra.mxu0 0
      %1099 = vmatpush.bf16.msra.mxu0 0
      %1100 = vmatpush.bf16.msra.mxu0 %v1088
      %1101 = vmatmul.bf16.gmra.mxu0 %v1091
      %v1102 = vpop.f32.mrf.mxu0
      %v1103 = vadd.f32 %v1082, %v1102
      %v1104 = vpop.f32.mrf.mxu0
      %v1105 = vadd.f32 %v1082, %v1104
      %1106 = vdwg.mxu0
      %v1107 = vadd.f32 %v1103, %v989
      %v1108 = vadd.f32 %v1105, %v991
      %v1109 = vpack.c.bf16 %v1108, %v1107
      %v1110 = vld [vmem:[%s15] sm:$0x3]
      %v1111 = vld [vmem:[%s16] sm:$0x1]
      %v1113 = vperm.slane %v1111, 0
      %v1116 = vsel %vm706, %v1109, 0
      %v1119 = vsel %vm775, %v1110, 0
      %1121 = vmatpush.bf16.msra.mxu0 0
      %1122 = vmatpush.bf16.msra.mxu0 0
      %1123 = vmatpush.bf16.msra.mxu0 0
      %1124 = vmatpush.bf16.msra.mxu0 0
      %1125 = vmatpush.bf16.msra.mxu0 0
      %1126 = vmatpush.bf16.msra.mxu0 0
      %1127 = vmatpush.bf16.msra.mxu0 0
      %1128 = vmatpush.bf16.msra.mxu0 %v1119
      %1129 = vmatmul.bf16.gmra.mxu0 %v1116
      %v1130 = vpop.f32.mrf.mxu0
      %v1131 = vadd.f32 %v1113, %v1130
      %v1132 = vpop.f32.mrf.mxu0
      %v1133 = vadd.f32 %v1113, %v1132
      %1134 = vdwg.mxu0
      %v1135 = vpack.c.bf16 %v1131, %v1131
      %v1136 = vpack.c.bf16 %v1133, %v1133
      %1137 = vst [vmem:[%s582] sm:$0xf] %v1135
      %1138 = vst [vmem:[%s582 + $0x4] sm:$0xf] %v1136
      %p1139 = scmp.lt.s32.totalorder %s28, 1
      %s1140 = scalar_select %p1139, %s28, 1
      %s1141 = smul.addr %s1140, 2
      %s1142 = smul.addr %s1141, 4
      %s1143 = scalar_lea.vmem %s17, %s1142
      // Predicated region
      $region89: #{encoder_decoder_forward.5} parent=87 // pred_check
        %p1144 = pneg %p418
      $region90: #{encoder_decoder_forward.5} parent=87 // pred_check_branch
        %1146 = sbr.rel (%p1144) target = $region92
      $region91: #{encoder_decoder_forward.5} parent=87 // pred_region
        _
      $region92: #{encoder_decoder_forward.5} parent=87 // pred_fallthru
        _
    $region88: #{encoder_decoder_forward.5} parent=5 // pred_fallthru
      _
    %p1147 = scmp.le.s32.totalorder 2, %s23
    // Predicated region
    $region93: #{encoder_decoder_forward.5} parent=5 // pred_check
      %p1148 = pneg %p1147
    $region94: #{encoder_decoder_forward.5} parent=5 // pred_check_branch
      %1150 = sbr.rel (%p1148) target = $region96
    $region95: #{encoder_decoder_forward.5} parent=5 // pred_region
      %s1151 = ssub.s32 %s23, 2
      // Predicated region
      $region97: #{encoder_decoder_forward.5} parent=95 // pred_check
        %p1152 = pneg %p424
      $region98: #{encoder_decoder_forward.5} parent=95 // pred_check_branch
        %1154 = sbr.rel (%p1152) target = $region100
      $region99: #{encoder_decoder_forward.5} parent=95 // pred_region
        %p1155 = scmp.lt.s32.totalorder %s29, 1
        %s1156 = scalar_select %p1155, %s29, 1
        %s1157 = smul.addr %s1156, 2
        %s1158 = smul.addr %s1157, 4
        %s1159 = scalar_lea.vmem %s17, %s1158
      $region100: #{encoder_decoder_forward.5} parent=95 // pred_fallthru
        _
    $region96: #{encoder_decoder_forward.5} parent=5 // pred_fallthru
      _
  $region6: #{encoder_decoder_forward.5} parent=0 // loop_footer
    %s27 = sadd.s32 1, %s23
  $region7: #{encoder_decoder_forward.5} parent=0 // loop_footer_branch
    %22 = sbr.rel target = $region3
  $region8: #{encoder_decoder_forward.5} parent=0 // loop_exit
    _

// kernel: encoder_decoder_forward.6
$region0: #{encoder_decoder_forward.6}
  #allocation0 [shape = 'u32[]', space=smem, size = 0x4, offset = 0x4, fixed_abs, tag = 'smem constant byte address 0x4 - core index']
  #allocation1 [shape = 'u32[72,128]{1,0:T(1,128)}', space=vmem, size = 0x9000, scoped, tag = 'internal scratch']
  #allocation2 [shape = 'f32[16,8]{1,0:T(8,128)}', space=vmem, size = 0x2000, scoped, tag = 'scratch operand']
  %s0 = inlined_call_operand.vmem [shape: bf16[2,16,128], index: 0, kind: input, shape index: {}]
  %s1 = inlined_call_operand.vmem [shape: bf16[2,16,8], index: 1, kind: input, shape index: {}]
  %s2 = inlined_call_operand.vmem [shape: f32[2,1,2], index: 2, kind: input, shape index: {}]
  %s3 = inlined_call_operand.vmem [shape: bf16[128,2], index: 3, kind: input, shape index: {}]
  %s4 = inlined_call_operand.vmem [shape: bf16[8,2], index: 4, kind: input, shape index: {}]
  %s5 = inlined_call_operand.vmem [shape: f32[1,2], index: 5, kind: input, shape index: {}]
  %s6 = inlined_call_operand.vmem [shape: f32[1,2], index: 6, kind: input, shape index: {}]
  %s7 = inlined_call_operand.vmem [shape: bf16[2,24], index: 7, kind: input, shape index: {}]
  %s8 = inlined_call_operand.vmem [shape: bf16[8,2], index: 8, kind: input, shape index: {}]
  %s9 = inlined_call_operand.vmem [shape: f32[1,2], index: 9, kind: input, shape index: {}]
  %s10 = inlined_call_operand.vmem [shape: f32[1,2], index: 10, kind: input, shape index: {}]
  %s11 = inlined_call_operand.vmem [shape: bf16[2,16], index: 11, kind: input, shape index: {}]
  %s12 = inlined_call_operand.vmem [shape: f32[1,16], index: 12, kind: input, shape index: {}]
  %s13 = inlined_call_operand.vmem [shape: bf16[16,2], index: 13, kind: input, shape index: {}]
  %s14 = inlined_call_operand.vmem [shape: f32[1,2], index: 14, kind: input, shape index: {}]
  %s15 = inlined_call_operand.vmem [shape: bf16[2,128], index: 15, kind: input, shape index: {}]
  %s16 = inlined_call_operand.vmem [shape: f32[1,128], index: 16, kind: input, shape index: {}]
  %s17 = inlined_call_operand.vmem [shape: bf16[2,16,128], index: 17, kind: output, shape index: {}]
  %s18 = sld [smem:[#allocation0]]
  $region101: #{encoder_decoder_forward.6} parent=0
    _
  %s20 = ssub.s32 1, %s18
  %s21 = scalar_select 0, %s20, %s18
  loop: start=0, step=1, limit=4
  $region2: #{encoder_decoder_forward.6} parent=0 // loop_pre_header
    _
  $region3: #{encoder_decoder_forward.6} parent=0 // loop_header
    %s23 = sphi 0, %s27
    %p24 = scmp.ge.s32.totalorder %s23, 4
    %s33 = sphi 0, %s35
    %s36 = sphi 0, %s33
    %s37 = sphi 0, %s36
    %s53 = sphi 0, %s37
    %s59 = sphi 0, %s61
    %s62 = sphi 0, %s59
    %s63 = sphi 0, %s62
    %s79 = sphi 0, %s63
    %s85 = sphi 0, %s87
    %s88 = sphi 0, %s85
    %s89 = sphi 0, %s88
    %s105 = sphi 0, %s89
    %s109 = sphi 0, %s109
    %s111 = sphi 0, %s109
    %s112 = sphi 0, %s111
    %s126 = sphi 0, %s112
    %s130 = sphi 0, %s130
    %s132 = sphi 0, %s130
    %s133 = sphi 0, %s132
    %s147 = sphi 0, %s133
    %s151 = sphi 0, %s151
    %s153 = sphi 0, %s151
    %s154 = sphi 0, %s153
    %s168 = sphi 0, %s154
    %s172 = sphi 0, %s172
    %s174 = sphi 0, %s172
    %s175 = sphi 0, %s174
    %s189 = sphi 0, %s175
    %s193 = sphi 0, %s193
    %s195 = sphi 0, %s193
    %s196 = sphi 0, %s195
    %s210 = sphi 0, %s196
    %s214 = sphi 0, %s214
    %s216 = sphi 0, %s214
    %s217 = sphi 0, %s216
    %s231 = sphi 0, %s217
    %s235 = sphi 0, %s235
    %s237 = sphi 0, %s235
    %s238 = sphi 0, %s237
    %s252 = sphi 0, %s238
    %s256 = sphi 0, %s256
    %s258 = sphi 0, %s256
    %s259 = sphi 0, %s258
    %s273 = sphi 0, %s259
    %s277 = sphi 0, %s277
    %s279 = sphi 0, %s277
    %s280 = sphi 0, %s279
    %s294 = sphi 0, %s280
    %s298 = sphi 0, %s298
    %s300 = sphi 0, %s298
    %s301 = sphi 0, %s300
    %s315 = sphi 0, %s301
    %s319 = sphi 0, %s319
    %s321 = sphi 0, %s319
    %s322 = sphi 0, %s321
    %s336 = sphi 0, %s322
    %s340 = sphi 0, %s340
    %s342 = sphi 0, %s340
    %s343 = sphi 0, %s342
    %s357 = sphi 0, %s343
    %s361 = sphi 0, %s361
    %s363 = sphi 0, %s361
    %s364 = sphi 0, %s363
    %s378 = sphi 0, %s364
    %s382 = sphi 0, %s382
    %s384 = sphi 0, %s382
    %s385 = sphi 0, %s384
    %s399 = sphi 0, %s385
    %s405 = sphi 0, %s407
    %s408 = sphi 0, %s405
    %s409 = sphi 0, %s408
    %s425 = sphi 0, %s409
  $region4: #{encoder_decoder_forward.6} parent=0 // loop_header_branch
    %26 = sbr.rel (%p24) target = $region8
  $region5: #{encoder_decoder_forward.6} parent=0 // loop_body
    %s28 = ssub.s32 %s23, 1
    %s29 = ssub.s32 %s23, 2
    %s30 = sadd.s32 %s23, 1
    %s31 = ssub.s32 %s23, %s30
    %p32 = scmp.eq.s32.totalorder %s31, 0
    %s34 = sadd.s32 %s33, 1
    %s35 = scalar_select %p32, %s33, %s34
    %p38 = pneg %p32
    %p39 = scmp.eq.s32.totalorder %s23, 1
    %p40 = por %p38, %p39
    %p41 = scmp.ne.s32.totalorder %s33, %s36
    %p42 = scmp.eq.s32.totalorder %s23, 0
    %p43 = por %p41, %p42
    %p44 = scmp.ne.s32.totalorder %s33, %s36
    %p45 = scmp.eq.s32.totalorder %s28, 1
    %p46 = por %p44, %p45
    %p47 = scmp.ne.s32.totalorder %s36, %s37
    %p48 = scmp.eq.s32.totalorder %s28, 0
    %p49 = por %p47, %p48
    %p50 = scmp.ne.s32.totalorder %s36, %s37
    %p51 = scmp.eq.s32.totalorder %s29, 1
    %p52 = por %p50, %p51
    %p54 = scmp.ne.s32.totalorder %s37, %s53
    %p55 = scmp.eq.s32.totalorder %s29, 0
    %p56 = por %p54, %p55
    %s57 = ssub.s32 %s23, %s30
    %p58 = scmp.eq.s32.totalorder %s57, 0
    %s60 = sadd.s32 %s59, 1
    %s61 = scalar_select %p58, %s59, %s60
    %p64 = pneg %p58
    %p65 = scmp.eq.s32.totalorder %s23, 1
    %p66 = por %p64, %p65
    %p67 = scmp.ne.s32.totalorder %s59, %s62
    %p68 = scmp.eq.s32.totalorder %s23, 0
    %p69 = por %p67, %p68
    %p70 = scmp.ne.s32.totalorder %s59, %s62
    %p71 = scmp.eq.s32.totalorder %s28, 1
    %p72 = por %p70, %p71
    %p73 = scmp.ne.s32.totalorder %s62, %s63
    %p74 = scmp.eq.s32.totalorder %s28, 0
    %p75 = por %p73, %p74
    %p76 = scmp.ne.s32.totalorder %s62, %s63
    %p77 = scmp.eq.s32.totalorder %s29, 1
    %p78 = por %p76, %p77
    %p80 = scmp.ne.s32.totalorder %s63, %s79
    %p81 = scmp.eq.s32.totalorder %s29, 0
    %p82 = por %p80, %p81
    %s83 = ssub.s32 %s23, %s30
    %p84 = scmp.eq.s32.totalorder %s83, 0
    %s86 = sadd.s32 %s85, 1
    %s87 = scalar_select %p84, %s85, %s86
    %p90 = pneg %p84
    %p91 = scmp.eq.s32.totalorder %s23, 1
    %p92 = por %p90, %p91
    %p93 = scmp.ne.s32.totalorder %s85, %s88
    %p94 = scmp.eq.s32.totalorder %s23, 0
    %p95 = por %p93, %p94
    %p96 = scmp.ne.s32.totalorder %s85, %s88
    %p97 = scmp.eq.s32.totalorder %s28, 1
    %p98 = por %p96, %p97
    %p99 = scmp.ne.s32.totalorder %s88, %s89
    %p100 = scmp.eq.s32.totalorder %s28, 0
    %p101 = por %p99, %p100
    %p102 = scmp.ne.s32.totalorder %s88, %s89
    %p103 = scmp.eq.s32.totalorder %s29, 1
    %p104 = por %p102, %p103
    %p106 = scmp.ne.s32.totalorder %s89, %s105
    %p107 = scmp.eq.s32.totalorder %s29, 0
    %p108 = por %p106, %p107
    %s110 = sadd.s32 %s109, 1
    %p113 = scmp.eq.s32.totalorder %s23, 1
    %p114 = scmp.ne.s32.totalorder %s109, %s111
    %p115 = scmp.eq.s32.totalorder %s23, 0
    %p116 = por %p114, %p115
    %p117 = scmp.ne.s32.totalorder %s109, %s111
    %p118 = scmp.eq.s32.totalorder %s28, 1
    %p119 = por %p117, %p118
    %p120 = scmp.ne.s32.totalorder %s111, %s112
    %p121 = scmp.eq.s32.totalorder %s28, 0
    %p122 = por %p120, %p121
    %p123 = scmp.ne.s32.totalorder %s111, %s112
    %p124 = scmp.eq.s32.totalorder %s29, 1
    %p125 = por %p123, %p124
    %p127 = scmp.ne.s32.totalorder %s112, %s126
    %p128 = scmp.eq.s32.totalorder %s29, 0
    %p129 = por %p127, %p128
    %s131 = sadd.s32 %s130, 1
    %p134 = scmp.eq.s32.totalorder %s23, 1
    %p135 = scmp.ne.s32.totalorder %s130, %s132
    %p136 = scmp.eq.s32.totalorder %s23, 0
    %p137 = por %p135, %p136
    %p138 = scmp.ne.s32.totalorder %s130, %s132
    %p139 = scmp.eq.s32.totalorder %s28, 1
    %p140 = por %p138, %p139
    %p141 = scmp.ne.s32.totalorder %s132, %s133
    %p142 = scmp.eq.s32.totalorder %s28, 0
    %p143 = por %p141, %p142
    %p144 = scmp.ne.s32.totalorder %s132, %s133
    %p145 = scmp.eq.s32.totalorder %s29, 1
    %p146 = por %p144, %p145
    %p148 = scmp.ne.s32.totalorder %s133, %s147
    %p149 = scmp.eq.s32.totalorder %s29, 0
    %p150 = por %p148, %p149
    %s152 = sadd.s32 %s151, 1
    %p155 = scmp.eq.s32.totalorder %s23, 1
    %p156 = scmp.ne.s32.totalorder %s151, %s153
    %p157 = scmp.eq.s32.totalorder %s23, 0
    %p158 = por %p156, %p157
    %p159 = scmp.ne.s32.totalorder %s151, %s153
    %p160 = scmp.eq.s32.totalorder %s28, 1
    %p161 = por %p159, %p160
    %p162 = scmp.ne.s32.totalorder %s153, %s154
    %p163 = scmp.eq.s32.totalorder %s28, 0
    %p164 = por %p162, %p163
    %p165 = scmp.ne.s32.totalorder %s153, %s154
    %p166 = scmp.eq.s32.totalorder %s29, 1
    %p167 = por %p165, %p166
    %p169 = scmp.ne.s32.totalorder %s154, %s168
    %p170 = scmp.eq.s32.totalorder %s29, 0
    %p171 = por %p169, %p170
    %s173 = sadd.s32 %s172, 1
    %p176 = scmp.eq.s32.totalorder %s23, 1
    %p177 = scmp.ne.s32.totalorder %s172, %s174
    %p178 = scmp.eq.s32.totalorder %s23, 0
    %p179 = por %p177, %p178
    %p180 = scmp.ne.s32.totalorder %s172, %s174
    %p181 = scmp.eq.s32.totalorder %s28, 1
    %p182 = por %p180, %p181
    %p183 = scmp.ne.s32.totalorder %s174, %s175
    %p184 = scmp.eq.s32.totalorder %s28, 0
    %p185 = por %p183, %p184
    %p186 = scmp.ne.s32.totalorder %s174, %s175
    %p187 = scmp.eq.s32.totalorder %s29, 1
    %p188 = por %p186, %p187
    %p190 = scmp.ne.s32.totalorder %s175, %s189
    %p191 = scmp.eq.s32.totalorder %s29, 0
    %p192 = por %p190, %p191
    %s194 = sadd.s32 %s193, 1
    %p197 = scmp.eq.s32.totalorder %s23, 1
    %p198 = scmp.ne.s32.totalorder %s193, %s195
    %p199 = scmp.eq.s32.totalorder %s23, 0
    %p200 = por %p198, %p199
    %p201 = scmp.ne.s32.totalorder %s193, %s195
    %p202 = scmp.eq.s32.totalorder %s28, 1
    %p203 = por %p201, %p202
    %p204 = scmp.ne.s32.totalorder %s195, %s196
    %p205 = scmp.eq.s32.totalorder %s28, 0
    %p206 = por %p204, %p205
    %p207 = scmp.ne.s32.totalorder %s195, %s196
    %p208 = scmp.eq.s32.totalorder %s29, 1
    %p209 = por %p207, %p208
    %p211 = scmp.ne.s32.totalorder %s196, %s210
    %p212 = scmp.eq.s32.totalorder %s29, 0
    %p213 = por %p211, %p212
    %s215 = sadd.s32 %s214, 1
    %p218 = scmp.eq.s32.totalorder %s23, 1
    %p219 = scmp.ne.s32.totalorder %s214, %s216
    %p220 = scmp.eq.s32.totalorder %s23, 0
    %p221 = por %p219, %p220
    %p222 = scmp.ne.s32.totalorder %s214, %s216
    %p223 = scmp.eq.s32.totalorder %s28, 1
    %p224 = por %p222, %p223
    %p225 = scmp.ne.s32.totalorder %s216, %s217
    %p226 = scmp.eq.s32.totalorder %s28, 0
    %p227 = por %p225, %p226
    %p228 = scmp.ne.s32.totalorder %s216, %s217
    %p229 = scmp.eq.s32.totalorder %s29, 1
    %p230 = por %p228, %p229
    %p232 = scmp.ne.s32.totalorder %s217, %s231
    %p233 = scmp.eq.s32.totalorder %s29, 0
    %p234 = por %p232, %p233
    %s236 = sadd.s32 %s235, 1
    %p239 = scmp.eq.s32.totalorder %s23, 1
    %p240 = scmp.ne.s32.totalorder %s235, %s237
    %p241 = scmp.eq.s32.totalorder %s23, 0
    %p242 = por %p240, %p241
    %p243 = scmp.ne.s32.totalorder %s235, %s237
    %p244 = scmp.eq.s32.totalorder %s28, 1
    %p245 = por %p243, %p244
    %p246 = scmp.ne.s32.totalorder %s237, %s238
    %p247 = scmp.eq.s32.totalorder %s28, 0
    %p248 = por %p246, %p247
    %p249 = scmp.ne.s32.totalorder %s237, %s238
    %p250 = scmp.eq.s32.totalorder %s29, 1
    %p251 = por %p249, %p250
    %p253 = scmp.ne.s32.totalorder %s238, %s252
    %p254 = scmp.eq.s32.totalorder %s29, 0
    %p255 = por %p253, %p254
    %s257 = sadd.s32 %s256, 1
    %p260 = scmp.eq.s32.totalorder %s23, 1
    %p261 = scmp.ne.s32.totalorder %s256, %s258
    %p262 = scmp.eq.s32.totalorder %s23, 0
    %p263 = por %p261, %p262
    %p264 = scmp.ne.s32.totalorder %s256, %s258
    %p265 = scmp.eq.s32.totalorder %s28, 1
    %p266 = por %p264, %p265
    %p267 = scmp.ne.s32.totalorder %s258, %s259
    %p268 = scmp.eq.s32.totalorder %s28, 0
    %p269 = por %p267, %p268
    %p270 = scmp.ne.s32.totalorder %s258, %s259
    %p271 = scmp.eq.s32.totalorder %s29, 1
    %p272 = por %p270, %p271
    %p274 = scmp.ne.s32.totalorder %s259, %s273
    %p275 = scmp.eq.s32.totalorder %s29, 0
    %p276 = por %p274, %p275
    %s278 = sadd.s32 %s277, 1
    %p281 = scmp.eq.s32.totalorder %s23, 1
    %p282 = scmp.ne.s32.totalorder %s277, %s279
    %p283 = scmp.eq.s32.totalorder %s23, 0
    %p284 = por %p282, %p283
    %p285 = scmp.ne.s32.totalorder %s277, %s279
    %p286 = scmp.eq.s32.totalorder %s28, 1
    %p287 = por %p285, %p286
    %p288 = scmp.ne.s32.totalorder %s279, %s280
    %p289 = scmp.eq.s32.totalorder %s28, 0
    %p290 = por %p288, %p289
    %p291 = scmp.ne.s32.totalorder %s279, %s280
    %p292 = scmp.eq.s32.totalorder %s29, 1
    %p293 = por %p291, %p292
    %p295 = scmp.ne.s32.totalorder %s280, %s294
    %p296 = scmp.eq.s32.totalorder %s29, 0
    %p297 = por %p295, %p296
    %s299 = sadd.s32 %s298, 1
    %p302 = scmp.eq.s32.totalorder %s23, 1
    %p303 = scmp.ne.s32.totalorder %s298, %s300
    %p304 = scmp.eq.s32.totalorder %s23, 0
    %p305 = por %p303, %p304
    %p306 = scmp.ne.s32.totalorder %s298, %s300
    %p307 = scmp.eq.s32.totalorder %s28, 1
    %p308 = por %p306, %p307
    %p309 = scmp.ne.s32.totalorder %s300, %s301
    %p310 = scmp.eq.s32.totalorder %s28, 0
    %p311 = por %p309, %p310
    %p312 = scmp.ne.s32.totalorder %s300, %s301
    %p313 = scmp.eq.s32.totalorder %s29, 1
    %p314 = por %p312, %p313
    %p316 = scmp.ne.s32.totalorder %s301, %s315
    %p317 = scmp.eq.s32.totalorder %s29, 0
    %p318 = por %p316, %p317
    %s320 = sadd.s32 %s319, 1
    %p323 = scmp.eq.s32.totalorder %s23, 1
    %p324 = scmp.ne.s32.totalorder %s319, %s321
    %p325 = scmp.eq.s32.totalorder %s23, 0
    %p326 = por %p324, %p325
    %p327 = scmp.ne.s32.totalorder %s319, %s321
    %p328 = scmp.eq.s32.totalorder %s28, 1
    %p329 = por %p327, %p328
    %p330 = scmp.ne.s32.totalorder %s321, %s322
    %p331 = scmp.eq.s32.totalorder %s28, 0
    %p332 = por %p330, %p331
    %p333 = scmp.ne.s32.totalorder %s321, %s322
    %p334 = scmp.eq.s32.totalorder %s29, 1
    %p335 = por %p333, %p334
    %p337 = scmp.ne.s32.totalorder %s322, %s336
    %p338 = scmp.eq.s32.totalorder %s29, 0
    %p339 = por %p337, %p338
    %s341 = sadd.s32 %s340, 1
    %p344 = scmp.eq.s32.totalorder %s23, 1
    %p345 = scmp.ne.s32.totalorder %s340, %s342
    %p346 = scmp.eq.s32.totalorder %s23, 0
    %p347 = por %p345, %p346
    %p348 = scmp.ne.s32.totalorder %s340, %s342
    %p349 = scmp.eq.s32.totalorder %s28, 1
    %p350 = por %p348, %p349
    %p351 = scmp.ne.s32.totalorder %s342, %s343
    %p352 = scmp.eq.s32.totalorder %s28, 0
    %p353 = por %p351, %p352
    %p354 = scmp.ne.s32.totalorder %s342, %s343
    %p355 = scmp.eq.s32.totalorder %s29, 1
    %p356 = por %p354, %p355
    %p358 = scmp.ne.s32.totalorder %s343, %s357
    %p359 = scmp.eq.s32.totalorder %s29, 0
    %p360 = por %p358, %p359
    %s362 = sadd.s32 %s361, 1
    %p365 = scmp.eq.s32.totalorder %s23, 1
    %p366 = scmp.ne.s32.totalorder %s361, %s363
    %p367 = scmp.eq.s32.totalorder %s23, 0
    %p368 = por %p366, %p367
    %p369 = scmp.ne.s32.totalorder %s361, %s363
    %p370 = scmp.eq.s32.totalorder %s28, 1
    %p371 = por %p369, %p370
    %p372 = scmp.ne.s32.totalorder %s363, %s364
    %p373 = scmp.eq.s32.totalorder %s28, 0
    %p374 = por %p372, %p373
    %p375 = scmp.ne.s32.totalorder %s363, %s364
    %p376 = scmp.eq.s32.totalorder %s29, 1
    %p377 = por %p375, %p376
    %p379 = scmp.ne.s32.totalorder %s364, %s378
    %p380 = scmp.eq.s32.totalorder %s29, 0
    %p381 = por %p379, %p380
    %s383 = sadd.s32 %s382, 1
    %p386 = scmp.eq.s32.totalorder %s23, 1
    %p387 = scmp.ne.s32.totalorder %s382, %s384
    %p388 = scmp.eq.s32.totalorder %s23, 0
    %p389 = por %p387, %p388
    %p390 = scmp.ne.s32.totalorder %s382, %s384
    %p391 = scmp.eq.s32.totalorder %s28, 1
    %p392 = por %p390, %p391
    %p393 = scmp.ne.s32.totalorder %s384, %s385
    %p394 = scmp.eq.s32.totalorder %s28, 0
    %p395 = por %p393, %p394
    %p396 = scmp.ne.s32.totalorder %s384, %s385
    %p397 = scmp.eq.s32.totalorder %s29, 1
    %p398 = por %p396, %p397
    %p400 = scmp.ne.s32.totalorder %s385, %s399
    %p401 = scmp.eq.s32.totalorder %s29, 0
    %p402 = por %p400, %p401
    %s403 = ssub.s32 %s23, %s30
    %p404 = scmp.eq.s32.totalorder %s403, 0
    %s406 = sadd.s32 %s405, 1
    %s407 = scalar_select %p404, %s405, %s406
    %p410 = pneg %p404
    %p411 = scmp.eq.s32.totalorder %s23, 1
    %p412 = por %p410, %p411
    %p413 = scmp.ne.s32.totalorder %s405, %s408
    %p414 = scmp.eq.s32.totalorder %s23, 0
    %p415 = por %p413, %p414
    %p416 = scmp.ne.s32.totalorder %s405, %s408
    %p417 = scmp.eq.s32.totalorder %s28, 1
    %p418 = por %p416, %p417
    %p419 = scmp.ne.s32.totalorder %s408, %s409
    %p420 = scmp.eq.s32.totalorder %s28, 0
    %p421 = por %p419, %p420
    %p422 = scmp.ne.s32.totalorder %s408, %s409
    %p423 = scmp.eq.s32.totalorder %s29, 1
    %p424 = por %p422, %p423
    %p426 = scmp.ne.s32.totalorder %s409, %s425
    %p427 = scmp.eq.s32.totalorder %s29, 0
    %p428 = por %p426, %p427
    %p429 = scmp.le.s32.totalorder 1, %s23
    %p430 = scmp.lt.s32.totalorder %s23, 3
    %p431 = pnand %p429, %p430
    %p432 = pneg %p431
    // Predicated region
    $region9: #{encoder_decoder_forward.6} parent=5 // pred_check
      _
    $region10: #{encoder_decoder_forward.6} parent=5 // pred_check_branch
      %434 = sbr.rel (%p431) target = $region12
    $region11: #{encoder_decoder_forward.6} parent=5 // pred_region
      %s435 = ssub.s32 %s23, 1
      // Predicated region
      $region13: #{encoder_decoder_forward.6} parent=11 // pred_check
        %p436 = pneg %p122
      $region14: #{encoder_decoder_forward.6} parent=11 // pred_check_branch
        %438 = sbr.rel (%p436) target = $region16
      $region15: #{encoder_decoder_forward.6} parent=11 // pred_region
        _
      $region16: #{encoder_decoder_forward.6} parent=11 // pred_fallthru
        _
      // Predicated region
      $region17: #{encoder_decoder_forward.6} parent=11 // pred_check
        %p439 = pneg %p143
      $region18: #{encoder_decoder_forward.6} parent=11 // pred_check_branch
        %441 = sbr.rel (%p439) target = $region20
      $region19: #{encoder_decoder_forward.6} parent=11 // pred_region
        _
      $region20: #{encoder_decoder_forward.6} parent=11 // pred_fallthru
        _
      // Predicated region
      $region21: #{encoder_decoder_forward.6} parent=11 // pred_check
        %p442 = pneg %p164
      $region22: #{encoder_decoder_forward.6} parent=11 // pred_check_branch
        %444 = sbr.rel (%p442) target = $region24
      $region23: #{encoder_decoder_forward.6} parent=11 // pred_region
        _
      $region24: #{encoder_decoder_forward.6} parent=11 // pred_fallthru
        _
      // Predicated region
      $region25: #{encoder_decoder_forward.6} parent=11 // pred_check
        %p445 = pneg %p185
      $region26: #{encoder_decoder_forward.6} parent=11 // pred_check_branch
        %447 = sbr.rel (%p445) target = $region28
      $region27: #{encoder_decoder_forward.6} parent=11 // pred_region
        _
      $region28: #{encoder_decoder_forward.6} parent=11 // pred_fallthru
        _
      // Predicated region
      $region29: #{encoder_decoder_forward.6} parent=11 // pred_check
        %p448 = pneg %p206
      $region30: #{encoder_decoder_forward.6} parent=11 // pred_check_branch
        %450 = sbr.rel (%p448) target = $region32
      $region31: #{encoder_decoder_forward.6} parent=11 // pred_region
        _
      $region32: #{encoder_decoder_forward.6} parent=11 // pred_fallthru
        _
      // Predicated region
      $region33: #{encoder_decoder_forward.6} parent=11 // pred_check
        %p451 = pneg %p227
      $region34: #{encoder_decoder_forward.6} parent=11 // pred_check_branch
        %453 = sbr.rel (%p451) target = $region36
      $region35: #{encoder_decoder_forward.6} parent=11 // pred_region
        _
      $region36: #{encoder_decoder_forward.6} parent=11 // pred_fallthru
        _
      // Predicated region
      $region37: #{encoder_decoder_forward.6} parent=11 // pred_check
        %p454 = pneg %p248
      $region38: #{encoder_decoder_forward.6} parent=11 // pred_check_branch
        %456 = sbr.rel (%p454) target = $region40
      $region39: #{encoder_decoder_forward.6} parent=11 // pred_region
        _
      $region40: #{encoder_decoder_forward.6} parent=11 // pred_fallthru
        _
      // Predicated region
      $region41: #{encoder_decoder_forward.6} parent=11 // pred_check
        %p457 = pneg %p269
      $region42: #{encoder_decoder_forward.6} parent=11 // pred_check_branch
        %459 = sbr.rel (%p457) target = $region44
      $region43: #{encoder_decoder_forward.6} parent=11 // pred_region
        _
      $region44: #{encoder_decoder_forward.6} parent=11 // pred_fallthru
        _
      // Predicated region
      $region45: #{encoder_decoder_forward.6} parent=11 // pred_check
        %p460 = pneg %p290
      $region46: #{encoder_decoder_forward.6} parent=11 // pred_check_branch
        %462 = sbr.rel (%p460) target = $region48
      $region47: #{encoder_decoder_forward.6} parent=11 // pred_region
        _
      $region48: #{encoder_decoder_forward.6} parent=11 // pred_fallthru
        _
      // Predicated region
      $region49: #{encoder_decoder_forward.6} parent=11 // pred_check
        %p463 = pneg %p311
      $region50: #{encoder_decoder_forward.6} parent=11 // pred_check_branch
        %465 = sbr.rel (%p463) target = $region52
      $region51: #{encoder_decoder_forward.6} parent=11 // pred_region
        _
      $region52: #{encoder_decoder_forward.6} parent=11 // pred_fallthru
        _
      // Predicated region
      $region53: #{encoder_decoder_forward.6} parent=11 // pred_check
        %p466 = pneg %p332
      $region54: #{encoder_decoder_forward.6} parent=11 // pred_check_branch
        %468 = sbr.rel (%p466) target = $region56
      $region55: #{encoder_decoder_forward.6} parent=11 // pred_region
        _
      $region56: #{encoder_decoder_forward.6} parent=11 // pred_fallthru
        _
      // Predicated region
      $region57: #{encoder_decoder_forward.6} parent=11 // pred_check
        %p469 = pneg %p353
      $region58: #{encoder_decoder_forward.6} parent=11 // pred_check_branch
        %471 = sbr.rel (%p469) target = $region60
      $region59: #{encoder_decoder_forward.6} parent=11 // pred_region
        _
      $region60: #{encoder_decoder_forward.6} parent=11 // pred_fallthru
        _
      // Predicated region
      $region61: #{encoder_decoder_forward.6} parent=11 // pred_check
        %p472 = pneg %p374
      $region62: #{encoder_decoder_forward.6} parent=11 // pred_check_branch
        %474 = sbr.rel (%p472) target = $region64
      $region63: #{encoder_decoder_forward.6} parent=11 // pred_region
        _
      $region64: #{encoder_decoder_forward.6} parent=11 // pred_fallthru
        _
      // Predicated region
      $region65: #{encoder_decoder_forward.6} parent=11 // pred_check
        %p475 = pneg %p395
      $region66: #{encoder_decoder_forward.6} parent=11 // pred_check_branch
        %477 = sbr.rel (%p475) target = $region68
      $region67: #{encoder_decoder_forward.6} parent=11 // pred_region
        _
      $region68: #{encoder_decoder_forward.6} parent=11 // pred_fallthru
        _
    $region12: #{encoder_decoder_forward.6} parent=5 // pred_fallthru
      _
    %p478 = scmp.lt.s32.totalorder %s23, 2
    // Predicated region
    $region69: #{encoder_decoder_forward.6} parent=5 // pred_check
      %p479 = pneg %p478
    $region70: #{encoder_decoder_forward.6} parent=5 // pred_check_branch
      %481 = sbr.rel (%p479) target = $region72
    $region71: #{encoder_decoder_forward.6} parent=5 // pred_region
      // Predicated region
      $region73: #{encoder_decoder_forward.6} parent=71 // pred_check
        %p482 = pneg %p43
      $region74: #{encoder_decoder_forward.6} parent=71 // pred_check_branch
        %484 = sbr.rel (%p482) target = $region76
      $region75: #{encoder_decoder_forward.6} parent=71 // pred_region
        %p485 = scmp.lt.s32.totalorder %s23, 1
        %s486 = scalar_select %p485, %s23, 1
        %s487 = smul.addr %s486, 2
        %s488 = smul.addr %s487, 4
        %s489 = scalar_lea.vmem %s0, %s488
      $region76: #{encoder_decoder_forward.6} parent=71 // pred_fallthru
        _
      // Predicated region
      $region77: #{encoder_decoder_forward.6} parent=71 // pred_check
        %p490 = pneg %p69
      $region78: #{encoder_decoder_forward.6} parent=71 // pred_check_branch
        %492 = sbr.rel (%p490) target = $region80
      $region79: #{encoder_decoder_forward.6} parent=71 // pred_region
        %p493 = scmp.lt.s32.totalorder %s23, 1
        %s494 = scalar_select %p493, %s23, 1
        %s495 = smul.addr %s494, 2
        %s496 = smul.addr %s495, 4
        %s497 = scalar_lea.vmem %s1, %s496
      $region80: #{encoder_decoder_forward.6} parent=71 // pred_fallthru
        _
      // Predicated region
      $region81: #{encoder_decoder_forward.6} parent=71 // pred_check
        %p498 = pneg %p95
      $region82: #{encoder_decoder_forward.6} parent=71 // pred_check_branch
        %500 = sbr.rel (%p498) target = $region84
      $region83: #{encoder_decoder_forward.6} parent=71 // pred_region
        %p501 = scmp.lt.s32.totalorder %s23, 1
        %s502 = scalar_select %p501, %s23, 1
        %s503 = scalar_lea.vmem %s2, %s502
      $region84: #{encoder_decoder_forward.6} parent=71 // pred_fallthru
        _
    $region72: #{encoder_decoder_forward.6} parent=5 // pred_fallthru
      _
    %p504 = scmp.le.s32.totalorder 1, %s23
    %p505 = scmp.lt.s32.totalorder %s23, 3
    %p506 = pnand %p504, %p505
    %p507 = pneg %p506
    // Predicated region
    $region85: #{encoder_decoder_forward.6} parent=5 // pred_check
      _
    $region86: #{encoder_decoder_forward.6} parent=5 // pred_check_branch
      %509 = sbr.rel (%p506) target = $region88
    $region87: #{encoder_decoder_forward.6} parent=5 // pred_region
      %s510 = ssub.s32 %s23, 1
      %p511 = scmp.lt.s32.totalorder %s28, 1
      %s512 = scalar_select %p511, %s28, 1
      %s513 = smul.addr %s512, 2
      %s514 = smul.addr %s513, 4
      %s515 = scalar_lea.vmem %s0, %s514
      %p516 = pneg %p49
      %p517 = pneg %p46
      %p518 = scmp.lt.s32.totalorder %s28, 1
      %s519 = scalar_select %p518, %s28, 1
      %s520 = smul.addr %s519, 2
      %s521 = smul.addr %s520, 4
      %s522 = scalar_lea.vmem %s1, %s521
      %p523 = pneg %p75
      %p524 = pneg %p72
      %p525 = scmp.lt.s32.totalorder %s28, 1
      %s526 = scalar_select %p525, %s28, 1
      %s527 = scalar_lea.vmem %s2, %s526
      %p528 = pneg %p101
      %p529 = pneg %p98
      %p530 = pneg %p122
      %p531 = pneg %p119
      %p532 = pneg %p143
      %p533 = pneg %p140
      %p534 = pneg %p164
      %p535 = pneg %p161
      %p536 = pneg %p185
      %p537 = pneg %p182
      %p538 = pneg %p206
      %p539 = pneg %p203
      %p540 = pneg %p227
      %p541 = pneg %p224
      %p542 = pneg %p248
      %p543 = pneg %p245
      %p544 = pneg %p269
      %p545 = pneg %p266
      %p546 = pneg %p290
      %p547 = pneg %p287
      %p548 = pneg %p311
      %p549 = pneg %p308
      %p550 = pneg %p332
      %p551 = pneg %p329
      %p552 = pneg %p353
      %p553 = pneg %p350
      %p554 = pneg %p374
      %p555 = pneg %p371
      %p556 = pneg %p395
      %p557 = pneg %p392
      %p558 = pneg %p421
      %p559 = pneg %p418
      %p560 = scmp.lt.s32.totalorder %s28, 1
      %s561 = scalar_select %p560, %s28, 1
      %s562 = smul.addr %s561, 2
      %s563 = smul.addr %s562, 4
      %s564 = scalar_lea.vmem %s17, %s563
      %p565 = scmp.lt.s32.totalorder %s28, 1
      %s566 = scalar_select %p565, %s28, 1
      %s567 = smul.addr %s566, 2
      %s568 = smul.addr %s567, 4
      %s569 = scalar_lea.vmem %s0, %s568
      %p570 = scmp.lt.s32.totalorder %s28, 1
      %s571 = scalar_select %p570, %s28, 1
      %s572 = smul.addr %s571, 2
      %s573 = smul.addr %s572, 4
      %s574 = scalar_lea.vmem %s1, %s573
      %p575 = scmp.lt.s32.totalorder %s28, 1
      %s576 = scalar_select %p575, %s28, 1
      %s577 = scalar_lea.vmem %s2, %s576
      %p578 = scmp.lt.s32.totalorder %s28, 1
      %s579 = scalar_select %p578, %s28, 1
      %s580 = smul.addr %s579, 2
      %s581 = smul.addr %s580, 4
      %s582 = scalar_lea.vmem %s17, %s581
      %v584 = vld [vmem:[%s569] sm:$0xf]
      %v585 = vld [vmem:[%s569 + $0x4] sm:$0xf]
      %v586 = vld [vmem:[%s574] sm:$0xf]
      %v587 = vld [vmem:[%s574 + $0x4] sm:$0xf]
      %v588 = vld [vmem:[%s3] sm:$0xf]
      %v589 = vld [vmem:[%s3 + $0x4] sm:$0xf]
      %v590 = vld [vmem:[%s3 + $0x8] sm:$0xf]
      %v591 = vld [vmem:[%s3 + $0xc] sm:$0xf]
      %v592 = vld [vmem:[%s3 + $0x10] sm:$0xf]
      %v593 = vld [vmem:[%s3 + $0x14] sm:$0xf]
      %v594 = vld [vmem:[%s3 + $0x18] sm:$0xf]
      %v595 = vld [vmem:[%s3 + $0x1c] sm:$0xf]
      %v596 = vld [vmem:[%s3 + $0x20] sm:$0xf]
      %v597 = vld [vmem:[%s3 + $0x24] sm:$0xf]
      %v598 = vld [vmem:[%s3 + $0x28] sm:$0xf]
      %v599 = vld [vmem:[%s3 + $0x2c] sm:$0xf]
      %v600 = vld [vmem:[%s3 + $0x30] sm:$0xf]
      %v601 = vld [vmem:[%s3 + $0x34] sm:$0xf]
      %v602 = vld [vmem:[%s3 + $0x38] sm:$0xf]
      %v603 = vld [vmem:[%s3 + $0x3c] sm:$0xf]
      %v604 = vld [vmem:[%s4] sm:$0xf]
      %v607 = vunpack.c.l.b16 %v586
      %v608 = vunpack.c.l.b16 %v587
      %v609 = vpack.c.b16 %v608, %v607
      %vm610 = vcmask 64512
      %v612 = vsel %vm610, %v609, 0
      %vm614 = vcmask 1043456
      %v616 = vsel %vm614, %v604, 0
      %618 = vmatpush.bf16.msra.mxu0 0
      %619 = vmatpush.bf16.msra.mxu0 0
      %620 = vmatpush.bf16.msra.mxu0 0
      %621 = vmatpush.bf16.msra.mxu0 0
      %622 = vmatpush.bf16.msra.mxu0 0
      %623 = vmatpush.bf16.msra.mxu0 0
      %624 = vmatpush.bf16.msra.mxu0 0
      %625 = vmatpush.bf16.msra.mxu0 %v616
      %626 = vmatmul.bf16.gmra.mxu0 %v612
      %v627 = vpop.f32.mrf.mxu0
      %v628 = vadd.f32 0.0, %v627
      %v629 = vpop.f32.mrf.mxu0
      %v630 = vadd.f32 0.0, %v629
      %631 = vdwg.mxu0
      %v634 = vunpack.c.l.b16 %v584
      %v635 = vunpack.c.l.b16 %v585
      %v636 = vpack.c.b16 %v635, %v634
      %v654 = vunpack.c.l.b16 %v588
      %v655 = vunpack.c.l.b16 %v589
      %v656 = vunpack.c.l.b16 %v590
      %v657 = vunpack.c.l.b16 %v591
      %v658 = vunpack.c.l.b16 %v592
      %v659 = vunpack.c.l.b16 %v593
      %v660 = vunpack.c.l.b16 %v594
      %v661 = vunpack.c.l.b16 %v595
      %v662 = vunpack.c.l.b16 %v596
      %v663 = vunpack.c.l.b16 %v597
      %v664 = vunpack.c.l.b16 %v598
      %v665 = vunpack.c.l.b16 %v599
      %v666 = vunpack.c.l.b16 %v600
      %v667 = vunpack.c.l.b16 %v601
      %v668 = vunpack.c.l.b16 %v602
      %v669 = vunpack.c.l.b16 %v603
      %v670 = vpack.c.b16 %v655, %v654
      %v671 = vpack.c.b16 %v657, %v656
      %v672 = vpack.c.b16 %v659, %v658
      %v673 = vpack.c.b16 %v661, %v660
      %v674 = vpack.c.b16 %v663, %v662
      %v675 = vpack.c.b16 %v665, %v664
      %v676 = vpack.c.b16 %v667, %v666
      %v677 = vpack.c.b16 %v669, %v668
      %686 = vmatpush.bf16.msra.mxu0 %v677
      %687 = vmatpush.bf16.msra.mxu0 %v676
      %688 = vmatpush.bf16.msra.mxu0 %v675
      %689 = vmatpush.bf16.msra.mxu0 %v674
      %690 = vmatpush.bf16.msra.mxu0 %v673
      %691 = vmatpush.bf16.msra.mxu0 %v672
      %692 = vmatpush.bf16.msra.mxu0 %v671
      %693 = vmatpush.bf16.msra.mxu0 %v670
      %694 = vmatmul.bf16.gmra.mxu0 %v636
      %v695 = vpop.f32.mrf.mxu0
      %v696 = vadd.f32 %v628, %v695
      %v697 = vpop.f32.mrf.mxu0
      %v698 = vadd.f32 %v630, %v697
      %699 = vdwg.mxu0
      %v700 = vld [vmem:[%s577] sm:$0x1]
      %v702 = vperm.slane %v700, 0
      %v704 = vadd.f32 %v696, %v702
      %v705 = vadd.f32 %v698, %v702
      %vm706 = vcmask 15360
      %v707 = vsel %vm706, %v704, 0.0
      %708 = vadd.xlane.f32.xlu0 %v707
      %v709 = vpop.xlane.xlu0 %708
      %v710 = vsel %vm706, %v705, 0.0
      %711 = vadd.xlane.f32.xlu0 %v710
      %v712 = vpop.xlane.xlu0 %711
      %v713 = vrcp.pop 2.0
      %v714 = vmul.f32 2.0, %v713
      %v715 = vsub.f32 1.0, %v714
      %v716 = vmul.f32 %v713, %v715
      %v717 = vadd.f32 %v713, %v716
      %vm718 = vweird.f32 %v713
      %v719 = vsel %vm718, %v713, %v717
      %v720 = vmul.f32 %v709, %v719
      %v721 = vmul.f32 %v712, %v719
      %v722 = vsub.f32 %v704, %v720
      %v723 = vsub.f32 %v705, %v721
      %v724 = vmul.f32 %v722, %v722
      %v725 = vmul.f32 %v723, %v723
      %v726 = vsel %vm706, %v724, 0.0
      %727 = vadd.xlane.f32.xlu0 %v726
      %v728 = vpop.xlane.xlu0 %727
      %v729 = vsel %vm706, %v725, 0.0
      %730 = vadd.xlane.f32.xlu0 %v729
      %v731 = vpop.xlane.xlu0 %730
      %v732 = vmul.f32 %v728, %v719
      %v733 = vmul.f32 %v731, %v719
      %v734 = vadd.f32 %v732, 1e-05
      %v735 = vadd.f32 %v733, 1e-05
      %v736 = vrsqrt.pop %v734
      %v737 = vmul.f32 %v736, %v734
      %v738 = vmul.f32 %v737, %v736
      %v739 = vmul.f32 0.5, %v738
      %v740 = vsub.f32 1.5, %v739
      %v741 = vmul.f32 %v736, %v740
      %vm742 = vweird.f32 %v734
      %vm743 = vweird.f32 %v736
      %vm744 = vmor %vm742, %vm743
      %v745 = vsel %vm744, %v736, %v741
      %v746 = vrsqrt.pop %v735
      %v747 = vmul.f32 %v746, %v735
      %v748 = vmul.f32 %v747, %v746
      %v749 = vmul.f32 0.5, %v748
      %v750 = vsub.f32 1.5, %v749
      %v751 = vmul.f32 %v746, %v750
      %vm752 = vweird.f32 %v735
      %vm753 = vweird.f32 %v746
      %vm754 = vmor %vm752, %vm753
      %v755 = vsel %vm754, %v746, %v751
      %v756 = vmul.f32 %v722, %v745
      %v757 = vmul.f32 %v723, %v755
      %v758 = vld [vmem:[%s5] sm:$0x1]
      %v760 = vperm.slane %v758, 0
      %v762 = vmul.f32 %v756, %v760
      %v763 = vmul.f32 %v757, %v760
      %v764 = vld [vmem:[%s6] sm:$0x1]
      %v766 = vperm.slane %v764, 0
      %v768 = vadd.f32 %v762, %v766
      %v769 = vadd.f32 %v763, %v766
      %v770 = vpack.c.bf16 %v769, %v768
      %v771 = vld [vmem:[%s7] sm:$0x1]
      %v773 = vsel %vm706, %v770, 0
      %vm775 = vcmask 1040384
      %v777 = vsel %vm775, %v771, 0
      %779 = vmatpush.bf16.msra.mxu0 0
      %780 = vmatpush.bf16.msra.mxu0 0
      %781 = vmatpush.bf16.msra.mxu0 0
      %782 = vmatpush.bf16.msra.mxu0 0
      %783 = vmatpush.bf16.msra.mxu0 0
      %784 = vmatpush.bf16.msra.mxu0 0
      %785 = vmatpush.bf16.msra.mxu0 0
      %786 = vmatpush.bf16.msra.mxu0 %v777
      %787 = vmatmul.bf16.gmra.mxu0 %v773
      %v788 = vpop.f32.mrf.mxu0
      %v789 = vadd.f32 0.0, %v788
      %v790 = vpop.f32.mrf.mxu0
      %v791 = vadd.f32 0.0, %v790
      %792 = vdwg.mxu0
      %v793 = vlaneseq
      %v794 = vshrl.u32 %v793, 7
      %v795 = vadd.s32 %v794, 8
      %v796 = vlaneseq
      %v797 = vand.u32 %v796, 127
      %vm798 = vcmp.eq.s32.totalorder %v794, %v797
      %vm799 = vcmp.eq.s32.totalorder %v795, %v797
      %v800 = vpack.c.bf16 %v789, %v789
      %v801 = vpack.c.bf16 %v791, %v791
      %v804 = vunpack.c.l.b16 %v800
      %v805 = vunpack.c.l.b16 %v801
      %v806 = vpack.c.b16 %v805, %v804
      %807 = vrot.lane.b32.xlu0 %v806, 120
      %v808 = vpop.permute.xlu0 %807
      %vm809 = vcmask 31744
      %v811 = vsel %vm809, %v806, 0
      %v814 = vsel %vm809, %v808, 0
      %816 = vmatpush.bf16.xpose.msra.mxu0 0
      %817 = vmatpush.bf16.xpose.msra.mxu0 0
      %818 = vmatpush.bf16.xpose.msra.mxu0 0
      %819 = vmatpush.bf16.xpose.msra.mxu0 0
      %820 = vmatpush.bf16.xpose.msra.mxu0 0
      %821 = vmatpush.bf16.xpose.msra.mxu0 0
      %822 = vmatpush.bf16.xpose.msra.mxu0 0
      %823 = vmatpush.bf16.xpose.msra.mxu0 %v814
      %824 = vmatmul.bf16.gmra.mxu0 %v811
      %v825 = vpop.f32.mrf.mxu0
      %v826 = vadd.f32 0.0, %v825
      %v827 = vpop.f32.mrf.mxu0
      %v828 = vadd.f32 0.0, %v827
      %829 = vdwg.mxu0
      %v830 = vsel %vm798, -1e+09, %v826
      %v831 = vsel %vm799, -1e+09, %v828
      %vm832 = vcmask 130048
      %v833 = vsel %vm832, %v830, -inf
      %834 = vmax.xlane.f32.xlu0 %v833
      %v835 = vpop.xlane.xlu0 %834
      %v836 = vsel %vm832, %v831, -inf
      %837 = vmax.xlane.f32.xlu0 %v836
      %v838 = vpop.xlane.xlu0 %837
      %v839 = vsub.f32 %v830, %v835
      %v840 = vsub.f32 %v831, %v838
      %v841 = vmul.f32 %v839, 1.442695
      %v842 = vpow.pop %v841
      %v843 = vmul.f32 %v840, 1.442695
      %v844 = vpow.pop %v843
      %v845 = vsel %vm832, %v842, 0.0
      %846 = vadd.xlane.f32.xlu0 %v845
      %v847 = vpop.xlane.xlu0 %846
      %v848 = vsel %vm832, %v844, 0.0
      %849 = vadd.xlane.f32.xlu0 %v848
      %v850 = vpop.xlane.xlu0 %849
      %v851 = vrcp.pop %v847
      %v852 = vrcp.pop %v850
      %v853 = vmul.f32 %v842, %v851
      %v854 = vmul.f32 %v844, %v852
      %v855 = vpack.c.bf16 %v853, %v853
      %v856 = vpack.c.bf16 %v854, %v854
      %v859 = vunpack.c.l.b16 %v855
      %v860 = vunpack.c.l.b16 %v856
      %v861 = vpack.c.b16 %v860, %v859
      %862 = vrot.lane.b32.xlu0 %v806, 112
      %v863 = vpop.permute.xlu0 %862
      %v866 = vsel %vm832, %v861, 0
      %868 = vmatpush.bf16.msra.mxu0 0
      %869 = vmatpush.bf16.msra.mxu0 0
      %870 = vmatpush.bf16.msra.mxu0 0
      %871 = vmatpush.bf16.msra.mxu0 0
      %872 = vmatpush.bf16.msra.mxu0 0
      %873 = vmatpush.bf16.msra.mxu0 0
      %874 = vmatpush.bf16.msra.mxu0 0
      %875 = vmatpush.bf16.msra.mxu0 %v863
      %876 = vmatmul.bf16.gmra.mxu0 %v866
      %v877 = vpop.f32.mrf.mxu0
      %v878 = vadd.f32 0.0, %v877
      %v879 = vpop.f32.mrf.mxu0
      %v880 = vadd.f32 0.0, %v879
      %881 = vdwg.mxu0
      %882 = vst.msk [vmem:[#allocation2] sm:$0xff] %vm809, %v878
      %883 = vst.msk [vmem:[#allocation2 + $0x8] sm:$0xff] %vm809, %v880
      %884 = vrot.lane.b32.xlu0 %v806, 124
      %v885 = vpop.permute.xlu0 %884
      %886 = vrot.lane.b32.xlu0 %v806, 116
      %v887 = vpop.permute.xlu0 %886
      %v889 = vsel %vm809, %v885, 0
      %v892 = vsel %vm809, %v887, 0
      %894 = vmatpush.bf16.xpose.msra.mxu0 0
      %895 = vmatpush.bf16.xpose.msra.mxu0 0
      %896 = vmatpush.bf16.xpose.msra.mxu0 0
      %897 = vmatpush.bf16.xpose.msra.mxu0 0
      %898 = vmatpush.bf16.xpose.msra.mxu0 0
      %899 = vmatpush.bf16.xpose.msra.mxu0 0
      %900 = vmatpush.bf16.xpose.msra.mxu0 0
      %901 = vmatpush.bf16.xpose.msra.mxu0 %v892
      %902 = vmatmul.bf16.gmra.mxu0 %v889
      %v903 = vpop.f32.mrf.mxu0
      %v904 = vadd.f32 0.0, %v903
      %v905 = vpop.f32.mrf.mxu0
      %v906 = vadd.f32 0.0, %v905
      %907 = vdwg.mxu0
      %v908 = vsel %vm798, -1e+09, %v904
      %v909 = vsel %vm799, -1e+09, %v906
      %v910 = vsel %vm832, %v908, -inf
      %911 = vmax.xlane.f32.xlu0 %v910
      %v912 = vpop.xlane.xlu0 %911
      %v913 = vsel %vm832, %v909, -inf
      %914 = vmax.xlane.f32.xlu0 %v913
      %v915 = vpop.xlane.xlu0 %914
      %v916 = vsub.f32 %v908, %v912
      %v917 = vsub.f32 %v909, %v915
      %v918 = vmul.f32 %v916, 1.442695
      %v919 = vpow.pop %v918
      %v920 = vmul.f32 %v917, 1.442695
      %v921 = vpow.pop %v920
      %v922 = vsel %vm832, %v919, 0.0
      %923 = vadd.xlane.f32.xlu0 %v922
      %v924 = vpop.xlane.xlu0 %923
      %v925 = vsel %vm832, %v921, 0.0
      %926 = vadd.xlane.f32.xlu0 %v925
      %v927 = vpop.xlane.xlu0 %926
      %v928 = vrcp.pop %v924
      %v929 = vrcp.pop %v927
      %v930 = vmul.f32 %v919, %v928
      %v931 = vmul.f32 %v921, %v929
      %v932 = vpack.c.bf16 %v930, %v930
      %v933 = vpack.c.bf16 %v931, %v931
      %v936 = vunpack.c.l.b16 %v932
      %v937 = vunpack.c.l.b16 %v933
      %v938 = vpack.c.b16 %v937, %v936
      %939 = vrot.lane.b32.xlu0 %v806, 108
      %v940 = vpop.permute.xlu0 %939
      %v943 = vsel %vm832, %v938, 0
      %945 = vmatpush.bf16.msra.mxu0 0
      %946 = vmatpush.bf16.msra.mxu0 0
      %947 = vmatpush.bf16.msra.mxu0 0
      %948 = vmatpush.bf16.msra.mxu0 0
      %949 = vmatpush.bf16.msra.mxu0 0
      %950 = vmatpush.bf16.msra.mxu0 0
      %951 = vmatpush.bf16.msra.mxu0 0
      %952 = vmatpush.bf16.msra.mxu0 %v940
      %953 = vmatmul.bf16.gmra.mxu0 %v943
      %v954 = vpop.f32.mrf.mxu0
      %v955 = vadd.f32 0.0, %v954
      %v956 = vpop.f32.mrf.mxu0
      %v957 = vadd.f32 0.0, %v956
      %958 = vdwg.mxu0
      %961 = vrot.lane.b32.xlu0 %v955, 4
      %v962 = vpop.permute.xlu0 %961
      %963 = vrot.lane.b32.xlu0 %v957, 4
      %v964 = vpop.permute.xlu0 %963
      %vm967 = vcmask 64544
      %968 = vst.msk [vmem:[#allocation2] sm:$0xff] %vm967, %v962
      %969 = vst.msk [vmem:[#allocation2 + $0x8] sm:$0xff] %vm967, %v964
      %v970 = vld [vmem:[#allocation2] sm:$0xff]
      %v971 = vld [vmem:[#allocation2 + $0x8] sm:$0xff]
      %v972 = vpack.c.bf16 %v971, %v970
      %v973 = vld [vmem:[%s8] sm:$0xf]
      %v975 = vsel %vm610, %v972, 0
      %v978 = vsel %vm614, %v973, 0
      %980 = vmatpush.bf16.msra.mxu0 0
      %981 = vmatpush.bf16.msra.mxu0 0
      %982 = vmatpush.bf16.msra.mxu0 0
      %983 = vmatpush.bf16.msra.mxu0 0
      %984 = vmatpush.bf16.msra.mxu0 0
      %985 = vmatpush.bf16.msra.mxu0 0
      %986 = vmatpush.bf16.msra.mxu0 0
      %987 = vmatpush.bf16.msra.mxu0 %v978
      %988 = vmatmul.bf16.gmra.mxu0 %v975
      %v989 = vpop.f32.mrf.mxu0
      %v990 = vadd.f32 %v704, %v989
      %v991 = vpop.f32.mrf.mxu0
      %v992 = vadd.f32 %v705, %v991
      %993 = vdwg.mxu0
      %v994 = vsel %vm706, %v990, 0.0
      %995 = vadd.xlane.f32.xlu0 %v994
      %v996 = vpop.xlane.xlu0 %995
      %v997 = vsel %vm706, %v992, 0.0
      %998 = vadd.xlane.f32.xlu0 %v997
      %v999 = vpop.xlane.xlu0 %998
      %v1000 = vmul.f32 %v996, %v719
      %v1001 = vmul.f32 %v999, %v719
      %v1002 = vsub.f32 %v990, %v1000
      %v1003 = vsub.f32 %v992, %v1001
      %v1004 = vmul.f32 %v1002, %v1002
      %v1005 = vmul.f32 %v1003, %v1003
      %v1006 = vsel %vm706, %v1004, 0.0
      %1007 = vadd.xlane.f32.xlu0 %v1006
      %v1008 = vpop.xlane.xlu0 %1007
      %v1009 = vsel %vm706, %v1005, 0.0
      %1010 = vadd.xlane.f32.xlu0 %v1009
      %v1011 = vpop.xlane.xlu0 %1010
      %v1012 = vmul.f32 %v1008, %v719
      %v1013 = vmul.f32 %v1011, %v719
      %v1014 = vadd.f32 %v1012, 1e-06
      %v1015 = vadd.f32 %v1013, 1e-06
      %v1016 = vrsqrt.pop %v1014
      %v1017 = vmul.f32 %v1016, %v1014
      %v1018 = vmul.f32 %v1017, %v1016
      %v1019 = vmul.f32 0.5, %v1018
      %v1020 = vsub.f32 1.5, %v1019
      %v1021 = vmul.f32 %v1016, %v1020
      %vm1022 = vweird.f32 %v1014
      %vm1023 = vweird.f32 %v1016
      %vm1024 = vmor %vm1022, %vm1023
      %v1025 = vsel %vm1024, %v1016, %v1021
      %v1026 = vrsqrt.pop %v1015
      %v1027 = vmul.f32 %v1026, %v1015
      %v1028 = vmul.f32 %v1027, %v1026
      %v1029 = vmul.f32 0.5, %v1028
      %v1030 = vsub.f32 1.5, %v1029
      %v1031 = vmul.f32 %v1026, %v1030
      %vm1032 = vweird.f32 %v1015
      %vm1033 = vweird.f32 %v1026
      %vm1034 = vmor %vm1032, %vm1033
      %v1035 = vsel %vm1034, %v1026, %v1031
      %v1036 = vmul.f32 %v1002, %v1025
      %v1037 = vmul.f32 %v1003, %v1035
      %v1038 = vld [vmem:[%s9] sm:$0x1]
      %v1040 = vperm.slane %v1038, 0
      %v1042 = vmul.f32 %v1036, %v1040
      %v1043 = vmul.f32 %v1037, %v1040
      %v1044 = vld [vmem:[%s10] sm:$0x1]
      %v1046 = vperm.slane %v1044, 0
      %v1048 = vadd.f32 %v1042, %v1046
      %v1049 = vadd.f32 %v1043, %v1046
      %v1050 = vpack.c.bf16 %v1049, %v1048
      %v1051 = vld [vmem:[%s11] sm:$0x1]
      %v1052 = vld [vmem:[%s12] sm:$0x1]
      %v1054 = vperm.slane %v1052, 0
      %v1057 = vsel %vm706, %v1050, 0
      %v1060 = vsel %vm775, %v1051, 0
      %1062 = vmatpush.bf16.msra.mxu0 0
      %1063 = vmatpush.bf16.msra.mxu0 0
      %1064 = vmatpush.bf16.msra.mxu0 0
      %1065 = vmatpush.bf16.msra.mxu0 0
      %1066 = vmatpush.bf16.msra.mxu0 0
      %1067 = vmatpush.bf16.msra.mxu0 0
      %1068 = vmatpush.bf16.msra.mxu0 0
      %1069 = vmatpush.bf16.msra.mxu0 %v1060
      %1070 = vmatmul.bf16.gmra.mxu0 %v1057
      %v1071 = vpop.f32.mrf.mxu0
      %v1072 = vadd.f32 %v1054, %v1071
      %v1073 = vpop.f32.mrf.mxu0
      %v1074 = vadd.f32 %v1054, %v1073
      %1075 = vdwg.mxu0
      %v1076 = vmax.f32 %v1072, 0.0
      %v1077 = vmax.f32 %v1074, 0.0
      %v1078 = vpack.c.bf16 %v1077, %v1076
      %v1079 = vld [vmem:[%s13] sm:$0xf]
      %v1080 = vld [vmem:[%s13 + $0x4] sm:$0xf]
      %v1081 = vld [vmem:[%s14] sm:$0x1]
      %v1083 = vperm.slane %v1081, 0
      %v1087 = vunpack.c.l.b16 %v1079
      %v1088 = vunpack.c.l.b16 %v1080
      %v1089 = vpack.c.b16 %v1088, %v1087
      %v1092 = vsel %vm832, %v1078, 0
      %1094 = vmatpush.bf16.msra.mxu0 0
      %1095 = vmatpush.bf16.msra.mxu0 0
      %1096 = vmatpush.bf16.msra.mxu0 0
      %1097 = vmatpush.bf16.msra.mxu0 0
      %1098 = vmatpush.bf16.msra.mxu0 0
      %1099 = vmatpush.bf16.msra.mxu0 0
      %1100 = vmatpush.bf16.msra.mxu0 0
      %1101 = vmatpush.bf16.msra.mxu0 %v1089
      %1102 = vmatmul.bf16.gmra.mxu0 %v1092
      %v1103 = vpop.f32.mrf.mxu0
      %v1104 = vadd.f32 %v1083, %v1103
      %v1105 = vpop.f32.mrf.mxu0
      %v1106 = vadd.f32 %v1083, %v1105
      %1107 = vdwg.mxu0
      %v1108 = vadd.f32 %v1104, %v990
      %v1109 = vadd.f32 %v1106, %v992
      %v1110 = vpack.c.bf16 %v1109, %v1108
      %v1111 = vld [vmem:[%s15] sm:$0x1]
      %v1112 = vld [vmem:[%s16] sm:$0x1]
      %v1114 = vperm.slane %v1112, 0
      %v1117 = vsel %vm706, %v1110, 0
      %v1120 = vsel %vm775, %v1111, 0
      %1122 = vmatpush.bf16.msra.mxu0 0
      %1123 = vmatpush.bf16.msra.mxu0 0
      %1124 = vmatpush.bf16.msra.mxu0 0
      %1125 = vmatpush.bf16.msra.mxu0 0
      %1126 = vmatpush.bf16.msra.mxu0 0
      %1127 = vmatpush.bf16.msra.mxu0 0
      %1128 = vmatpush.bf16.msra.mxu0 0
      %1129 = vmatpush.bf16.msra.mxu0 %v1120
      %1130 = vmatmul.bf16.gmra.mxu0 %v1117
      %v1131 = vpop.f32.mrf.mxu0
      %v1132 = vadd.f32 %v1114, %v1131
      %v1133 = vpop.f32.mrf.mxu0
      %v1134 = vadd.f32 %v1114, %v1133
      %1135 = vdwg.mxu0
      %v1136 = vpack.c.bf16 %v1132, %v1132
      %v1137 = vpack.c.bf16 %v1134, %v1134
      %1138 = vst [vmem:[%s582] sm:$0xf] %v1136
      %1139 = vst [vmem:[%s582 + $0x4] sm:$0xf] %v1137
      %p1140 = scmp.lt.s32.totalorder %s28, 1
      %s1141 = scalar_select %p1140, %s28, 1
      %s1142 = smul.addr %s1141, 2
      %s1143 = smul.addr %s1142, 4
      %s1144 = scalar_lea.vmem %s17, %s1143
      // Predicated region
      $region89: #{encoder_decoder_forward.6} parent=87 // pred_check
        %p1145 = pneg %p418
      $region90: #{encoder_decoder_forward.6} parent=87 // pred_check_branch
        %1147 = sbr.rel (%p1145) target = $region92
      $region91: #{encoder_decoder_forward.6} parent=87 // pred_region
        _
      $region92: #{encoder_decoder_forward.6} parent=87 // pred_fallthru
        _
    $region88: #{encoder_decoder_forward.6} parent=5 // pred_fallthru
      _
    %p1148 = scmp.le.s32.totalorder 2, %s23
    // Predicated region
    $region93: #{encoder_decoder_forward.6} parent=5 // pred_check
      %p1149 = pneg %p1148
    $region94: #{encoder_decoder_forward.6} parent=5 // pred_check_branch
      %1151 = sbr.rel (%p1149) target = $region96
    $region95: #{encoder_decoder_forward.6} parent=5 // pred_region
      %s1152 = ssub.s32 %s23, 2
      // Predicated region
      $region97: #{encoder_decoder_forward.6} parent=95 // pred_check
        %p1153 = pneg %p424
      $region98: #{encoder_decoder_forward.6} parent=95 // pred_check_branch
        %1155 = sbr.rel (%p1153) target = $region100
      $region99: #{encoder_decoder_forward.6} parent=95 // pred_region
        %p1156 = scmp.lt.s32.totalorder %s29, 1
        %s1157 = scalar_select %p1156, %s29, 1
        %s1158 = smul.addr %s1157, 2
        %s1159 = smul.addr %s1158, 4
        %s1160 = scalar_lea.vmem %s17, %s1159
      $region100: #{encoder_decoder_forward.6} parent=95 // pred_fallthru
        _
    $region96: #{encoder_decoder_forward.6} parent=5 // pred_fallthru
      _
  $region6: #{encoder_decoder_forward.6} parent=0 // loop_footer
    %s27 = sadd.s32 1, %s23
  $region7: #{encoder_decoder_forward.6} parent=0 // loop_footer_branch
    %22 = sbr.rel target = $region3
  $region8: #{encoder_decoder_forward.6} parent=0 // loop_exit
    _

// kernel: encoder_decoder_forward.7
$region0: #{encoder_decoder_forward.7}
  #allocation0 [shape = 'u32[]', space=smem, size = 0x4, offset = 0x4, fixed_abs, tag = 'smem constant byte address 0x4 - core index']
  #allocation1 [shape = 'u32[72,128]{1,0:T(1,128)}', space=vmem, size = 0x9000, scoped, tag = 'internal scratch']
  #allocation2 [shape = 'f32[16,8]{1,0:T(8,128)}', space=vmem, size = 0x2000, scoped, tag = 'scratch operand']
  %s0 = inlined_call_operand.vmem [shape: bf16[2,16,128], index: 0, kind: input, shape index: {}]
  %s1 = inlined_call_operand.vmem [shape: bf16[2,16,128], index: 1, kind: input, shape index: {}]
  %s2 = inlined_call_operand.vmem [shape: bf16[2,16,8], index: 2, kind: input, shape index: {}]
  %s3 = inlined_call_operand.vmem [shape: f32[2,1,4], index: 3, kind: input, shape index: {}]
  %s4 = inlined_call_operand.vmem [shape: bf16[128,4], index: 4, kind: input, shape index: {}]
  %s5 = inlined_call_operand.vmem [shape: bf16[8,4], index: 5, kind: input, shape index: {}]
  %s6 = inlined_call_operand.vmem [shape: f32[1,4], index: 6, kind: input, shape index: {}]
  %s7 = inlined_call_operand.vmem [shape: f32[1,4], index: 7, kind: input, shape index: {}]
  %s8 = inlined_call_operand.vmem [shape: bf16[4,24], index: 8, kind: input, shape index: {}]
  %s9 = inlined_call_operand.vmem [shape: bf16[8,4], index: 9, kind: input, shape index: {}]
  %s10 = inlined_call_operand.vmem [shape: f32[1,4], index: 10, kind: input, shape index: {}]
  %s11 = inlined_call_operand.vmem [shape: f32[1,4], index: 11, kind: input, shape index: {}]
  %s12 = inlined_call_operand.vmem [shape: bf16[4,16], index: 12, kind: input, shape index: {}]
  %s13 = inlined_call_operand.vmem [shape: f32[1,16], index: 13, kind: input, shape index: {}]
  %s14 = inlined_call_operand.vmem [shape: bf16[16,4], index: 14, kind: input, shape index: {}]
  %s15 = inlined_call_operand.vmem [shape: f32[1,4], index: 15, kind: input, shape index: {}]
  %s16 = inlined_call_operand.vmem [shape: bf16[4,128], index: 16, kind: input, shape index: {}]
  %s17 = inlined_call_operand.vmem [shape: f32[1,128], index: 17, kind: input, shape index: {}]
  %s18 = inlined_call_operand.vmem [shape: bf16[2,16,128], index: 18, kind: output, shape index: {}]
  %s19 = sld [smem:[#allocation0]]
  $region105: #{encoder_decoder_forward.7} parent=0
    _
  %s21 = ssub.s32 1, %s19
  %s22 = scalar_select 0, %s21, %s19
  loop: start=0, step=1, limit=4
  $region2: #{encoder_decoder_forward.7} parent=0 // loop_pre_header
    _
  $region3: #{encoder_decoder_forward.7} parent=0 // loop_header
    %s24 = sphi 0, %s28
    %p25 = scmp.ge.s32.totalorder %s24, 4
    %s34 = sphi 0, %s36
    %s37 = sphi 0, %s34
    %s38 = sphi 0, %s37
    %s54 = sphi 0, %s38
    %s60 = sphi 0, %s62
    %s63 = sphi 0, %s60
    %s64 = sphi 0, %s63
    %s80 = sphi 0, %s64
    %s86 = sphi 0, %s88
    %s89 = sphi 0, %s86
    %s90 = sphi 0, %s89
    %s106 = sphi 0, %s90
    %s112 = sphi 0, %s114
    %s115 = sphi 0, %s112
    %s116 = sphi 0, %s115
    %s132 = sphi 0, %s116
    %s136 = sphi 0, %s136
    %s138 = sphi 0, %s136
    %s139 = sphi 0, %s138
    %s153 = sphi 0, %s139
    %s157 = sphi 0, %s157
    %s159 = sphi 0, %s157
    %s160 = sphi 0, %s159
    %s174 = sphi 0, %s160
    %s178 = sphi 0, %s178
    %s180 = sphi 0, %s178
    %s181 = sphi 0, %s180
    %s195 = sphi 0, %s181
    %s199 = sphi 0, %s199
    %s201 = sphi 0, %s199
    %s202 = sphi 0, %s201
    %s216 = sphi 0, %s202
    %s220 = sphi 0, %s220
    %s222 = sphi 0, %s220
    %s223 = sphi 0, %s222
    %s237 = sphi 0, %s223
    %s241 = sphi 0, %s241
    %s243 = sphi 0, %s241
    %s244 = sphi 0, %s243
    %s258 = sphi 0, %s244
    %s262 = sphi 0, %s262
    %s264 = sphi 0, %s262
    %s265 = sphi 0, %s264
    %s279 = sphi 0, %s265
    %s283 = sphi 0, %s283
    %s285 = sphi 0, %s283
    %s286 = sphi 0, %s285
    %s300 = sphi 0, %s286
    %s304 = sphi 0, %s304
    %s306 = sphi 0, %s304
    %s307 = sphi 0, %s306
    %s321 = sphi 0, %s307
    %s325 = sphi 0, %s325
    %s327 = sphi 0, %s325
    %s328 = sphi 0, %s327
    %s342 = sphi 0, %s328
    %s346 = sphi 0, %s346
    %s348 = sphi 0, %s346
    %s349 = sphi 0, %s348
    %s363 = sphi 0, %s349
    %s367 = sphi 0, %s367
    %s369 = sphi 0, %s367
    %s370 = sphi 0, %s369
    %s384 = sphi 0, %s370
    %s388 = sphi 0, %s388
    %s390 = sphi 0, %s388
    %s391 = sphi 0, %s390
    %s405 = sphi 0, %s391
    %s409 = sphi 0, %s409
    %s411 = sphi 0, %s409
    %s412 = sphi 0, %s411
    %s426 = sphi 0, %s412
    %s432 = sphi 0, %s434
    %s435 = sphi 0, %s432
    %s436 = sphi 0, %s435
    %s452 = sphi 0, %s436
  $region4: #{encoder_decoder_forward.7} parent=0 // loop_header_branch
    %27 = sbr.rel (%p25) target = $region8
  $region5: #{encoder_decoder_forward.7} parent=0 // loop_body
    %s29 = ssub.s32 %s24, 1
    %s30 = ssub.s32 %s24, 2
    %s31 = sadd.s32 %s24, 1
    %s32 = ssub.s32 %s24, %s31
    %p33 = scmp.eq.s32.totalorder %s32, 0
    %s35 = sadd.s32 %s34, 1
    %s36 = scalar_select %p33, %s34, %s35
    %p39 = pneg %p33
    %p40 = scmp.eq.s32.totalorder %s24, 1
    %p41 = por %p39, %p40
    %p42 = scmp.ne.s32.totalorder %s34, %s37
    %p43 = scmp.eq.s32.totalorder %s24, 0
    %p44 = por %p42, %p43
    %p45 = scmp.ne.s32.totalorder %s34, %s37
    %p46 = scmp.eq.s32.totalorder %s29, 1
    %p47 = por %p45, %p46
    %p48 = scmp.ne.s32.totalorder %s37, %s38
    %p49 = scmp.eq.s32.totalorder %s29, 0
    %p50 = por %p48, %p49
    %p51 = scmp.ne.s32.totalorder %s37, %s38
    %p52 = scmp.eq.s32.totalorder %s30, 1
    %p53 = por %p51, %p52
    %p55 = scmp.ne.s32.totalorder %s38, %s54
    %p56 = scmp.eq.s32.totalorder %s30, 0
    %p57 = por %p55, %p56
    %s58 = ssub.s32 %s24, %s31
    %p59 = scmp.eq.s32.totalorder %s58, 0
    %s61 = sadd.s32 %s60, 1
    %s62 = scalar_select %p59, %s60, %s61
    %p65 = pneg %p59
    %p66 = scmp.eq.s32.totalorder %s24, 1
    %p67 = por %p65, %p66
    %p68 = scmp.ne.s32.totalorder %s60, %s63
    %p69 = scmp.eq.s32.totalorder %s24, 0
    %p70 = por %p68, %p69
    %p71 = scmp.ne.s32.totalorder %s60, %s63
    %p72 = scmp.eq.s32.totalorder %s29, 1
    %p73 = por %p71, %p72
    %p74 = scmp.ne.s32.totalorder %s63, %s64
    %p75 = scmp.eq.s32.totalorder %s29, 0
    %p76 = por %p74, %p75
    %p77 = scmp.ne.s32.totalorder %s63, %s64
    %p78 = scmp.eq.s32.totalorder %s30, 1
    %p79 = por %p77, %p78
    %p81 = scmp.ne.s32.totalorder %s64, %s80
    %p82 = scmp.eq.s32.totalorder %s30, 0
    %p83 = por %p81, %p82
    %s84 = ssub.s32 %s24, %s31
    %p85 = scmp.eq.s32.totalorder %s84, 0
    %s87 = sadd.s32 %s86, 1
    %s88 = scalar_select %p85, %s86, %s87
    %p91 = pneg %p85
    %p92 = scmp.eq.s32.totalorder %s24, 1
    %p93 = por %p91, %p92
    %p94 = scmp.ne.s32.totalorder %s86, %s89
    %p95 = scmp.eq.s32.totalorder %s24, 0
    %p96 = por %p94, %p95
    %p97 = scmp.ne.s32.totalorder %s86, %s89
    %p98 = scmp.eq.s32.totalorder %s29, 1
    %p99 = por %p97, %p98
    %p100 = scmp.ne.s32.totalorder %s89, %s90
    %p101 = scmp.eq.s32.totalorder %s29, 0
    %p102 = por %p100, %p101
    %p103 = scmp.ne.s32.totalorder %s89, %s90
    %p104 = scmp.eq.s32.totalorder %s30, 1
    %p105 = por %p103, %p104
    %p107 = scmp.ne.s32.totalorder %s90, %s106
    %p108 = scmp.eq.s32.totalorder %s30, 0
    %p109 = por %p107, %p108
    %s110 = ssub.s32 %s24, %s31
    %p111 = scmp.eq.s32.totalorder %s110, 0
    %s113 = sadd.s32 %s112, 1
    %s114 = scalar_select %p111, %s112, %s113
    %p117 = pneg %p111
    %p118 = scmp.eq.s32.totalorder %s24, 1
    %p119 = por %p117, %p118
    %p120 = scmp.ne.s32.totalorder %s112, %s115
    %p121 = scmp.eq.s32.totalorder %s24, 0
    %p122 = por %p120, %p121
    %p123 = scmp.ne.s32.totalorder %s112, %s115
    %p124 = scmp.eq.s32.totalorder %s29, 1
    %p125 = por %p123, %p124
    %p126 = scmp.ne.s32.totalorder %s115, %s116
    %p127 = scmp.eq.s32.totalorder %s29, 0
    %p128 = por %p126, %p127
    %p129 = scmp.ne.s32.totalorder %s115, %s116
    %p130 = scmp.eq.s32.totalorder %s30, 1
    %p131 = por %p129, %p130
    %p133 = scmp.ne.s32.totalorder %s116, %s132
    %p134 = scmp.eq.s32.totalorder %s30, 0
    %p135 = por %p133, %p134
    %s137 = sadd.s32 %s136, 1
    %p140 = scmp.eq.s32.totalorder %s24, 1
    %p141 = scmp.ne.s32.totalorder %s136, %s138
    %p142 = scmp.eq.s32.totalorder %s24, 0
    %p143 = por %p141, %p142
    %p144 = scmp.ne.s32.totalorder %s136, %s138
    %p145 = scmp.eq.s32.totalorder %s29, 1
    %p146 = por %p144, %p145
    %p147 = scmp.ne.s32.totalorder %s138, %s139
    %p148 = scmp.eq.s32.totalorder %s29, 0
    %p149 = por %p147, %p148
    %p150 = scmp.ne.s32.totalorder %s138, %s139
    %p151 = scmp.eq.s32.totalorder %s30, 1
    %p152 = por %p150, %p151
    %p154 = scmp.ne.s32.totalorder %s139, %s153
    %p155 = scmp.eq.s32.totalorder %s30, 0
    %p156 = por %p154, %p155
    %s158 = sadd.s32 %s157, 1
    %p161 = scmp.eq.s32.totalorder %s24, 1
    %p162 = scmp.ne.s32.totalorder %s157, %s159
    %p163 = scmp.eq.s32.totalorder %s24, 0
    %p164 = por %p162, %p163
    %p165 = scmp.ne.s32.totalorder %s157, %s159
    %p166 = scmp.eq.s32.totalorder %s29, 1
    %p167 = por %p165, %p166
    %p168 = scmp.ne.s32.totalorder %s159, %s160
    %p169 = scmp.eq.s32.totalorder %s29, 0
    %p170 = por %p168, %p169
    %p171 = scmp.ne.s32.totalorder %s159, %s160
    %p172 = scmp.eq.s32.totalorder %s30, 1
    %p173 = por %p171, %p172
    %p175 = scmp.ne.s32.totalorder %s160, %s174
    %p176 = scmp.eq.s32.totalorder %s30, 0
    %p177 = por %p175, %p176
    %s179 = sadd.s32 %s178, 1
    %p182 = scmp.eq.s32.totalorder %s24, 1
    %p183 = scmp.ne.s32.totalorder %s178, %s180
    %p184 = scmp.eq.s32.totalorder %s24, 0
    %p185 = por %p183, %p184
    %p186 = scmp.ne.s32.totalorder %s178, %s180
    %p187 = scmp.eq.s32.totalorder %s29, 1
    %p188 = por %p186, %p187
    %p189 = scmp.ne.s32.totalorder %s180, %s181
    %p190 = scmp.eq.s32.totalorder %s29, 0
    %p191 = por %p189, %p190
    %p192 = scmp.ne.s32.totalorder %s180, %s181
    %p193 = scmp.eq.s32.totalorder %s30, 1
    %p194 = por %p192, %p193
    %p196 = scmp.ne.s32.totalorder %s181, %s195
    %p197 = scmp.eq.s32.totalorder %s30, 0
    %p198 = por %p196, %p197
    %s200 = sadd.s32 %s199, 1
    %p203 = scmp.eq.s32.totalorder %s24, 1
    %p204 = scmp.ne.s32.totalorder %s199, %s201
    %p205 = scmp.eq.s32.totalorder %s24, 0
    %p206 = por %p204, %p205
    %p207 = scmp.ne.s32.totalorder %s199, %s201
    %p208 = scmp.eq.s32.totalorder %s29, 1
    %p209 = por %p207, %p208
    %p210 = scmp.ne.s32.totalorder %s201, %s202
    %p211 = scmp.eq.s32.totalorder %s29, 0
    %p212 = por %p210, %p211
    %p213 = scmp.ne.s32.totalorder %s201, %s202
    %p214 = scmp.eq.s32.totalorder %s30, 1
    %p215 = por %p213, %p214
    %p217 = scmp.ne.s32.totalorder %s202, %s216
    %p218 = scmp.eq.s32.totalorder %s30, 0
    %p219 = por %p217, %p218
    %s221 = sadd.s32 %s220, 1
    %p224 = scmp.eq.s32.totalorder %s24, 1
    %p225 = scmp.ne.s32.totalorder %s220, %s222
    %p226 = scmp.eq.s32.totalorder %s24, 0
    %p227 = por %p225, %p226
    %p228 = scmp.ne.s32.totalorder %s220, %s222
    %p229 = scmp.eq.s32.totalorder %s29, 1
    %p230 = por %p228, %p229
    %p231 = scmp.ne.s32.totalorder %s222, %s223
    %p232 = scmp.eq.s32.totalorder %s29, 0
    %p233 = por %p231, %p232
    %p234 = scmp.ne.s32.totalorder %s222, %s223
    %p235 = scmp.eq.s32.totalorder %s30, 1
    %p236 = por %p234, %p235
    %p238 = scmp.ne.s32.totalorder %s223, %s237
    %p239 = scmp.eq.s32.totalorder %s30, 0
    %p240 = por %p238, %p239
    %s242 = sadd.s32 %s241, 1
    %p245 = scmp.eq.s32.totalorder %s24, 1
    %p246 = scmp.ne.s32.totalorder %s241, %s243
    %p247 = scmp.eq.s32.totalorder %s24, 0
    %p248 = por %p246, %p247
    %p249 = scmp.ne.s32.totalorder %s241, %s243
    %p250 = scmp.eq.s32.totalorder %s29, 1
    %p251 = por %p249, %p250
    %p252 = scmp.ne.s32.totalorder %s243, %s244
    %p253 = scmp.eq.s32.totalorder %s29, 0
    %p254 = por %p252, %p253
    %p255 = scmp.ne.s32.totalorder %s243, %s244
    %p256 = scmp.eq.s32.totalorder %s30, 1
    %p257 = por %p255, %p256
    %p259 = scmp.ne.s32.totalorder %s244, %s258
    %p260 = scmp.eq.s32.totalorder %s30, 0
    %p261 = por %p259, %p260
    %s263 = sadd.s32 %s262, 1
    %p266 = scmp.eq.s32.totalorder %s24, 1
    %p267 = scmp.ne.s32.totalorder %s262, %s264
    %p268 = scmp.eq.s32.totalorder %s24, 0
    %p269 = por %p267, %p268
    %p270 = scmp.ne.s32.totalorder %s262, %s264
    %p271 = scmp.eq.s32.totalorder %s29, 1
    %p272 = por %p270, %p271
    %p273 = scmp.ne.s32.totalorder %s264, %s265
    %p274 = scmp.eq.s32.totalorder %s29, 0
    %p275 = por %p273, %p274
    %p276 = scmp.ne.s32.totalorder %s264, %s265
    %p277 = scmp.eq.s32.totalorder %s30, 1
    %p278 = por %p276, %p277
    %p280 = scmp.ne.s32.totalorder %s265, %s279
    %p281 = scmp.eq.s32.totalorder %s30, 0
    %p282 = por %p280, %p281
    %s284 = sadd.s32 %s283, 1
    %p287 = scmp.eq.s32.totalorder %s24, 1
    %p288 = scmp.ne.s32.totalorder %s283, %s285
    %p289 = scmp.eq.s32.totalorder %s24, 0
    %p290 = por %p288, %p289
    %p291 = scmp.ne.s32.totalorder %s283, %s285
    %p292 = scmp.eq.s32.totalorder %s29, 1
    %p293 = por %p291, %p292
    %p294 = scmp.ne.s32.totalorder %s285, %s286
    %p295 = scmp.eq.s32.totalorder %s29, 0
    %p296 = por %p294, %p295
    %p297 = scmp.ne.s32.totalorder %s285, %s286
    %p298 = scmp.eq.s32.totalorder %s30, 1
    %p299 = por %p297, %p298
    %p301 = scmp.ne.s32.totalorder %s286, %s300
    %p302 = scmp.eq.s32.totalorder %s30, 0
    %p303 = por %p301, %p302
    %s305 = sadd.s32 %s304, 1
    %p308 = scmp.eq.s32.totalorder %s24, 1
    %p309 = scmp.ne.s32.totalorder %s304, %s306
    %p310 = scmp.eq.s32.totalorder %s24, 0
    %p311 = por %p309, %p310
    %p312 = scmp.ne.s32.totalorder %s304, %s306
    %p313 = scmp.eq.s32.totalorder %s29, 1
    %p314 = por %p312, %p313
    %p315 = scmp.ne.s32.totalorder %s306, %s307
    %p316 = scmp.eq.s32.totalorder %s29, 0
    %p317 = por %p315, %p316
    %p318 = scmp.ne.s32.totalorder %s306, %s307
    %p319 = scmp.eq.s32.totalorder %s30, 1
    %p320 = por %p318, %p319
    %p322 = scmp.ne.s32.totalorder %s307, %s321
    %p323 = scmp.eq.s32.totalorder %s30, 0
    %p324 = por %p322, %p323
    %s326 = sadd.s32 %s325, 1
    %p329 = scmp.eq.s32.totalorder %s24, 1
    %p330 = scmp.ne.s32.totalorder %s325, %s327
    %p331 = scmp.eq.s32.totalorder %s24, 0
    %p332 = por %p330, %p331
    %p333 = scmp.ne.s32.totalorder %s325, %s327
    %p334 = scmp.eq.s32.totalorder %s29, 1
    %p335 = por %p333, %p334
    %p336 = scmp.ne.s32.totalorder %s327, %s328
    %p337 = scmp.eq.s32.totalorder %s29, 0
    %p338 = por %p336, %p337
    %p339 = scmp.ne.s32.totalorder %s327, %s328
    %p340 = scmp.eq.s32.totalorder %s30, 1
    %p341 = por %p339, %p340
    %p343 = scmp.ne.s32.totalorder %s328, %s342
    %p344 = scmp.eq.s32.totalorder %s30, 0
    %p345 = por %p343, %p344
    %s347 = sadd.s32 %s346, 1
    %p350 = scmp.eq.s32.totalorder %s24, 1
    %p351 = scmp.ne.s32.totalorder %s346, %s348
    %p352 = scmp.eq.s32.totalorder %s24, 0
    %p353 = por %p351, %p352
    %p354 = scmp.ne.s32.totalorder %s346, %s348
    %p355 = scmp.eq.s32.totalorder %s29, 1
    %p356 = por %p354, %p355
    %p357 = scmp.ne.s32.totalorder %s348, %s349
    %p358 = scmp.eq.s32.totalorder %s29, 0
    %p359 = por %p357, %p358
    %p360 = scmp.ne.s32.totalorder %s348, %s349
    %p361 = scmp.eq.s32.totalorder %s30, 1
    %p362 = por %p360, %p361
    %p364 = scmp.ne.s32.totalorder %s349, %s363
    %p365 = scmp.eq.s32.totalorder %s30, 0
    %p366 = por %p364, %p365
    %s368 = sadd.s32 %s367, 1
    %p371 = scmp.eq.s32.totalorder %s24, 1
    %p372 = scmp.ne.s32.totalorder %s367, %s369
    %p373 = scmp.eq.s32.totalorder %s24, 0
    %p374 = por %p372, %p373
    %p375 = scmp.ne.s32.totalorder %s367, %s369
    %p376 = scmp.eq.s32.totalorder %s29, 1
    %p377 = por %p375, %p376
    %p378 = scmp.ne.s32.totalorder %s369, %s370
    %p379 = scmp.eq.s32.totalorder %s29, 0
    %p380 = por %p378, %p379
    %p381 = scmp.ne.s32.totalorder %s369, %s370
    %p382 = scmp.eq.s32.totalorder %s30, 1
    %p383 = por %p381, %p382
    %p385 = scmp.ne.s32.totalorder %s370, %s384
    %p386 = scmp.eq.s32.totalorder %s30, 0
    %p387 = por %p385, %p386
    %s389 = sadd.s32 %s388, 1
    %p392 = scmp.eq.s32.totalorder %s24, 1
    %p393 = scmp.ne.s32.totalorder %s388, %s390
    %p394 = scmp.eq.s32.totalorder %s24, 0
    %p395 = por %p393, %p394
    %p396 = scmp.ne.s32.totalorder %s388, %s390
    %p397 = scmp.eq.s32.totalorder %s29, 1
    %p398 = por %p396, %p397
    %p399 = scmp.ne.s32.totalorder %s390, %s391
    %p400 = scmp.eq.s32.totalorder %s29, 0
    %p401 = por %p399, %p400
    %p402 = scmp.ne.s32.totalorder %s390, %s391
    %p403 = scmp.eq.s32.totalorder %s30, 1
    %p404 = por %p402, %p403
    %p406 = scmp.ne.s32.totalorder %s391, %s405
    %p407 = scmp.eq.s32.totalorder %s30, 0
    %p408 = por %p406, %p407
    %s410 = sadd.s32 %s409, 1
    %p413 = scmp.eq.s32.totalorder %s24, 1
    %p414 = scmp.ne.s32.totalorder %s409, %s411
    %p415 = scmp.eq.s32.totalorder %s24, 0
    %p416 = por %p414, %p415
    %p417 = scmp.ne.s32.totalorder %s409, %s411
    %p418 = scmp.eq.s32.totalorder %s29, 1
    %p419 = por %p417, %p418
    %p420 = scmp.ne.s32.totalorder %s411, %s412
    %p421 = scmp.eq.s32.totalorder %s29, 0
    %p422 = por %p420, %p421
    %p423 = scmp.ne.s32.totalorder %s411, %s412
    %p424 = scmp.eq.s32.totalorder %s30, 1
    %p425 = por %p423, %p424
    %p427 = scmp.ne.s32.totalorder %s412, %s426
    %p428 = scmp.eq.s32.totalorder %s30, 0
    %p429 = por %p427, %p428
    %s430 = ssub.s32 %s24, %s31
    %p431 = scmp.eq.s32.totalorder %s430, 0
    %s433 = sadd.s32 %s432, 1
    %s434 = scalar_select %p431, %s432, %s433
    %p437 = pneg %p431
    %p438 = scmp.eq.s32.totalorder %s24, 1
    %p439 = por %p437, %p438
    %p440 = scmp.ne.s32.totalorder %s432, %s435
    %p441 = scmp.eq.s32.totalorder %s24, 0
    %p442 = por %p440, %p441
    %p443 = scmp.ne.s32.totalorder %s432, %s435
    %p444 = scmp.eq.s32.totalorder %s29, 1
    %p445 = por %p443, %p444
    %p446 = scmp.ne.s32.totalorder %s435, %s436
    %p447 = scmp.eq.s32.totalorder %s29, 0
    %p448 = por %p446, %p447
    %p449 = scmp.ne.s32.totalorder %s435, %s436
    %p450 = scmp.eq.s32.totalorder %s30, 1
    %p451 = por %p449, %p450
    %p453 = scmp.ne.s32.totalorder %s436, %s452
    %p454 = scmp.eq.s32.totalorder %s30, 0
    %p455 = por %p453, %p454
    %p456 = scmp.le.s32.totalorder 1, %s24
    %p457 = scmp.lt.s32.totalorder %s24, 3
    %p458 = pnand %p456, %p457
    %p459 = pneg %p458
    // Predicated region
    $region9: #{encoder_decoder_forward.7} parent=5 // pred_check
      _
    $region10: #{encoder_decoder_forward.7} parent=5 // pred_check_branch
      %461 = sbr.rel (%p458) target = $region12
    $region11: #{encoder_decoder_forward.7} parent=5 // pred_region
      %s462 = ssub.s32 %s24, 1
      // Predicated region
      $region13: #{encoder_decoder_forward.7} parent=11 // pred_check
        %p463 = pneg %p149
      $region14: #{encoder_decoder_forward.7} parent=11 // pred_check_branch
        %465 = sbr.rel (%p463) target = $region16
      $region15: #{encoder_decoder_forward.7} parent=11 // pred_region
        _
      $region16: #{encoder_decoder_forward.7} parent=11 // pred_fallthru
        _
      // Predicated region
      $region17: #{encoder_decoder_forward.7} parent=11 // pred_check
        %p466 = pneg %p170
      $region18: #{encoder_decoder_forward.7} parent=11 // pred_check_branch
        %468 = sbr.rel (%p466) target = $region20
      $region19: #{encoder_decoder_forward.7} parent=11 // pred_region
        _
      $region20: #{encoder_decoder_forward.7} parent=11 // pred_fallthru
        _
      // Predicated region
      $region21: #{encoder_decoder_forward.7} parent=11 // pred_check
        %p469 = pneg %p191
      $region22: #{encoder_decoder_forward.7} parent=11 // pred_check_branch
        %471 = sbr.rel (%p469) target = $region24
      $region23: #{encoder_decoder_forward.7} parent=11 // pred_region
        _
      $region24: #{encoder_decoder_forward.7} parent=11 // pred_fallthru
        _
      // Predicated region
      $region25: #{encoder_decoder_forward.7} parent=11 // pred_check
        %p472 = pneg %p212
      $region26: #{encoder_decoder_forward.7} parent=11 // pred_check_branch
        %474 = sbr.rel (%p472) target = $region28
      $region27: #{encoder_decoder_forward.7} parent=11 // pred_region
        _
      $region28: #{encoder_decoder_forward.7} parent=11 // pred_fallthru
        _
      // Predicated region
      $region29: #{encoder_decoder_forward.7} parent=11 // pred_check
        %p475 = pneg %p233
      $region30: #{encoder_decoder_forward.7} parent=11 // pred_check_branch
        %477 = sbr.rel (%p475) target = $region32
      $region31: #{encoder_decoder_forward.7} parent=11 // pred_region
        _
      $region32: #{encoder_decoder_forward.7} parent=11 // pred_fallthru
        _
      // Predicated region
      $region33: #{encoder_decoder_forward.7} parent=11 // pred_check
        %p478 = pneg %p254
      $region34: #{encoder_decoder_forward.7} parent=11 // pred_check_branch
        %480 = sbr.rel (%p478) target = $region36
      $region35: #{encoder_decoder_forward.7} parent=11 // pred_region
        _
      $region36: #{encoder_decoder_forward.7} parent=11 // pred_fallthru
        _
      // Predicated region
      $region37: #{encoder_decoder_forward.7} parent=11 // pred_check
        %p481 = pneg %p275
      $region38: #{encoder_decoder_forward.7} parent=11 // pred_check_branch
        %483 = sbr.rel (%p481) target = $region40
      $region39: #{encoder_decoder_forward.7} parent=11 // pred_region
        _
      $region40: #{encoder_decoder_forward.7} parent=11 // pred_fallthru
        _
      // Predicated region
      $region41: #{encoder_decoder_forward.7} parent=11 // pred_check
        %p484 = pneg %p296
      $region42: #{encoder_decoder_forward.7} parent=11 // pred_check_branch
        %486 = sbr.rel (%p484) target = $region44
      $region43: #{encoder_decoder_forward.7} parent=11 // pred_region
        _
      $region44: #{encoder_decoder_forward.7} parent=11 // pred_fallthru
        _
      // Predicated region
      $region45: #{encoder_decoder_forward.7} parent=11 // pred_check
        %p487 = pneg %p317
      $region46: #{encoder_decoder_forward.7} parent=11 // pred_check_branch
        %489 = sbr.rel (%p487) target = $region48
      $region47: #{encoder_decoder_forward.7} parent=11 // pred_region
        _
      $region48: #{encoder_decoder_forward.7} parent=11 // pred_fallthru
        _
      // Predicated region
      $region49: #{encoder_decoder_forward.7} parent=11 // pred_check
        %p490 = pneg %p338
      $region50: #{encoder_decoder_forward.7} parent=11 // pred_check_branch
        %492 = sbr.rel (%p490) target = $region52
      $region51: #{encoder_decoder_forward.7} parent=11 // pred_region
        _
      $region52: #{encoder_decoder_forward.7} parent=11 // pred_fallthru
        _
      // Predicated region
      $region53: #{encoder_decoder_forward.7} parent=11 // pred_check
        %p493 = pneg %p359
      $region54: #{encoder_decoder_forward.7} parent=11 // pred_check_branch
        %495 = sbr.rel (%p493) target = $region56
      $region55: #{encoder_decoder_forward.7} parent=11 // pred_region
        _
      $region56: #{encoder_decoder_forward.7} parent=11 // pred_fallthru
        _
      // Predicated region
      $region57: #{encoder_decoder_forward.7} parent=11 // pred_check
        %p496 = pneg %p380
      $region58: #{encoder_decoder_forward.7} parent=11 // pred_check_branch
        %498 = sbr.rel (%p496) target = $region60
      $region59: #{encoder_decoder_forward.7} parent=11 // pred_region
        _
      $region60: #{encoder_decoder_forward.7} parent=11 // pred_fallthru
        _
      // Predicated region
      $region61: #{encoder_decoder_forward.7} parent=11 // pred_check
        %p499 = pneg %p401
      $region62: #{encoder_decoder_forward.7} parent=11 // pred_check_branch
        %501 = sbr.rel (%p499) target = $region64
      $region63: #{encoder_decoder_forward.7} parent=11 // pred_region
        _
      $region64: #{encoder_decoder_forward.7} parent=11 // pred_fallthru
        _
      // Predicated region
      $region65: #{encoder_decoder_forward.7} parent=11 // pred_check
        %p502 = pneg %p422
      $region66: #{encoder_decoder_forward.7} parent=11 // pred_check_branch
        %504 = sbr.rel (%p502) target = $region68
      $region67: #{encoder_decoder_forward.7} parent=11 // pred_region
        _
      $region68: #{encoder_decoder_forward.7} parent=11 // pred_fallthru
        _
    $region12: #{encoder_decoder_forward.7} parent=5 // pred_fallthru
      _
    %p505 = scmp.lt.s32.totalorder %s24, 2
    // Predicated region
    $region69: #{encoder_decoder_forward.7} parent=5 // pred_check
      %p506 = pneg %p505
    $region70: #{encoder_decoder_forward.7} parent=5 // pred_check_branch
      %508 = sbr.rel (%p506) target = $region72
    $region71: #{encoder_decoder_forward.7} parent=5 // pred_region
      // Predicated region
      $region73: #{encoder_decoder_forward.7} parent=71 // pred_check
        %p509 = pneg %p44
      $region74: #{encoder_decoder_forward.7} parent=71 // pred_check_branch
        %511 = sbr.rel (%p509) target = $region76
      $region75: #{encoder_decoder_forward.7} parent=71 // pred_region
        %p512 = scmp.lt.s32.totalorder %s24, 1
        %s513 = scalar_select %p512, %s24, 1
        %s514 = smul.addr %s513, 2
        %s515 = smul.addr %s514, 4
        %s516 = scalar_lea.vmem %s0, %s515
      $region76: #{encoder_decoder_forward.7} parent=71 // pred_fallthru
        _
      // Predicated region
      $region77: #{encoder_decoder_forward.7} parent=71 // pred_check
        %p517 = pneg %p70
      $region78: #{encoder_decoder_forward.7} parent=71 // pred_check_branch
        %519 = sbr.rel (%p517) target = $region80
      $region79: #{encoder_decoder_forward.7} parent=71 // pred_region
        %p520 = scmp.lt.s32.totalorder %s24, 1
        %s521 = scalar_select %p520, %s24, 1
        %s522 = smul.addr %s521, 2
        %s523 = smul.addr %s522, 4
        %s524 = scalar_lea.vmem %s1, %s523
      $region80: #{encoder_decoder_forward.7} parent=71 // pred_fallthru
        _
      // Predicated region
      $region81: #{encoder_decoder_forward.7} parent=71 // pred_check
        %p525 = pneg %p96
      $region82: #{encoder_decoder_forward.7} parent=71 // pred_check_branch
        %527 = sbr.rel (%p525) target = $region84
      $region83: #{encoder_decoder_forward.7} parent=71 // pred_region
        %p528 = scmp.lt.s32.totalorder %s24, 1
        %s529 = scalar_select %p528, %s24, 1
        %s530 = smul.addr %s529, 2
        %s531 = smul.addr %s530, 4
        %s532 = scalar_lea.vmem %s2, %s531
      $region84: #{encoder_decoder_forward.7} parent=71 // pred_fallthru
        _
      // Predicated region
      $region85: #{encoder_decoder_forward.7} parent=71 // pred_check
        %p533 = pneg %p122
      $region86: #{encoder_decoder_forward.7} parent=71 // pred_check_branch
        %535 = sbr.rel (%p533) target = $region88
      $region87: #{encoder_decoder_forward.7} parent=71 // pred_region
        %p536 = scmp.lt.s32.totalorder %s24, 1
        %s537 = scalar_select %p536, %s24, 1
        %s538 = scalar_lea.vmem %s3, %s537
      $region88: #{encoder_decoder_forward.7} parent=71 // pred_fallthru
        _
    $region72: #{encoder_decoder_forward.7} parent=5 // pred_fallthru
      _
    %p539 = scmp.le.s32.totalorder 1, %s24
    %p540 = scmp.lt.s32.totalorder %s24, 3
    %p541 = pnand %p539, %p540
    %p542 = pneg %p541
    // Predicated region
    $region89: #{encoder_decoder_forward.7} parent=5 // pred_check
      _
    $region90: #{encoder_decoder_forward.7} parent=5 // pred_check_branch
      %544 = sbr.rel (%p541) target = $region92
    $region91: #{encoder_decoder_forward.7} parent=5 // pred_region
      %s545 = ssub.s32 %s24, 1
      %p546 = scmp.lt.s32.totalorder %s29, 1
      %s547 = scalar_select %p546, %s29, 1
      %s548 = smul.addr %s547, 2
      %s549 = smul.addr %s548, 4
      %s550 = scalar_lea.vmem %s0, %s549
      %p551 = pneg %p50
      %p552 = pneg %p47
      %p553 = scmp.lt.s32.totalorder %s29, 1
      %s554 = scalar_select %p553, %s29, 1
      %s555 = smul.addr %s554, 2
      %s556 = smul.addr %s555, 4
      %s557 = scalar_lea.vmem %s1, %s556
      %p558 = pneg %p76
      %p559 = pneg %p73
      %p560 = scmp.lt.s32.totalorder %s29, 1
      %s561 = scalar_select %p560, %s29, 1
      %s562 = smul.addr %s561, 2
      %s563 = smul.addr %s562, 4
      %s564 = scalar_lea.vmem %s2, %s563
      %p565 = pneg %p102
      %p566 = pneg %p99
      %p567 = scmp.lt.s32.totalorder %s29, 1
      %s568 = scalar_select %p567, %s29, 1
      %s569 = scalar_lea.vmem %s3, %s568
      %p570 = pneg %p128
      %p571 = pneg %p125
      %p572 = pneg %p149
      %p573 = pneg %p146
      %p574 = pneg %p170
      %p575 = pneg %p167
      %p576 = pneg %p191
      %p577 = pneg %p188
      %p578 = pneg %p212
      %p579 = pneg %p209
      %p580 = pneg %p233
      %p581 = pneg %p230
      %p582 = pneg %p254
      %p583 = pneg %p251
      %p584 = pneg %p275
      %p585 = pneg %p272
      %p586 = pneg %p296
      %p587 = pneg %p293
      %p588 = pneg %p317
      %p589 = pneg %p314
      %p590 = pneg %p338
      %p591 = pneg %p335
      %p592 = pneg %p359
      %p593 = pneg %p356
      %p594 = pneg %p380
      %p595 = pneg %p377
      %p596 = pneg %p401
      %p597 = pneg %p398
      %p598 = pneg %p422
      %p599 = pneg %p419
      %p600 = pneg %p448
      %p601 = pneg %p445
      %p602 = scmp.lt.s32.totalorder %s29, 1
      %s603 = scalar_select %p602, %s29, 1
      %s604 = smul.addr %s603, 2
      %s605 = smul.addr %s604, 4
      %s606 = scalar_lea.vmem %s18, %s605
      %p607 = scmp.lt.s32.totalorder %s29, 1
      %s608 = scalar_select %p607, %s29, 1
      %s609 = smul.addr %s608, 2
      %s610 = smul.addr %s609, 4
      %s611 = scalar_lea.vmem %s0, %s610
      %p612 = scmp.lt.s32.totalorder %s29, 1
      %s613 = scalar_select %p612, %s29, 1
      %s614 = smul.addr %s613, 2
      %s615 = smul.addr %s614, 4
      %s616 = scalar_lea.vmem %s1, %s615
      %p617 = scmp.lt.s32.totalorder %s29, 1
      %s618 = scalar_select %p617, %s29, 1
      %s619 = smul.addr %s618, 2
      %s620 = smul.addr %s619, 4
      %s621 = scalar_lea.vmem %s2, %s620
      %p622 = scmp.lt.s32.totalorder %s29, 1
      %s623 = scalar_select %p622, %s29, 1
      %s624 = scalar_lea.vmem %s3, %s623
      %p625 = scmp.lt.s32.totalorder %s29, 1
      %s626 = scalar_select %p625, %s29, 1
      %s627 = smul.addr %s626, 2
      %s628 = smul.addr %s627, 4
      %s629 = scalar_lea.vmem %s18, %s628
      %v631 = vld [vmem:[%s611] sm:$0xf]
      %v632 = vld [vmem:[%s611 + $0x4] sm:$0xf]
      %v633 = vld [vmem:[%s616] sm:$0xf]
      %v634 = vld [vmem:[%s616 + $0x4] sm:$0xf]
      %v635 = vunpack.c.l.bf16 %v631
      %v636 = vunpack.c.l.bf16 %v632
      %v637 = vunpack.c.l.bf16 %v633
      %v638 = vunpack.c.l.bf16 %v634
      %v639 = vadd.f32 %v635, %v637
      %v640 = vadd.f32 %v636, %v638
      %v641 = vpack.c.bf16 %v639, %v639
      %v642 = vpack.c.bf16 %v640, %v640
      %v643 = vld [vmem:[%s621] sm:$0xf]
      %v644 = vld [vmem:[%s621 + $0x4] sm:$0xf]
      %v645 = vld [vmem:[%s4] sm:$0xf]
      %v646 = vld [vmem:[%s4 + $0x4] sm:$0xf]
      %v647 = vld [vmem:[%s4 + $0x8] sm:$0xf]
      %v648 = vld [vmem:[%s4 + $0xc] sm:$0xf]
      %v649 = vld [vmem:[%s4 + $0x10] sm:$0xf]
      %v650 = vld [vmem:[%s4 + $0x14] sm:$0xf]
      %v651 = vld [vmem:[%s4 + $0x18] sm:$0xf]
      %v652 = vld [vmem:[%s4 + $0x1c] sm:$0xf]
      %v653 = vld [vmem:[%s4 + $0x20] sm:$0xf]
      %v654 = vld [vmem:[%s4 + $0x24] sm:$0xf]
      %v655 = vld [vmem:[%s4 + $0x28] sm:$0xf]
      %v656 = vld [vmem:[%s4 + $0x2c] sm:$0xf]
      %v657 = vld [vmem:[%s4 + $0x30] sm:$0xf]
      %v658 = vld [vmem:[%s4 + $0x34] sm:$0xf]
      %v659 = vld [vmem:[%s4 + $0x38] sm:$0xf]
      %v660 = vld [vmem:[%s4 + $0x3c] sm:$0xf]
      %v661 = vld [vmem:[%s5] sm:$0xf]
      %v664 = vunpack.c.l.b16 %v643
      %v665 = vunpack.c.l.b16 %v644
      %v666 = vpack.c.b16 %v665, %v664
      %vm667 = vcmask 64512
      %v669 = vsel %vm667, %v666, 0
      %vm671 = vcmask 1043456
      %v673 = vsel %vm671, %v661, 0
      %675 = vmatpush.bf16.msra.mxu0 0
      %676 = vmatpush.bf16.msra.mxu0 0
      %677 = vmatpush.bf16.msra.mxu0 0
      %678 = vmatpush.bf16.msra.mxu0 0
      %679 = vmatpush.bf16.msra.mxu0 0
      %680 = vmatpush.bf16.msra.mxu0 0
      %681 = vmatpush.bf16.msra.mxu0 0
      %682 = vmatpush.bf16.msra.mxu0 %v673
      %683 = vmatmul.bf16.gmra.mxu0 %v669
      %v684 = vpop.f32.mrf.mxu0
      %v685 = vadd.f32 0.0, %v684
      %v686 = vpop.f32.mrf.mxu0
      %v687 = vadd.f32 0.0, %v686
      %688 = vdwg.mxu0
      %v691 = vunpack.c.l.b16 %v641
      %v692 = vunpack.c.l.b16 %v642
      %v693 = vpack.c.b16 %v692, %v691
      %v711 = vunpack.c.l.b16 %v645
      %v712 = vunpack.c.l.b16 %v646
      %v713 = vunpack.c.l.b16 %v647
      %v714 = vunpack.c.l.b16 %v648
      %v715 = vunpack.c.l.b16 %v649
      %v716 = vunpack.c.l.b16 %v650
      %v717 = vunpack.c.l.b16 %v651
      %v718 = vunpack.c.l.b16 %v652
      %v719 = vunpack.c.l.b16 %v653
      %v720 = vunpack.c.l.b16 %v654
      %v721 = vunpack.c.l.b16 %v655
      %v722 = vunpack.c.l.b16 %v656
      %v723 = vunpack.c.l.b16 %v657
      %v724 = vunpack.c.l.b16 %v658
      %v725 = vunpack.c.l.b16 %v659
      %v726 = vunpack.c.l.b16 %v660
      %v727 = vpack.c.b16 %v712, %v711
      %v728 = vpack.c.b16 %v714, %v713
      %v729 = vpack.c.b16 %v716, %v715
      %v730 = vpack.c.b16 %v718, %v717
      %v731 = vpack.c.b16 %v720, %v719
      %v732 = vpack.c.b16 %v722, %v721
      %v733 = vpack.c.b16 %v724, %v723
      %v734 = vpack.c.b16 %v726, %v725
      %743 = vmatpush.bf16.msra.mxu0 %v734
      %744 = vmatpush.bf16.msra.mxu0 %v733
      %745 = vmatpush.bf16.msra.mxu0 %v732
      %746 = vmatpush.bf16.msra.mxu0 %v731
      %747 = vmatpush.bf16.msra.mxu0 %v730
      %748 = vmatpush.bf16.msra.mxu0 %v729
      %749 = vmatpush.bf16.msra.mxu0 %v728
      %750 = vmatpush.bf16.msra.mxu0 %v727
      %751 = vmatmul.bf16.gmra.mxu0 %v693
      %v752 = vpop.f32.mrf.mxu0
      %v753 = vadd.f32 %v685, %v752
      %v754 = vpop.f32.mrf.mxu0
      %v755 = vadd.f32 %v687, %v754
      %756 = vdwg.mxu0
      %v757 = vld [vmem:[%s624] sm:$0x1]
      %v759 = vperm.slane %v757, 0
      %v761 = vadd.f32 %v753, %v759
      %v762 = vadd.f32 %v755, %v759
      %vm763 = vcmask 31744
      %v764 = vsel %vm763, %v761, 0.0
      %765 = vadd.xlane.f32.xlu0 %v764
      %v766 = vpop.xlane.xlu0 %765
      %v767 = vsel %vm763, %v762, 0.0
      %768 = vadd.xlane.f32.xlu0 %v767
      %v769 = vpop.xlane.xlu0 %768
      %v770 = vrcp.pop 4.0
      %v771 = vmul.f32 4.0, %v770
      %v772 = vsub.f32 1.0, %v771
      %v773 = vmul.f32 %v770, %v772
      %v774 = vadd.f32 %v770, %v773
      %vm775 = vweird.f32 %v770
      %v776 = vsel %vm775, %v770, %v774
      %v777 = vmul.f32 %v766, %v776
      %v778 = vmul.f32 %v769, %v776
      %v779 = vsub.f32 %v761, %v777
      %v780 = vsub.f32 %v762, %v778
      %v781 = vmul.f32 %v779, %v779
      %v782 = vmul.f32 %v780, %v780
      %v783 = vsel %vm763, %v781, 0.0
      %784 = vadd.xlane.f32.xlu0 %v783
      %v785 = vpop.xlane.xlu0 %784
      %v786 = vsel %vm763, %v782, 0.0
      %787 = vadd.xlane.f32.xlu0 %v786
      %v788 = vpop.xlane.xlu0 %787
      %v789 = vmul.f32 %v785, %v776
      %v790 = vmul.f32 %v788, %v776
      %v791 = vadd.f32 %v789, 1e-05
      %v792 = vadd.f32 %v790, 1e-05
      %v793 = vrsqrt.pop %v791
      %v794 = vmul.f32 %v793, %v791
      %v795 = vmul.f32 %v794, %v793
      %v796 = vmul.f32 0.5, %v795
      %v797 = vsub.f32 1.5, %v796
      %v798 = vmul.f32 %v793, %v797
      %vm799 = vweird.f32 %v791
      %vm800 = vweird.f32 %v793
      %vm801 = vmor %vm799, %vm800
      %v802 = vsel %vm801, %v793, %v798
      %v803 = vrsqrt.pop %v792
      %v804 = vmul.f32 %v803, %v792
      %v805 = vmul.f32 %v804, %v803
      %v806 = vmul.f32 0.5, %v805
      %v807 = vsub.f32 1.5, %v806
      %v808 = vmul.f32 %v803, %v807
      %vm809 = vweird.f32 %v792
      %vm810 = vweird.f32 %v803
      %vm811 = vmor %vm809, %vm810
      %v812 = vsel %vm811, %v803, %v808
      %v813 = vmul.f32 %v779, %v802
      %v814 = vmul.f32 %v780, %v812
      %v815 = vld [vmem:[%s6] sm:$0x1]
      %v817 = vperm.slane %v815, 0
      %v819 = vmul.f32 %v813, %v817
      %v820 = vmul.f32 %v814, %v817
      %v821 = vld [vmem:[%s7] sm:$0x1]
      %v823 = vperm.slane %v821, 0
      %v825 = vadd.f32 %v819, %v823
      %v826 = vadd.f32 %v820, %v823
      %v827 = vpack.c.bf16 %v826, %v825
      %v828 = vld [vmem:[%s8] sm:$0x3]
      %v830 = vsel %vm763, %v827, 0
      %vm832 = vcmask 1041408
      %v834 = vsel %vm832, %v828, 0
      %836 = vmatpush.bf16.msra.mxu0 0
      %837 = vmatpush.bf16.msra.mxu0 0
      %838 = vmatpush.bf16.msra.mxu0 0
      %839 = vmatpush.bf16.msra.mxu0 0
      %840 = vmatpush.bf16.msra.mxu0 0
      %841 = vmatpush.bf16.msra.mxu0 0
      %842 = vmatpush.bf16.msra.mxu0 0
      %843 = vmatpush.bf16.msra.mxu0 %v834
      %844 = vmatmul.bf16.gmra.mxu0 %v830
      %v845 = vpop.f32.mrf.mxu0
      %v846 = vadd.f32 0.0, %v845
      %v847 = vpop.f32.mrf.mxu0
      %v848 = vadd.f32 0.0, %v847
      %849 = vdwg.mxu0
      %v850 = vlaneseq
      %v851 = vshrl.u32 %v850, 7
      %v852 = vadd.s32 %v851, 8
      %v853 = vlaneseq
      %v854 = vand.u32 %v853, 127
      %vm855 = vcmp.eq.s32.totalorder %v851, %v854
      %vm856 = vcmp.eq.s32.totalorder %v852, %v854
      %v857 = vpack.c.bf16 %v846, %v846
      %v858 = vpack.c.bf16 %v848, %v848
      %v861 = vunpack.c.l.b16 %v857
      %v862 = vunpack.c.l.b16 %v858
      %v863 = vpack.c.b16 %v862, %v861
      %864 = vrot.lane.b32.xlu0 %v863, 120
      %v865 = vpop.permute.xlu0 %864
      %v867 = vsel %vm763, %v863, 0
      %v870 = vsel %vm763, %v865, 0
      %872 = vmatpush.bf16.xpose.msra.mxu0 0
      %873 = vmatpush.bf16.xpose.msra.mxu0 0
      %874 = vmatpush.bf16.xpose.msra.mxu0 0
      %875 = vmatpush.bf16.xpose.msra.mxu0 0
      %876 = vmatpush.bf16.xpose.msra.mxu0 0
      %877 = vmatpush.bf16.xpose.msra.mxu0 0
      %878 = vmatpush.bf16.xpose.msra.mxu0 0
      %879 = vmatpush.bf16.xpose.msra.mxu0 %v870
      %880 = vmatmul.bf16.gmra.mxu0 %v867
      %v881 = vpop.f32.mrf.mxu0
      %v882 = vadd.f32 0.0, %v881
      %v883 = vpop.f32.mrf.mxu0
      %v884 = vadd.f32 0.0, %v883
      %885 = vdwg.mxu0
      %v886 = vsel %vm855, -1e+09, %v882
      %v887 = vsel %vm856, -1e+09, %v884
      %vm888 = vcmask 130048
      %v889 = vsel %vm888, %v886, -inf
      %890 = vmax.xlane.f32.xlu0 %v889
      %v891 = vpop.xlane.xlu0 %890
      %v892 = vsel %vm888, %v887, -inf
      %893 = vmax.xlane.f32.xlu0 %v892
      %v894 = vpop.xlane.xlu0 %893
      %v895 = vsub.f32 %v886, %v891
      %v896 = vsub.f32 %v887, %v894
      %v897 = vmul.f32 %v895, 1.442695
      %v898 = vpow.pop %v897
      %v899 = vmul.f32 %v896, 1.442695
      %v900 = vpow.pop %v899
      %v901 = vsel %vm888, %v898, 0.0
      %902 = vadd.xlane.f32.xlu0 %v901
      %v903 = vpop.xlane.xlu0 %902
      %v904 = vsel %vm888, %v900, 0.0
      %905 = vadd.xlane.f32.xlu0 %v904
      %v906 = vpop.xlane.xlu0 %905
      %v907 = vrcp.pop %v903
      %v908 = vrcp.pop %v906
      %v909 = vmul.f32 %v898, %v907
      %v910 = vmul.f32 %v900, %v908
      %v911 = vpack.c.bf16 %v909, %v909
      %v912 = vpack.c.bf16 %v910, %v910
      %v915 = vunpack.c.l.b16 %v911
      %v916 = vunpack.c.l.b16 %v912
      %v917 = vpack.c.b16 %v916, %v915
      %918 = vrot.lane.b32.xlu0 %v863, 112
      %v919 = vpop.permute.xlu0 %918
      %v922 = vsel %vm888, %v917, 0
      %924 = vmatpush.bf16.msra.mxu0 0
      %925 = vmatpush.bf16.msra.mxu0 0
      %926 = vmatpush.bf16.msra.mxu0 0
      %927 = vmatpush.bf16.msra.mxu0 0
      %928 = vmatpush.bf16.msra.mxu0 0
      %929 = vmatpush.bf16.msra.mxu0 0
      %930 = vmatpush.bf16.msra.mxu0 0
      %931 = vmatpush.bf16.msra.mxu0 %v919
      %932 = vmatmul.bf16.gmra.mxu0 %v922
      %v933 = vpop.f32.mrf.mxu0
      %v934 = vadd.f32 0.0, %v933
      %v935 = vpop.f32.mrf.mxu0
      %v936 = vadd.f32 0.0, %v935
      %937 = vdwg.mxu0
      %938 = vst.msk [vmem:[#allocation2] sm:$0xff] %vm763, %v934
      %939 = vst.msk [vmem:[#allocation2 + $0x8] sm:$0xff] %vm763, %v936
      %940 = vrot.lane.b32.xlu0 %v863, 124
      %v941 = vpop.permute.xlu0 %940
      %942 = vrot.lane.b32.xlu0 %v863, 116
      %v943 = vpop.permute.xlu0 %942
      %v945 = vsel %vm763, %v941, 0
      %v948 = vsel %vm763, %v943, 0
      %950 = vmatpush.bf16.xpose.msra.mxu0 0
      %951 = vmatpush.bf16.xpose.msra.mxu0 0
      %952 = vmatpush.bf16.xpose.msra.mxu0 0
      %953 = vmatpush.bf16.xpose.msra.mxu0 0
      %954 = vmatpush.bf16.xpose.msra.mxu0 0
      %955 = vmatpush.bf16.xpose.msra.mxu0 0
      %956 = vmatpush.bf16.xpose.msra.mxu0 0
      %957 = vmatpush.bf16.xpose.msra.mxu0 %v948
      %958 = vmatmul.bf16.gmra.mxu0 %v945
      %v959 = vpop.f32.mrf.mxu0
      %v960 = vadd.f32 0.0, %v959
      %v961 = vpop.f32.mrf.mxu0
      %v962 = vadd.f32 0.0, %v961
      %963 = vdwg.mxu0
      %v964 = vsel %vm855, -1e+09, %v960
      %v965 = vsel %vm856, -1e+09, %v962
      %v966 = vsel %vm888, %v964, -inf
      %967 = vmax.xlane.f32.xlu0 %v966
      %v968 = vpop.xlane.xlu0 %967
      %v969 = vsel %vm888, %v965, -inf
      %970 = vmax.xlane.f32.xlu0 %v969
      %v971 = vpop.xlane.xlu0 %970
      %v972 = vsub.f32 %v964, %v968
      %v973 = vsub.f32 %v965, %v971
      %v974 = vmul.f32 %v972, 1.442695
      %v975 = vpow.pop %v974
      %v976 = vmul.f32 %v973, 1.442695
      %v977 = vpow.pop %v976
      %v978 = vsel %vm888, %v975, 0.0
      %979 = vadd.xlane.f32.xlu0 %v978
      %v980 = vpop.xlane.xlu0 %979
      %v981 = vsel %vm888, %v977, 0.0
      %982 = vadd.xlane.f32.xlu0 %v981
      %v983 = vpop.xlane.xlu0 %982
      %v984 = vrcp.pop %v980
      %v985 = vrcp.pop %v983
      %v986 = vmul.f32 %v975, %v984
      %v987 = vmul.f32 %v977, %v985
      %v988 = vpack.c.bf16 %v986, %v986
      %v989 = vpack.c.bf16 %v987, %v987
      %v992 = vunpack.c.l.b16 %v988
      %v993 = vunpack.c.l.b16 %v989
      %v994 = vpack.c.b16 %v993, %v992
      %995 = vrot.lane.b32.xlu0 %v863, 108
      %v996 = vpop.permute.xlu0 %995
      %v999 = vsel %vm888, %v994, 0
      %1001 = vmatpush.bf16.msra.mxu0 0
      %1002 = vmatpush.bf16.msra.mxu0 0
      %1003 = vmatpush.bf16.msra.mxu0 0
      %1004 = vmatpush.bf16.msra.mxu0 0
      %1005 = vmatpush.bf16.msra.mxu0 0
      %1006 = vmatpush.bf16.msra.mxu0 0
      %1007 = vmatpush.bf16.msra.mxu0 0
      %1008 = vmatpush.bf16.msra.mxu0 %v996
      %1009 = vmatmul.bf16.gmra.mxu0 %v999
      %v1010 = vpop.f32.mrf.mxu0
      %v1011 = vadd.f32 0.0, %v1010
      %v1012 = vpop.f32.mrf.mxu0
      %v1013 = vadd.f32 0.0, %v1012
      %1014 = vdwg.mxu0
      %1017 = vrot.lane.b32.xlu0 %v1011, 4
      %v1018 = vpop.permute.xlu0 %1017
      %1019 = vrot.lane.b32.xlu0 %v1013, 4
      %v1020 = vpop.permute.xlu0 %1019
      %vm1023 = vcmask 64544
      %1024 = vst.msk [vmem:[#allocation2] sm:$0xff] %vm1023, %v1018
      %1025 = vst.msk [vmem:[#allocation2 + $0x8] sm:$0xff] %vm1023, %v1020
      %v1026 = vld [vmem:[#allocation2] sm:$0xff]
      %v1027 = vld [vmem:[#allocation2 + $0x8] sm:$0xff]
      %v1028 = vpack.c.bf16 %v1027, %v1026
      %v1029 = vld [vmem:[%s9] sm:$0xf]
      %v1031 = vsel %vm667, %v1028, 0
      %v1034 = vsel %vm671, %v1029, 0
      %1036 = vmatpush.bf16.msra.mxu0 0
      %1037 = vmatpush.bf16.msra.mxu0 0
      %1038 = vmatpush.bf16.msra.mxu0 0
      %1039 = vmatpush.bf16.msra.mxu0 0
      %1040 = vmatpush.bf16.msra.mxu0 0
      %1041 = vmatpush.bf16.msra.mxu0 0
      %1042 = vmatpush.bf16.msra.mxu0 0
      %1043 = vmatpush.bf16.msra.mxu0 %v1034
      %1044 = vmatmul.bf16.gmra.mxu0 %v1031
      %v1045 = vpop.f32.mrf.mxu0
      %v1046 = vadd.f32 %v761, %v1045
      %v1047 = vpop.f32.mrf.mxu0
      %v1048 = vadd.f32 %v762, %v1047
      %1049 = vdwg.mxu0
      %v1050 = vsel %vm763, %v1046, 0.0
      %1051 = vadd.xlane.f32.xlu0 %v1050
      %v1052 = vpop.xlane.xlu0 %1051
      %v1053 = vsel %vm763, %v1048, 0.0
      %1054 = vadd.xlane.f32.xlu0 %v1053
      %v1055 = vpop.xlane.xlu0 %1054
      %v1056 = vmul.f32 %v1052, %v776
      %v1057 = vmul.f32 %v1055, %v776
      %v1058 = vsub.f32 %v1046, %v1056
      %v1059 = vsub.f32 %v1048, %v1057
      %v1060 = vmul.f32 %v1058, %v1058
      %v1061 = vmul.f32 %v1059, %v1059
      %v1062 = vsel %vm763, %v1060, 0.0
      %1063 = vadd.xlane.f32.xlu0 %v1062
      %v1064 = vpop.xlane.xlu0 %1063
      %v1065 = vsel %vm763, %v1061, 0.0
      %1066 = vadd.xlane.f32.xlu0 %v1065
      %v1067 = vpop.xlane.xlu0 %1066
      %v1068 = vmul.f32 %v1064, %v776
      %v1069 = vmul.f32 %v1067, %v776
      %v1070 = vadd.f32 %v1068, 1e-06
      %v1071 = vadd.f32 %v1069, 1e-06
      %v1072 = vrsqrt.pop %v1070
      %v1073 = vmul.f32 %v1072, %v1070
      %v1074 = vmul.f32 %v1073, %v1072
      %v1075 = vmul.f32 0.5, %v1074
      %v1076 = vsub.f32 1.5, %v1075
      %v1077 = vmul.f32 %v1072, %v1076
      %vm1078 = vweird.f32 %v1070
      %vm1079 = vweird.f32 %v1072
      %vm1080 = vmor %vm1078, %vm1079
      %v1081 = vsel %vm1080, %v1072, %v1077
      %v1082 = vrsqrt.pop %v1071
      %v1083 = vmul.f32 %v1082, %v1071
      %v1084 = vmul.f32 %v1083, %v1082
      %v1085 = vmul.f32 0.5, %v1084
      %v1086 = vsub.f32 1.5, %v1085
      %v1087 = vmul.f32 %v1082, %v1086
      %vm1088 = vweird.f32 %v1071
      %vm1089 = vweird.f32 %v1082
      %vm1090 = vmor %vm1088, %vm1089
      %v1091 = vsel %vm1090, %v1082, %v1087
      %v1092 = vmul.f32 %v1058, %v1081
      %v1093 = vmul.f32 %v1059, %v1091
      %v1094 = vld [vmem:[%s10] sm:$0x1]
      %v1096 = vperm.slane %v1094, 0
      %v1098 = vmul.f32 %v1092, %v1096
      %v1099 = vmul.f32 %v1093, %v1096
      %v1100 = vld [vmem:[%s11] sm:$0x1]
      %v1102 = vperm.slane %v1100, 0
      %v1104 = vadd.f32 %v1098, %v1102
      %v1105 = vadd.f32 %v1099, %v1102
      %v1106 = vpack.c.bf16 %v1105, %v1104
      %v1107 = vld [vmem:[%s12] sm:$0x3]
      %v1108 = vld [vmem:[%s13] sm:$0x1]
      %v1110 = vperm.slane %v1108, 0
      %v1113 = vsel %vm763, %v1106, 0
      %v1116 = vsel %vm832, %v1107, 0
      %1118 = vmatpush.bf16.msra.mxu0 0
      %1119 = vmatpush.bf16.msra.mxu0 0
      %1120 = vmatpush.bf16.msra.mxu0 0
      %1121 = vmatpush.bf16.msra.mxu0 0
      %1122 = vmatpush.bf16.msra.mxu0 0
      %1123 = vmatpush.bf16.msra.mxu0 0
      %1124 = vmatpush.bf16.msra.mxu0 0
      %1125 = vmatpush.bf16.msra.mxu0 %v1116
      %1126 = vmatmul.bf16.gmra.mxu0 %v1113
      %v1127 = vpop.f32.mrf.mxu0
      %v1128 = vadd.f32 %v1110, %v1127
      %v1129 = vpop.f32.mrf.mxu0
      %v1130 = vadd.f32 %v1110, %v1129
      %1131 = vdwg.mxu0
      %v1132 = vmax.f32 %v1128, 0.0
      %v1133 = vmax.f32 %v1130, 0.0
      %v1134 = vpack.c.bf16 %v1133, %v1132
      %v1135 = vld [vmem:[%s14] sm:$0xf]
      %v1136 = vld [vmem:[%s14 + $0x4] sm:$0xf]
      %v1137 = vld [vmem:[%s15] sm:$0x1]
      %v1139 = vperm.slane %v1137, 0
      %v1143 = vunpack.c.l.b16 %v1135
      %v1144 = vunpack.c.l.b16 %v1136
      %v1145 = vpack.c.b16 %v1144, %v1143
      %v1148 = vsel %vm888, %v1134, 0
      %1150 = vmatpush.bf16.msra.mxu0 0
      %1151 = vmatpush.bf16.msra.mxu0 0
      %1152 = vmatpush.bf16.msra.mxu0 0
      %1153 = vmatpush.bf16.msra.mxu0 0
      %1154 = vmatpush.bf16.msra.mxu0 0
      %1155 = vmatpush.bf16.msra.mxu0 0
      %1156 = vmatpush.bf16.msra.mxu0 0
      %1157 = vmatpush.bf16.msra.mxu0 %v1145
      %1158 = vmatmul.bf16.gmra.mxu0 %v1148
      %v1159 = vpop.f32.mrf.mxu0
      %v1160 = vadd.f32 %v1139, %v1159
      %v1161 = vpop.f32.mrf.mxu0
      %v1162 = vadd.f32 %v1139, %v1161
      %1163 = vdwg.mxu0
      %v1164 = vadd.f32 %v1160, %v1046
      %v1165 = vadd.f32 %v1162, %v1048
      %v1166 = vpack.c.bf16 %v1165, %v1164
      %v1167 = vld [vmem:[%s16] sm:$0x3]
      %v1168 = vld [vmem:[%s17] sm:$0x1]
      %v1170 = vperm.slane %v1168, 0
      %v1173 = vsel %vm763, %v1166, 0
      %v1176 = vsel %vm832, %v1167, 0
      %1178 = vmatpush.bf16.msra.mxu0 0
      %1179 = vmatpush.bf16.msra.mxu0 0
      %1180 = vmatpush.bf16.msra.mxu0 0
      %1181 = vmatpush.bf16.msra.mxu0 0
      %1182 = vmatpush.bf16.msra.mxu0 0
      %1183 = vmatpush.bf16.msra.mxu0 0
      %1184 = vmatpush.bf16.msra.mxu0 0
      %1185 = vmatpush.bf16.msra.mxu0 %v1176
      %1186 = vmatmul.bf16.gmra.mxu0 %v1173
      %v1187 = vpop.f32.mrf.mxu0
      %v1188 = vadd.f32 %v1170, %v1187
      %v1189 = vpop.f32.mrf.mxu0
      %v1190 = vadd.f32 %v1170, %v1189
      %1191 = vdwg.mxu0
      %v1192 = vpack.c.bf16 %v1188, %v1188
      %v1193 = vpack.c.bf16 %v1190, %v1190
      %1194 = vst [vmem:[%s629] sm:$0xf] %v1192
      %1195 = vst [vmem:[%s629 + $0x4] sm:$0xf] %v1193
      %p1196 = scmp.lt.s32.totalorder %s29, 1
      %s1197 = scalar_select %p1196, %s29, 1
      %s1198 = smul.addr %s1197, 2
      %s1199 = smul.addr %s1198, 4
      %s1200 = scalar_lea.vmem %s18, %s1199
      // Predicated region
      $region93: #{encoder_decoder_forward.7} parent=91 // pred_check
        %p1201 = pneg %p445
      $region94: #{encoder_decoder_forward.7} parent=91 // pred_check_branch
        %1203 = sbr.rel (%p1201) target = $region96
      $region95: #{encoder_decoder_forward.7} parent=91 // pred_region
        _
      $region96: #{encoder_decoder_forward.7} parent=91 // pred_fallthru
        _
    $region92: #{encoder_decoder_forward.7} parent=5 // pred_fallthru
      _
    %p1204 = scmp.le.s32.totalorder 2, %s24
    // Predicated region
    $region97: #{encoder_decoder_forward.7} parent=5 // pred_check
      %p1205 = pneg %p1204
    $region98: #{encoder_decoder_forward.7} parent=5 // pred_check_branch
      %1207 = sbr.rel (%p1205) target = $region100
    $region99: #{encoder_decoder_forward.7} parent=5 // pred_region
      %s1208 = ssub.s32 %s24, 2
      // Predicated region
      $region101: #{encoder_decoder_forward.7} parent=99 // pred_check
        %p1209 = pneg %p451
      $region102: #{encoder_decoder_forward.7} parent=99 // pred_check_branch
        %1211 = sbr.rel (%p1209) target = $region104
      $region103: #{encoder_decoder_forward.7} parent=99 // pred_region
        %p1212 = scmp.lt.s32.totalorder %s30, 1
        %s1213 = scalar_select %p1212, %s30, 1
        %s1214 = smul.addr %s1213, 2
        %s1215 = smul.addr %s1214, 4
        %s1216 = scalar_lea.vmem %s18, %s1215
      $region104: #{encoder_decoder_forward.7} parent=99 // pred_fallthru
        _
    $region100: #{encoder_decoder_forward.7} parent=5 // pred_fallthru
      _
  $region6: #{encoder_decoder_forward.7} parent=0 // loop_footer
    %s28 = sadd.s32 1, %s24
  $region7: #{encoder_decoder_forward.7} parent=0 // loop_footer_branch
    %23 = sbr.rel target = $region3
  $region8: #{encoder_decoder_forward.7} parent=0 // loop_exit
    _

</llo_original>
